<compile_context>
chip_gen: v7x
topology: tpu7x:2x2x1
jax: 0.10.0
libtpu: 0.0.40
codegen_flags: <defaults>
</compile_context>

<pallas_src>
import jax
import jax.numpy as jnp
import numpy as np
from jax import lax
from jax.experimental import pallas as pl
from jax.experimental.pallas import tpu as pltpu

F = 128          # uniform padded lane width for every feature segment (E, H, 2H <= 128 here)
EPS = 1e-12
NEG_BIG = -1e30


def _round_up(x, m):
    return (x + m - 1) // m * m


# ----------------------------------------------------------------------------
# Kernel
# ----------------------------------------------------------------------------
def _pointer_decoder_kernel(
        yemb_ref, h_pre_ref, c_pre_ref, hctx_pre_ref,
        enc_out_ref, enc_feat_ref, mask_ref, cov_in_ref, art_ref,
        wx_ref, bx_ref, wl_ref, bl_ref, wdec_ref, bdec_ref,
        wc_ref, v_ref, wpg_ref, bpg_ref, w1_ref, b1_ref, w2_ref, b2_ref,
        final_ref, h_out_ref, c_out_ref, hctx_out_ref,
        attn_out_ref, pgen_out_ref, cov_out_ref):
    f32 = jnp.float32
    bf16 = jnp.bfloat16
    bt = h_pre_ref.shape[0]
    tk_pad = mask_ref.shape[1]
    vext_pad = final_ref.shape[1]

    y_emb = yemb_ref[...]
    h_pre = h_pre_ref[...]
    c_pre = c_pre_ref[...]
    hctx_pre = hctx_pre_ref[...]
    coverage = cov_in_ref[...]
    enc_mask = mask_ref[...]

    # ---- x = x_context(cat(h_context_pre, y_emb)) : one fused K=2F bf16 matmul, f32 acc ----
    xin = jnp.concatenate([hctx_pre, y_emb], axis=1).astype(bf16)
    x = jnp.dot(xin, wx_ref[...], preferred_element_type=f32) + bx_ref[...]

    # ---- single LSTM step: gates = [x | h] @ Wl (PyTorch order i,f,g,o, F-aligned blocks) ----
    gin = jnp.concatenate([x, h_pre], axis=1).astype(bf16)
    gates = jnp.dot(gin, wl_ref[...], preferred_element_type=f32) + bl_ref[...]
    i_g = jax.nn.sigmoid(gates[:, 0:F])
    f_g = jax.nn.sigmoid(gates[:, F:2 * F])
    g_g = jnp.tanh(gates[:, 2 * F:3 * F])
    o_g = jax.nn.sigmoid(gates[:, 3 * F:4 * F])
    c_new = f_g * c_pre + i_g * g_g
    h_new = o_g * jnp.tanh(c_new)

    # ---- coverage attention; s_t_hat = [h | c] fused into one matmul ----
    sin = jnp.concatenate([h_new, c_new], axis=1).astype(bf16)
    dec_fea = jnp.dot(sin, wdec_ref[...], preferred_element_type=f32) + bdec_ref[...]
    # TODO(synk): at production Tk tile this block over a Tk grid axis / online softmax.
    cov_feat = coverage[:, :, None] * wc_ref[...][None, :, :]       # (bt, tk_pad, F)
    e = jnp.tanh(enc_feat_ref[...] + dec_fea[:, None, :] + cov_feat)
    scores = jnp.sum(e * v_ref[...][None, :, :], axis=-1)           # (bt, tk_pad)
    scores = scores - jnp.max(scores, axis=1, keepdims=True)
    exps = jnp.exp(scores) * enc_mask                               # masked exp
    inv_denom = 1.0 / (jnp.sum(exps, axis=1, keepdims=True) + EPS)  # exact (externally visible)
    attn = exps * inv_denom
    h_context = jnp.sum(attn[:, :, None] * enc_out_ref[...], axis=1)   # (bt, F)
    cov_next = coverage + attn

    # ---- p_gen: one fused elementwise sum + a single cross-lane reduction ----
    wpg = wpg_ref[...]
    pg_prod = (h_context * wpg[0:1, :] + h_new * wpg[1:2, :]
               + c_new * wpg[2:3, :] + x * wpg[3:4, :])
    p_gen = jax.nn.sigmoid(jnp.sum(pg_prod, axis=1, keepdims=True) + bpg_ref[...])  # (bt, 1)

    # ---- vocab distribution over the padded extended width ----
    # columns >= V carry a -1e30 bias so softmax gives them exactly 0 (this implements the
    # torch.cat([vocab_dist, extra_zeros]) concat); final_dist is one lane-dense full-tile store.
    oin = jnp.concatenate([h_new, h_context], axis=1).astype(bf16)
    o1 = jnp.dot(oin, w1_ref[...], preferred_element_type=f32) + b1_ref[...]
    # TODO(synk): at production vocab, tile w2/b2/final_dist over a vocab grid axis.
    logits = jnp.dot(o1.astype(bf16), w2_ref[...], preferred_element_type=f32) + b2_ref[...]
    logits = logits - jnp.max(logits, axis=1, keepdims=True)
    ez = jnp.exp(logits)
    vocab_dist = ez * (1.0 / jnp.sum(ez, axis=1, keepdims=True))    # exact reciprocal

    # ---- pointer scatter-add, lane-dense: int32 ids, extended vocab on the LANE axis ----
    # padded Tk columns carry attn == 0 (mask), so they contribute nothing; padded batch rows
    # are sliced off in the wrapper.
    ids = art_ref[...]                                              # (bt, tk_pad) int32
    vio = lax.broadcasted_iota(jnp.int32, (bt, tk_pad, vext_pad), 2)
    onehot = (ids[:, :, None] == vio).astype(f32)                   # exact 0/1, no float ids
    ptr_w = ((1.0 - p_gen) * attn)[:, :, None]                      # (bt, tk_pad, 1)
    scat = jnp.sum(onehot * ptr_w, axis=1)                          # (bt, vext_pad)
    # TODO(synk): at production Tk*Vext, chunk Tk (128 rows) and accumulate via MXU matmuls.

    # ---- outputs ----
    final_ref[...] = p_gen * vocab_dist + scat
    h_out_ref[...] = h_new
    c_out_ref[...] = c_new
    hctx_out_ref[...] = h_context
    attn_out_ref[...] = attn
    pgen_out_ref[...] = p_gen
    cov_out_ref[...] = cov_next


# ----------------------------------------------------------------------------
# Wrapper: pad to TPU-friendly shapes, build specs, call the kernel, un-pad.
# ----------------------------------------------------------------------------
def pointer_decoder_step(y_ids, h_pre, c_pre, h_ctx_pre, enc_out, enc_feat,
                         enc_mask, coverage, art_ids, params, extra):
    B, H = h_pre.shape
    Tk = enc_mask.shape[1]
    E = params["x_ctx_b"].shape[0]
    V = params["out2_b"].shape[0]
    vext = V + extra
    assert E <= F and H <= F and 2 * H <= F, "TODO(synk): generalize segment padding > 128"

    B_pad = _round_up(max(B, 1), 8)
    # One batch tile covering the whole padded batch (largest matmul M), capped at 128 rows.
    # TODO(synk): on v7x with real batches, use B_TILE = B_pad // 2 so both TensorCores work.
    B_TILE = min(B_pad, 128)
    B_pad = _round_up(B_pad, B_TILE)
    Tk_pad = _round_up(Tk, F)
    Vext_pad = _round_up(vext, F)
    f32 = jnp.float32
    bf16 = jnp.bfloat16

    # ---------------- padded runtime inputs ----------------
    def pad2(a, r, c):
        return jnp.zeros((r, c), a.dtype).at[:a.shape[0], :a.shape[1]].set(a)

    def pad3(a, d0, d1, d2):
        return jnp.zeros((d0, d1, d2), a.dtype).at[:a.shape[0], :a.shape[1], :a.shape[2]].set(a)

    # Embedding gather done by XLA in the wrapper (trivial B*E gather, pipelined by BlockSpec DMA).
    y_emb = params["emb"][y_ids[:, 0].astype(jnp.int32)]            # (B, E)
    yemb_p = pad2(y_emb.astype(f32), B_pad, F)
    h0 = pad2(h_pre.astype(f32), B_pad, F)
    c0 = pad2(c_pre.astype(f32), B_pad, F)
    hctx0 = pad2(h_ctx_pre.astype(f32), B_pad, F)
    enc_out_p = pad3(enc_out.astype(f32), B_pad, Tk_pad, F)
    enc_feat_p = pad3(enc_feat.astype(f32), B_pad, Tk_pad, F)
    mask_p = pad2(enc_mask.astype(f32), B_pad, Tk_pad)
    cov_p = pad2(coverage.astype(f32), B_pad, Tk_pad)
    art_p = pad2(art_ids.astype(jnp.int32), B_pad, Tk_pad)

    # ---------------- padded (in, out) weight layout; MXU operands stored in bf16 ----------------
    xT = params["x_ctx_w"].T                      # (2H+E, E)
    wx = jnp.zeros((2 * F, F), f32)
    wx = wx.at[0:2 * H, :E].set(xT[0:2 * H])
    wx = wx.at[F:F + E, :E].set(xT[2 * H:2 * H + E])
    wx = wx.astype(bf16)
    bx = jnp.zeros((1, F), f32).at[0, :E].set(params["x_ctx_b"])

    wl = jnp.zeros((2 * F, 4 * F), f32)
    bl = jnp.zeros((1, 4 * F), f32)
    for g in range(4):
        wl = wl.at[0:E, g * F:g * F + H].set(params["lstm_w_ih"][g * H:(g + 1) * H, :].T)
        wl = wl.at[F:F + H, g * F:g * F + H].set(params["lstm_w_hh"][g * H:(g + 1) * H, :].T)
        bl = bl.at[0, g * F:g * F + H].set(params["lstm_b_ih"][g * H:(g + 1) * H]
                                           + params["lstm_b_hh"][g * H:(g + 1) * H])
    wl = wl.astype(bf16)

    dT = params["dec_proj_w"].T                   # (2H, 2H)
    wdec = jnp.zeros((2 * F, F), f32)
    wdec = wdec.at[0:H, 0:2 * H].set(dT[0:H])
    wdec = wdec.at[F:F + H, 0:2 * H].set(dT[H:2 * H])
    wdec = wdec.astype(bf16)
    bdec = jnp.zeros((1, F), f32).at[0, :2 * H].set(params["dec_proj_b"])

    wc = jnp.zeros((1, F), f32).at[0, :2 * H].set(params["W_c"][:, 0])
    vv = jnp.zeros((1, F), f32).at[0, :2 * H].set(params["v_w"][0])

    wpg = jnp.zeros((4, F), f32)
    wpg = wpg.at[0, :2 * H].set(params["pg_w"][0, 0:2 * H])
    wpg = wpg.at[1, :H].set(params["pg_w"][0, 2 * H:3 * H])
    wpg = wpg.at[2, :H].set(params["pg_w"][0, 3 * H:4 * H])
    wpg = wpg.at[3, :E].set(params["pg_w"][0, 4 * H:4 * H + E])
    bpg = params["pg_b"].reshape(1, 1).astype(f32)

    o1T = params["out1_w"].T                      # (3H, H)
    w1 = jnp.zeros((2 * F, F), f32)
    w1 = w1.at[0:H, 0:H].set(o1T[0:H])
    w1 = w1.at[F:F + 2 * H, 0:H].set(o1T[H:3 * H])
    w1 = w1.astype(bf16)
    b1 = jnp.zeros((1, F), f32).at[0, :H].set(params["out1_b"])

    w2 = jnp.zeros((F, Vext_pad), f32).at[0:H, 0:V].set(params["out2_w"].T).astype(bf16)
    b2 = jnp.full((1, Vext_pad), NEG_BIG, f32).at[0, :V].set(params["out2_b"])

    weights = (wx, bx, wl, bl, wdec, bdec, wc, vv, wpg, bpg, w1, b1, w2, b2)

    # ---------------- specs ----------------
    grid = (B_pad // B_TILE,)
    bspec2 = lambda c: pl.BlockSpec((B_TILE, c), lambda i: (i, 0))
    in_specs = [
        bspec2(F),                                                  # y_emb
        bspec2(F), bspec2(F), bspec2(F),                            # h, c, h_context_pre
        pl.BlockSpec((B_TILE, Tk_pad, F), lambda i: (i, 0, 0)),     # encoder_outputs
        pl.BlockSpec((B_TILE, Tk_pad, F), lambda i: (i, 0, 0)),     # encoder_feature
        bspec2(Tk_pad), bspec2(Tk_pad), bspec2(Tk_pad),             # mask, coverage, article ids
    ]
    # weights: full-shape blocks with constant index maps -> DMA'd once, VMEM-resident.
    in_specs += [pl.BlockSpec(w.shape, lambda i, n=w.ndim: (0,) * n) for w in weights]

    out_shape = (
        jax.ShapeDtypeStruct((B_pad, Vext_pad), f32),   # final_dist
        jax.ShapeDtypeStruct((B_pad, F), f32),          # h_t
        jax.ShapeDtypeStruct((B_pad, F), f32),          # c_t
        jax.ShapeDtypeStruct((B_pad, F), f32),          # h_context
        jax.ShapeDtypeStruct((B_pad, Tk_pad), f32),     # attn_weight
        jax.ShapeDtypeStruct((B_pad, 1), f32),          # p_gen
        jax.ShapeDtypeStruct((B_pad, Tk_pad), f32),     # coverage_next
    )
    out_specs = (
        bspec2(Vext_pad), bspec2(F), bspec2(F), bspec2(F),
        bspec2(Tk_pad), bspec2(1), bspec2(Tk_pad),
    )

    outs = pl.pallas_call(
        _pointer_decoder_kernel,
        grid=grid,
        out_shape=out_shape,
        in_specs=in_specs,
        out_specs=out_specs,
        compiler_params=pltpu.CompilerParams(
            dimension_semantics=("parallel",),
            vmem_limit_bytes=48 * 1024 * 1024),
    )(yemb_p, h0, c0, hctx0, enc_out_p, enc_feat_p, mask_p, cov_p, art_p, *weights)

    final, h_t, c_t, h_ctx, attn, p_gen, cov_next = outs
    return (final[:B, :vext], h_t[:B, :H], c_t[:B, :H], h_ctx[:B, :2 * H],
            attn[:B, :Tk], p_gen[:B], cov_next[:B, :Tk])


# ----------------------------------------------------------------------------
# Deterministic params (PyTorch parameter shapes) and a pure-JAX reference.
# ----------------------------------------------------------------------------
def init_params(key, E, H, V):
    ks = jax.random.split(key, 17)

    def w(k, shape, scale=0.1):
        return jax.random.normal(k, shape, dtype=jnp.float32) * scale

    return {
        "emb": w(ks[0], (V, E)),
        "dec_proj_w": w(ks[1], (2 * H, 2 * H)), "dec_proj_b": w(ks[2], (2 * H,)),
        "v_w": w(ks[3], (1, 2 * H)),
        "W_c": w(ks[4], (2 * H, 1)),
        "x_ctx_w": w(ks[5], (E, 2 * H + E)), "x_ctx_b": w(ks[6], (E,)),
        "lstm_w_ih": w(ks[7], (4 * H, E)), "lstm_w_hh": w(ks[8], (4 * H, H)),
        "lstm_b_ih": w(ks[9], (4 * H,)), "lstm_b_hh": w(ks[10], (4 * H,)),
        "pg_w": w(ks[11], (1, 4 * H + E)), "pg_b": w(ks[12], (1,)),
        "out1_w": w(ks[13], (H, 3 * H)), "out1_b": w(ks[14], (H,)),
        "out2_w": w(ks[15], (V, H)), "out2_b": w(ks[16], (V,)),
    }


def reference(y_ids, h_pre, c_pre, h_ctx_pre, enc_out, enc_feat, enc_mask,
              coverage, art_ids, params, extra):
    f32 = jnp.float32
    B, H = h_pre.shape
    V = params["out2_b"].shape[0]
    vext = V + extra

    y_emb = params["emb"][y_ids[:, 0]]
    x = (jnp.concatenate([h_ctx_pre, y_emb], axis=1) @ params["x_ctx_w"].T
         + params["x_ctx_b"])
    gates = (x @ params["lstm_w_ih"].T + h_pre @ params["lstm_w_hh"].T
             + params["lstm_b_ih"] + params["lstm_b_hh"])
    i_g = jax.nn.sigmoid(gates[:, 0:H])
    f_g = jax.nn.sigmoid(gates[:, H:2 * H])
    g_g = jnp.tanh(gates[:, 2 * H:3 * H])
    o_g = jax.nn.sigmoid(gates[:, 3 * H:4 * H])
    c_new = f_g * c_pre + i_g * g_g
    h_new = o_g * jnp.tanh(c_new)

    s_t_hat = jnp.concatenate([h_new, c_new], axis=1)
    dec_fea = s_t_hat @ params["dec_proj_w"].T + params["dec_proj_b"]
    cov_feat = coverage[:, :, None] * params["W_c"].T[None, :, :]
    e = jnp.tanh(enc_feat + dec_fea[:, None, :] + cov_feat)
    scores = jnp.sum(e * params["v_w"][None, :, :], axis=-1)
    sm = jax.nn.softmax(scores, axis=1)
    am = sm * enc_mask
    attn = am / (jnp.sum(am, axis=1, keepdims=True) + EPS)
    h_context = jnp.sum(attn[:, :, None] * enc_out, axis=1)
    cov_next = coverage + attn

    p_gen = jax.nn.sigmoid(
        jnp.concatenate([h_context, s_t_hat, x], axis=1) @ params["pg_w"].T
        + params["pg_b"])
    o1 = jnp.concatenate([h_new, h_context], axis=1) @ params["out1_w"].T + params["out1_b"]
    logits = o1 @ params["out2_w"].T + params["out2_b"]
    vocab_dist = jax.nn.softmax(logits, axis=1)

    vd = jnp.concatenate([p_gen * vocab_dist, jnp.zeros((B, extra), f32)], axis=1)
    ad = (1.0 - p_gen) * attn
    onehot = (art_ids[:, :, None] == jnp.arange(vext)[None, None, :]).astype(f32)
    final = vd + jnp.sum(onehot * ad[:, :, None], axis=1)
    return final, h_new, c_new, h_context, attn, p_gen, cov_next


if __name__ == "__main__":
    B, E, H, Tk, V, extra = 2, 32, 32, 12, 48, 4   # input_size=32, hidden=32, vocab=48

    key = jax.random.PRNGKey(0)
    ks = jax.random.split(key, 8)
    y_ids = jax.random.randint(ks[0], (B, 1), 0, V, dtype=jnp.int32)
    h_pre = jax.random.normal(ks[1], (B, H), dtype=jnp.float32) * 0.5
    c_pre = jax.random.normal(ks[2], (B, H), dtype=jnp.float32) * 0.5
    enc_out = jax.random.normal(ks[3], (B, Tk, 2 * H), dtype=jnp.float32) * 0.5
    enc_feat = jax.random.normal(ks[4], (B, Tk, 2 * H), dtype=jnp.float32) * 0.5
    lens = jnp.array([Tk, Tk - 3], dtype=jnp.int32)
    enc_mask = (jnp.arange(Tk)[None, :] < lens[:, None]).astype(jnp.float32)
    h_ctx_pre = jax.random.normal(ks[5], (B, 2 * H), dtype=jnp.float32) * 0.5
    coverage = jnp.zeros((B, Tk), dtype=jnp.float32)
    art_ids = jax.random.randint(ks[6], (B, Tk), 0, V + extra, dtype=jnp.int32)

    params = init_params(jax.random.PRNGKey(42), E, H, V)

    outs = pointer_decoder_step(y_ids, h_pre, c_pre, h_ctx_pre, enc_out, enc_feat,
                                enc_mask, coverage, art_ids, params, extra)
    outs = jax.block_until_ready(outs)

    refs = reference(y_ids, h_pre, c_pre, h_ctx_pre, enc_out, enc_feat,
                     enc_mask, coverage, art_ids, params, extra)
    names = ["final_dist", "h_t", "c_t", "h_context", "attn_weight", "p_gen", "coverage"]
    for name, a, b in zip(names, outs, refs):
        np.testing.assert_allclose(np.asarray(a), np.asarray(b),
                                   rtol=5e-2, atol=3e-3, err_msg=name)
    # final_dist rows must be valid probability distributions (exact reciprocals in-kernel)
    s = np.asarray(outs[0]).sum(axis=1)
    assert np.allclose(s, 1.0, atol=5e-4)
    assert np.all(np.asarray(outs[0]) >= -1e-6)

    print("KERNEL_OK")
</pallas_src>

<mosaic_0001>
module attributes {stable_mosaic.version = 11 : i64} {
  func.func @_pointer_decoder_kernel(%arg0: i32, %arg1: memref<8x128xf32, #tpu.memory_space<vmem>>, %arg2: memref<8x128xf32, #tpu.memory_space<vmem>>, %arg3: memref<8x128xf32, #tpu.memory_space<vmem>>, %arg4: memref<8x128xf32, #tpu.memory_space<vmem>>, %arg5: memref<8x128x128xf32, #tpu.memory_space<vmem>>, %arg6: memref<8x128x128xf32, #tpu.memory_space<vmem>>, %arg7: memref<8x128xf32, #tpu.memory_space<vmem>>, %arg8: memref<8x128xf32, #tpu.memory_space<vmem>>, %arg9: memref<8x128xi32, #tpu.memory_space<vmem>>, %arg10: memref<256x128xbf16, #tpu.memory_space<vmem>>, %arg11: memref<1x128xf32, #tpu.memory_space<vmem>>, %arg12: memref<256x512xbf16, #tpu.memory_space<vmem>>, %arg13: memref<1x512xf32, #tpu.memory_space<vmem>>, %arg14: memref<256x128xbf16, #tpu.memory_space<vmem>>, %arg15: memref<1x128xf32, #tpu.memory_space<vmem>>, %arg16: memref<1x128xf32, #tpu.memory_space<vmem>>, %arg17: memref<1x128xf32, #tpu.memory_space<vmem>>, %arg18: memref<4x128xf32, #tpu.memory_space<vmem>>, %arg19: memref<1x1xf32, #tpu.memory_space<vmem>>, %arg20: memref<256x128xbf16, #tpu.memory_space<vmem>>, %arg21: memref<1x128xf32, #tpu.memory_space<vmem>>, %arg22: memref<128x128xbf16, #tpu.memory_space<vmem>>, %arg23: memref<1x128xf32, #tpu.memory_space<vmem>>, %arg24: memref<8x128xf32, #tpu.memory_space<vmem>>, %arg25: memref<8x128xf32, #tpu.memory_space<vmem>>, %arg26: memref<8x128xf32, #tpu.memory_space<vmem>>, %arg27: memref<8x128xf32, #tpu.memory_space<vmem>>, %arg28: memref<8x128xf32, #tpu.memory_space<vmem>>, %arg29: memref<8x1xf32, #tpu.memory_space<vmem>>, %arg30: memref<8x128xf32, #tpu.memory_space<vmem>>) attributes {dimension_semantics = [#tpu.dimension_semantics<parallel>], iteration_bounds = array<i64: 1>, scalar_prefetch = 0 : i64, scratch_operands = 0 : i64, tpu.core_type = #tpu.core_type<tc>, window_params = [{transform_indices = @transform_0, window_bounds = array<i64: 8, 128>}, {transform_indices = @transform_1, window_bounds = array<i64: 8, 128>}, {transform_indices = @transform_2, window_bounds = array<i64: 8, 128>}, {transform_indices = @transform_3, window_bounds = array<i64: 8, 128>}, {transform_indices = @transform_4, window_bounds = array<i64: 8, 128, 128>}, {transform_indices = @transform_5, window_bounds = array<i64: 8, 128, 128>}, {transform_indices = @transform_6, window_bounds = array<i64: 8, 128>}, {transform_indices = @transform_7, window_bounds = array<i64: 8, 128>}, {transform_indices = @transform_8, window_bounds = array<i64: 8, 128>}, {pipeline_mode = #tpu.pipeline_mode<synchronous>, transform_indices = @transform_9, window_bounds = array<i64: 256, 128>}, {pipeline_mode = #tpu.pipeline_mode<synchronous>, transform_indices = @transform_10, window_bounds = array<i64: 1, 128>}, {pipeline_mode = #tpu.pipeline_mode<synchronous>, transform_indices = @transform_11, window_bounds = array<i64: 256, 512>}, {pipeline_mode = #tpu.pipeline_mode<synchronous>, transform_indices = @transform_12, window_bounds = array<i64: 1, 512>}, {pipeline_mode = #tpu.pipeline_mode<synchronous>, transform_indices = @transform_13, window_bounds = array<i64: 256, 128>}, {pipeline_mode = #tpu.pipeline_mode<synchronous>, transform_indices = @transform_14, window_bounds = array<i64: 1, 128>}, {pipeline_mode = #tpu.pipeline_mode<synchronous>, transform_indices = @transform_15, window_bounds = array<i64: 1, 128>}, {pipeline_mode = #tpu.pipeline_mode<synchronous>, transform_indices = @transform_16, window_bounds = array<i64: 1, 128>}, {pipeline_mode = #tpu.pipeline_mode<synchronous>, transform_indices = @transform_17, window_bounds = array<i64: 4, 128>}, {pipeline_mode = #tpu.pipeline_mode<synchronous>, transform_indices = @transform_18, window_bounds = array<i64: 1, 1>}, {pipeline_mode = #tpu.pipeline_mode<synchronous>, transform_indices = @transform_19, window_bounds = array<i64: 256, 128>}, {pipeline_mode = #tpu.pipeline_mode<synchronous>, transform_indices = @transform_20, window_bounds = array<i64: 1, 128>}, {pipeline_mode = #tpu.pipeline_mode<synchronous>, transform_indices = @transform_21, window_bounds = array<i64: 128, 128>}, {pipeline_mode = #tpu.pipeline_mode<synchronous>, transform_indices = @transform_22, window_bounds = array<i64: 1, 128>}, {transform_indices = @transform_23, window_bounds = array<i64: 8, 128>}, {transform_indices = @transform_24, window_bounds = array<i64: 8, 128>}, {transform_indices = @transform_25, window_bounds = array<i64: 8, 128>}, {transform_indices = @transform_26, window_bounds = array<i64: 8, 128>}, {transform_indices = @transform_27, window_bounds = array<i64: 8, 128>}, {transform_indices = @transform_28, window_bounds = array<i64: 8, 1>}, {transform_indices = @transform_29, window_bounds = array<i64: 8, 128>}]} {
    %c0 = arith.constant 0 : index
    %c0_0 = arith.constant 0 : index
    %0 = vector.load %arg1[%c0, %c0_0] : memref<8x128xf32, #tpu.memory_space<vmem>>, vector<8x128xf32>
    %c0_1 = arith.constant 0 : index
    %c0_2 = arith.constant 0 : index
    %1 = vector.load %arg2[%c0_1, %c0_2] : memref<8x128xf32, #tpu.memory_space<vmem>>, vector<8x128xf32>
    %c0_3 = arith.constant 0 : index
    %c0_4 = arith.constant 0 : index
    %2 = vector.load %arg3[%c0_3, %c0_4] : memref<8x128xf32, #tpu.memory_space<vmem>>, vector<8x128xf32>
    %c0_5 = arith.constant 0 : index
    %c0_6 = arith.constant 0 : index
    %3 = vector.load %arg4[%c0_5, %c0_6] : memref<8x128xf32, #tpu.memory_space<vmem>>, vector<8x128xf32>
    %c0_7 = arith.constant 0 : index
    %c0_8 = arith.constant 0 : index
    %4 = vector.load %arg8[%c0_7, %c0_8] : memref<8x128xf32, #tpu.memory_space<vmem>>, vector<8x128xf32>
    %c0_9 = arith.constant 0 : index
    %c0_10 = arith.constant 0 : index
    %5 = vector.load %arg7[%c0_9, %c0_10] : memref<8x128xf32, #tpu.memory_space<vmem>>, vector<8x128xf32>
    %6 = tpu.concatenate %3, %0 in 1 : vector<8x128xf32>, vector<8x128xf32> -> vector<8x256xf32>
    %7 = arith.truncf %6 : vector<8x256xf32> to vector<8x256xbf16>
    %c0_11 = arith.constant 0 : index
    %c0_12 = arith.constant 0 : index
    %8 = vector.load %arg10[%c0_11, %c0_12] : memref<256x128xbf16, #tpu.memory_space<vmem>>, vector<256x128xbf16>
    %cst = arith.constant dense<0.000000e+00> : vector<8x128xf32>
    %9 = tpu.matmul %7, %8, %cst {dimension_numbers = #tpu.dot_dimension_numbers<[1], [0], [0], [1], [0, 0, 1, 1], [], []>} : vector<8x256xbf16>, vector<256x128xbf16>, vector<8x128xf32> -> vector<8x128xf32>
    %c0_13 = arith.constant 0 : index
    %c0_14 = arith.constant 0 : index
    %10 = vector.load %arg11[%c0_13, %c0_14] : memref<1x128xf32, #tpu.memory_space<vmem>>, vector<1x128xf32>
    %11 = vector.broadcast %10 : vector<1x128xf32> to vector<8x128xf32>
    %12 = arith.addf %9, %11 : vector<8x128xf32>
    %13 = tpu.concatenate %12, %1 in 1 : vector<8x128xf32>, vector<8x128xf32> -> vector<8x256xf32>
    %14 = arith.truncf %13 : vector<8x256xf32> to vector<8x256xbf16>
    %c0_15 = arith.constant 0 : index
    %c0_16 = arith.constant 0 : index
    %15 = vector.load %arg12[%c0_15, %c0_16] : memref<256x512xbf16, #tpu.memory_space<vmem>>, vector<256x512xbf16>
    %cst_17 = arith.constant dense<0.000000e+00> : vector<8x512xf32>
    %16 = tpu.matmul %14, %15, %cst_17 {dimension_numbers = #tpu.dot_dimension_numbers<[1], [0], [0], [1], [0, 0, 1, 1], [], []>} : vector<8x256xbf16>, vector<256x512xbf16>, vector<8x512xf32> -> vector<8x512xf32>
    %c0_18 = arith.constant 0 : index
    %c0_19 = arith.constant 0 : index
    %17 = vector.load %arg13[%c0_18, %c0_19] : memref<1x512xf32, #tpu.memory_space<vmem>>, vector<1x512xf32>
    %18 = vector.broadcast %17 : vector<1x512xf32> to vector<8x512xf32>
    %19 = arith.addf %16, %18 : vector<8x512xf32>
    %20 = vector.extract_strided_slice %19 {offsets = [0, 0], sizes = [8, 128], strides = [1, 1]} : vector<8x512xf32> to vector<8x128xf32>
    %21 = arith.negf %20 : vector<8x128xf32>
    %22 = math.exp %21 : vector<8x128xf32>
    %cst_20 = arith.constant 1.000000e+00 : f32
    %23 = vector.broadcast %cst_20 : f32 to vector<8x128xf32>
    %24 = arith.addf %23, %22 : vector<8x128xf32>
    %25 = arith.divf %23, %24 : vector<8x128xf32>
    %26 = vector.extract_strided_slice %19 {offsets = [0, 128], sizes = [8, 128], strides = [1, 1]} : vector<8x512xf32> to vector<8x128xf32>
    %27 = arith.negf %26 : vector<8x128xf32>
    %28 = math.exp %27 : vector<8x128xf32>
    %cst_21 = arith.constant 1.000000e+00 : f32
    %29 = vector.broadcast %cst_21 : f32 to vector<8x128xf32>
    %30 = arith.addf %29, %28 : vector<8x128xf32>
    %31 = arith.divf %29, %30 : vector<8x128xf32>
    %32 = vector.extract_strided_slice %19 {offsets = [0, 256], sizes = [8, 128], strides = [1, 1]} : vector<8x512xf32> to vector<8x128xf32>
    %33 = math.tanh %32 : vector<8x128xf32>
    %34 = vector.extract_strided_slice %19 {offsets = [0, 384], sizes = [8, 128], strides = [1, 1]} : vector<8x512xf32> to vector<8x128xf32>
    %35 = arith.negf %34 : vector<8x128xf32>
    %36 = math.exp %35 : vector<8x128xf32>
    %cst_22 = arith.constant 1.000000e+00 : f32
    %37 = vector.broadcast %cst_22 : f32 to vector<8x128xf32>
    %38 = arith.addf %37, %36 : vector<8x128xf32>
    %39 = arith.divf %37, %38 : vector<8x128xf32>
    %40 = arith.mulf %31, %2 : vector<8x128xf32>
    %41 = arith.mulf %25, %33 : vector<8x128xf32>
    %42 = arith.addf %40, %41 : vector<8x128xf32>
    %43 = math.tanh %42 : vector<8x128xf32>
    %44 = arith.mulf %39, %43 : vector<8x128xf32>
    %45 = tpu.concatenate %44, %42 in 1 : vector<8x128xf32>, vector<8x128xf32> -> vector<8x256xf32>
    %46 = arith.truncf %45 : vector<8x256xf32> to vector<8x256xbf16>
    %c0_23 = arith.constant 0 : index
    %c0_24 = arith.constant 0 : index
    %47 = vector.load %arg14[%c0_23, %c0_24] : memref<256x128xbf16, #tpu.memory_space<vmem>>, vector<256x128xbf16>
    %cst_25 = arith.constant dense<0.000000e+00> : vector<8x128xf32>
    %48 = tpu.matmul %46, %47, %cst_25 {dimension_numbers = #tpu.dot_dimension_numbers<[1], [0], [0], [1], [0, 0, 1, 1], [], []>} : vector<8x256xbf16>, vector<256x128xbf16>, vector<8x128xf32> -> vector<8x128xf32>
    %c0_26 = arith.constant 0 : index
    %c0_27 = arith.constant 0 : index
    %49 = vector.load %arg15[%c0_26, %c0_27] : memref<1x128xf32, #tpu.memory_space<vmem>>, vector<1x128xf32>
    %50 = vector.broadcast %49 : vector<1x128xf32> to vector<8x128xf32>
    %51 = arith.addf %48, %50 : vector<8x128xf32>
    %52 = vector.shape_cast %4 : vector<8x128xf32> to vector<8x128x1xf32>
    %c0_28 = arith.constant 0 : index
    %c0_29 = arith.constant 0 : index
    %53 = vector.load %arg16[%c0_28, %c0_29] : memref<1x128xf32, #tpu.memory_space<vmem>>, vector<1x128xf32>
    %54 = vector.shape_cast %53 : vector<1x128xf32> to vector<1x1x128xf32>
    %55 = vector.broadcast %52 : vector<8x128x1xf32> to vector<8x128x128xf32>
    %56 = vector.broadcast %54 : vector<1x1x128xf32> to vector<8x128x128xf32>
    %57 = arith.mulf %55, %56 : vector<8x128x128xf32>
    %c0_30 = arith.constant 0 : index
    %c0_31 = arith.constant 0 : index
    %c0_32 = arith.constant 0 : index
    %58 = vector.load %arg6[%c0_30, %c0_31, %c0_32] : memref<8x128x128xf32, #tpu.memory_space<vmem>>, vector<8x128x128xf32>
    %59 = vector.shape_cast %51 : vector<8x128xf32> to vector<8x1x128xf32>
    %60 = vector.broadcast %59 : vector<8x1x128xf32> to vector<8x128x128xf32>
    %61 = arith.addf %58, %60 : vector<8x128x128xf32>
    %62 = arith.addf %61, %57 : vector<8x128x128xf32>
    %63 = math.tanh %62 : vector<8x128x128xf32>
    %c0_33 = arith.constant 0 : index
    %c0_34 = arith.constant 0 : index
    %64 = vector.load %arg17[%c0_33, %c0_34] : memref<1x128xf32, #tpu.memory_space<vmem>>, vector<1x128xf32>
    %65 = vector.shape_cast %64 : vector<1x128xf32> to vector<1x1x128xf32>
    %66 = vector.broadcast %65 : vector<1x1x128xf32> to vector<8x128x128xf32>
    %67 = arith.mulf %63, %66 : vector<8x128x128xf32>
    %cst_35 = arith.constant dense<0.000000e+00> : vector<8x128xf32>
    %68 = vector.multi_reduction <add>, %67, %cst_35 [2] : vector<8x128x128xf32> to vector<8x128xf32>
    %cst_36 = arith.constant dense<0xFF800000> : vector<8xf32>
    %69 = vector.multi_reduction <maximumf>, %68, %cst_36 [1] : vector<8x128xf32> to vector<8xf32>
    %70 = vector.shape_cast %69 : vector<8xf32> to vector<8x1xf32>
    %71 = vector.broadcast %70 : vector<8x1xf32> to vector<8x128xf32>
    %72 = arith.subf %68, %71 : vector<8x128xf32>
    %73 = math.exp %72 : vector<8x128xf32>
    %74 = arith.mulf %73, %5 : vector<8x128xf32>
    %cst_37 = arith.constant dense<0.000000e+00> : vector<8xf32>
    %75 = vector.multi_reduction <add>, %74, %cst_37 [1] : vector<8x128xf32> to vector<8xf32>
    %76 = vector.shape_cast %75 : vector<8xf32> to vector<8x1xf32>
    %cst_38 = arith.constant 9.99999996E-13 : f32
    %77 = vector.broadcast %cst_38 : f32 to vector<8x1xf32>
    %78 = arith.addf %76, %77 : vector<8x1xf32>
    %cst_39 = arith.constant 1.000000e+00 : f32
    %79 = vector.broadcast %cst_39 : f32 to vector<8x1xf32>
    %80 = arith.divf %79, %78 : vector<8x1xf32>
    %81 = vector.broadcast %80 : vector<8x1xf32> to vector<8x128xf32>
    %82 = arith.mulf %74, %81 : vector<8x128xf32>
    %83 = vector.shape_cast %82 : vector<8x128xf32> to vector<8x128x1xf32>
    %c0_40 = arith.constant 0 : index
    %c0_41 = arith.constant 0 : index
    %c0_42 = arith.constant 0 : index
    %84 = vector.load %arg5[%c0_40, %c0_41, %c0_42] : memref<8x128x128xf32, #tpu.memory_space<vmem>>, vector<8x128x128xf32>
    %85 = vector.broadcast %83 : vector<8x128x1xf32> to vector<8x128x128xf32>
    %86 = arith.mulf %85, %84 : vector<8x128x128xf32>
    %cst_43 = arith.constant dense<0.000000e+00> : vector<8x128xf32>
    %87 = vector.multi_reduction <add>, %86, %cst_43 [1] : vector<8x128x128xf32> to vector<8x128xf32>
    %88 = arith.addf %4, %82 : vector<8x128xf32>
    %c0_44 = arith.constant 0 : index
    %c0_45 = arith.constant 0 : index
    %89 = vector.load %arg18[%c0_44, %c0_45] : memref<4x128xf32, #tpu.memory_space<vmem>>, vector<4x128xf32>
    %90 = vector.extract_strided_slice %89 {offsets = [0, 0], sizes = [1, 128], strides = [1, 1]} : vector<4x128xf32> to vector<1x128xf32>
    %91 = vector.broadcast %90 : vector<1x128xf32> to vector<8x128xf32>
    %92 = arith.mulf %87, %91 : vector<8x128xf32>
    %93 = vector.extract_strided_slice %89 {offsets = [1, 0], sizes = [1, 128], strides = [1, 1]} : vector<4x128xf32> to vector<1x128xf32>
    %94 = vector.broadcast %93 : vector<1x128xf32> to vector<8x128xf32>
    %95 = arith.mulf %44, %94 : vector<8x128xf32>
    %96 = arith.addf %92, %95 : vector<8x128xf32>
    %97 = vector.extract_strided_slice %89 {offsets = [2, 0], sizes = [1, 128], strides = [1, 1]} : vector<4x128xf32> to vector<1x128xf32>
    %98 = vector.broadcast %97 : vector<1x128xf32> to vector<8x128xf32>
    %99 = arith.mulf %42, %98 : vector<8x128xf32>
    %100 = arith.addf %96, %99 : vector<8x128xf32>
    %101 = vector.extract_strided_slice %89 {offsets = [3, 0], sizes = [1, 128], strides = [1, 1]} : vector<4x128xf32> to vector<1x128xf32>
    %102 = vector.broadcast %101 : vector<1x128xf32> to vector<8x128xf32>
    %103 = arith.mulf %12, %102 : vector<8x128xf32>
    %104 = arith.addf %100, %103 : vector<8x128xf32>
    %cst_46 = arith.constant dense<0.000000e+00> : vector<8xf32>
    %105 = vector.multi_reduction <add>, %104, %cst_46 [1] : vector<8x128xf32> to vector<8xf32>
    %106 = vector.shape_cast %105 : vector<8xf32> to vector<8x1xf32>
    %c0_47 = arith.constant 0 : index
    %c0_48 = arith.constant 0 : index
    %107 = vector.load %arg19[%c0_47, %c0_48] : memref<1x1xf32, #tpu.memory_space<vmem>>, vector<1x1xf32>
    %108 = vector.broadcast %107 : vector<1x1xf32> to vector<8x1xf32>
    %109 = arith.addf %106, %108 : vector<8x1xf32>
    %110 = arith.negf %109 : vector<8x1xf32>
    %111 = math.exp %110 : vector<8x1xf32>
    %cst_49 = arith.constant 1.000000e+00 : f32
    %112 = vector.broadcast %cst_49 : f32 to vector<8x1xf32>
    %113 = arith.addf %112, %111 : vector<8x1xf32>
    %114 = arith.divf %112, %113 : vector<8x1xf32>
    %115 = tpu.concatenate %44, %87 in 1 : vector<8x128xf32>, vector<8x128xf32> -> vector<8x256xf32>
    %116 = arith.truncf %115 : vector<8x256xf32> to vector<8x256xbf16>
    %c0_50 = arith.constant 0 : index
    %c0_51 = arith.constant 0 : index
    %117 = vector.load %arg20[%c0_50, %c0_51] : memref<256x128xbf16, #tpu.memory_space<vmem>>, vector<256x128xbf16>
    %cst_52 = arith.constant dense<0.000000e+00> : vector<8x128xf32>
    %118 = tpu.matmul %116, %117, %cst_52 {dimension_numbers = #tpu.dot_dimension_numbers<[1], [0], [0], [1], [0, 0, 1, 1], [], []>} : vector<8x256xbf16>, vector<256x128xbf16>, vector<8x128xf32> -> vector<8x128xf32>
    %c0_53 = arith.constant 0 : index
    %c0_54 = arith.constant 0 : index
    %119 = vector.load %arg21[%c0_53, %c0_54] : memref<1x128xf32, #tpu.memory_space<vmem>>, vector<1x128xf32>
    %120 = vector.broadcast %119 : vector<1x128xf32> to vector<8x128xf32>
    %121 = arith.addf %118, %120 : vector<8x128xf32>
    %122 = arith.truncf %121 : vector<8x128xf32> to vector<8x128xbf16>
    %c0_55 = arith.constant 0 : index
    %c0_56 = arith.constant 0 : index
    %123 = vector.load %arg22[%c0_55, %c0_56] : memref<128x128xbf16, #tpu.memory_space<vmem>>, vector<128x128xbf16>
    %cst_57 = arith.constant dense<0.000000e+00> : vector<8x128xf32>
    %124 = tpu.matmul %122, %123, %cst_57 {dimension_numbers = #tpu.dot_dimension_numbers<[1], [0], [0], [1], [0, 0, 1, 1], [], []>} : vector<8x128xbf16>, vector<128x128xbf16>, vector<8x128xf32> -> vector<8x128xf32>
    %c0_58 = arith.constant 0 : index
    %c0_59 = arith.constant 0 : index
    %125 = vector.load %arg23[%c0_58, %c0_59] : memref<1x128xf32, #tpu.memory_space<vmem>>, vector<1x128xf32>
    %126 = vector.broadcast %125 : vector<1x128xf32> to vector<8x128xf32>
    %127 = arith.addf %124, %126 : vector<8x128xf32>
    %cst_60 = arith.constant dense<0xFF800000> : vector<8xf32>
    %128 = vector.multi_reduction <maximumf>, %127, %cst_60 [1] : vector<8x128xf32> to vector<8xf32>
    %129 = vector.shape_cast %128 : vector<8xf32> to vector<8x1xf32>
    %130 = vector.broadcast %129 : vector<8x1xf32> to vector<8x128xf32>
    %131 = arith.subf %127, %130 : vector<8x128xf32>
    %132 = math.exp %131 : vector<8x128xf32>
    %cst_61 = arith.constant dense<0.000000e+00> : vector<8xf32>
    %133 = vector.multi_reduction <add>, %132, %cst_61 [1] : vector<8x128xf32> to vector<8xf32>
    %134 = vector.shape_cast %133 : vector<8xf32> to vector<8x1xf32>
    %cst_62 = arith.constant 1.000000e+00 : f32
    %135 = vector.broadcast %cst_62 : f32 to vector<8x1xf32>
    %136 = arith.divf %135, %134 : vector<8x1xf32>
    %137 = vector.broadcast %136 : vector<8x1xf32> to vector<8x128xf32>
    %138 = arith.mulf %132, %137 : vector<8x128xf32>
    %c0_63 = arith.constant 0 : index
    %c0_64 = arith.constant 0 : index
    %139 = vector.load %arg9[%c0_63, %c0_64] : memref<8x128xi32, #tpu.memory_space<vmem>>, vector<8x128xi32>
    %140 = tpu.iota {dimensions = array<i32: 2>} : vector<8x128x128xi32>
    %141 = vector.shape_cast %139 : vector<8x128xi32> to vector<8x128x1xi32>
    %142 = vector.broadcast %141 : vector<8x128x1xi32> to vector<8x128x128xi32>
    %143 = arith.cmpi eq, %142, %140 : vector<8x128x128xi32>
    %144 = arith.extui %143 : vector<8x128x128xi1> to vector<8x128x128xi32>
    %145 = arith.sitofp %144 : vector<8x128x128xi32> to vector<8x128x128xf32>
    %cst_65 = arith.constant 1.000000e+00 : f32
    %146 = vector.broadcast %cst_65 : f32 to vector<8x1xf32>
    %147 = arith.subf %146, %114 : vector<8x1xf32>
    %148 = vector.broadcast %147 : vector<8x1xf32> to vector<8x128xf32>
    %149 = arith.mulf %148, %82 : vector<8x128xf32>
    %150 = vector.shape_cast %149 : vector<8x128xf32> to vector<8x128x1xf32>
    %151 = vector.broadcast %150 : vector<8x128x1xf32> to vector<8x128x128xf32>
    %152 = arith.mulf %145, %151 : vector<8x128x128xf32>
    %cst_66 = arith.constant dense<0.000000e+00> : vector<8x128xf32>
    %153 = vector.multi_reduction <add>, %152, %cst_66 [1] : vector<8x128x128xf32> to vector<8x128xf32>
    %154 = vector.broadcast %114 : vector<8x1xf32> to vector<8x128xf32>
    %155 = arith.mulf %154, %138 : vector<8x128xf32>
    %156 = arith.addf %155, %153 : vector<8x128xf32>
    %c0_67 = arith.constant 0 : index
    %c0_68 = arith.constant 0 : index
    %157 = vector.load %arg24[%c0_67, %c0_68] : memref<8x128xf32, #tpu.memory_space<vmem>>, vector<8x128xf32>
    tpu.vector_store %arg24[%c0_67, %c0_68], %156 {strides = array<i32>} : memref<8x128xf32, #tpu.memory_space<vmem>>, vector<8x128xf32>,
    %c0_69 = arith.constant 0 : index
    %c0_70 = arith.constant 0 : index
    %158 = vector.load %arg25[%c0_69, %c0_70] : memref<8x128xf32, #tpu.memory_space<vmem>>, vector<8x128xf32>
    tpu.vector_store %arg25[%c0_69, %c0_70], %44 {strides = array<i32>} : memref<8x128xf32, #tpu.memory_space<vmem>>, vector<8x128xf32>,
    %c0_71 = arith.constant 0 : index
    %c0_72 = arith.constant 0 : index
    %159 = vector.load %arg26[%c0_71, %c0_72] : memref<8x128xf32, #tpu.memory_space<vmem>>, vector<8x128xf32>
    tpu.vector_store %arg26[%c0_71, %c0_72], %42 {strides = array<i32>} : memref<8x128xf32, #tpu.memory_space<vmem>>, vector<8x128xf32>,
    %c0_73 = arith.constant 0 : index
    %c0_74 = arith.constant 0 : index
    %160 = vector.load %arg27[%c0_73, %c0_74] : memref<8x128xf32, #tpu.memory_space<vmem>>, vector<8x128xf32>
    tpu.vector_store %arg27[%c0_73, %c0_74], %87 {strides = array<i32>} : memref<8x128xf32, #tpu.memory_space<vmem>>, vector<8x128xf32>,
    %c0_75 = arith.constant 0 : index
    %c0_76 = arith.constant 0 : index
    %161 = vector.load %arg28[%c0_75, %c0_76] : memref<8x128xf32, #tpu.memory_space<vmem>>, vector<8x128xf32>
    tpu.vector_store %arg28[%c0_75, %c0_76], %82 {strides = array<i32>} : memref<8x128xf32, #tpu.memory_space<vmem>>, vector<8x128xf32>,
    %c0_77 = arith.constant 0 : index
    %c0_78 = arith.constant 0 : index
    %162 = vector.load %arg29[%c0_77, %c0_78] : memref<8x1xf32, #tpu.memory_space<vmem>>, vector<8x1xf32>
    tpu.vector_store %arg29[%c0_77, %c0_78], %114 {strides = array<i32>} : memref<8x1xf32, #tpu.memory_space<vmem>>, vector<8x1xf32>,
    %c0_79 = arith.constant 0 : index
    %c0_80 = arith.constant 0 : index
    %163 = vector.load %arg30[%c0_79, %c0_80] : memref<8x128xf32, #tpu.memory_space<vmem>>, vector<8x128xf32>
    tpu.vector_store %arg30[%c0_79, %c0_80], %88 {strides = array<i32>} : memref<8x128xf32, #tpu.memory_space<vmem>>, vector<8x128xf32>,
    return
  }
  func.func @transform_0(%arg0: i32) -> (i32, i32) {
    %c0_i32 = arith.constant 0 : i32
    %c0_i32_0 = arith.constant 0 : i32
    return %arg0, %c0_i32 : i32, i32
  }
  func.func @transform_1(%arg0: i32) -> (i32, i32) {
    %c0_i32 = arith.constant 0 : i32
    %c0_i32_0 = arith.constant 0 : i32
    return %arg0, %c0_i32 : i32, i32
  }
  func.func @transform_2(%arg0: i32) -> (i32, i32) {
    %c0_i32 = arith.constant 0 : i32
    %c0_i32_0 = arith.constant 0 : i32
    return %arg0, %c0_i32 : i32, i32
  }
  func.func @transform_3(%arg0: i32) -> (i32, i32) {
    %c0_i32 = arith.constant 0 : i32
    %c0_i32_0 = arith.constant 0 : i32
    return %arg0, %c0_i32 : i32, i32
  }
  func.func @transform_4(%arg0: i32) -> (i32, i32, i32) {
    %c0_i32 = arith.constant 0 : i32
    %c0_i32_0 = arith.constant 0 : i32
    %c0_i32_1 = arith.constant 0 : i32
    return %arg0, %c0_i32, %c0_i32_0 : i32, i32, i32
  }
  func.func @transform_5(%arg0: i32) -> (i32, i32, i32) {
    %c0_i32 = arith.constant 0 : i32
    %c0_i32_0 = arith.constant 0 : i32
    %c0_i32_1 = arith.constant 0 : i32
    return %arg0, %c0_i32, %c0_i32_0 : i32, i32, i32
  }
  func.func @transform_6(%arg0: i32) -> (i32, i32) {
    %c0_i32 = arith.constant 0 : i32
    %c0_i32_0 = arith.constant 0 : i32
    return %arg0, %c0_i32 : i32, i32
  }
  func.func @transform_7(%arg0: i32) -> (i32, i32) {
    %c0_i32 = arith.constant 0 : i32
    %c0_i32_0 = arith.constant 0 : i32
    return %arg0, %c0_i32 : i32, i32
  }
  func.func @transform_8(%arg0: i32) -> (i32, i32) {
    %c0_i32 = arith.constant 0 : i32
    %c0_i32_0 = arith.constant 0 : i32
    return %arg0, %c0_i32 : i32, i32
  }
  func.func @transform_9(%arg0: i32) -> (i32, i32) {
    %c0_i32 = arith.constant 0 : i32
    %c0_i32_0 = arith.constant 0 : i32
    %c0_i32_1 = arith.constant 0 : i32
    return %c0_i32, %c0_i32_0 : i32, i32
  }
  func.func @transform_10(%arg0: i32) -> (i32, i32) {
    %c0_i32 = arith.constant 0 : i32
    %c0_i32_0 = arith.constant 0 : i32
    %c0_i32_1 = arith.constant 0 : i32
    return %c0_i32, %c0_i32_0 : i32, i32
  }
  func.func @transform_11(%arg0: i32) -> (i32, i32) {
    %c0_i32 = arith.constant 0 : i32
    %c0_i32_0 = arith.constant 0 : i32
    %c0_i32_1 = arith.constant 0 : i32
    return %c0_i32, %c0_i32_0 : i32, i32
  }
  func.func @transform_12(%arg0: i32) -> (i32, i32) {
    %c0_i32 = arith.constant 0 : i32
    %c0_i32_0 = arith.constant 0 : i32
    %c0_i32_1 = arith.constant 0 : i32
    return %c0_i32, %c0_i32_0 : i32, i32
  }
  func.func @transform_13(%arg0: i32) -> (i32, i32) {
    %c0_i32 = arith.constant 0 : i32
    %c0_i32_0 = arith.constant 0 : i32
    %c0_i32_1 = arith.constant 0 : i32
    return %c0_i32, %c0_i32_0 : i32, i32
  }
  func.func @transform_14(%arg0: i32) -> (i32, i32) {
    %c0_i32 = arith.constant 0 : i32
    %c0_i32_0 = arith.constant 0 : i32
    %c0_i32_1 = arith.constant 0 : i32
    return %c0_i32, %c0_i32_0 : i32, i32
  }
  func.func @transform_15(%arg0: i32) -> (i32, i32) {
    %c0_i32 = arith.constant 0 : i32
    %c0_i32_0 = arith.constant 0 : i32
    %c0_i32_1 = arith.constant 0 : i32
    return %c0_i32, %c0_i32_0 : i32, i32
  }
  func.func @transform_16(%arg0: i32) -> (i32, i32) {
    %c0_i32 = arith.constant 0 : i32
    %c0_i32_0 = arith.constant 0 : i32
    %c0_i32_1 = arith.constant 0 : i32
    return %c0_i32, %c0_i32_0 : i32, i32
  }
  func.func @transform_17(%arg0: i32) -> (i32, i32) {
    %c0_i32 = arith.constant 0 : i32
    %c0_i32_0 = arith.constant 0 : i32
    %c0_i32_1 = arith.constant 0 : i32
    return %c0_i32, %c0_i32_0 : i32, i32
  }
  func.func @transform_18(%arg0: i32) -> (i32, i32) {
    %c0_i32 = arith.constant 0 : i32
    %c0_i32_0 = arith.constant 0 : i32
    %c0_i32_1 = arith.constant 0 : i32
    return %c0_i32, %c0_i32_0 : i32, i32
  }
  func.func @transform_19(%arg0: i32) -> (i32, i32) {
    %c0_i32 = arith.constant 0 : i32
    %c0_i32_0 = arith.constant 0 : i32
    %c0_i32_1 = arith.constant 0 : i32
    return %c0_i32, %c0_i32_0 : i32, i32
  }
  func.func @transform_20(%arg0: i32) -> (i32, i32) {
    %c0_i32 = arith.constant 0 : i32
    %c0_i32_0 = arith.constant 0 : i32
    %c0_i32_1 = arith.constant 0 : i32
    return %c0_i32, %c0_i32_0 : i32, i32
  }
  func.func @transform_21(%arg0: i32) -> (i32, i32) {
    %c0_i32 = arith.constant 0 : i32
    %c0_i32_0 = arith.constant 0 : i32
    %c0_i32_1 = arith.constant 0 : i32
    return %c0_i32, %c0_i32_0 : i32, i32
  }
  func.func @transform_22(%arg0: i32) -> (i32, i32) {
    %c0_i32 = arith.constant 0 : i32
    %c0_i32_0 = arith.constant 0 : i32
    %c0_i32_1 = arith.constant 0 : i32
    return %c0_i32, %c0_i32_0 : i32, i32
  }
  func.func @transform_23(%arg0: i32) -> (i32, i32) {
    %c0_i32 = arith.constant 0 : i32
    %c0_i32_0 = arith.constant 0 : i32
    return %arg0, %c0_i32 : i32, i32
  }
  func.func @transform_24(%arg0: i32) -> (i32, i32) {
    %c0_i32 = arith.constant 0 : i32
    %c0_i32_0 = arith.constant 0 : i32
    return %arg0, %c0_i32 : i32, i32
  }
  func.func @transform_25(%arg0: i32) -> (i32, i32) {
    %c0_i32 = arith.constant 0 : i32
    %c0_i32_0 = arith.constant 0 : i32
    return %arg0, %c0_i32 : i32, i32
  }
  func.func @transform_26(%arg0: i32) -> (i32, i32) {
    %c0_i32 = arith.constant 0 : i32
    %c0_i32_0 = arith.constant 0 : i32
    return %arg0, %c0_i32 : i32, i32
  }
  func.func @transform_27(%arg0: i32) -> (i32, i32) {
    %c0_i32 = arith.constant 0 : i32
    %c0_i32_0 = arith.constant 0 : i32
    return %arg0, %c0_i32 : i32, i32
  }
  func.func @transform_28(%arg0: i32) -> (i32, i32) {
    %c0_i32 = arith.constant 0 : i32
    %c0_i32_0 = arith.constant 0 : i32
    return %arg0, %c0_i32 : i32, i32
  }
  func.func @transform_29(%arg0: i32) -> (i32, i32) {
    %c0_i32 = arith.constant 0 : i32
    %c0_i32_0 = arith.constant 0 : i32
    return %arg0, %c0_i32 : i32, i32
  }
}

</mosaic_0001>

<llo_original>
// kernel: tpu_custom_call.1
$region0: #{tpu_custom_call.1}
  #allocation0 [shape = 'u32[]', space=smem, size = 0x4, offset = 0x4, fixed_abs, tag = 'smem constant byte address 0x4 - core index']
  #allocation1 [shape = 'u32[144,128]{1,0:T(1,128)}', space=vmem, size = 0x12000, scoped, tag = 'internal scratch']
  #allocation2 [shape = 'f32[1,1]{1,0:T(1,128)S(1)}', space=vmem, size = 0x200, scoped, tag = 'scoped memory for tpu_custom_call.1']
  %s0 = inlined_call_operand.smem [shape: u32[30], index: -1, kind: input, shape index: {}]
  %s1 = sld [smem:[%s0]]
  %s2 = scalar_lea.smem %s0, 1
  %s3 = sld [smem:[%s2]]
  %s4 = scalar_lea.smem %s0, 2
  %s5 = sld [smem:[%s4]]
  %s6 = scalar_lea.smem %s0, 3
  %s7 = sld [smem:[%s6]]
  %s8 = scalar_lea.smem %s0, 4
  %s9 = sld [smem:[%s8]]
  %s10 = scalar_lea.smem %s0, 5
  %s11 = sld [smem:[%s10]]
  %s12 = scalar_lea.smem %s0, 6
  %s13 = sld [smem:[%s12]]
  %s14 = scalar_lea.smem %s0, 7
  %s15 = sld [smem:[%s14]]
  %s16 = scalar_lea.smem %s0, 8
  %s17 = sld [smem:[%s16]]
  %s18 = scalar_lea.smem %s0, 9
  %s19 = sld [smem:[%s18]]
  %s20 = scalar_lea.smem %s0, 10
  %s21 = sld [smem:[%s20]]
  %s22 = scalar_lea.smem %s0, 11
  %s23 = sld [smem:[%s22]]
  %s24 = scalar_lea.smem %s0, 12
  %s25 = sld [smem:[%s24]]
  %s26 = scalar_lea.smem %s0, 13
  %s27 = sld [smem:[%s26]]
  %s28 = scalar_lea.smem %s0, 14
  %s29 = sld [smem:[%s28]]
  %s30 = scalar_lea.smem %s0, 15
  %s31 = sld [smem:[%s30]]
  %s32 = scalar_lea.smem %s0, 16
  %s33 = sld [smem:[%s32]]
  %s34 = scalar_lea.smem %s0, 17
  %s35 = sld [smem:[%s34]]
  %s36 = scalar_lea.smem %s0, 18
  %s37 = sld [smem:[%s36]]
  %s38 = scalar_lea.smem %s0, 19
  %s39 = sld [smem:[%s38]]
  %s40 = scalar_lea.smem %s0, 20
  %s41 = sld [smem:[%s40]]
  %s42 = scalar_lea.smem %s0, 21
  %s43 = sld [smem:[%s42]]
  %s44 = scalar_lea.smem %s0, 22
  %s45 = sld [smem:[%s44]]
  %s46 = scalar_lea.smem %s0, 23
  %s47 = sld [smem:[%s46]]
  %s48 = scalar_lea.smem %s0, 24
  %s49 = sld [smem:[%s48]]
  %s50 = scalar_lea.smem %s0, 25
  %s51 = sld [smem:[%s50]]
  %s52 = scalar_lea.smem %s0, 26
  %s53 = sld [smem:[%s52]]
  %s54 = scalar_lea.smem %s0, 27
  %s55 = sld [smem:[%s54]]
  %s56 = scalar_lea.smem %s0, 28
  %s57 = sld [smem:[%s56]]
  %s58 = scalar_lea.smem %s0, 29
  %s59 = sld [smem:[%s58]]
  %60 = xla_tuple %s47, %s49, %s51, %s53, %s55, %s57, %s59
  %s61 = sld [smem:[#allocation0]]
  $region210: #{tpu_custom_call.1} parent=0
    _
  %s63 = ssub.s32 1, %s61
  %s64 = scalar_select 0, %s63, %s61
  %v65 = vstv %s37
  %66 = vst [vmem:[#allocation2] sm:$0x1] %v65
  $region1: #{tpu_custom_call.1} parent=0
    #allocation3 [shape = 'u8[4096]{0}', space=vmem, size = 0x1000, scoped, tag = 'input window, operand 0, single buffered']
    #allocation4 [shape = 's32[1]{0}', space=sflag, size = 0x4, scoped, tag = 'scoped memory for tpu_custom_call.1']
    #allocation5 [shape = 's32[1]{0}', space=sflag, size = 0x4, scoped, tag = 'scoped memory for tpu_custom_call.1']
    #allocation6 [shape = 'u8[4096]{0}', space=vmem, size = 0x1000, scoped, tag = 'input window, operand 1, single buffered']
    #allocation7 [shape = 's32[1]{0}', space=sflag, size = 0x4, scoped, tag = 'scoped memory for tpu_custom_call.1']
    #allocation8 [shape = 'u8[4096]{0}', space=vmem, size = 0x1000, scoped, tag = 'input window, operand 3, single buffered']
    #allocation9 [shape = 'u8[524288]{0}', space=vmem, size = 0x80000, scoped, tag = 'input window, operand 4, single buffered']
    #allocation10 [shape = 's32[1]{0}', space=sflag, size = 0x4, scoped, tag = 'scoped memory for tpu_custom_call.1']
    #allocation11 [shape = 'u8[524288]{0}', space=vmem, size = 0x80000, scoped, tag = 'input window, operand 5, single buffered']
    #allocation12 [shape = 'u8[4096]{0}', space=vmem, size = 0x1000, scoped, tag = 'input window, operand 6, single buffered']
    #allocation13 [shape = 's32[1]{0}', space=sflag, size = 0x4, scoped, tag = 'scoped memory for tpu_custom_call.1']
    #allocation14 [shape = 'u8[4096]{0}', space=vmem, size = 0x1000, scoped, tag = 'input window, operand 7, single buffered']
    #allocation15 [shape = 'u8[4096]{0}', space=vmem, size = 0x1000, scoped, tag = 'input window, operand 8, single buffered']
    #allocation16 [shape = 's32[1]{0}', space=sflag, size = 0x4, scoped, tag = 'scoped memory for tpu_custom_call.1']
    #allocation17 [shape = 'u8[65536]{0}', space=vmem, size = 0x10000, scoped, tag = 'input window, operand 9, single buffered']
    #allocation18 [shape = 'u8[262144]{0}', space=vmem, size = 0x40000, scoped, tag = 'input window, operand 11, single buffered']
    #allocation19 [shape = 's32[1]{0}', space=sflag, size = 0x4, scoped, tag = 'scoped memory for tpu_custom_call.1']
    #allocation20 [shape = 'u8[65536]{0}', space=vmem, size = 0x10000, scoped, tag = 'input window, operand 13, single buffered']
    #allocation21 [shape = 'u8[512]{0}', space=vmem, size = 0x400, scoped, tag = 'input window, operand 16, single buffered']
    #allocation22 [shape = 's32[1]{0}', space=sflag, size = 0x4, scoped, tag = 'scoped memory for tpu_custom_call.1']
    #allocation23 [shape = 'u8[2048]{0}', space=vmem, size = 0x800, scoped, tag = 'input window, operand 17, single buffered']
    #allocation24 [shape = 'u8[65536]{0}', space=vmem, size = 0x10000, scoped, tag = 'input window, operand 19, single buffered']
    #allocation25 [shape = 's32[1]{0}', space=sflag, size = 0x4, scoped, tag = 'scoped memory for tpu_custom_call.1']
    #allocation26 [shape = 'u8[512]{0}', space=vmem, size = 0x400, scoped, tag = 'input window, operand 20, single buffered']
    #allocation27 [shape = 'u8[4096]{0}', space=vmem, size = 0x1000, scoped, tag = 'output window, operand 0, single buffered']
    #allocation28 [shape = 'u8[4096]{0}', space=vmem, size = 0x1000, scoped, tag = 'output window, operand 1, single buffered']
    #allocation29 [shape = 's32[1]{0}', space=sflag, size = 0x4, scoped, tag = 'scoped memory for tpu_custom_call.1']
    #allocation30 [shape = 'u8[4096]{0}', space=vmem, size = 0x1000, scoped, tag = 'output window, operand 2, single buffered']
    #allocation31 [shape = 'u8[4096]{0}', space=vmem, size = 0x1000, scoped, tag = 'output window, operand 3, single buffered']
    #allocation32 [shape = 's32[1]{0}', space=sflag, size = 0x4, scoped, tag = 'scoped memory for tpu_custom_call.1']
    #allocation33 [shape = 'u8[4096]{0}', space=vmem, size = 0x1000, scoped, tag = 'output window, operand 4, single buffered']
    #allocation34 [shape = 'u8[4096]{0}', space=vmem, size = 0x1000, scoped, tag = 'output window, operand 6, single buffered']
    #allocation35 [shape = 's32[1]{0}', space=sflag, size = 0x4, scoped, tag = 'scoped memory for tpu_custom_call.1']
    %67 = vsyncpa [#allocation4], 0
    %68 = vsyncpa [#allocation7], 0
    %69 = vsyncpa [#allocation10], 0
    %70 = vsyncpa [#allocation13], 0
    %71 = vsyncpa [#allocation16], 0
    %72 = vsyncpa [#allocation19], 0
    %73 = vsyncpa [#allocation22], 0
    %74 = vsyncpa [#allocation25], 0
    %75 = vsyncpa [#allocation5], 0
    %76 = vsyncpa [#allocation29], 0
    %77 = vsyncpa [#allocation32], 0
    %78 = vsyncpa [#allocation35], 0
    // Predicated region
    $region2: #{tpu_custom_call.1} parent=1 // pred_check
      _
    $region3: #{tpu_custom_call.1} parent=1 // pred_check_branch
      %80 = sbr.rel (0) target = $region5
    $region4: #{tpu_custom_call.1} parent=1 // pred_region
      %s82 = ssub.s32 128, 128
      %83 = vsyncadd [#allocation4], %s82
      %s85 = sshll.u32 [#allocation3], 4
      %s86 = int_to_ptr.vmem [resolvable:$true] %s85
      %88 = dma.hbm_to_vmem [thread:$0]  %s1, 128, %s86, [#allocation4]
    $region5: #{tpu_custom_call.1} parent=1 // pred_fallthru
      _
    // Predicated region
    $region6: #{tpu_custom_call.1} parent=1 // pred_check
      _
    $region7: #{tpu_custom_call.1} parent=1 // pred_check_branch
      %90 = sbr.rel (0) target = $region9
    $region8: #{tpu_custom_call.1} parent=1 // pred_region
      %s92 = ssub.s32 128, 128
      %93 = vsyncadd [#allocation7], %s92
      %s95 = sshll.u32 [#allocation6], 4
      %s96 = int_to_ptr.vmem [resolvable:$true] %s95
      %98 = dma.hbm_to_vmem [thread:$0]  %s3, 128, %s96, [#allocation7]
    $region9: #{tpu_custom_call.1} parent=1 // pred_fallthru
      _
    // Predicated region
    $region10: #{tpu_custom_call.1} parent=1 // pred_check
      _
    $region11: #{tpu_custom_call.1} parent=1 // pred_check_branch
      %100 = sbr.rel (0) target = $region13
    $region12: #{tpu_custom_call.1} parent=1 // pred_region
      _
    $region13: #{tpu_custom_call.1} parent=1 // pred_fallthru
      _
    // Predicated region
    $region14: #{tpu_custom_call.1} parent=1 // pred_check
      _
    $region15: #{tpu_custom_call.1} parent=1 // pred_check_branch
      %102 = sbr.rel (0) target = $region17
    $region16: #{tpu_custom_call.1} parent=1 // pred_region
      %s104 = ssub.s32 128, 128
      %105 = vsyncadd [#allocation7], %s104
      %s107 = sshll.u32 [#allocation8], 4
      %s108 = int_to_ptr.vmem [resolvable:$true] %s107
      %110 = dma.hbm_to_vmem [thread:$0]  %s7, 128, %s108, [#allocation7]
    $region17: #{tpu_custom_call.1} parent=1 // pred_fallthru
      _
    // Predicated region
    $region18: #{tpu_custom_call.1} parent=1 // pred_check
      _
    $region19: #{tpu_custom_call.1} parent=1 // pred_check_branch
      %112 = sbr.rel (0) target = $region21
    $region20: #{tpu_custom_call.1} parent=1 // pred_region
      %s114 = ssub.s32 16384, 16384
      %115 = vsyncadd [#allocation10], %s114
      %s116 = sshll.u32 [#allocation9], 4
      %s117 = int_to_ptr.vmem [resolvable:$true] %s116
      %122 = dma.hbm_to_vmem [thread:$0]  %s9, 16384, %s117, [#allocation10], 128, 128, 8
    $region21: #{tpu_custom_call.1} parent=1 // pred_fallthru
      _
    // Predicated region
    $region22: #{tpu_custom_call.1} parent=1 // pred_check
      _
    $region23: #{tpu_custom_call.1} parent=1 // pred_check_branch
      %124 = sbr.rel (0) target = $region25
    $region24: #{tpu_custom_call.1} parent=1 // pred_region
      %s126 = ssub.s32 16384, 16384
      %127 = vsyncadd [#allocation10], %s126
      %s128 = sshll.u32 [#allocation11], 4
      %s129 = int_to_ptr.vmem [resolvable:$true] %s128
      %134 = dma.hbm_to_vmem [thread:$0]  %s11, 16384, %s129, [#allocation10], 128, 128, 8
    $region25: #{tpu_custom_call.1} parent=1 // pred_fallthru
      _
    // Predicated region
    $region26: #{tpu_custom_call.1} parent=1 // pred_check
      _
    $region27: #{tpu_custom_call.1} parent=1 // pred_check_branch
      %136 = sbr.rel (0) target = $region29
    $region28: #{tpu_custom_call.1} parent=1 // pred_region
      %s138 = ssub.s32 128, 128
      %139 = vsyncadd [#allocation13], %s138
      %s141 = sshll.u32 [#allocation12], 4
      %s142 = int_to_ptr.vmem [resolvable:$true] %s141
      %144 = dma.hbm_to_vmem [thread:$0]  %s13, 128, %s142, [#allocation13]
    $region29: #{tpu_custom_call.1} parent=1 // pred_fallthru
      _
    // Predicated region
    $region30: #{tpu_custom_call.1} parent=1 // pred_check
      _
    $region31: #{tpu_custom_call.1} parent=1 // pred_check_branch
      %146 = sbr.rel (0) target = $region33
    $region32: #{tpu_custom_call.1} parent=1 // pred_region
      %s148 = ssub.s32 128, 128
      %149 = vsyncadd [#allocation13], %s148
      %s151 = sshll.u32 [#allocation14], 4
      %s152 = int_to_ptr.vmem [resolvable:$true] %s151
      %154 = dma.hbm_to_vmem [thread:$0]  %s15, 128, %s152, [#allocation13]
    $region33: #{tpu_custom_call.1} parent=1 // pred_fallthru
      _
    // Predicated region
    $region34: #{tpu_custom_call.1} parent=1 // pred_check
      _
    $region35: #{tpu_custom_call.1} parent=1 // pred_check_branch
      %156 = sbr.rel (0) target = $region37
    $region36: #{tpu_custom_call.1} parent=1 // pred_region
      %s158 = ssub.s32 128, 128
      %159 = vsyncadd [#allocation16], %s158
      %s161 = sshll.u32 [#allocation15], 4
      %s162 = int_to_ptr.vmem [resolvable:$true] %s161
      %164 = dma.hbm_to_vmem [thread:$0]  %s17, 128, %s162, [#allocation16]
    $region37: #{tpu_custom_call.1} parent=1 // pred_fallthru
      _
    // Predicated region
    $region38: #{tpu_custom_call.1} parent=1 // pred_check
      _
    $region39: #{tpu_custom_call.1} parent=1 // pred_check_branch
      %166 = sbr.rel (0) target = $region41
    $region40: #{tpu_custom_call.1} parent=1 // pred_region
      %s168 = ssub.s32 2048, 2048
      %169 = vsyncadd [#allocation16], %s168
      %s170 = sshll.u32 [#allocation17], 4
      %s171 = int_to_ptr.vmem [resolvable:$true] %s170
      %176 = dma.hbm_to_vmem [thread:$0]  %s19, 2048, %s171, [#allocation16], 64, 64, 4
    $region41: #{tpu_custom_call.1} parent=1 // pred_fallthru
      _
    // Predicated region
    $region42: #{tpu_custom_call.1} parent=1 // pred_check
      _
    $region43: #{tpu_custom_call.1} parent=1 // pred_check_branch
      %178 = sbr.rel (0) target = $region45
    $region44: #{tpu_custom_call.1} parent=1 // pred_region
      _
    $region45: #{tpu_custom_call.1} parent=1 // pred_fallthru
      _
    // Predicated region
    $region46: #{tpu_custom_call.1} parent=1 // pred_check
      _
    $region47: #{tpu_custom_call.1} parent=1 // pred_check_branch
      %180 = sbr.rel (0) target = $region49
    $region48: #{tpu_custom_call.1} parent=1 // pred_region
      %s182 = ssub.s32 8192, 8192
      %183 = vsyncadd [#allocation19], %s182
      %s184 = sshll.u32 [#allocation18], 4
      %s185 = int_to_ptr.vmem [resolvable:$true] %s184
      %190 = dma.hbm_to_vmem [thread:$0]  %s23, 8192, %s185, [#allocation19], 256, 256, 16
    $region49: #{tpu_custom_call.1} parent=1 // pred_fallthru
      _
    // Predicated region
    $region50: #{tpu_custom_call.1} parent=1 // pred_check
      _
    $region51: #{tpu_custom_call.1} parent=1 // pred_check_branch
      %192 = sbr.rel (0) target = $region53
    $region52: #{tpu_custom_call.1} parent=1 // pred_region
      _
    $region53: #{tpu_custom_call.1} parent=1 // pred_fallthru
      _
    // Predicated region
    $region54: #{tpu_custom_call.1} parent=1 // pred_check
      _
    $region55: #{tpu_custom_call.1} parent=1 // pred_check_branch
      %194 = sbr.rel (0) target = $region57
    $region56: #{tpu_custom_call.1} parent=1 // pred_region
      %s196 = ssub.s32 2048, 2048
      %197 = vsyncadd [#allocation19], %s196
      %s198 = sshll.u32 [#allocation20], 4
      %s199 = int_to_ptr.vmem [resolvable:$true] %s198
      %204 = dma.hbm_to_vmem [thread:$0]  %s27, 2048, %s199, [#allocation19], 64, 64, 4
    $region57: #{tpu_custom_call.1} parent=1 // pred_fallthru
      _
    // Predicated region
    $region58: #{tpu_custom_call.1} parent=1 // pred_check
      _
    $region59: #{tpu_custom_call.1} parent=1 // pred_check_branch
      %206 = sbr.rel (0) target = $region61
    $region60: #{tpu_custom_call.1} parent=1 // pred_region
      _
    $region61: #{tpu_custom_call.1} parent=1 // pred_fallthru
      _
    // Predicated region
    $region62: #{tpu_custom_call.1} parent=1 // pred_check
      _
    $region63: #{tpu_custom_call.1} parent=1 // pred_check_branch
      %208 = sbr.rel (0) target = $region65
    $region64: #{tpu_custom_call.1} parent=1 // pred_region
      _
    $region65: #{tpu_custom_call.1} parent=1 // pred_fallthru
      _
    // Predicated region
    $region66: #{tpu_custom_call.1} parent=1 // pred_check
      _
    $region67: #{tpu_custom_call.1} parent=1 // pred_check_branch
      %210 = sbr.rel (0) target = $region69
    $region68: #{tpu_custom_call.1} parent=1 // pred_region
      %s212 = ssub.s32 16, 16
      %213 = vsyncadd [#allocation22], %s212
      %s215 = sshll.u32 [#allocation21], 4
      %s216 = int_to_ptr.vmem [resolvable:$true] %s215
      %218 = dma.hbm_to_vmem [thread:$0]  %s33, 16, %s216, [#allocation22]
    $region69: #{tpu_custom_call.1} parent=1 // pred_fallthru
      _
    // Predicated region
    $region70: #{tpu_custom_call.1} parent=1 // pred_check
      _
    $region71: #{tpu_custom_call.1} parent=1 // pred_check_branch
      %220 = sbr.rel (0) target = $region73
    $region72: #{tpu_custom_call.1} parent=1 // pred_region
      %s222 = ssub.s32 64, 64
      %223 = vsyncadd [#allocation22], %s222
      %s225 = sshll.u32 [#allocation23], 4
      %s226 = int_to_ptr.vmem [resolvable:$true] %s225
      %228 = dma.hbm_to_vmem [thread:$0]  %s35, 64, %s226, [#allocation22]
    $region73: #{tpu_custom_call.1} parent=1 // pred_fallthru
      _
    // Predicated region
    $region74: #{tpu_custom_call.1} parent=1 // pred_check
      _
    $region75: #{tpu_custom_call.1} parent=1 // pred_check_branch
      %230 = sbr.rel (0) target = $region77
    $region76: #{tpu_custom_call.1} parent=1 // pred_region
      _
    $region77: #{tpu_custom_call.1} parent=1 // pred_fallthru
      _
    // Predicated region
    $region78: #{tpu_custom_call.1} parent=1 // pred_check
      _
    $region79: #{tpu_custom_call.1} parent=1 // pred_check_branch
      %232 = sbr.rel (0) target = $region81
    $region80: #{tpu_custom_call.1} parent=1 // pred_region
      %s234 = ssub.s32 2048, 2048
      %235 = vsyncadd [#allocation25], %s234
      %s236 = sshll.u32 [#allocation24], 4
      %s237 = int_to_ptr.vmem [resolvable:$true] %s236
      %242 = dma.hbm_to_vmem [thread:$0]  %s39, 2048, %s237, [#allocation25], 64, 64, 4
    $region81: #{tpu_custom_call.1} parent=1 // pred_fallthru
      _
    // Predicated region
    $region82: #{tpu_custom_call.1} parent=1 // pred_check
      _
    $region83: #{tpu_custom_call.1} parent=1 // pred_check_branch
      %244 = sbr.rel (0) target = $region85
    $region84: #{tpu_custom_call.1} parent=1 // pred_region
      %s246 = ssub.s32 16, 16
      %247 = vsyncadd [#allocation25], %s246
      %s249 = sshll.u32 [#allocation26], 4
      %s250 = int_to_ptr.vmem [resolvable:$true] %s249
      %252 = dma.hbm_to_vmem [thread:$0]  %s41, 16, %s250, [#allocation25]
    $region85: #{tpu_custom_call.1} parent=1 // pred_fallthru
      _
    // Predicated region
    $region86: #{tpu_custom_call.1} parent=1 // pred_check
      _
    $region87: #{tpu_custom_call.1} parent=1 // pred_check_branch
      %254 = sbr.rel (0) target = $region89
    $region88: #{tpu_custom_call.1} parent=1 // pred_region
      _
    $region89: #{tpu_custom_call.1} parent=1 // pred_fallthru
      _
    // Predicated region
    $region90: #{tpu_custom_call.1} parent=1 // pred_check
      _
    $region91: #{tpu_custom_call.1} parent=1 // pred_check_branch
      %256 = sbr.rel (0) target = $region93
    $region92: #{tpu_custom_call.1} parent=1 // pred_region
      _
    $region93: #{tpu_custom_call.1} parent=1 // pred_fallthru
      _
    // Predicated region
    $region94: #{tpu_custom_call.1} parent=1 // pred_check
      _
    $region95: #{tpu_custom_call.1} parent=1 // pred_check_branch
      %258 = sbr.rel (0) target = $region97
    $region96: #{tpu_custom_call.1} parent=1 // pred_region
      %259 = dma.done [#allocation4], 128
    $region97: #{tpu_custom_call.1} parent=1 // pred_fallthru
      _
    // Predicated region
    $region98: #{tpu_custom_call.1} parent=1 // pred_check
      _
    $region99: #{tpu_custom_call.1} parent=1 // pred_check_branch
      %261 = sbr.rel (0) target = $region101
    $region100: #{tpu_custom_call.1} parent=1 // pred_region
      %262 = dma.done [#allocation7], 128
    $region101: #{tpu_custom_call.1} parent=1 // pred_fallthru
      _
    // Predicated region
    $region102: #{tpu_custom_call.1} parent=1 // pred_check
      _
    $region103: #{tpu_custom_call.1} parent=1 // pred_check_branch
      %264 = sbr.rel (0) target = $region105
    $region104: #{tpu_custom_call.1} parent=1 // pred_region
      %265 = dma.done [#allocation7], 128
    $region105: #{tpu_custom_call.1} parent=1 // pred_fallthru
      _
    // Predicated region
    $region106: #{tpu_custom_call.1} parent=1 // pred_check
      _
    $region107: #{tpu_custom_call.1} parent=1 // pred_check_branch
      %267 = sbr.rel (0) target = $region109
    $region108: #{tpu_custom_call.1} parent=1 // pred_region
      %268 = dma.done [#allocation10], 16384
    $region109: #{tpu_custom_call.1} parent=1 // pred_fallthru
      _
    // Predicated region
    $region110: #{tpu_custom_call.1} parent=1 // pred_check
      _
    $region111: #{tpu_custom_call.1} parent=1 // pred_check_branch
      %270 = sbr.rel (0) target = $region113
    $region112: #{tpu_custom_call.1} parent=1 // pred_region
      %271 = dma.done [#allocation10], 16384
    $region113: #{tpu_custom_call.1} parent=1 // pred_fallthru
      _
    // Predicated region
    $region114: #{tpu_custom_call.1} parent=1 // pred_check
      _
    $region115: #{tpu_custom_call.1} parent=1 // pred_check_branch
      %273 = sbr.rel (0) target = $region117
    $region116: #{tpu_custom_call.1} parent=1 // pred_region
      %274 = dma.done [#allocation13], 128
    $region117: #{tpu_custom_call.1} parent=1 // pred_fallthru
      _
    // Predicated region
    $region118: #{tpu_custom_call.1} parent=1 // pred_check
      _
    $region119: #{tpu_custom_call.1} parent=1 // pred_check_branch
      %276 = sbr.rel (0) target = $region121
    $region120: #{tpu_custom_call.1} parent=1 // pred_region
      %277 = dma.done [#allocation13], 128
    $region121: #{tpu_custom_call.1} parent=1 // pred_fallthru
      _
    // Predicated region
    $region122: #{tpu_custom_call.1} parent=1 // pred_check
      _
    $region123: #{tpu_custom_call.1} parent=1 // pred_check_branch
      %279 = sbr.rel (0) target = $region125
    $region124: #{tpu_custom_call.1} parent=1 // pred_region
      %280 = dma.done [#allocation16], 128
    $region125: #{tpu_custom_call.1} parent=1 // pred_fallthru
      _
    // Predicated region
    $region126: #{tpu_custom_call.1} parent=1 // pred_check
      _
    $region127: #{tpu_custom_call.1} parent=1 // pred_check_branch
      %282 = sbr.rel (0) target = $region129
    $region128: #{tpu_custom_call.1} parent=1 // pred_region
      %283 = dma.done [#allocation16], 2048
    $region129: #{tpu_custom_call.1} parent=1 // pred_fallthru
      _
    // Predicated region
    $region130: #{tpu_custom_call.1} parent=1 // pred_check
      _
    $region131: #{tpu_custom_call.1} parent=1 // pred_check_branch
      %285 = sbr.rel (0) target = $region133
    $region132: #{tpu_custom_call.1} parent=1 // pred_region
      %286 = dma.done [#allocation19], 8192
    $region133: #{tpu_custom_call.1} parent=1 // pred_fallthru
      _
    // Predicated region
    $region134: #{tpu_custom_call.1} parent=1 // pred_check
      _
    $region135: #{tpu_custom_call.1} parent=1 // pred_check_branch
      %288 = sbr.rel (0) target = $region137
    $region136: #{tpu_custom_call.1} parent=1 // pred_region
      %289 = dma.done [#allocation19], 2048
    $region137: #{tpu_custom_call.1} parent=1 // pred_fallthru
      _
    // Predicated region
    $region138: #{tpu_custom_call.1} parent=1 // pred_check
      _
    $region139: #{tpu_custom_call.1} parent=1 // pred_check_branch
      %291 = sbr.rel (0) target = $region141
    $region140: #{tpu_custom_call.1} parent=1 // pred_region
      %292 = dma.done [#allocation22], 16
    $region141: #{tpu_custom_call.1} parent=1 // pred_fallthru
      _
    // Predicated region
    $region142: #{tpu_custom_call.1} parent=1 // pred_check
      _
    $region143: #{tpu_custom_call.1} parent=1 // pred_check_branch
      %294 = sbr.rel (0) target = $region145
    $region144: #{tpu_custom_call.1} parent=1 // pred_region
      %295 = dma.done [#allocation22], 64
    $region145: #{tpu_custom_call.1} parent=1 // pred_fallthru
      _
    // Predicated region
    $region146: #{tpu_custom_call.1} parent=1 // pred_check
      _
    $region147: #{tpu_custom_call.1} parent=1 // pred_check_branch
      %297 = sbr.rel (0) target = $region149
    $region148: #{tpu_custom_call.1} parent=1 // pred_region
      %298 = dma.done [#allocation25], 2048
    $region149: #{tpu_custom_call.1} parent=1 // pred_fallthru
      _
    // Predicated region
    $region150: #{tpu_custom_call.1} parent=1 // pred_check
      _
    $region151: #{tpu_custom_call.1} parent=1 // pred_check_branch
      %300 = sbr.rel (0) target = $region153
    $region152: #{tpu_custom_call.1} parent=1 // pred_region
      %301 = dma.done [#allocation25], 16
    $region153: #{tpu_custom_call.1} parent=1 // pred_fallthru
      _
    %v303 = vld [vmem:[#allocation3] sm:$0xff]
    %v304 = vld [vmem:[#allocation6] sm:$0xff]
    %v305 = vld [vmem:[%s5] sm:$0xff]
    %v306 = vld [vmem:[#allocation8] sm:$0xff]
    %v307 = vld [vmem:[#allocation14] sm:$0xff]
    %v308 = vld [vmem:[#allocation12] sm:$0xff]
    %v309 = vpack.c.bf16 %v306, %v306
    %v310 = vpack.c.bf16 %v303, %v303
    %v311 = vld [vmem:[#allocation17] sm:$0xf]
    %v312 = vld [vmem:[#allocation17 + $0x4] sm:$0xf]
    %v313 = vld [vmem:[#allocation17 + $0x8] sm:$0xf]
    %v314 = vld [vmem:[#allocation17 + $0xc] sm:$0xf]
    %v315 = vld [vmem:[#allocation17 + $0x10] sm:$0xf]
    %v316 = vld [vmem:[#allocation17 + $0x14] sm:$0xf]
    %v317 = vld [vmem:[#allocation17 + $0x18] sm:$0xf]
    %v318 = vld [vmem:[#allocation17 + $0x1c] sm:$0xf]
    %v319 = vld [vmem:[#allocation17 + $0x20] sm:$0xf]
    %v320 = vld [vmem:[#allocation17 + $0x24] sm:$0xf]
    %v321 = vld [vmem:[#allocation17 + $0x28] sm:$0xf]
    %v322 = vld [vmem:[#allocation17 + $0x2c] sm:$0xf]
    %v323 = vld [vmem:[#allocation17 + $0x30] sm:$0xf]
    %v324 = vld [vmem:[#allocation17 + $0x34] sm:$0xf]
    %v325 = vld [vmem:[#allocation17 + $0x38] sm:$0xf]
    %v326 = vld [vmem:[#allocation17 + $0x3c] sm:$0xf]
    %v327 = vld [vmem:[#allocation17 + $0x40] sm:$0xf]
    %v328 = vld [vmem:[#allocation17 + $0x44] sm:$0xf]
    %v329 = vld [vmem:[#allocation17 + $0x48] sm:$0xf]
    %v330 = vld [vmem:[#allocation17 + $0x4c] sm:$0xf]
    %v331 = vld [vmem:[#allocation17 + $0x50] sm:$0xf]
    %v332 = vld [vmem:[#allocation17 + $0x54] sm:$0xf]
    %v333 = vld [vmem:[#allocation17 + $0x58] sm:$0xf]
    %v334 = vld [vmem:[#allocation17 + $0x5c] sm:$0xf]
    %v335 = vld [vmem:[#allocation17 + $0x60] sm:$0xf]
    %v336 = vld [vmem:[#allocation17 + $0x64] sm:$0xf]
    %v337 = vld [vmem:[#allocation17 + $0x68] sm:$0xf]
    %v338 = vld [vmem:[#allocation17 + $0x6c] sm:$0xf]
    %v339 = vld [vmem:[#allocation17 + $0x70] sm:$0xf]
    %v340 = vld [vmem:[#allocation17 + $0x74] sm:$0xf]
    %v341 = vld [vmem:[#allocation17 + $0x78] sm:$0xf]
    %v342 = vld [vmem:[#allocation17 + $0x7c] sm:$0xf]
    %v343 = vld [vmem:[%s21] sm:$0x1]
    %v345 = vlaneseq
    %v346 = vshrl.u32 %v345, 7
    %v347 = vsub.s32 0, %v346
    %v348 = vrot.slane %v343, %v347
    %v382 = vunpack.c.l.b16 %v311
    %v383 = vunpack.c.l.b16 %v312
    %v384 = vunpack.c.l.b16 %v313
    %v385 = vunpack.c.l.b16 %v314
    %v386 = vunpack.c.l.b16 %v315
    %v387 = vunpack.c.l.b16 %v316
    %v388 = vunpack.c.l.b16 %v317
    %v389 = vunpack.c.l.b16 %v318
    %v390 = vunpack.c.l.b16 %v319
    %v391 = vunpack.c.l.b16 %v320
    %v392 = vunpack.c.l.b16 %v321
    %v393 = vunpack.c.l.b16 %v322
    %v394 = vunpack.c.l.b16 %v323
    %v395 = vunpack.c.l.b16 %v324
    %v396 = vunpack.c.l.b16 %v325
    %v397 = vunpack.c.l.b16 %v326
    %v398 = vunpack.c.l.b16 %v327
    %v399 = vunpack.c.l.b16 %v328
    %v400 = vunpack.c.l.b16 %v329
    %v401 = vunpack.c.l.b16 %v330
    %v402 = vunpack.c.l.b16 %v331
    %v403 = vunpack.c.l.b16 %v332
    %v404 = vunpack.c.l.b16 %v333
    %v405 = vunpack.c.l.b16 %v334
    %v406 = vunpack.c.l.b16 %v335
    %v407 = vunpack.c.l.b16 %v336
    %v408 = vunpack.c.l.b16 %v337
    %v409 = vunpack.c.l.b16 %v338
    %v410 = vunpack.c.l.b16 %v339
    %v411 = vunpack.c.l.b16 %v340
    %v412 = vunpack.c.l.b16 %v341
    %v413 = vunpack.c.l.b16 %v342
    %v414 = vpack.c.b16 %v383, %v382
    %v415 = vpack.c.b16 %v385, %v384
    %v416 = vpack.c.b16 %v387, %v386
    %v417 = vpack.c.b16 %v389, %v388
    %v418 = vpack.c.b16 %v391, %v390
    %v419 = vpack.c.b16 %v393, %v392
    %v420 = vpack.c.b16 %v395, %v394
    %v421 = vpack.c.b16 %v397, %v396
    %v422 = vpack.c.b16 %v399, %v398
    %v423 = vpack.c.b16 %v401, %v400
    %v424 = vpack.c.b16 %v403, %v402
    %v425 = vpack.c.b16 %v405, %v404
    %v426 = vpack.c.b16 %v407, %v406
    %v427 = vpack.c.b16 %v409, %v408
    %v428 = vpack.c.b16 %v411, %v410
    %v429 = vpack.c.b16 %v413, %v412
    %446 = vmatprep.subr.bf16.mxu0 0
    %447 = vmatpush1.bf16.msra.mxu0 %v414
    %448 = vmatprep.subr.bf16.mxu0 0
    %449 = vmatpush1.bf16.msra.mxu0 %v415
    %450 = vmatprep.subr.bf16.mxu0 0
    %451 = vmatpush1.bf16.msra.mxu0 %v416
    %452 = vmatprep.subr.bf16.mxu0 0
    %453 = vmatpush1.bf16.msra.mxu0 %v417
    %454 = vmatprep.subr.bf16.mxu0 0
    %455 = vmatpush1.bf16.msra.mxu0 %v418
    %456 = vmatprep.subr.bf16.mxu0 0
    %457 = vmatpush1.bf16.msra.mxu0 %v419
    %458 = vmatprep.subr.bf16.mxu0 0
    %459 = vmatpush1.bf16.msra.mxu0 %v420
    %460 = vmatprep.subr.bf16.mxu0 0
    %461 = vmatpush1.bf16.msra.mxu0 %v421
    %462 = vmatprep.subr.bf16.mxu0 0
    %463 = vmatpush1.bf16.msra.mxu0 %v422
    %464 = vmatprep.subr.bf16.mxu0 0
    %465 = vmatpush1.bf16.msra.mxu0 %v423
    %466 = vmatprep.subr.bf16.mxu0 0
    %467 = vmatpush1.bf16.msra.mxu0 %v424
    %468 = vmatprep.subr.bf16.mxu0 0
    %469 = vmatpush1.bf16.msra.mxu0 %v425
    %470 = vmatprep.subr.bf16.mxu0 0
    %471 = vmatpush1.bf16.msra.mxu0 %v426
    %472 = vmatprep.subr.bf16.mxu0 0
    %473 = vmatpush1.bf16.msra.mxu0 %v427
    %474 = vmatprep.subr.bf16.mxu0 0
    %475 = vmatpush1.bf16.msra.mxu0 %v428
    %476 = vmatprep.subr.bf16.mxu0 0
    %477 = vmatpush1.bf16.msra.mxu0 %v429
    %478 = vmatprep.mubr.bf16.mxu0 %v310
    %479 = vmatmul.mubr.bf16.gmra.mrb[0].mxu0 %v309
    %v480 = vpop.f32.mrb[0].mxu0
    %v481 = vadd.f32 %v348, %v480
    %v482 = vpop.f32.mrb[0].mxu0
    %v483 = vpop.f32.mrb[0].mxu0
    %v484 = vpop.f32.mrb[0].mxu0
    %485 = vdwg.mxu0
    %v486 = vpack.c.bf16 %v481, %v481
    %v487 = vpack.c.bf16 %v304, %v304
    %v488 = vld [vmem:[#allocation18] sm:$0xff]
    %v489 = vld [vmem:[#allocation18 + $0x8] sm:$0xff]
    %v490 = vld [vmem:[#allocation18 + $0x10] sm:$0xff]
    %v491 = vld [vmem:[#allocation18 + $0x18] sm:$0xff]
    %v492 = vld [vmem:[#allocation18 + $0x20] sm:$0xff]
    %v493 = vld [vmem:[#allocation18 + $0x28] sm:$0xff]
    %v494 = vld [vmem:[#allocation18 + $0x30] sm:$0xff]
    %v495 = vld [vmem:[#allocation18 + $0x38] sm:$0xff]
    %v496 = vld [vmem:[#allocation18 + $0x40] sm:$0xff]
    %v497 = vld [vmem:[#allocation18 + $0x48] sm:$0xff]
    %v498 = vld [vmem:[#allocation18 + $0x50] sm:$0xff]
    %v499 = vld [vmem:[#allocation18 + $0x58] sm:$0xff]
    %v500 = vld [vmem:[#allocation18 + $0x60] sm:$0xff]
    %v501 = vld [vmem:[#allocation18 + $0x68] sm:$0xff]
    %v502 = vld [vmem:[#allocation18 + $0x70] sm:$0xff]
    %v503 = vld [vmem:[#allocation18 + $0x78] sm:$0xff]
    %v504 = vld [vmem:[#allocation18 + $0x80] sm:$0xff]
    %v505 = vld [vmem:[#allocation18 + $0x88] sm:$0xff]
    %v506 = vld [vmem:[#allocation18 + $0x90] sm:$0xff]
    %v507 = vld [vmem:[#allocation18 + $0x98] sm:$0xff]
    %v508 = vld [vmem:[#allocation18 + $0xa0] sm:$0xff]
    %v509 = vld [vmem:[#allocation18 + $0xa8] sm:$0xff]
    %v510 = vld [vmem:[#allocation18 + $0xb0] sm:$0xff]
    %v511 = vld [vmem:[#allocation18 + $0xb8] sm:$0xff]
    %v512 = vld [vmem:[#allocation18 + $0xc0] sm:$0xff]
    %v513 = vld [vmem:[#allocation18 + $0xc8] sm:$0xff]
    %v514 = vld [vmem:[#allocation18 + $0xd0] sm:$0xff]
    %v515 = vld [vmem:[#allocation18 + $0xd8] sm:$0xff]
    %v516 = vld [vmem:[#allocation18 + $0xe0] sm:$0xff]
    %v517 = vld [vmem:[#allocation18 + $0xe8] sm:$0xff]
    %v518 = vld [vmem:[#allocation18 + $0xf0] sm:$0xff]
    %v519 = vld [vmem:[#allocation18 + $0xf8] sm:$0xff]
    %v520 = vld [vmem:[#allocation18 + $0x100] sm:$0xff]
    %v521 = vld [vmem:[#allocation18 + $0x108] sm:$0xff]
    %v522 = vld [vmem:[#allocation18 + $0x110] sm:$0xff]
    %v523 = vld [vmem:[#allocation18 + $0x118] sm:$0xff]
    %v524 = vld [vmem:[#allocation18 + $0x120] sm:$0xff]
    %v525 = vld [vmem:[#allocation18 + $0x128] sm:$0xff]
    %v526 = vld [vmem:[#allocation18 + $0x130] sm:$0xff]
    %v527 = vld [vmem:[#allocation18 + $0x138] sm:$0xff]
    %v528 = vld [vmem:[#allocation18 + $0x140] sm:$0xff]
    %v529 = vld [vmem:[#allocation18 + $0x148] sm:$0xff]
    %v530 = vld [vmem:[#allocation18 + $0x150] sm:$0xff]
    %v531 = vld [vmem:[#allocation18 + $0x158] sm:$0xff]
    %v532 = vld [vmem:[#allocation18 + $0x160] sm:$0xff]
    %v533 = vld [vmem:[#allocation18 + $0x168] sm:$0xff]
    %v534 = vld [vmem:[#allocation18 + $0x170] sm:$0xff]
    %v535 = vld [vmem:[#allocation18 + $0x178] sm:$0xff]
    %v536 = vld [vmem:[#allocation18 + $0x180] sm:$0xff]
    %v537 = vld [vmem:[#allocation18 + $0x188] sm:$0xff]
    %v538 = vld [vmem:[#allocation18 + $0x190] sm:$0xff]
    %v539 = vld [vmem:[#allocation18 + $0x198] sm:$0xff]
    %v540 = vld [vmem:[#allocation18 + $0x1a0] sm:$0xff]
    %v541 = vld [vmem:[#allocation18 + $0x1a8] sm:$0xff]
    %v542 = vld [vmem:[#allocation18 + $0x1b0] sm:$0xff]
    %v543 = vld [vmem:[#allocation18 + $0x1b8] sm:$0xff]
    %v544 = vld [vmem:[#allocation18 + $0x1c0] sm:$0xff]
    %v545 = vld [vmem:[#allocation18 + $0x1c8] sm:$0xff]
    %v546 = vld [vmem:[#allocation18 + $0x1d0] sm:$0xff]
    %v547 = vld [vmem:[#allocation18 + $0x1d8] sm:$0xff]
    %v548 = vld [vmem:[#allocation18 + $0x1e0] sm:$0xff]
    %v549 = vld [vmem:[#allocation18 + $0x1e8] sm:$0xff]
    %v550 = vld [vmem:[#allocation18 + $0x1f0] sm:$0xff]
    %v551 = vld [vmem:[#allocation18 + $0x1f8] sm:$0xff]
    %v552 = vld [vmem:[%s25] sm:$0xf]
    %v554 = vlaneseq
    %v555 = vshrl.u32 %v554, 7
    %v556 = vsub.s32 0, %v555
    %v557 = vrot.slane %v552, %v556
    %v558 = vlaneseq
    %v559 = vshrl.u32 %v558, 7
    %v560 = vsub.s32 1, %v559
    %v561 = vrot.slane %v552, %v560
    %v562 = vlaneseq
    %v563 = vshrl.u32 %v562, 7
    %v564 = vsub.s32 2, %v563
    %v565 = vrot.slane %v552, %v564
    %v566 = vlaneseq
    %v567 = vshrl.u32 %v566, 7
    %v568 = vsub.s32 3, %v567
    %v569 = vrot.slane %v552, %v568
    %v638 = vunpack.c.l.b16 %v488
    %v639 = vunpack.c.h.b16 %v488
    %v640 = vunpack.c.l.b16 %v489
    %v641 = vunpack.c.h.b16 %v489
    %v642 = vunpack.c.l.b16 %v490
    %v643 = vunpack.c.h.b16 %v490
    %v644 = vunpack.c.l.b16 %v491
    %v645 = vunpack.c.h.b16 %v491
    %v646 = vunpack.c.l.b16 %v492
    %v647 = vunpack.c.h.b16 %v492
    %v648 = vunpack.c.l.b16 %v493
    %v649 = vunpack.c.h.b16 %v493
    %v650 = vunpack.c.l.b16 %v494
    %v651 = vunpack.c.h.b16 %v494
    %v652 = vunpack.c.l.b16 %v495
    %v653 = vunpack.c.h.b16 %v495
    %v654 = vunpack.c.l.b16 %v496
    %v655 = vunpack.c.h.b16 %v496
    %v656 = vunpack.c.l.b16 %v497
    %v657 = vunpack.c.h.b16 %v497
    %v658 = vunpack.c.l.b16 %v498
    %v659 = vunpack.c.h.b16 %v498
    %v660 = vunpack.c.l.b16 %v499
    %v661 = vunpack.c.h.b16 %v499
    %v662 = vunpack.c.l.b16 %v500
    %v663 = vunpack.c.h.b16 %v500
    %v664 = vunpack.c.l.b16 %v501
    %v665 = vunpack.c.h.b16 %v501
    %v666 = vunpack.c.l.b16 %v502
    %v667 = vunpack.c.h.b16 %v502
    %v668 = vunpack.c.l.b16 %v503
    %v669 = vunpack.c.h.b16 %v503
    %v670 = vunpack.c.l.b16 %v504
    %v671 = vunpack.c.h.b16 %v504
    %v672 = vunpack.c.l.b16 %v505
    %v673 = vunpack.c.h.b16 %v505
    %v674 = vunpack.c.l.b16 %v506
    %v675 = vunpack.c.h.b16 %v506
    %v676 = vunpack.c.l.b16 %v507
    %v677 = vunpack.c.h.b16 %v507
    %v678 = vunpack.c.l.b16 %v508
    %v679 = vunpack.c.h.b16 %v508
    %v680 = vunpack.c.l.b16 %v509
    %v681 = vunpack.c.h.b16 %v509
    %v682 = vunpack.c.l.b16 %v510
    %v683 = vunpack.c.h.b16 %v510
    %v684 = vunpack.c.l.b16 %v511
    %v685 = vunpack.c.h.b16 %v511
    %v686 = vunpack.c.l.b16 %v512
    %v687 = vunpack.c.h.b16 %v512
    %v688 = vunpack.c.l.b16 %v513
    %v689 = vunpack.c.h.b16 %v513
    %v690 = vunpack.c.l.b16 %v514
    %v691 = vunpack.c.h.b16 %v514
    %v692 = vunpack.c.l.b16 %v515
    %v693 = vunpack.c.h.b16 %v515
    %v694 = vunpack.c.l.b16 %v516
    %v695 = vunpack.c.h.b16 %v516
    %v696 = vunpack.c.l.b16 %v517
    %v697 = vunpack.c.h.b16 %v517
    %v698 = vunpack.c.l.b16 %v518
    %v699 = vunpack.c.h.b16 %v518
    %v700 = vunpack.c.l.b16 %v519
    %v701 = vunpack.c.h.b16 %v519
    %v702 = vunpack.c.l.b16 %v520
    %v703 = vunpack.c.h.b16 %v520
    %v704 = vunpack.c.l.b16 %v521
    %v705 = vunpack.c.h.b16 %v521
    %v706 = vunpack.c.l.b16 %v522
    %v707 = vunpack.c.h.b16 %v522
    %v708 = vunpack.c.l.b16 %v523
    %v709 = vunpack.c.h.b16 %v523
    %v710 = vunpack.c.l.b16 %v524
    %v711 = vunpack.c.h.b16 %v524
    %v712 = vunpack.c.l.b16 %v525
    %v713 = vunpack.c.h.b16 %v525
    %v714 = vunpack.c.l.b16 %v526
    %v715 = vunpack.c.h.b16 %v526
    %v716 = vunpack.c.l.b16 %v527
    %v717 = vunpack.c.h.b16 %v527
    %v718 = vunpack.c.l.b16 %v528
    %v719 = vunpack.c.h.b16 %v528
    %v720 = vunpack.c.l.b16 %v529
    %v721 = vunpack.c.h.b16 %v529
    %v722 = vunpack.c.l.b16 %v530
    %v723 = vunpack.c.h.b16 %v530
    %v724 = vunpack.c.l.b16 %v531
    %v725 = vunpack.c.h.b16 %v531
    %v726 = vunpack.c.l.b16 %v532
    %v727 = vunpack.c.h.b16 %v532
    %v728 = vunpack.c.l.b16 %v533
    %v729 = vunpack.c.h.b16 %v533
    %v730 = vunpack.c.l.b16 %v534
    %v731 = vunpack.c.h.b16 %v534
    %v732 = vunpack.c.l.b16 %v535
    %v733 = vunpack.c.h.b16 %v535
    %v734 = vunpack.c.l.b16 %v536
    %v735 = vunpack.c.h.b16 %v536
    %v736 = vunpack.c.l.b16 %v537
    %v737 = vunpack.c.h.b16 %v537
    %v738 = vunpack.c.l.b16 %v538
    %v739 = vunpack.c.h.b16 %v538
    %v740 = vunpack.c.l.b16 %v539
    %v741 = vunpack.c.h.b16 %v539
    %v742 = vunpack.c.l.b16 %v540
    %v743 = vunpack.c.h.b16 %v540
    %v744 = vunpack.c.l.b16 %v541
    %v745 = vunpack.c.h.b16 %v541
    %v746 = vunpack.c.l.b16 %v542
    %v747 = vunpack.c.h.b16 %v542
    %v748 = vunpack.c.l.b16 %v543
    %v749 = vunpack.c.h.b16 %v543
    %v750 = vunpack.c.l.b16 %v544
    %v751 = vunpack.c.h.b16 %v544
    %v752 = vunpack.c.l.b16 %v545
    %v753 = vunpack.c.h.b16 %v545
    %v754 = vunpack.c.l.b16 %v546
    %v755 = vunpack.c.h.b16 %v546
    %v756 = vunpack.c.l.b16 %v547
    %v757 = vunpack.c.h.b16 %v547
    %v758 = vunpack.c.l.b16 %v548
    %v759 = vunpack.c.h.b16 %v548
    %v760 = vunpack.c.l.b16 %v549
    %v761 = vunpack.c.h.b16 %v549
    %v762 = vunpack.c.l.b16 %v550
    %v763 = vunpack.c.h.b16 %v550
    %v764 = vunpack.c.l.b16 %v551
    %v765 = vunpack.c.h.b16 %v551
    %v766 = vpack.c.b16 %v642, %v638
    %v767 = vpack.c.b16 %v643, %v639
    %v768 = vpack.c.b16 %v644, %v640
    %v769 = vpack.c.b16 %v645, %v641
    %v770 = vpack.c.b16 %v650, %v646
    %v771 = vpack.c.b16 %v651, %v647
    %v772 = vpack.c.b16 %v652, %v648
    %v773 = vpack.c.b16 %v653, %v649
    %v774 = vpack.c.b16 %v658, %v654
    %v775 = vpack.c.b16 %v659, %v655
    %v776 = vpack.c.b16 %v660, %v656
    %v777 = vpack.c.b16 %v661, %v657
    %v778 = vpack.c.b16 %v666, %v662
    %v779 = vpack.c.b16 %v667, %v663
    %v780 = vpack.c.b16 %v668, %v664
    %v781 = vpack.c.b16 %v669, %v665
    %v782 = vpack.c.b16 %v674, %v670
    %v783 = vpack.c.b16 %v675, %v671
    %v784 = vpack.c.b16 %v676, %v672
    %v785 = vpack.c.b16 %v677, %v673
    %v786 = vpack.c.b16 %v682, %v678
    %v787 = vpack.c.b16 %v683, %v679
    %v788 = vpack.c.b16 %v684, %v680
    %v789 = vpack.c.b16 %v685, %v681
    %v790 = vpack.c.b16 %v690, %v686
    %v791 = vpack.c.b16 %v691, %v687
    %v792 = vpack.c.b16 %v692, %v688
    %v793 = vpack.c.b16 %v693, %v689
    %v794 = vpack.c.b16 %v698, %v694
    %v795 = vpack.c.b16 %v699, %v695
    %v796 = vpack.c.b16 %v700, %v696
    %v797 = vpack.c.b16 %v701, %v697
    %v798 = vpack.c.b16 %v706, %v702
    %v799 = vpack.c.b16 %v707, %v703
    %v800 = vpack.c.b16 %v708, %v704
    %v801 = vpack.c.b16 %v709, %v705
    %v802 = vpack.c.b16 %v714, %v710
    %v803 = vpack.c.b16 %v715, %v711
    %v804 = vpack.c.b16 %v716, %v712
    %v805 = vpack.c.b16 %v717, %v713
    %v806 = vpack.c.b16 %v722, %v718
    %v807 = vpack.c.b16 %v723, %v719
    %v808 = vpack.c.b16 %v724, %v720
    %v809 = vpack.c.b16 %v725, %v721
    %v810 = vpack.c.b16 %v730, %v726
    %v811 = vpack.c.b16 %v731, %v727
    %v812 = vpack.c.b16 %v732, %v728
    %v813 = vpack.c.b16 %v733, %v729
    %v814 = vpack.c.b16 %v738, %v734
    %v815 = vpack.c.b16 %v739, %v735
    %v816 = vpack.c.b16 %v740, %v736
    %v817 = vpack.c.b16 %v741, %v737
    %v818 = vpack.c.b16 %v746, %v742
    %v819 = vpack.c.b16 %v747, %v743
    %v820 = vpack.c.b16 %v748, %v744
    %v821 = vpack.c.b16 %v749, %v745
    %v822 = vpack.c.b16 %v754, %v750
    %v823 = vpack.c.b16 %v755, %v751
    %v824 = vpack.c.b16 %v756, %v752
    %v825 = vpack.c.b16 %v757, %v753
    %v826 = vpack.c.b16 %v762, %v758
    %v827 = vpack.c.b16 %v763, %v759
    %v828 = vpack.c.b16 %v764, %v760
    %v829 = vpack.c.b16 %v765, %v761
    %894 = vmatprep.subr.bf16.mxu0 %v767
    %895 = vmatpush1.bf16.msra.mxu0 %v766
    %896 = vmatprep.subr.bf16.mxu0 %v771
    %897 = vmatpush1.bf16.msra.mxu0 %v770
    %898 = vmatprep.subr.bf16.mxu0 %v775
    %899 = vmatpush1.bf16.msra.mxu0 %v774
    %900 = vmatprep.subr.bf16.mxu0 %v779
    %901 = vmatpush1.bf16.msra.mxu0 %v778
    %902 = vmatprep.subr.bf16.mxu0 %v783
    %903 = vmatpush1.bf16.msra.mxu0 %v782
    %904 = vmatprep.subr.bf16.mxu0 %v787
    %905 = vmatpush1.bf16.msra.mxu0 %v786
    %906 = vmatprep.subr.bf16.mxu0 %v791
    %907 = vmatpush1.bf16.msra.mxu0 %v790
    %908 = vmatprep.subr.bf16.mxu0 %v795
    %909 = vmatpush1.bf16.msra.mxu0 %v794
    %910 = vmatprep.subr.bf16.mxu0 %v799
    %911 = vmatpush1.bf16.msra.mxu0 %v798
    %912 = vmatprep.subr.bf16.mxu0 %v803
    %913 = vmatpush1.bf16.msra.mxu0 %v802
    %914 = vmatprep.subr.bf16.mxu0 %v807
    %915 = vmatpush1.bf16.msra.mxu0 %v806
    %916 = vmatprep.subr.bf16.mxu0 %v811
    %917 = vmatpush1.bf16.msra.mxu0 %v810
    %918 = vmatprep.subr.bf16.mxu0 %v815
    %919 = vmatpush1.bf16.msra.mxu0 %v814
    %920 = vmatprep.subr.bf16.mxu0 %v819
    %921 = vmatpush1.bf16.msra.mxu0 %v818
    %922 = vmatprep.subr.bf16.mxu0 %v823
    %923 = vmatpush1.bf16.msra.mxu0 %v822
    %924 = vmatprep.subr.bf16.mxu0 %v827
    %925 = vmatpush1.bf16.msra.mxu0 %v826
    %926 = vmatprep.mubr.bf16.mxu0 %v487
    %927 = vmatmul.mubr.bf16.gmra.mrb[0].mxu0 %v486
    %v928 = vpop.f32.mrb[0].mxu0
    %v929 = vadd.f32 %v557, %v928
    %v930 = vpop.f32.mrb[0].mxu0
    %v931 = vadd.f32 %v561, %v930
    %v932 = vpop.f32.mrb[0].mxu0
    %v933 = vpop.f32.mrb[0].mxu0
    %934 = vdwg.mxu0
    %935 = vmatprep.subr.bf16.mxu0 %v769
    %936 = vmatpush1.bf16.msra.mxu0 %v768
    %937 = vmatprep.subr.bf16.mxu0 %v773
    %938 = vmatpush1.bf16.msra.mxu0 %v772
    %939 = vmatprep.subr.bf16.mxu0 %v777
    %940 = vmatpush1.bf16.msra.mxu0 %v776
    %941 = vmatprep.subr.bf16.mxu0 %v781
    %942 = vmatpush1.bf16.msra.mxu0 %v780
    %943 = vmatprep.subr.bf16.mxu0 %v785
    %944 = vmatpush1.bf16.msra.mxu0 %v784
    %945 = vmatprep.subr.bf16.mxu0 %v789
    %946 = vmatpush1.bf16.msra.mxu0 %v788
    %947 = vmatprep.subr.bf16.mxu0 %v793
    %948 = vmatpush1.bf16.msra.mxu0 %v792
    %949 = vmatprep.subr.bf16.mxu0 %v797
    %950 = vmatpush1.bf16.msra.mxu0 %v796
    %951 = vmatprep.subr.bf16.mxu0 %v801
    %952 = vmatpush1.bf16.msra.mxu0 %v800
    %953 = vmatprep.subr.bf16.mxu0 %v805
    %954 = vmatpush1.bf16.msra.mxu0 %v804
    %955 = vmatprep.subr.bf16.mxu0 %v809
    %956 = vmatpush1.bf16.msra.mxu0 %v808
    %957 = vmatprep.subr.bf16.mxu0 %v813
    %958 = vmatpush1.bf16.msra.mxu0 %v812
    %959 = vmatprep.subr.bf16.mxu0 %v817
    %960 = vmatpush1.bf16.msra.mxu0 %v816
    %961 = vmatprep.subr.bf16.mxu0 %v821
    %962 = vmatpush1.bf16.msra.mxu0 %v820
    %963 = vmatprep.subr.bf16.mxu0 %v825
    %964 = vmatpush1.bf16.msra.mxu0 %v824
    %965 = vmatprep.subr.bf16.mxu0 %v829
    %966 = vmatpush1.bf16.msra.mxu0 %v828
    %967 = vmatprep.mubr.bf16.mxu0 %v487
    %968 = vmatmul.mubr.bf16.gmra.mrb[0].mxu0 %v486
    %v969 = vpop.f32.mrb[0].mxu0
    %v970 = vadd.f32 %v565, %v969
    %v971 = vpop.f32.mrb[0].mxu0
    %v972 = vadd.f32 %v569, %v971
    %v973 = vpop.f32.mrb[0].mxu0
    %v974 = vpop.f32.mrb[0].mxu0
    %975 = vdwg.mxu0
    %v976 = vxor.u32 %v929, 2147483648
    %v977 = vmul.f32 %v976, 1.442695
    %v978 = vpow.pop %v977
    %v979 = vadd.f32 %v978, 1.0
    %v980 = vrcp.pop %v979
    %v981 = vmul.f32 1.0, %v980
    %v982 = vxor.u32 %v931, 2147483648
    %v983 = vmul.f32 %v982, 1.442695
    %v984 = vpow.pop %v983
    %v985 = vadd.f32 %v984, 1.0
    %v986 = vrcp.pop %v985
    %v987 = vmul.f32 1.0, %v986
    %v988 = vtanh.pop %v970
    %v989 = vxor.u32 %v972, 2147483648
    %v990 = vmul.f32 %v989, 1.442695
    %v991 = vpow.pop %v990
    %v992 = vadd.f32 %v991, 1.0
    %v993 = vrcp.pop %v992
    %v994 = vmul.f32 1.0, %v993
    %v995 = vmul.f32 %v987, %v305
    %v996 = vmul.f32 %v981, %v988
    %v997 = vadd.f32 %v995, %v996
    %v998 = vtanh.pop %v997
    %v999 = vmul.f32 %v994, %v998
    %v1000 = vpack.c.bf16 %v999, %v999
    %v1001 = vpack.c.bf16 %v997, %v997
    %v1002 = vld [vmem:[#allocation20] sm:$0xf]
    %v1003 = vld [vmem:[#allocation20 + $0x4] sm:$0xf]
    %v1004 = vld [vmem:[#allocation20 + $0x8] sm:$0xf]
    %v1005 = vld [vmem:[#allocation20 + $0xc] sm:$0xf]
    %v1006 = vld [vmem:[#allocation20 + $0x10] sm:$0xf]
    %v1007 = vld [vmem:[#allocation20 + $0x14] sm:$0xf]
    %v1008 = vld [vmem:[#allocation20 + $0x18] sm:$0xf]
    %v1009 = vld [vmem:[#allocation20 + $0x1c] sm:$0xf]
    %v1010 = vld [vmem:[#allocation20 + $0x20] sm:$0xf]
    %v1011 = vld [vmem:[#allocation20 + $0x24] sm:$0xf]
    %v1012 = vld [vmem:[#allocation20 + $0x28] sm:$0xf]
    %v1013 = vld [vmem:[#allocation20 + $0x2c] sm:$0xf]
    %v1014 = vld [vmem:[#allocation20 + $0x30] sm:$0xf]
    %v1015 = vld [vmem:[#allocation20 + $0x34] sm:$0xf]
    %v1016 = vld [vmem:[#allocation20 + $0x38] sm:$0xf]
    %v1017 = vld [vmem:[#allocation20 + $0x3c] sm:$0xf]
    %v1018 = vld [vmem:[#allocation20 + $0x40] sm:$0xf]
    %v1019 = vld [vmem:[#allocation20 + $0x44] sm:$0xf]
    %v1020 = vld [vmem:[#allocation20 + $0x48] sm:$0xf]
    %v1021 = vld [vmem:[#allocation20 + $0x4c] sm:$0xf]
    %v1022 = vld [vmem:[#allocation20 + $0x50] sm:$0xf]
    %v1023 = vld [vmem:[#allocation20 + $0x54] sm:$0xf]
    %v1024 = vld [vmem:[#allocation20 + $0x58] sm:$0xf]
    %v1025 = vld [vmem:[#allocation20 + $0x5c] sm:$0xf]
    %v1026 = vld [vmem:[#allocation20 + $0x60] sm:$0xf]
    %v1027 = vld [vmem:[#allocation20 + $0x64] sm:$0xf]
    %v1028 = vld [vmem:[#allocation20 + $0x68] sm:$0xf]
    %v1029 = vld [vmem:[#allocation20 + $0x6c] sm:$0xf]
    %v1030 = vld [vmem:[#allocation20 + $0x70] sm:$0xf]
    %v1031 = vld [vmem:[#allocation20 + $0x74] sm:$0xf]
    %v1032 = vld [vmem:[#allocation20 + $0x78] sm:$0xf]
    %v1033 = vld [vmem:[#allocation20 + $0x7c] sm:$0xf]
    %v1034 = vld [vmem:[%s29] sm:$0x1]
    %v1036 = vlaneseq
    %v1037 = vshrl.u32 %v1036, 7
    %v1038 = vsub.s32 0, %v1037
    %v1039 = vrot.slane %v1034, %v1038
    %v1073 = vunpack.c.l.b16 %v1002
    %v1074 = vunpack.c.l.b16 %v1003
    %v1075 = vunpack.c.l.b16 %v1004
    %v1076 = vunpack.c.l.b16 %v1005
    %v1077 = vunpack.c.l.b16 %v1006
    %v1078 = vunpack.c.l.b16 %v1007
    %v1079 = vunpack.c.l.b16 %v1008
    %v1080 = vunpack.c.l.b16 %v1009
    %v1081 = vunpack.c.l.b16 %v1010
    %v1082 = vunpack.c.l.b16 %v1011
    %v1083 = vunpack.c.l.b16 %v1012
    %v1084 = vunpack.c.l.b16 %v1013
    %v1085 = vunpack.c.l.b16 %v1014
    %v1086 = vunpack.c.l.b16 %v1015
    %v1087 = vunpack.c.l.b16 %v1016
    %v1088 = vunpack.c.l.b16 %v1017
    %v1089 = vunpack.c.l.b16 %v1018
    %v1090 = vunpack.c.l.b16 %v1019
    %v1091 = vunpack.c.l.b16 %v1020
    %v1092 = vunpack.c.l.b16 %v1021
    %v1093 = vunpack.c.l.b16 %v1022
    %v1094 = vunpack.c.l.b16 %v1023
    %v1095 = vunpack.c.l.b16 %v1024
    %v1096 = vunpack.c.l.b16 %v1025
    %v1097 = vunpack.c.l.b16 %v1026
    %v1098 = vunpack.c.l.b16 %v1027
    %v1099 = vunpack.c.l.b16 %v1028
    %v1100 = vunpack.c.l.b16 %v1029
    %v1101 = vunpack.c.l.b16 %v1030
    %v1102 = vunpack.c.l.b16 %v1031
    %v1103 = vunpack.c.l.b16 %v1032
    %v1104 = vunpack.c.l.b16 %v1033
    %v1105 = vpack.c.b16 %v1074, %v1073
    %v1106 = vpack.c.b16 %v1076, %v1075
    %v1107 = vpack.c.b16 %v1078, %v1077
    %v1108 = vpack.c.b16 %v1080, %v1079
    %v1109 = vpack.c.b16 %v1082, %v1081
    %v1110 = vpack.c.b16 %v1084, %v1083
    %v1111 = vpack.c.b16 %v1086, %v1085
    %v1112 = vpack.c.b16 %v1088, %v1087
    %v1113 = vpack.c.b16 %v1090, %v1089
    %v1114 = vpack.c.b16 %v1092, %v1091
    %v1115 = vpack.c.b16 %v1094, %v1093
    %v1116 = vpack.c.b16 %v1096, %v1095
    %v1117 = vpack.c.b16 %v1098, %v1097
    %v1118 = vpack.c.b16 %v1100, %v1099
    %v1119 = vpack.c.b16 %v1102, %v1101
    %v1120 = vpack.c.b16 %v1104, %v1103
    %1137 = vmatprep.subr.bf16.mxu0 0
    %1138 = vmatpush1.bf16.msra.mxu0 %v1105
    %1139 = vmatprep.subr.bf16.mxu0 0
    %1140 = vmatpush1.bf16.msra.mxu0 %v1106
    %1141 = vmatprep.subr.bf16.mxu0 0
    %1142 = vmatpush1.bf16.msra.mxu0 %v1107
    %1143 = vmatprep.subr.bf16.mxu0 0
    %1144 = vmatpush1.bf16.msra.mxu0 %v1108
    %1145 = vmatprep.subr.bf16.mxu0 0
    %1146 = vmatpush1.bf16.msra.mxu0 %v1109
    %1147 = vmatprep.subr.bf16.mxu0 0
    %1148 = vmatpush1.bf16.msra.mxu0 %v1110
    %1149 = vmatprep.subr.bf16.mxu0 0
    %1150 = vmatpush1.bf16.msra.mxu0 %v1111
    %1151 = vmatprep.subr.bf16.mxu0 0
    %1152 = vmatpush1.bf16.msra.mxu0 %v1112
    %1153 = vmatprep.subr.bf16.mxu0 0
    %1154 = vmatpush1.bf16.msra.mxu0 %v1113
    %1155 = vmatprep.subr.bf16.mxu0 0
    %1156 = vmatpush1.bf16.msra.mxu0 %v1114
    %1157 = vmatprep.subr.bf16.mxu0 0
    %1158 = vmatpush1.bf16.msra.mxu0 %v1115
    %1159 = vmatprep.subr.bf16.mxu0 0
    %1160 = vmatpush1.bf16.msra.mxu0 %v1116
    %1161 = vmatprep.subr.bf16.mxu0 0
    %1162 = vmatpush1.bf16.msra.mxu0 %v1117
    %1163 = vmatprep.subr.bf16.mxu0 0
    %1164 = vmatpush1.bf16.msra.mxu0 %v1118
    %1165 = vmatprep.subr.bf16.mxu0 0
    %1166 = vmatpush1.bf16.msra.mxu0 %v1119
    %1167 = vmatprep.subr.bf16.mxu0 0
    %1168 = vmatpush1.bf16.msra.mxu0 %v1120
    %1169 = vmatprep.mubr.bf16.mxu0 %v1001
    %1170 = vmatmul.mubr.bf16.gmra.mrb[0].mxu0 %v1000
    %v1171 = vpop.f32.mrb[0].mxu0
    %v1172 = vadd.f32 %v1039, %v1171
    %v1173 = vpop.f32.mrb[0].mxu0
    %v1174 = vpop.f32.mrb[0].mxu0
    %v1175 = vpop.f32.mrb[0].mxu0
    %1176 = vdwg.mxu0
    %v1177 = vlaneseq
    %v1178 = vshrl.u32 %v1177, 7
    %v1179 = vsub.s32 0, %v1178
    %v1180 = vrot.slane %v307, %v1179
    %1182 = vbcast.lane.b32.xlu0 %v1180, 256
    %v1183 = vpop.permute.xlu0 %1182
    %s1185 = sor.u32 256, 8
    %1186 = vbcast.lane.b32.xlu0 %v1180, %s1185
    %v1187 = vpop.permute.xlu0 %1186
    %s1189 = sor.u32 256, 16
    %1190 = vbcast.lane.b32.xlu0 %v1180, %s1189
    %v1191 = vpop.permute.xlu0 %1190
    %s1193 = sor.u32 256, 24
    %1194 = vbcast.lane.b32.xlu0 %v1180, %s1193
    %v1195 = vpop.permute.xlu0 %1194
    %s1197 = sor.u32 256, 32
    %1198 = vbcast.lane.b32.xlu0 %v1180, %s1197
    %v1199 = vpop.permute.xlu0 %1198
    %s1201 = sor.u32 256, 40
    %1202 = vbcast.lane.b32.xlu0 %v1180, %s1201
    %v1203 = vpop.permute.xlu0 %1202
    %s1205 = sor.u32 256, 48
    %1206 = vbcast.lane.b32.xlu0 %v1180, %s1205
    %v1207 = vpop.permute.xlu0 %1206
    %s1209 = sor.u32 256, 56
    %1210 = vbcast.lane.b32.xlu0 %v1180, %s1209
    %v1211 = vpop.permute.xlu0 %1210
    %s1213 = sor.u32 256, 64
    %1214 = vbcast.lane.b32.xlu0 %v1180, %s1213
    %v1215 = vpop.permute.xlu0 %1214
    %s1217 = sor.u32 256, 72
    %1218 = vbcast.lane.b32.xlu0 %v1180, %s1217
    %v1219 = vpop.permute.xlu0 %1218
    %s1221 = sor.u32 256, 80
    %1222 = vbcast.lane.b32.xlu0 %v1180, %s1221
    %v1223 = vpop.permute.xlu0 %1222
    %s1225 = sor.u32 256, 88
    %1226 = vbcast.lane.b32.xlu0 %v1180, %s1225
    %v1227 = vpop.permute.xlu0 %1226
    %s1229 = sor.u32 256, 96
    %1230 = vbcast.lane.b32.xlu0 %v1180, %s1229
    %v1231 = vpop.permute.xlu0 %1230
    %s1233 = sor.u32 256, 104
    %1234 = vbcast.lane.b32.xlu0 %v1180, %s1233
    %v1235 = vpop.permute.xlu0 %1234
    %s1237 = sor.u32 256, 112
    %1238 = vbcast.lane.b32.xlu0 %v1180, %s1237
    %v1239 = vpop.permute.xlu0 %1238
    %s1241 = sor.u32 256, 120
    %1242 = vbcast.lane.b32.xlu0 %v1180, %s1241
    %v1243 = vpop.permute.xlu0 %1242
    %v1244 = vlaneseq
    %v1245 = vshrl.u32 %v1244, 7
    %v1246 = vsub.s32 1, %v1245
    %v1247 = vrot.slane %v307, %v1246
    %1249 = vbcast.lane.b32.xlu0 %v1247, 256
    %v1250 = vpop.permute.xlu0 %1249
    %s1252 = sor.u32 256, 8
    %1253 = vbcast.lane.b32.xlu0 %v1247, %s1252
    %v1254 = vpop.permute.xlu0 %1253
    %s1256 = sor.u32 256, 16
    %1257 = vbcast.lane.b32.xlu0 %v1247, %s1256
    %v1258 = vpop.permute.xlu0 %1257
    %s1260 = sor.u32 256, 24
    %1261 = vbcast.lane.b32.xlu0 %v1247, %s1260
    %v1262 = vpop.permute.xlu0 %1261
    %s1264 = sor.u32 256, 32
    %1265 = vbcast.lane.b32.xlu0 %v1247, %s1264
    %v1266 = vpop.permute.xlu0 %1265
    %s1268 = sor.u32 256, 40
    %1269 = vbcast.lane.b32.xlu0 %v1247, %s1268
    %v1270 = vpop.permute.xlu0 %1269
    %s1272 = sor.u32 256, 48
    %1273 = vbcast.lane.b32.xlu0 %v1247, %s1272
    %v1274 = vpop.permute.xlu0 %1273
    %s1276 = sor.u32 256, 56
    %1277 = vbcast.lane.b32.xlu0 %v1247, %s1276
    %v1278 = vpop.permute.xlu0 %1277
    %s1280 = sor.u32 256, 64
    %1281 = vbcast.lane.b32.xlu0 %v1247, %s1280
    %v1282 = vpop.permute.xlu0 %1281
    %s1284 = sor.u32 256, 72
    %1285 = vbcast.lane.b32.xlu0 %v1247, %s1284
    %v1286 = vpop.permute.xlu0 %1285
    %s1288 = sor.u32 256, 80
    %1289 = vbcast.lane.b32.xlu0 %v1247, %s1288
    %v1290 = vpop.permute.xlu0 %1289
    %s1292 = sor.u32 256, 88
    %1293 = vbcast.lane.b32.xlu0 %v1247, %s1292
    %v1294 = vpop.permute.xlu0 %1293
    %s1296 = sor.u32 256, 96
    %1297 = vbcast.lane.b32.xlu0 %v1247, %s1296
    %v1298 = vpop.permute.xlu0 %1297
    %s1300 = sor.u32 256, 104
    %1301 = vbcast.lane.b32.xlu0 %v1247, %s1300
    %v1302 = vpop.permute.xlu0 %1301
    %s1304 = sor.u32 256, 112
    %1305 = vbcast.lane.b32.xlu0 %v1247, %s1304
    %v1306 = vpop.permute.xlu0 %1305
    %s1308 = sor.u32 256, 120
    %1309 = vbcast.lane.b32.xlu0 %v1247, %s1308
    %v1310 = vpop.permute.xlu0 %1309
    %v1311 = vlaneseq
    %v1312 = vshrl.u32 %v1311, 7
    %v1313 = vsub.s32 2, %v1312
    %v1314 = vrot.slane %v307, %v1313
    %1316 = vbcast.lane.b32.xlu0 %v1314, 256
    %v1317 = vpop.permute.xlu0 %1316
    %s1319 = sor.u32 256, 8
    %1320 = vbcast.lane.b32.xlu0 %v1314, %s1319
    %v1321 = vpop.permute.xlu0 %1320
    %s1323 = sor.u32 256, 16
    %1324 = vbcast.lane.b32.xlu0 %v1314, %s1323
    %v1325 = vpop.permute.xlu0 %1324
    %s1327 = sor.u32 256, 24
    %1328 = vbcast.lane.b32.xlu0 %v1314, %s1327
    %v1329 = vpop.permute.xlu0 %1328
    %s1331 = sor.u32 256, 32
    %1332 = vbcast.lane.b32.xlu0 %v1314, %s1331
    %v1333 = vpop.permute.xlu0 %1332
    %s1335 = sor.u32 256, 40
    %1336 = vbcast.lane.b32.xlu0 %v1314, %s1335
    %v1337 = vpop.permute.xlu0 %1336
    %s1339 = sor.u32 256, 48
    %1340 = vbcast.lane.b32.xlu0 %v1314, %s1339
    %v1341 = vpop.permute.xlu0 %1340
    %s1343 = sor.u32 256, 56
    %1344 = vbcast.lane.b32.xlu0 %v1314, %s1343
    %v1345 = vpop.permute.xlu0 %1344
    %s1347 = sor.u32 256, 64
    %1348 = vbcast.lane.b32.xlu0 %v1314, %s1347
    %v1349 = vpop.permute.xlu0 %1348
    %s1351 = sor.u32 256, 72
    %1352 = vbcast.lane.b32.xlu0 %v1314, %s1351
    %v1353 = vpop.permute.xlu0 %1352
    %s1355 = sor.u32 256, 80
    %1356 = vbcast.lane.b32.xlu0 %v1314, %s1355
    %v1357 = vpop.permute.xlu0 %1356
    %s1359 = sor.u32 256, 88
    %1360 = vbcast.lane.b32.xlu0 %v1314, %s1359
    %v1361 = vpop.permute.xlu0 %1360
    %s1363 = sor.u32 256, 96
    %1364 = vbcast.lane.b32.xlu0 %v1314, %s1363
    %v1365 = vpop.permute.xlu0 %1364
    %s1367 = sor.u32 256, 104
    %1368 = vbcast.lane.b32.xlu0 %v1314, %s1367
    %v1369 = vpop.permute.xlu0 %1368
    %s1371 = sor.u32 256, 112
    %1372 = vbcast.lane.b32.xlu0 %v1314, %s1371
    %v1373 = vpop.permute.xlu0 %1372
    %s1375 = sor.u32 256, 120
    %1376 = vbcast.lane.b32.xlu0 %v1314, %s1375
    %v1377 = vpop.permute.xlu0 %1376
    %v1378 = vlaneseq
    %v1379 = vshrl.u32 %v1378, 7
    %v1380 = vsub.s32 3, %v1379
    %v1381 = vrot.slane %v307, %v1380
    %1383 = vbcast.lane.b32.xlu0 %v1381, 256
    %v1384 = vpop.permute.xlu0 %1383
    %s1386 = sor.u32 256, 8
    %1387 = vbcast.lane.b32.xlu0 %v1381, %s1386
    %v1388 = vpop.permute.xlu0 %1387
    %s1390 = sor.u32 256, 16
    %1391 = vbcast.lane.b32.xlu0 %v1381, %s1390
    %v1392 = vpop.permute.xlu0 %1391
    %s1394 = sor.u32 256, 24
    %1395 = vbcast.lane.b32.xlu0 %v1381, %s1394
    %v1396 = vpop.permute.xlu0 %1395
    %s1398 = sor.u32 256, 32
    %1399 = vbcast.lane.b32.xlu0 %v1381, %s1398
    %v1400 = vpop.permute.xlu0 %1399
    %s1402 = sor.u32 256, 40
    %1403 = vbcast.lane.b32.xlu0 %v1381, %s1402
    %v1404 = vpop.permute.xlu0 %1403
    %s1406 = sor.u32 256, 48
    %1407 = vbcast.lane.b32.xlu0 %v1381, %s1406
    %v1408 = vpop.permute.xlu0 %1407
    %s1410 = sor.u32 256, 56
    %1411 = vbcast.lane.b32.xlu0 %v1381, %s1410
    %v1412 = vpop.permute.xlu0 %1411
    %s1414 = sor.u32 256, 64
    %1415 = vbcast.lane.b32.xlu0 %v1381, %s1414
    %v1416 = vpop.permute.xlu0 %1415
    %s1418 = sor.u32 256, 72
    %1419 = vbcast.lane.b32.xlu0 %v1381, %s1418
    %v1420 = vpop.permute.xlu0 %1419
    %s1422 = sor.u32 256, 80
    %1423 = vbcast.lane.b32.xlu0 %v1381, %s1422
    %v1424 = vpop.permute.xlu0 %1423
    %s1426 = sor.u32 256, 88
    %1427 = vbcast.lane.b32.xlu0 %v1381, %s1426
    %v1428 = vpop.permute.xlu0 %1427
    %s1430 = sor.u32 256, 96
    %1431 = vbcast.lane.b32.xlu0 %v1381, %s1430
    %v1432 = vpop.permute.xlu0 %1431
    %s1434 = sor.u32 256, 104
    %1435 = vbcast.lane.b32.xlu0 %v1381, %s1434
    %v1436 = vpop.permute.xlu0 %1435
    %s1438 = sor.u32 256, 112
    %1439 = vbcast.lane.b32.xlu0 %v1381, %s1438
    %v1440 = vpop.permute.xlu0 %1439
    %s1442 = sor.u32 256, 120
    %1443 = vbcast.lane.b32.xlu0 %v1381, %s1442
    %v1444 = vpop.permute.xlu0 %1443
    %v1445 = vlaneseq
    %v1446 = vshrl.u32 %v1445, 7
    %v1447 = vsub.s32 4, %v1446
    %v1448 = vrot.slane %v307, %v1447
    %1450 = vbcast.lane.b32.xlu0 %v1448, 256
    %v1451 = vpop.permute.xlu0 %1450
    %s1453 = sor.u32 256, 8
    %1454 = vbcast.lane.b32.xlu0 %v1448, %s1453
    %v1455 = vpop.permute.xlu0 %1454
    %s1457 = sor.u32 256, 16
    %1458 = vbcast.lane.b32.xlu0 %v1448, %s1457
    %v1459 = vpop.permute.xlu0 %1458
    %s1461 = sor.u32 256, 24
    %1462 = vbcast.lane.b32.xlu0 %v1448, %s1461
    %v1463 = vpop.permute.xlu0 %1462
    %s1465 = sor.u32 256, 32
    %1466 = vbcast.lane.b32.xlu0 %v1448, %s1465
    %v1467 = vpop.permute.xlu0 %1466
    %s1469 = sor.u32 256, 40
    %1470 = vbcast.lane.b32.xlu0 %v1448, %s1469
    %v1471 = vpop.permute.xlu0 %1470
    %s1473 = sor.u32 256, 48
    %1474 = vbcast.lane.b32.xlu0 %v1448, %s1473
    %v1475 = vpop.permute.xlu0 %1474
    %s1477 = sor.u32 256, 56
    %1478 = vbcast.lane.b32.xlu0 %v1448, %s1477
    %v1479 = vpop.permute.xlu0 %1478
    %s1481 = sor.u32 256, 64
    %1482 = vbcast.lane.b32.xlu0 %v1448, %s1481
    %v1483 = vpop.permute.xlu0 %1482
    %s1485 = sor.u32 256, 72
    %1486 = vbcast.lane.b32.xlu0 %v1448, %s1485
    %v1487 = vpop.permute.xlu0 %1486
    %s1489 = sor.u32 256, 80
    %1490 = vbcast.lane.b32.xlu0 %v1448, %s1489
    %v1491 = vpop.permute.xlu0 %1490
    %s1493 = sor.u32 256, 88
    %1494 = vbcast.lane.b32.xlu0 %v1448, %s1493
    %v1495 = vpop.permute.xlu0 %1494
    %s1497 = sor.u32 256, 96
    %1498 = vbcast.lane.b32.xlu0 %v1448, %s1497
    %v1499 = vpop.permute.xlu0 %1498
    %s1501 = sor.u32 256, 104
    %1502 = vbcast.lane.b32.xlu0 %v1448, %s1501
    %v1503 = vpop.permute.xlu0 %1502
    %s1505 = sor.u32 256, 112
    %1506 = vbcast.lane.b32.xlu0 %v1448, %s1505
    %v1507 = vpop.permute.xlu0 %1506
    %s1509 = sor.u32 256, 120
    %1510 = vbcast.lane.b32.xlu0 %v1448, %s1509
    %v1511 = vpop.permute.xlu0 %1510
    %v1512 = vlaneseq
    %v1513 = vshrl.u32 %v1512, 7
    %v1514 = vsub.s32 5, %v1513
    %v1515 = vrot.slane %v307, %v1514
    %1517 = vbcast.lane.b32.xlu0 %v1515, 256
    %v1518 = vpop.permute.xlu0 %1517
    %s1520 = sor.u32 256, 8
    %1521 = vbcast.lane.b32.xlu0 %v1515, %s1520
    %v1522 = vpop.permute.xlu0 %1521
    %s1524 = sor.u32 256, 16
    %1525 = vbcast.lane.b32.xlu0 %v1515, %s1524
    %v1526 = vpop.permute.xlu0 %1525
    %s1528 = sor.u32 256, 24
    %1529 = vbcast.lane.b32.xlu0 %v1515, %s1528
    %v1530 = vpop.permute.xlu0 %1529
    %s1532 = sor.u32 256, 32
    %1533 = vbcast.lane.b32.xlu0 %v1515, %s1532
    %v1534 = vpop.permute.xlu0 %1533
    %s1536 = sor.u32 256, 40
    %1537 = vbcast.lane.b32.xlu0 %v1515, %s1536
    %v1538 = vpop.permute.xlu0 %1537
    %s1540 = sor.u32 256, 48
    %1541 = vbcast.lane.b32.xlu0 %v1515, %s1540
    %v1542 = vpop.permute.xlu0 %1541
    %s1544 = sor.u32 256, 56
    %1545 = vbcast.lane.b32.xlu0 %v1515, %s1544
    %v1546 = vpop.permute.xlu0 %1545
    %s1548 = sor.u32 256, 64
    %1549 = vbcast.lane.b32.xlu0 %v1515, %s1548
    %v1550 = vpop.permute.xlu0 %1549
    %s1552 = sor.u32 256, 72
    %1553 = vbcast.lane.b32.xlu0 %v1515, %s1552
    %v1554 = vpop.permute.xlu0 %1553
    %s1556 = sor.u32 256, 80
    %1557 = vbcast.lane.b32.xlu0 %v1515, %s1556
    %v1558 = vpop.permute.xlu0 %1557
    %s1560 = sor.u32 256, 88
    %1561 = vbcast.lane.b32.xlu0 %v1515, %s1560
    %v1562 = vpop.permute.xlu0 %1561
    %s1564 = sor.u32 256, 96
    %1565 = vbcast.lane.b32.xlu0 %v1515, %s1564
    %v1566 = vpop.permute.xlu0 %1565
    %s1568 = sor.u32 256, 104
    %1569 = vbcast.lane.b32.xlu0 %v1515, %s1568
    %v1570 = vpop.permute.xlu0 %1569
    %s1572 = sor.u32 256, 112
    %1573 = vbcast.lane.b32.xlu0 %v1515, %s1572
    %v1574 = vpop.permute.xlu0 %1573
    %s1576 = sor.u32 256, 120
    %1577 = vbcast.lane.b32.xlu0 %v1515, %s1576
    %v1578 = vpop.permute.xlu0 %1577
    %v1579 = vlaneseq
    %v1580 = vshrl.u32 %v1579, 7
    %v1581 = vsub.s32 6, %v1580
    %v1582 = vrot.slane %v307, %v1581
    %1584 = vbcast.lane.b32.xlu0 %v1582, 256
    %v1585 = vpop.permute.xlu0 %1584
    %s1587 = sor.u32 256, 8
    %1588 = vbcast.lane.b32.xlu0 %v1582, %s1587
    %v1589 = vpop.permute.xlu0 %1588
    %s1591 = sor.u32 256, 16
    %1592 = vbcast.lane.b32.xlu0 %v1582, %s1591
    %v1593 = vpop.permute.xlu0 %1592
    %s1595 = sor.u32 256, 24
    %1596 = vbcast.lane.b32.xlu0 %v1582, %s1595
    %v1597 = vpop.permute.xlu0 %1596
    %s1599 = sor.u32 256, 32
    %1600 = vbcast.lane.b32.xlu0 %v1582, %s1599
    %v1601 = vpop.permute.xlu0 %1600
    %s1603 = sor.u32 256, 40
    %1604 = vbcast.lane.b32.xlu0 %v1582, %s1603
    %v1605 = vpop.permute.xlu0 %1604
    %s1607 = sor.u32 256, 48
    %1608 = vbcast.lane.b32.xlu0 %v1582, %s1607
    %v1609 = vpop.permute.xlu0 %1608
    %s1611 = sor.u32 256, 56
    %1612 = vbcast.lane.b32.xlu0 %v1582, %s1611
    %v1613 = vpop.permute.xlu0 %1612
    %s1615 = sor.u32 256, 64
    %1616 = vbcast.lane.b32.xlu0 %v1582, %s1615
    %v1617 = vpop.permute.xlu0 %1616
    %s1619 = sor.u32 256, 72
    %1620 = vbcast.lane.b32.xlu0 %v1582, %s1619
    %v1621 = vpop.permute.xlu0 %1620
    %s1623 = sor.u32 256, 80
    %1624 = vbcast.lane.b32.xlu0 %v1582, %s1623
    %v1625 = vpop.permute.xlu0 %1624
    %s1627 = sor.u32 256, 88
    %1628 = vbcast.lane.b32.xlu0 %v1582, %s1627
    %v1629 = vpop.permute.xlu0 %1628
    %s1631 = sor.u32 256, 96
    %1632 = vbcast.lane.b32.xlu0 %v1582, %s1631
    %v1633 = vpop.permute.xlu0 %1632
    %s1635 = sor.u32 256, 104
    %1636 = vbcast.lane.b32.xlu0 %v1582, %s1635
    %v1637 = vpop.permute.xlu0 %1636
    %s1639 = sor.u32 256, 112
    %1640 = vbcast.lane.b32.xlu0 %v1582, %s1639
    %v1641 = vpop.permute.xlu0 %1640
    %s1643 = sor.u32 256, 120
    %1644 = vbcast.lane.b32.xlu0 %v1582, %s1643
    %v1645 = vpop.permute.xlu0 %1644
    %v1646 = vlaneseq
    %v1647 = vshrl.u32 %v1646, 7
    %v1648 = vsub.s32 7, %v1647
    %v1649 = vrot.slane %v307, %v1648
    %1651 = vbcast.lane.b32.xlu0 %v1649, 256
    %v1652 = vpop.permute.xlu0 %1651
    %s1654 = sor.u32 256, 8
    %1655 = vbcast.lane.b32.xlu0 %v1649, %s1654
    %v1656 = vpop.permute.xlu0 %1655
    %s1658 = sor.u32 256, 16
    %1659 = vbcast.lane.b32.xlu0 %v1649, %s1658
    %v1660 = vpop.permute.xlu0 %1659
    %s1662 = sor.u32 256, 24
    %1663 = vbcast.lane.b32.xlu0 %v1649, %s1662
    %v1664 = vpop.permute.xlu0 %1663
    %s1666 = sor.u32 256, 32
    %1667 = vbcast.lane.b32.xlu0 %v1649, %s1666
    %v1668 = vpop.permute.xlu0 %1667
    %s1670 = sor.u32 256, 40
    %1671 = vbcast.lane.b32.xlu0 %v1649, %s1670
    %v1672 = vpop.permute.xlu0 %1671
    %s1674 = sor.u32 256, 48
    %1675 = vbcast.lane.b32.xlu0 %v1649, %s1674
    %v1676 = vpop.permute.xlu0 %1675
    %s1678 = sor.u32 256, 56
    %1679 = vbcast.lane.b32.xlu0 %v1649, %s1678
    %v1680 = vpop.permute.xlu0 %1679
    %s1682 = sor.u32 256, 64
    %1683 = vbcast.lane.b32.xlu0 %v1649, %s1682
    %v1684 = vpop.permute.xlu0 %1683
    %s1686 = sor.u32 256, 72
    %1687 = vbcast.lane.b32.xlu0 %v1649, %s1686
    %v1688 = vpop.permute.xlu0 %1687
    %s1690 = sor.u32 256, 80
    %1691 = vbcast.lane.b32.xlu0 %v1649, %s1690
    %v1692 = vpop.permute.xlu0 %1691
    %s1694 = sor.u32 256, 88
    %1695 = vbcast.lane.b32.xlu0 %v1649, %s1694
    %v1696 = vpop.permute.xlu0 %1695
    %s1698 = sor.u32 256, 96
    %1699 = vbcast.lane.b32.xlu0 %v1649, %s1698
    %v1700 = vpop.permute.xlu0 %1699
    %s1702 = sor.u32 256, 104
    %1703 = vbcast.lane.b32.xlu0 %v1649, %s1702
    %v1704 = vpop.permute.xlu0 %1703
    %s1706 = sor.u32 256, 112
    %1707 = vbcast.lane.b32.xlu0 %v1649, %s1706
    %v1708 = vpop.permute.xlu0 %1707
    %s1710 = sor.u32 256, 120
    %1711 = vbcast.lane.b32.xlu0 %v1649, %s1710
    %v1712 = vpop.permute.xlu0 %1711
    %v1713 = vld [vmem:[%s31] sm:$0x1]
    %v1715 = vlaneseq
    %v1716 = vshrl.u32 %v1715, 7
    %v1717 = vsub.s32 0, %v1716
    %v1718 = vrot.slane %v1713, %v1717
    %v1720 = vmul.f32 %v1183, %v1718
    %v1721 = vmul.f32 %v1187, %v1718
    %v1722 = vmul.f32 %v1191, %v1718
    %v1723 = vmul.f32 %v1195, %v1718
    %v1724 = vmul.f32 %v1199, %v1718
    %v1725 = vmul.f32 %v1203, %v1718
    %v1726 = vmul.f32 %v1207, %v1718
    %v1727 = vmul.f32 %v1211, %v1718
    %v1728 = vmul.f32 %v1215, %v1718
    %v1729 = vmul.f32 %v1219, %v1718
    %v1730 = vmul.f32 %v1223, %v1718
    %v1731 = vmul.f32 %v1227, %v1718
    %v1732 = vmul.f32 %v1231, %v1718
    %v1733 = vmul.f32 %v1235, %v1718
    %v1734 = vmul.f32 %v1239, %v1718
    %v1735 = vmul.f32 %v1243, %v1718
    %v1736 = vmul.f32 %v1250, %v1718
    %v1737 = vmul.f32 %v1254, %v1718
    %v1738 = vmul.f32 %v1258, %v1718
    %v1739 = vmul.f32 %v1262, %v1718
    %v1740 = vmul.f32 %v1266, %v1718
    %v1741 = vmul.f32 %v1270, %v1718
    %v1742 = vmul.f32 %v1274, %v1718
    %v1743 = vmul.f32 %v1278, %v1718
    %v1744 = vmul.f32 %v1282, %v1718
    %v1745 = vmul.f32 %v1286, %v1718
    %v1746 = vmul.f32 %v1290, %v1718
    %v1747 = vmul.f32 %v1294, %v1718
    %v1748 = vmul.f32 %v1298, %v1718
    %v1749 = vmul.f32 %v1302, %v1718
    %v1750 = vmul.f32 %v1306, %v1718
    %v1751 = vmul.f32 %v1310, %v1718
    %v1752 = vmul.f32 %v1317, %v1718
    %v1753 = vmul.f32 %v1321, %v1718
    %v1754 = vmul.f32 %v1325, %v1718
    %v1755 = vmul.f32 %v1329, %v1718
    %v1756 = vmul.f32 %v1333, %v1718
    %v1757 = vmul.f32 %v1337, %v1718
    %v1758 = vmul.f32 %v1341, %v1718
    %v1759 = vmul.f32 %v1345, %v1718
    %v1760 = vmul.f32 %v1349, %v1718
    %v1761 = vmul.f32 %v1353, %v1718
    %v1762 = vmul.f32 %v1357, %v1718
    %v1763 = vmul.f32 %v1361, %v1718
    %v1764 = vmul.f32 %v1365, %v1718
    %v1765 = vmul.f32 %v1369, %v1718
    %v1766 = vmul.f32 %v1373, %v1718
    %v1767 = vmul.f32 %v1377, %v1718
    %v1768 = vmul.f32 %v1384, %v1718
    %v1769 = vmul.f32 %v1388, %v1718
    %v1770 = vmul.f32 %v1392, %v1718
    %v1771 = vmul.f32 %v1396, %v1718
    %v1772 = vmul.f32 %v1400, %v1718
    %v1773 = vmul.f32 %v1404, %v1718
    %v1774 = vmul.f32 %v1408, %v1718
    %v1775 = vmul.f32 %v1412, %v1718
    %v1776 = vmul.f32 %v1416, %v1718
    %v1777 = vmul.f32 %v1420, %v1718
    %v1778 = vmul.f32 %v1424, %v1718
    %v1779 = vmul.f32 %v1428, %v1718
    %v1780 = vmul.f32 %v1432, %v1718
    %v1781 = vmul.f32 %v1436, %v1718
    %v1782 = vmul.f32 %v1440, %v1718
    %v1783 = vmul.f32 %v1444, %v1718
    %v1784 = vmul.f32 %v1451, %v1718
    %v1785 = vmul.f32 %v1455, %v1718
    %v1786 = vmul.f32 %v1459, %v1718
    %v1787 = vmul.f32 %v1463, %v1718
    %v1788 = vmul.f32 %v1467, %v1718
    %v1789 = vmul.f32 %v1471, %v1718
    %v1790 = vmul.f32 %v1475, %v1718
    %v1791 = vmul.f32 %v1479, %v1718
    %v1792 = vmul.f32 %v1483, %v1718
    %v1793 = vmul.f32 %v1487, %v1718
    %v1794 = vmul.f32 %v1491, %v1718
    %v1795 = vmul.f32 %v1495, %v1718
    %v1796 = vmul.f32 %v1499, %v1718
    %v1797 = vmul.f32 %v1503, %v1718
    %v1798 = vmul.f32 %v1507, %v1718
    %v1799 = vmul.f32 %v1511, %v1718
    %v1800 = vmul.f32 %v1518, %v1718
    %v1801 = vmul.f32 %v1522, %v1718
    %v1802 = vmul.f32 %v1526, %v1718
    %v1803 = vmul.f32 %v1530, %v1718
    %v1804 = vmul.f32 %v1534, %v1718
    %v1805 = vmul.f32 %v1538, %v1718
    %v1806 = vmul.f32 %v1542, %v1718
    %v1807 = vmul.f32 %v1546, %v1718
    %v1808 = vmul.f32 %v1550, %v1718
    %v1809 = vmul.f32 %v1554, %v1718
    %v1810 = vmul.f32 %v1558, %v1718
    %v1811 = vmul.f32 %v1562, %v1718
    %v1812 = vmul.f32 %v1566, %v1718
    %v1813 = vmul.f32 %v1570, %v1718
    %v1814 = vmul.f32 %v1574, %v1718
    %v1815 = vmul.f32 %v1578, %v1718
    %v1816 = vmul.f32 %v1585, %v1718
    %v1817 = vmul.f32 %v1589, %v1718
    %v1818 = vmul.f32 %v1593, %v1718
    %v1819 = vmul.f32 %v1597, %v1718
    %v1820 = vmul.f32 %v1601, %v1718
    %v1821 = vmul.f32 %v1605, %v1718
    %v1822 = vmul.f32 %v1609, %v1718
    %v1823 = vmul.f32 %v1613, %v1718
    %v1824 = vmul.f32 %v1617, %v1718
    %v1825 = vmul.f32 %v1621, %v1718
    %v1826 = vmul.f32 %v1625, %v1718
    %v1827 = vmul.f32 %v1629, %v1718
    %v1828 = vmul.f32 %v1633, %v1718
    %v1829 = vmul.f32 %v1637, %v1718
    %v1830 = vmul.f32 %v1641, %v1718
    %v1831 = vmul.f32 %v1645, %v1718
    %v1832 = vmul.f32 %v1652, %v1718
    %v1833 = vmul.f32 %v1656, %v1718
    %v1834 = vmul.f32 %v1660, %v1718
    %v1835 = vmul.f32 %v1664, %v1718
    %v1836 = vmul.f32 %v1668, %v1718
    %v1837 = vmul.f32 %v1672, %v1718
    %v1838 = vmul.f32 %v1676, %v1718
    %v1839 = vmul.f32 %v1680, %v1718
    %v1840 = vmul.f32 %v1684, %v1718
    %v1841 = vmul.f32 %v1688, %v1718
    %v1842 = vmul.f32 %v1692, %v1718
    %v1843 = vmul.f32 %v1696, %v1718
    %v1844 = vmul.f32 %v1700, %v1718
    %v1845 = vmul.f32 %v1704, %v1718
    %v1846 = vmul.f32 %v1708, %v1718
    %v1847 = vmul.f32 %v1712, %v1718
    %v1848 = vld [vmem:[#allocation11] sm:$0xff]
    %v1849 = vld [vmem:[#allocation11 + $0x8] sm:$0xff]
    %v1850 = vld [vmem:[#allocation11 + $0x10] sm:$0xff]
    %v1851 = vld [vmem:[#allocation11 + $0x18] sm:$0xff]
    %v1852 = vld [vmem:[#allocation11 + $0x20] sm:$0xff]
    %v1853 = vld [vmem:[#allocation11 + $0x28] sm:$0xff]
    %v1854 = vld [vmem:[#allocation11 + $0x30] sm:$0xff]
    %v1855 = vld [vmem:[#allocation11 + $0x38] sm:$0xff]
    %v1856 = vld [vmem:[#allocation11 + $0x40] sm:$0xff]
    %v1857 = vld [vmem:[#allocation11 + $0x48] sm:$0xff]
    %v1858 = vld [vmem:[#allocation11 + $0x50] sm:$0xff]
    %v1859 = vld [vmem:[#allocation11 + $0x58] sm:$0xff]
    %v1860 = vld [vmem:[#allocation11 + $0x60] sm:$0xff]
    %v1861 = vld [vmem:[#allocation11 + $0x68] sm:$0xff]
    %v1862 = vld [vmem:[#allocation11 + $0x70] sm:$0xff]
    %v1863 = vld [vmem:[#allocation11 + $0x78] sm:$0xff]
    %v1864 = vld [vmem:[#allocation11 + $0x80] sm:$0xff]
    %v1865 = vld [vmem:[#allocation11 + $0x88] sm:$0xff]
    %v1866 = vld [vmem:[#allocation11 + $0x90] sm:$0xff]
    %v1867 = vld [vmem:[#allocation11 + $0x98] sm:$0xff]
    %v1868 = vld [vmem:[#allocation11 + $0xa0] sm:$0xff]
    %v1869 = vld [vmem:[#allocation11 + $0xa8] sm:$0xff]
    %v1870 = vld [vmem:[#allocation11 + $0xb0] sm:$0xff]
    %v1871 = vld [vmem:[#allocation11 + $0xb8] sm:$0xff]
    %v1872 = vld [vmem:[#allocation11 + $0xc0] sm:$0xff]
    %v1873 = vld [vmem:[#allocation11 + $0xc8] sm:$0xff]
    %v1874 = vld [vmem:[#allocation11 + $0xd0] sm:$0xff]
    %v1875 = vld [vmem:[#allocation11 + $0xd8] sm:$0xff]
    %v1876 = vld [vmem:[#allocation11 + $0xe0] sm:$0xff]
    %v1877 = vld [vmem:[#allocation11 + $0xe8] sm:$0xff]
    %v1878 = vld [vmem:[#allocation11 + $0xf0] sm:$0xff]
    %v1879 = vld [vmem:[#allocation11 + $0xf8] sm:$0xff]
    %v1880 = vld [vmem:[#allocation11 + $0x100] sm:$0xff]
    %v1881 = vld [vmem:[#allocation11 + $0x108] sm:$0xff]
    %v1882 = vld [vmem:[#allocation11 + $0x110] sm:$0xff]
    %v1883 = vld [vmem:[#allocation11 + $0x118] sm:$0xff]
    %v1884 = vld [vmem:[#allocation11 + $0x120] sm:$0xff]
    %v1885 = vld [vmem:[#allocation11 + $0x128] sm:$0xff]
    %v1886 = vld [vmem:[#allocation11 + $0x130] sm:$0xff]
    %v1887 = vld [vmem:[#allocation11 + $0x138] sm:$0xff]
    %v1888 = vld [vmem:[#allocation11 + $0x140] sm:$0xff]
    %v1889 = vld [vmem:[#allocation11 + $0x148] sm:$0xff]
    %v1890 = vld [vmem:[#allocation11 + $0x150] sm:$0xff]
    %v1891 = vld [vmem:[#allocation11 + $0x158] sm:$0xff]
    %v1892 = vld [vmem:[#allocation11 + $0x160] sm:$0xff]
    %v1893 = vld [vmem:[#allocation11 + $0x168] sm:$0xff]
    %v1894 = vld [vmem:[#allocation11 + $0x170] sm:$0xff]
    %v1895 = vld [vmem:[#allocation11 + $0x178] sm:$0xff]
    %v1896 = vld [vmem:[#allocation11 + $0x180] sm:$0xff]
    %v1897 = vld [vmem:[#allocation11 + $0x188] sm:$0xff]
    %v1898 = vld [vmem:[#allocation11 + $0x190] sm:$0xff]
    %v1899 = vld [vmem:[#allocation11 + $0x198] sm:$0xff]
    %v1900 = vld [vmem:[#allocation11 + $0x1a0] sm:$0xff]
    %v1901 = vld [vmem:[#allocation11 + $0x1a8] sm:$0xff]
    %v1902 = vld [vmem:[#allocation11 + $0x1b0] sm:$0xff]
    %v1903 = vld [vmem:[#allocation11 + $0x1b8] sm:$0xff]
    %v1904 = vld [vmem:[#allocation11 + $0x1c0] sm:$0xff]
    %v1905 = vld [vmem:[#allocation11 + $0x1c8] sm:$0xff]
    %v1906 = vld [vmem:[#allocation11 + $0x1d0] sm:$0xff]
    %v1907 = vld [vmem:[#allocation11 + $0x1d8] sm:$0xff]
    %v1908 = vld [vmem:[#allocation11 + $0x1e0] sm:$0xff]
    %v1909 = vld [vmem:[#allocation11 + $0x1e8] sm:$0xff]
    %v1910 = vld [vmem:[#allocation11 + $0x1f0] sm:$0xff]
    %v1911 = vld [vmem:[#allocation11 + $0x1f8] sm:$0xff]
    %v1912 = vld [vmem:[#allocation11 + $0x200] sm:$0xff]
    %v1913 = vld [vmem:[#allocation11 + $0x208] sm:$0xff]
    %v1914 = vld [vmem:[#allocation11 + $0x210] sm:$0xff]
    %v1915 = vld [vmem:[#allocation11 + $0x218] sm:$0xff]
    %v1916 = vld [vmem:[#allocation11 + $0x220] sm:$0xff]
    %v1917 = vld [vmem:[#allocation11 + $0x228] sm:$0xff]
    %v1918 = vld [vmem:[#allocation11 + $0x230] sm:$0xff]
    %v1919 = vld [vmem:[#allocation11 + $0x238] sm:$0xff]
    %v1920 = vld [vmem:[#allocation11 + $0x240] sm:$0xff]
    %v1921 = vld [vmem:[#allocation11 + $0x248] sm:$0xff]
    %v1922 = vld [vmem:[#allocation11 + $0x250] sm:$0xff]
    %v1923 = vld [vmem:[#allocation11 + $0x258] sm:$0xff]
    %v1924 = vld [vmem:[#allocation11 + $0x260] sm:$0xff]
    %v1925 = vld [vmem:[#allocation11 + $0x268] sm:$0xff]
    %v1926 = vld [vmem:[#allocation11 + $0x270] sm:$0xff]
    %v1927 = vld [vmem:[#allocation11 + $0x278] sm:$0xff]
    %v1928 = vld [vmem:[#allocation11 + $0x280] sm:$0xff]
    %v1929 = vld [vmem:[#allocation11 + $0x288] sm:$0xff]
    %v1930 = vld [vmem:[#allocation11 + $0x290] sm:$0xff]
    %v1931 = vld [vmem:[#allocation11 + $0x298] sm:$0xff]
    %v1932 = vld [vmem:[#allocation11 + $0x2a0] sm:$0xff]
    %v1933 = vld [vmem:[#allocation11 + $0x2a8] sm:$0xff]
    %v1934 = vld [vmem:[#allocation11 + $0x2b0] sm:$0xff]
    %v1935 = vld [vmem:[#allocation11 + $0x2b8] sm:$0xff]
    %v1936 = vld [vmem:[#allocation11 + $0x2c0] sm:$0xff]
    %v1937 = vld [vmem:[#allocation11 + $0x2c8] sm:$0xff]
    %v1938 = vld [vmem:[#allocation11 + $0x2d0] sm:$0xff]
    %v1939 = vld [vmem:[#allocation11 + $0x2d8] sm:$0xff]
    %v1940 = vld [vmem:[#allocation11 + $0x2e0] sm:$0xff]
    %v1941 = vld [vmem:[#allocation11 + $0x2e8] sm:$0xff]
    %v1942 = vld [vmem:[#allocation11 + $0x2f0] sm:$0xff]
    %v1943 = vld [vmem:[#allocation11 + $0x2f8] sm:$0xff]
    %v1944 = vld [vmem:[#allocation11 + $0x300] sm:$0xff]
    %v1945 = vld [vmem:[#allocation11 + $0x308] sm:$0xff]
    %v1946 = vld [vmem:[#allocation11 + $0x310] sm:$0xff]
    %v1947 = vld [vmem:[#allocation11 + $0x318] sm:$0xff]
    %v1948 = vld [vmem:[#allocation11 + $0x320] sm:$0xff]
    %v1949 = vld [vmem:[#allocation11 + $0x328] sm:$0xff]
    %v1950 = vld [vmem:[#allocation11 + $0x330] sm:$0xff]
    %v1951 = vld [vmem:[#allocation11 + $0x338] sm:$0xff]
    %v1952 = vld [vmem:[#allocation11 + $0x340] sm:$0xff]
    %v1953 = vld [vmem:[#allocation11 + $0x348] sm:$0xff]
    %v1954 = vld [vmem:[#allocation11 + $0x350] sm:$0xff]
    %v1955 = vld [vmem:[#allocation11 + $0x358] sm:$0xff]
    %v1956 = vld [vmem:[#allocation11 + $0x360] sm:$0xff]
    %v1957 = vld [vmem:[#allocation11 + $0x368] sm:$0xff]
    %v1958 = vld [vmem:[#allocation11 + $0x370] sm:$0xff]
    %v1959 = vld [vmem:[#allocation11 + $0x378] sm:$0xff]
    %v1960 = vld [vmem:[#allocation11 + $0x380] sm:$0xff]
    %v1961 = vld [vmem:[#allocation11 + $0x388] sm:$0xff]
    %v1962 = vld [vmem:[#allocation11 + $0x390] sm:$0xff]
    %v1963 = vld [vmem:[#allocation11 + $0x398] sm:$0xff]
    %v1964 = vld [vmem:[#allocation11 + $0x3a0] sm:$0xff]
    %v1965 = vld [vmem:[#allocation11 + $0x3a8] sm:$0xff]
    %v1966 = vld [vmem:[#allocation11 + $0x3b0] sm:$0xff]
    %v1967 = vld [vmem:[#allocation11 + $0x3b8] sm:$0xff]
    %v1968 = vld [vmem:[#allocation11 + $0x3c0] sm:$0xff]
    %v1969 = vld [vmem:[#allocation11 + $0x3c8] sm:$0xff]
    %v1970 = vld [vmem:[#allocation11 + $0x3d0] sm:$0xff]
    %v1971 = vld [vmem:[#allocation11 + $0x3d8] sm:$0xff]
    %v1972 = vld [vmem:[#allocation11 + $0x3e0] sm:$0xff]
    %v1973 = vld [vmem:[#allocation11 + $0x3e8] sm:$0xff]
    %v1974 = vld [vmem:[#allocation11 + $0x3f0] sm:$0xff]
    %v1975 = vld [vmem:[#allocation11 + $0x3f8] sm:$0xff]
    %v1977 = vcombine.high %v1172, %v1172
    %v1979 = vunpack.c.l.s4 1966171168
    %v1980 = vunpack.c.0.s8 %v1979
    %v1981 = vlaneseq
    %v1982 = vshrl.u32 %v1981, 7
    %v1983 = vsub.s32 %v1980, %v1982
    %v1984 = vrot.slane %v1172, %v1983
    %v1986 = vunpack.c.l.s4 1966171168
    %v1987 = vunpack.c.0.s8 %v1986
    %v1988 = vlaneseq
    %v1989 = vshrl.u32 %v1988, 7
    %v1990 = vsub.s32 %v1987, %v1989
    %v1991 = vrot.slane %v1977, %v1990
    %v1992 = vcombine.high %v1984, %v1984
    %v1993 = vcombine.high %v1991, %v1991
    %v1995 = vunpack.c.l.s4 1966171168
    %v1996 = vunpack.c.0.s8 %v1995
    %v1997 = vlaneseq
    %v1998 = vshrl.u32 %v1997, 7
    %v1999 = vsub.s32 %v1996, %v1998
    %v2000 = vrot.slane %v1984, %v1999
    %v2002 = vunpack.c.l.s4 1966171168
    %v2003 = vunpack.c.0.s8 %v2002
    %v2004 = vlaneseq
    %v2005 = vshrl.u32 %v2004, 7
    %v2006 = vsub.s32 %v2003, %v2005
    %v2007 = vrot.slane %v1991, %v2006
    %v2009 = vunpack.c.l.s4 1966171168
    %v2010 = vunpack.c.0.s8 %v2009
    %v2011 = vlaneseq
    %v2012 = vshrl.u32 %v2011, 7
    %v2013 = vsub.s32 %v2010, %v2012
    %v2014 = vrot.slane %v1992, %v2013
    %v2016 = vunpack.c.l.s4 1966171168
    %v2017 = vunpack.c.0.s8 %v2016
    %v2018 = vlaneseq
    %v2019 = vshrl.u32 %v2018, 7
    %v2020 = vsub.s32 %v2017, %v2019
    %v2021 = vrot.slane %v1993, %v2020
    %v2022 = vcombine.high %v2000, %v2000
    %v2023 = vcombine.high %v2007, %v2007
    %v2024 = vcombine.high %v2014, %v2014
    %v2025 = vcombine.high %v2021, %v2021
    %v2026 = vlaneseq
    %v2027 = vshrl.u32 %v2026, 7
    %v2028 = vsub.s32 0, %v2027
    %v2029 = vrot.slane %v2000, %v2028
    %v2030 = vlaneseq
    %v2031 = vshrl.u32 %v2030, 7
    %v2032 = vsub.s32 0, %v2031
    %v2033 = vrot.slane %v2014, %v2032
    %v2034 = vlaneseq
    %v2035 = vshrl.u32 %v2034, 7
    %v2036 = vsub.s32 0, %v2035
    %v2037 = vrot.slane %v2022, %v2036
    %v2038 = vlaneseq
    %v2039 = vshrl.u32 %v2038, 7
    %v2040 = vsub.s32 0, %v2039
    %v2041 = vrot.slane %v2024, %v2040
    %v2042 = vlaneseq
    %v2043 = vshrl.u32 %v2042, 7
    %v2044 = vsub.s32 0, %v2043
    %v2045 = vrot.slane %v2007, %v2044
    %v2046 = vlaneseq
    %v2047 = vshrl.u32 %v2046, 7
    %v2048 = vsub.s32 0, %v2047
    %v2049 = vrot.slane %v2021, %v2048
    %v2050 = vlaneseq
    %v2051 = vshrl.u32 %v2050, 7
    %v2052 = vsub.s32 0, %v2051
    %v2053 = vrot.slane %v2023, %v2052
    %v2054 = vlaneseq
    %v2055 = vshrl.u32 %v2054, 7
    %v2056 = vsub.s32 0, %v2055
    %v2057 = vrot.slane %v2025, %v2056
    %v2066 = vadd.f32 %v1848, %v2029
    %v2067 = vadd.f32 %v1849, %v2029
    %v2068 = vadd.f32 %v1850, %v2029
    %v2069 = vadd.f32 %v1851, %v2029
    %v2070 = vadd.f32 %v1852, %v2029
    %v2071 = vadd.f32 %v1853, %v2029
    %v2072 = vadd.f32 %v1854, %v2029
    %v2073 = vadd.f32 %v1855, %v2029
    %v2074 = vadd.f32 %v1856, %v2029
    %v2075 = vadd.f32 %v1857, %v2029
    %v2076 = vadd.f32 %v1858, %v2029
    %v2077 = vadd.f32 %v1859, %v2029
    %v2078 = vadd.f32 %v1860, %v2029
    %v2079 = vadd.f32 %v1861, %v2029
    %v2080 = vadd.f32 %v1862, %v2029
    %v2081 = vadd.f32 %v1863, %v2029
    %v2082 = vadd.f32 %v1864, %v2033
    %v2083 = vadd.f32 %v1865, %v2033
    %v2084 = vadd.f32 %v1866, %v2033
    %v2085 = vadd.f32 %v1867, %v2033
    %v2086 = vadd.f32 %v1868, %v2033
    %v2087 = vadd.f32 %v1869, %v2033
    %v2088 = vadd.f32 %v1870, %v2033
    %v2089 = vadd.f32 %v1871, %v2033
    %v2090 = vadd.f32 %v1872, %v2033
    %v2091 = vadd.f32 %v1873, %v2033
    %v2092 = vadd.f32 %v1874, %v2033
    %v2093 = vadd.f32 %v1875, %v2033
    %v2094 = vadd.f32 %v1876, %v2033
    %v2095 = vadd.f32 %v1877, %v2033
    %v2096 = vadd.f32 %v1878, %v2033
    %v2097 = vadd.f32 %v1879, %v2033
    %v2098 = vadd.f32 %v1880, %v2037
    %v2099 = vadd.f32 %v1881, %v2037
    %v2100 = vadd.f32 %v1882, %v2037
    %v2101 = vadd.f32 %v1883, %v2037
    %v2102 = vadd.f32 %v1884, %v2037
    %v2103 = vadd.f32 %v1885, %v2037
    %v2104 = vadd.f32 %v1886, %v2037
    %v2105 = vadd.f32 %v1887, %v2037
    %v2106 = vadd.f32 %v1888, %v2037
    %v2107 = vadd.f32 %v1889, %v2037
    %v2108 = vadd.f32 %v1890, %v2037
    %v2109 = vadd.f32 %v1891, %v2037
    %v2110 = vadd.f32 %v1892, %v2037
    %v2111 = vadd.f32 %v1893, %v2037
    %v2112 = vadd.f32 %v1894, %v2037
    %v2113 = vadd.f32 %v1895, %v2037
    %v2114 = vadd.f32 %v1896, %v2041
    %v2115 = vadd.f32 %v1897, %v2041
    %v2116 = vadd.f32 %v1898, %v2041
    %v2117 = vadd.f32 %v1899, %v2041
    %v2118 = vadd.f32 %v1900, %v2041
    %v2119 = vadd.f32 %v1901, %v2041
    %v2120 = vadd.f32 %v1902, %v2041
    %v2121 = vadd.f32 %v1903, %v2041
    %v2122 = vadd.f32 %v1904, %v2041
    %v2123 = vadd.f32 %v1905, %v2041
    %v2124 = vadd.f32 %v1906, %v2041
    %v2125 = vadd.f32 %v1907, %v2041
    %v2126 = vadd.f32 %v1908, %v2041
    %v2127 = vadd.f32 %v1909, %v2041
    %v2128 = vadd.f32 %v1910, %v2041
    %v2129 = vadd.f32 %v1911, %v2041
    %v2130 = vadd.f32 %v1912, %v2045
    %v2131 = vadd.f32 %v1913, %v2045
    %v2132 = vadd.f32 %v1914, %v2045
    %v2133 = vadd.f32 %v1915, %v2045
    %v2134 = vadd.f32 %v1916, %v2045
    %v2135 = vadd.f32 %v1917, %v2045
    %v2136 = vadd.f32 %v1918, %v2045
    %v2137 = vadd.f32 %v1919, %v2045
    %v2138 = vadd.f32 %v1920, %v2045
    %v2139 = vadd.f32 %v1921, %v2045
    %v2140 = vadd.f32 %v1922, %v2045
    %v2141 = vadd.f32 %v1923, %v2045
    %v2142 = vadd.f32 %v1924, %v2045
    %v2143 = vadd.f32 %v1925, %v2045
    %v2144 = vadd.f32 %v1926, %v2045
    %v2145 = vadd.f32 %v1927, %v2045
    %v2146 = vadd.f32 %v1928, %v2049
    %v2147 = vadd.f32 %v1929, %v2049
    %v2148 = vadd.f32 %v1930, %v2049
    %v2149 = vadd.f32 %v1931, %v2049
    %v2150 = vadd.f32 %v1932, %v2049
    %v2151 = vadd.f32 %v1933, %v2049
    %v2152 = vadd.f32 %v1934, %v2049
    %v2153 = vadd.f32 %v1935, %v2049
    %v2154 = vadd.f32 %v1936, %v2049
    %v2155 = vadd.f32 %v1937, %v2049
    %v2156 = vadd.f32 %v1938, %v2049
    %v2157 = vadd.f32 %v1939, %v2049
    %v2158 = vadd.f32 %v1940, %v2049
    %v2159 = vadd.f32 %v1941, %v2049
    %v2160 = vadd.f32 %v1942, %v2049
    %v2161 = vadd.f32 %v1943, %v2049
    %v2162 = vadd.f32 %v1944, %v2053
    %v2163 = vadd.f32 %v1945, %v2053
    %v2164 = vadd.f32 %v1946, %v2053
    %v2165 = vadd.f32 %v1947, %v2053
    %v2166 = vadd.f32 %v1948, %v2053
    %v2167 = vadd.f32 %v1949, %v2053
    %v2168 = vadd.f32 %v1950, %v2053
    %v2169 = vadd.f32 %v1951, %v2053
    %v2170 = vadd.f32 %v1952, %v2053
    %v2171 = vadd.f32 %v1953, %v2053
    %v2172 = vadd.f32 %v1954, %v2053
    %v2173 = vadd.f32 %v1955, %v2053
    %v2174 = vadd.f32 %v1956, %v2053
    %v2175 = vadd.f32 %v1957, %v2053
    %v2176 = vadd.f32 %v1958, %v2053
    %v2177 = vadd.f32 %v1959, %v2053
    %v2178 = vadd.f32 %v1960, %v2057
    %v2179 = vadd.f32 %v1961, %v2057
    %v2180 = vadd.f32 %v1962, %v2057
    %v2181 = vadd.f32 %v1963, %v2057
    %v2182 = vadd.f32 %v1964, %v2057
    %v2183 = vadd.f32 %v1965, %v2057
    %v2184 = vadd.f32 %v1966, %v2057
    %v2185 = vadd.f32 %v1967, %v2057
    %v2186 = vadd.f32 %v1968, %v2057
    %v2187 = vadd.f32 %v1969, %v2057
    %v2188 = vadd.f32 %v1970, %v2057
    %v2189 = vadd.f32 %v1971, %v2057
    %v2190 = vadd.f32 %v1972, %v2057
    %v2191 = vadd.f32 %v1973, %v2057
    %v2192 = vadd.f32 %v1974, %v2057
    %v2193 = vadd.f32 %v1975, %v2057
    %v2194 = vadd.f32 %v2066, %v1720
    %v2195 = vadd.f32 %v2067, %v1721
    %v2196 = vadd.f32 %v2068, %v1722
    %v2197 = vadd.f32 %v2069, %v1723
    %v2198 = vadd.f32 %v2070, %v1724
    %v2199 = vadd.f32 %v2071, %v1725
    %v2200 = vadd.f32 %v2072, %v1726
    %v2201 = vadd.f32 %v2073, %v1727
    %v2202 = vadd.f32 %v2074, %v1728
    %v2203 = vadd.f32 %v2075, %v1729
    %v2204 = vadd.f32 %v2076, %v1730
    %v2205 = vadd.f32 %v2077, %v1731
    %v2206 = vadd.f32 %v2078, %v1732
    %v2207 = vadd.f32 %v2079, %v1733
    %v2208 = vadd.f32 %v2080, %v1734
    %v2209 = vadd.f32 %v2081, %v1735
    %v2210 = vadd.f32 %v2082, %v1736
    %v2211 = vadd.f32 %v2083, %v1737
    %v2212 = vadd.f32 %v2084, %v1738
    %v2213 = vadd.f32 %v2085, %v1739
    %v2214 = vadd.f32 %v2086, %v1740
    %v2215 = vadd.f32 %v2087, %v1741
    %v2216 = vadd.f32 %v2088, %v1742
    %v2217 = vadd.f32 %v2089, %v1743
    %v2218 = vadd.f32 %v2090, %v1744
    %v2219 = vadd.f32 %v2091, %v1745
    %v2220 = vadd.f32 %v2092, %v1746
    %v2221 = vadd.f32 %v2093, %v1747
    %v2222 = vadd.f32 %v2094, %v1748
    %v2223 = vadd.f32 %v2095, %v1749
    %v2224 = vadd.f32 %v2096, %v1750
    %v2225 = vadd.f32 %v2097, %v1751
    %v2226 = vadd.f32 %v2098, %v1752
    %v2227 = vadd.f32 %v2099, %v1753
    %v2228 = vadd.f32 %v2100, %v1754
    %v2229 = vadd.f32 %v2101, %v1755
    %v2230 = vadd.f32 %v2102, %v1756
    %v2231 = vadd.f32 %v2103, %v1757
    %v2232 = vadd.f32 %v2104, %v1758
    %v2233 = vadd.f32 %v2105, %v1759
    %v2234 = vadd.f32 %v2106, %v1760
    %v2235 = vadd.f32 %v2107, %v1761
    %v2236 = vadd.f32 %v2108, %v1762
    %v2237 = vadd.f32 %v2109, %v1763
    %v2238 = vadd.f32 %v2110, %v1764
    %v2239 = vadd.f32 %v2111, %v1765
    %v2240 = vadd.f32 %v2112, %v1766
    %v2241 = vadd.f32 %v2113, %v1767
    %v2242 = vadd.f32 %v2114, %v1768
    %v2243 = vadd.f32 %v2115, %v1769
    %v2244 = vadd.f32 %v2116, %v1770
    %v2245 = vadd.f32 %v2117, %v1771
    %v2246 = vadd.f32 %v2118, %v1772
    %v2247 = vadd.f32 %v2119, %v1773
    %v2248 = vadd.f32 %v2120, %v1774
    %v2249 = vadd.f32 %v2121, %v1775
    %v2250 = vadd.f32 %v2122, %v1776
    %v2251 = vadd.f32 %v2123, %v1777
    %v2252 = vadd.f32 %v2124, %v1778
    %v2253 = vadd.f32 %v2125, %v1779
    %v2254 = vadd.f32 %v2126, %v1780
    %v2255 = vadd.f32 %v2127, %v1781
    %v2256 = vadd.f32 %v2128, %v1782
    %v2257 = vadd.f32 %v2129, %v1783
    %v2258 = vadd.f32 %v2130, %v1784
    %v2259 = vadd.f32 %v2131, %v1785
    %v2260 = vadd.f32 %v2132, %v1786
    %v2261 = vadd.f32 %v2133, %v1787
    %v2262 = vadd.f32 %v2134, %v1788
    %v2263 = vadd.f32 %v2135, %v1789
    %v2264 = vadd.f32 %v2136, %v1790
    %v2265 = vadd.f32 %v2137, %v1791
    %v2266 = vadd.f32 %v2138, %v1792
    %v2267 = vadd.f32 %v2139, %v1793
    %v2268 = vadd.f32 %v2140, %v1794
    %v2269 = vadd.f32 %v2141, %v1795
    %v2270 = vadd.f32 %v2142, %v1796
    %v2271 = vadd.f32 %v2143, %v1797
    %v2272 = vadd.f32 %v2144, %v1798
    %v2273 = vadd.f32 %v2145, %v1799
    %v2274 = vadd.f32 %v2146, %v1800
    %v2275 = vadd.f32 %v2147, %v1801
    %v2276 = vadd.f32 %v2148, %v1802
    %v2277 = vadd.f32 %v2149, %v1803
    %v2278 = vadd.f32 %v2150, %v1804
    %v2279 = vadd.f32 %v2151, %v1805
    %v2280 = vadd.f32 %v2152, %v1806
    %v2281 = vadd.f32 %v2153, %v1807
    %v2282 = vadd.f32 %v2154, %v1808
    %v2283 = vadd.f32 %v2155, %v1809
    %v2284 = vadd.f32 %v2156, %v1810
    %v2285 = vadd.f32 %v2157, %v1811
    %v2286 = vadd.f32 %v2158, %v1812
    %v2287 = vadd.f32 %v2159, %v1813
    %v2288 = vadd.f32 %v2160, %v1814
    %v2289 = vadd.f32 %v2161, %v1815
    %v2290 = vadd.f32 %v2162, %v1816
    %v2291 = vadd.f32 %v2163, %v1817
    %v2292 = vadd.f32 %v2164, %v1818
    %v2293 = vadd.f32 %v2165, %v1819
    %v2294 = vadd.f32 %v2166, %v1820
    %v2295 = vadd.f32 %v2167, %v1821
    %v2296 = vadd.f32 %v2168, %v1822
    %v2297 = vadd.f32 %v2169, %v1823
    %v2298 = vadd.f32 %v2170, %v1824
    %v2299 = vadd.f32 %v2171, %v1825
    %v2300 = vadd.f32 %v2172, %v1826
    %v2301 = vadd.f32 %v2173, %v1827
    %v2302 = vadd.f32 %v2174, %v1828
    %v2303 = vadd.f32 %v2175, %v1829
    %v2304 = vadd.f32 %v2176, %v1830
    %v2305 = vadd.f32 %v2177, %v1831
    %v2306 = vadd.f32 %v2178, %v1832
    %v2307 = vadd.f32 %v2179, %v1833
    %v2308 = vadd.f32 %v2180, %v1834
    %v2309 = vadd.f32 %v2181, %v1835
    %v2310 = vadd.f32 %v2182, %v1836
    %v2311 = vadd.f32 %v2183, %v1837
    %v2312 = vadd.f32 %v2184, %v1838
    %v2313 = vadd.f32 %v2185, %v1839
    %v2314 = vadd.f32 %v2186, %v1840
    %v2315 = vadd.f32 %v2187, %v1841
    %v2316 = vadd.f32 %v2188, %v1842
    %v2317 = vadd.f32 %v2189, %v1843
    %v2318 = vadd.f32 %v2190, %v1844
    %v2319 = vadd.f32 %v2191, %v1845
    %v2320 = vadd.f32 %v2192, %v1846
    %v2321 = vadd.f32 %v2193, %v1847
    %v2322 = vtanh.pop %v2194
    %v2323 = vtanh.pop %v2195
    %v2324 = vtanh.pop %v2196
    %v2325 = vtanh.pop %v2197
    %v2326 = vtanh.pop %v2198
    %v2327 = vtanh.pop %v2199
    %v2328 = vtanh.pop %v2200
    %v2329 = vtanh.pop %v2201
    %v2330 = vtanh.pop %v2202
    %v2331 = vtanh.pop %v2203
    %v2332 = vtanh.pop %v2204
    %v2333 = vtanh.pop %v2205
    %v2334 = vtanh.pop %v2206
    %v2335 = vtanh.pop %v2207
    %v2336 = vtanh.pop %v2208
    %v2337 = vtanh.pop %v2209
    %v2338 = vtanh.pop %v2210
    %v2339 = vtanh.pop %v2211
    %v2340 = vtanh.pop %v2212
    %v2341 = vtanh.pop %v2213
    %v2342 = vtanh.pop %v2214
    %v2343 = vtanh.pop %v2215
    %v2344 = vtanh.pop %v2216
    %v2345 = vtanh.pop %v2217
    %v2346 = vtanh.pop %v2218
    %v2347 = vtanh.pop %v2219
    %v2348 = vtanh.pop %v2220
    %v2349 = vtanh.pop %v2221
    %v2350 = vtanh.pop %v2222
    %v2351 = vtanh.pop %v2223
    %v2352 = vtanh.pop %v2224
    %v2353 = vtanh.pop %v2225
    %v2354 = vtanh.pop %v2226
    %v2355 = vtanh.pop %v2227
    %v2356 = vtanh.pop %v2228
    %v2357 = vtanh.pop %v2229
    %v2358 = vtanh.pop %v2230
    %v2359 = vtanh.pop %v2231
    %v2360 = vtanh.pop %v2232
    %v2361 = vtanh.pop %v2233
    %v2362 = vtanh.pop %v2234
    %v2363 = vtanh.pop %v2235
    %v2364 = vtanh.pop %v2236
    %v2365 = vtanh.pop %v2237
    %v2366 = vtanh.pop %v2238
    %v2367 = vtanh.pop %v2239
    %v2368 = vtanh.pop %v2240
    %v2369 = vtanh.pop %v2241
    %v2370 = vtanh.pop %v2242
    %v2371 = vtanh.pop %v2243
    %v2372 = vtanh.pop %v2244
    %v2373 = vtanh.pop %v2245
    %v2374 = vtanh.pop %v2246
    %v2375 = vtanh.pop %v2247
    %v2376 = vtanh.pop %v2248
    %v2377 = vtanh.pop %v2249
    %v2378 = vtanh.pop %v2250
    %v2379 = vtanh.pop %v2251
    %v2380 = vtanh.pop %v2252
    %v2381 = vtanh.pop %v2253
    %v2382 = vtanh.pop %v2254
    %v2383 = vtanh.pop %v2255
    %v2384 = vtanh.pop %v2256
    %v2385 = vtanh.pop %v2257
    %v2386 = vtanh.pop %v2258
    %v2387 = vtanh.pop %v2259
    %v2388 = vtanh.pop %v2260
    %v2389 = vtanh.pop %v2261
    %v2390 = vtanh.pop %v2262
    %v2391 = vtanh.pop %v2263
    %v2392 = vtanh.pop %v2264
    %v2393 = vtanh.pop %v2265
    %v2394 = vtanh.pop %v2266
    %v2395 = vtanh.pop %v2267
    %v2396 = vtanh.pop %v2268
    %v2397 = vtanh.pop %v2269
    %v2398 = vtanh.pop %v2270
    %v2399 = vtanh.pop %v2271
    %v2400 = vtanh.pop %v2272
    %v2401 = vtanh.pop %v2273
    %v2402 = vtanh.pop %v2274
    %v2403 = vtanh.pop %v2275
    %v2404 = vtanh.pop %v2276
    %v2405 = vtanh.pop %v2277
    %v2406 = vtanh.pop %v2278
    %v2407 = vtanh.pop %v2279
    %v2408 = vtanh.pop %v2280
    %v2409 = vtanh.pop %v2281
    %v2410 = vtanh.pop %v2282
    %v2411 = vtanh.pop %v2283
    %v2412 = vtanh.pop %v2284
    %v2413 = vtanh.pop %v2285
    %v2414 = vtanh.pop %v2286
    %v2415 = vtanh.pop %v2287
    %v2416 = vtanh.pop %v2288
    %v2417 = vtanh.pop %v2289
    %v2418 = vtanh.pop %v2290
    %v2419 = vtanh.pop %v2291
    %v2420 = vtanh.pop %v2292
    %v2421 = vtanh.pop %v2293
    %v2422 = vtanh.pop %v2294
    %v2423 = vtanh.pop %v2295
    %v2424 = vtanh.pop %v2296
    %v2425 = vtanh.pop %v2297
    %v2426 = vtanh.pop %v2298
    %v2427 = vtanh.pop %v2299
    %v2428 = vtanh.pop %v2300
    %v2429 = vtanh.pop %v2301
    %v2430 = vtanh.pop %v2302
    %v2431 = vtanh.pop %v2303
    %v2432 = vtanh.pop %v2304
    %v2433 = vtanh.pop %v2305
    %v2434 = vtanh.pop %v2306
    %v2435 = vtanh.pop %v2307
    %v2436 = vtanh.pop %v2308
    %v2437 = vtanh.pop %v2309
    %v2438 = vtanh.pop %v2310
    %v2439 = vtanh.pop %v2311
    %v2440 = vtanh.pop %v2312
    %v2441 = vtanh.pop %v2313
    %v2442 = vtanh.pop %v2314
    %v2443 = vtanh.pop %v2315
    %v2444 = vtanh.pop %v2316
    %v2445 = vtanh.pop %v2317
    %v2446 = vtanh.pop %v2318
    %v2447 = vtanh.pop %v2319
    %v2448 = vtanh.pop %v2320
    %v2449 = vtanh.pop %v2321
    %v2450 = vld [vmem:[#allocation21] sm:$0x1]
    %v2452 = vlaneseq
    %v2453 = vshrl.u32 %v2452, 7
    %v2454 = vsub.s32 0, %v2453
    %v2455 = vrot.slane %v2450, %v2454
    %v2457 = vmul.f32 %v2322, %v2455
    %v2458 = vmul.f32 %v2323, %v2455
    %v2459 = vmul.f32 %v2324, %v2455
    %v2460 = vmul.f32 %v2325, %v2455
    %v2461 = vmul.f32 %v2326, %v2455
    %v2462 = vmul.f32 %v2327, %v2455
    %v2463 = vmul.f32 %v2328, %v2455
    %v2464 = vmul.f32 %v2329, %v2455
    %v2465 = vmul.f32 %v2330, %v2455
    %v2466 = vmul.f32 %v2331, %v2455
    %v2467 = vmul.f32 %v2332, %v2455
    %v2468 = vmul.f32 %v2333, %v2455
    %v2469 = vmul.f32 %v2334, %v2455
    %v2470 = vmul.f32 %v2335, %v2455
    %v2471 = vmul.f32 %v2336, %v2455
    %v2472 = vmul.f32 %v2337, %v2455
    %v2473 = vmul.f32 %v2338, %v2455
    %v2474 = vmul.f32 %v2339, %v2455
    %v2475 = vmul.f32 %v2340, %v2455
    %v2476 = vmul.f32 %v2341, %v2455
    %v2477 = vmul.f32 %v2342, %v2455
    %v2478 = vmul.f32 %v2343, %v2455
    %v2479 = vmul.f32 %v2344, %v2455
    %v2480 = vmul.f32 %v2345, %v2455
    %v2481 = vmul.f32 %v2346, %v2455
    %v2482 = vmul.f32 %v2347, %v2455
    %v2483 = vmul.f32 %v2348, %v2455
    %v2484 = vmul.f32 %v2349, %v2455
    %v2485 = vmul.f32 %v2350, %v2455
    %v2486 = vmul.f32 %v2351, %v2455
    %v2487 = vmul.f32 %v2352, %v2455
    %v2488 = vmul.f32 %v2353, %v2455
    %v2489 = vmul.f32 %v2354, %v2455
    %v2490 = vmul.f32 %v2355, %v2455
    %v2491 = vmul.f32 %v2356, %v2455
    %v2492 = vmul.f32 %v2357, %v2455
    %v2493 = vmul.f32 %v2358, %v2455
    %v2494 = vmul.f32 %v2359, %v2455
    %v2495 = vmul.f32 %v2360, %v2455
    %v2496 = vmul.f32 %v2361, %v2455
    %v2497 = vmul.f32 %v2362, %v2455
    %v2498 = vmul.f32 %v2363, %v2455
    %v2499 = vmul.f32 %v2364, %v2455
    %v2500 = vmul.f32 %v2365, %v2455
    %v2501 = vmul.f32 %v2366, %v2455
    %v2502 = vmul.f32 %v2367, %v2455
    %v2503 = vmul.f32 %v2368, %v2455
    %v2504 = vmul.f32 %v2369, %v2455
    %v2505 = vmul.f32 %v2370, %v2455
    %v2506 = vmul.f32 %v2371, %v2455
    %v2507 = vmul.f32 %v2372, %v2455
    %v2508 = vmul.f32 %v2373, %v2455
    %v2509 = vmul.f32 %v2374, %v2455
    %v2510 = vmul.f32 %v2375, %v2455
    %v2511 = vmul.f32 %v2376, %v2455
    %v2512 = vmul.f32 %v2377, %v2455
    %v2513 = vmul.f32 %v2378, %v2455
    %v2514 = vmul.f32 %v2379, %v2455
    %v2515 = vmul.f32 %v2380, %v2455
    %v2516 = vmul.f32 %v2381, %v2455
    %v2517 = vmul.f32 %v2382, %v2455
    %v2518 = vmul.f32 %v2383, %v2455
    %v2519 = vmul.f32 %v2384, %v2455
    %v2520 = vmul.f32 %v2385, %v2455
    %v2521 = vmul.f32 %v2386, %v2455
    %v2522 = vmul.f32 %v2387, %v2455
    %v2523 = vmul.f32 %v2388, %v2455
    %v2524 = vmul.f32 %v2389, %v2455
    %v2525 = vmul.f32 %v2390, %v2455
    %v2526 = vmul.f32 %v2391, %v2455
    %v2527 = vmul.f32 %v2392, %v2455
    %v2528 = vmul.f32 %v2393, %v2455
    %v2529 = vmul.f32 %v2394, %v2455
    %v2530 = vmul.f32 %v2395, %v2455
    %v2531 = vmul.f32 %v2396, %v2455
    %v2532 = vmul.f32 %v2397, %v2455
    %v2533 = vmul.f32 %v2398, %v2455
    %v2534 = vmul.f32 %v2399, %v2455
    %v2535 = vmul.f32 %v2400, %v2455
    %v2536 = vmul.f32 %v2401, %v2455
    %v2537 = vmul.f32 %v2402, %v2455
    %v2538 = vmul.f32 %v2403, %v2455
    %v2539 = vmul.f32 %v2404, %v2455
    %v2540 = vmul.f32 %v2405, %v2455
    %v2541 = vmul.f32 %v2406, %v2455
    %v2542 = vmul.f32 %v2407, %v2455
    %v2543 = vmul.f32 %v2408, %v2455
    %v2544 = vmul.f32 %v2409, %v2455
    %v2545 = vmul.f32 %v2410, %v2455
    %v2546 = vmul.f32 %v2411, %v2455
    %v2547 = vmul.f32 %v2412, %v2455
    %v2548 = vmul.f32 %v2413, %v2455
    %v2549 = vmul.f32 %v2414, %v2455
    %v2550 = vmul.f32 %v2415, %v2455
    %v2551 = vmul.f32 %v2416, %v2455
    %v2552 = vmul.f32 %v2417, %v2455
    %v2553 = vmul.f32 %v2418, %v2455
    %v2554 = vmul.f32 %v2419, %v2455
    %v2555 = vmul.f32 %v2420, %v2455
    %v2556 = vmul.f32 %v2421, %v2455
    %v2557 = vmul.f32 %v2422, %v2455
    %v2558 = vmul.f32 %v2423, %v2455
    %v2559 = vmul.f32 %v2424, %v2455
    %v2560 = vmul.f32 %v2425, %v2455
    %v2561 = vmul.f32 %v2426, %v2455
    %v2562 = vmul.f32 %v2427, %v2455
    %v2563 = vmul.f32 %v2428, %v2455
    %v2564 = vmul.f32 %v2429, %v2455
    %v2565 = vmul.f32 %v2430, %v2455
    %v2566 = vmul.f32 %v2431, %v2455
    %v2567 = vmul.f32 %v2432, %v2455
    %v2568 = vmul.f32 %v2433, %v2455
    %v2569 = vmul.f32 %v2434, %v2455
    %v2570 = vmul.f32 %v2435, %v2455
    %v2571 = vmul.f32 %v2436, %v2455
    %v2572 = vmul.f32 %v2437, %v2455
    %v2573 = vmul.f32 %v2438, %v2455
    %v2574 = vmul.f32 %v2439, %v2455
    %v2575 = vmul.f32 %v2440, %v2455
    %v2576 = vmul.f32 %v2441, %v2455
    %v2577 = vmul.f32 %v2442, %v2455
    %v2578 = vmul.f32 %v2443, %v2455
    %v2579 = vmul.f32 %v2444, %v2455
    %v2580 = vmul.f32 %v2445, %v2455
    %v2581 = vmul.f32 %v2446, %v2455
    %v2582 = vmul.f32 %v2447, %v2455
    %v2583 = vmul.f32 %v2448, %v2455
    %v2584 = vmul.f32 %v2449, %v2455
    %2585 = vadd.xlane.f32.xlu0 %v2457
    %v2586 = vpop.xlane.xlu0 %2585
    %2587 = vadd.xlane.f32.xlu0 %v2458
    %v2588 = vpop.xlane.xlu0 %2587
    %2589 = vadd.xlane.f32.xlu0 %v2459
    %v2590 = vpop.xlane.xlu0 %2589
    %2591 = vadd.xlane.f32.xlu0 %v2460
    %v2592 = vpop.xlane.xlu0 %2591
    %2593 = vadd.xlane.f32.xlu0 %v2461
    %v2594 = vpop.xlane.xlu0 %2593
    %2595 = vadd.xlane.f32.xlu0 %v2462
    %v2596 = vpop.xlane.xlu0 %2595
    %2597 = vadd.xlane.f32.xlu0 %v2463
    %v2598 = vpop.xlane.xlu0 %2597
    %2599 = vadd.xlane.f32.xlu0 %v2464
    %v2600 = vpop.xlane.xlu0 %2599
    %2601 = vadd.xlane.f32.xlu0 %v2465
    %v2602 = vpop.xlane.xlu0 %2601
    %2603 = vadd.xlane.f32.xlu0 %v2466
    %v2604 = vpop.xlane.xlu0 %2603
    %2605 = vadd.xlane.f32.xlu0 %v2467
    %v2606 = vpop.xlane.xlu0 %2605
    %2607 = vadd.xlane.f32.xlu0 %v2468
    %v2608 = vpop.xlane.xlu0 %2607
    %2609 = vadd.xlane.f32.xlu0 %v2469
    %v2610 = vpop.xlane.xlu0 %2609
    %2611 = vadd.xlane.f32.xlu0 %v2470
    %v2612 = vpop.xlane.xlu0 %2611
    %2613 = vadd.xlane.f32.xlu0 %v2471
    %v2614 = vpop.xlane.xlu0 %2613
    %2615 = vadd.xlane.f32.xlu0 %v2472
    %v2616 = vpop.xlane.xlu0 %2615
    %2617 = vadd.xlane.f32.xlu0 %v2473
    %v2618 = vpop.xlane.xlu0 %2617
    %2619 = vadd.xlane.f32.xlu0 %v2474
    %v2620 = vpop.xlane.xlu0 %2619
    %2621 = vadd.xlane.f32.xlu0 %v2475
    %v2622 = vpop.xlane.xlu0 %2621
    %2623 = vadd.xlane.f32.xlu0 %v2476
    %v2624 = vpop.xlane.xlu0 %2623
    %2625 = vadd.xlane.f32.xlu0 %v2477
    %v2626 = vpop.xlane.xlu0 %2625
    %2627 = vadd.xlane.f32.xlu0 %v2478
    %v2628 = vpop.xlane.xlu0 %2627
    %2629 = vadd.xlane.f32.xlu0 %v2479
    %v2630 = vpop.xlane.xlu0 %2629
    %2631 = vadd.xlane.f32.xlu0 %v2480
    %v2632 = vpop.xlane.xlu0 %2631
    %2633 = vadd.xlane.f32.xlu0 %v2481
    %v2634 = vpop.xlane.xlu0 %2633
    %2635 = vadd.xlane.f32.xlu0 %v2482
    %v2636 = vpop.xlane.xlu0 %2635
    %2637 = vadd.xlane.f32.xlu0 %v2483
    %v2638 = vpop.xlane.xlu0 %2637
    %2639 = vadd.xlane.f32.xlu0 %v2484
    %v2640 = vpop.xlane.xlu0 %2639
    %2641 = vadd.xlane.f32.xlu0 %v2485
    %v2642 = vpop.xlane.xlu0 %2641
    %2643 = vadd.xlane.f32.xlu0 %v2486
    %v2644 = vpop.xlane.xlu0 %2643
    %2645 = vadd.xlane.f32.xlu0 %v2487
    %v2646 = vpop.xlane.xlu0 %2645
    %2647 = vadd.xlane.f32.xlu0 %v2488
    %v2648 = vpop.xlane.xlu0 %2647
    %2649 = vadd.xlane.f32.xlu0 %v2489
    %v2650 = vpop.xlane.xlu0 %2649
    %2651 = vadd.xlane.f32.xlu0 %v2490
    %v2652 = vpop.xlane.xlu0 %2651
    %2653 = vadd.xlane.f32.xlu0 %v2491
    %v2654 = vpop.xlane.xlu0 %2653
    %2655 = vadd.xlane.f32.xlu0 %v2492
    %v2656 = vpop.xlane.xlu0 %2655
    %2657 = vadd.xlane.f32.xlu0 %v2493
    %v2658 = vpop.xlane.xlu0 %2657
    %2659 = vadd.xlane.f32.xlu0 %v2494
    %v2660 = vpop.xlane.xlu0 %2659
    %2661 = vadd.xlane.f32.xlu0 %v2495
    %v2662 = vpop.xlane.xlu0 %2661
    %2663 = vadd.xlane.f32.xlu0 %v2496
    %v2664 = vpop.xlane.xlu0 %2663
    %2665 = vadd.xlane.f32.xlu0 %v2497
    %v2666 = vpop.xlane.xlu0 %2665
    %2667 = vadd.xlane.f32.xlu0 %v2498
    %v2668 = vpop.xlane.xlu0 %2667
    %2669 = vadd.xlane.f32.xlu0 %v2499
    %v2670 = vpop.xlane.xlu0 %2669
    %2671 = vadd.xlane.f32.xlu0 %v2500
    %v2672 = vpop.xlane.xlu0 %2671
    %2673 = vadd.xlane.f32.xlu0 %v2501
    %v2674 = vpop.xlane.xlu0 %2673
    %2675 = vadd.xlane.f32.xlu0 %v2502
    %v2676 = vpop.xlane.xlu0 %2675
    %2677 = vadd.xlane.f32.xlu0 %v2503
    %v2678 = vpop.xlane.xlu0 %2677
    %2679 = vadd.xlane.f32.xlu0 %v2504
    %v2680 = vpop.xlane.xlu0 %2679
    %2681 = vadd.xlane.f32.xlu0 %v2505
    %v2682 = vpop.xlane.xlu0 %2681
    %2683 = vadd.xlane.f32.xlu0 %v2506
    %v2684 = vpop.xlane.xlu0 %2683
    %2685 = vadd.xlane.f32.xlu0 %v2507
    %v2686 = vpop.xlane.xlu0 %2685
    %2687 = vadd.xlane.f32.xlu0 %v2508
    %v2688 = vpop.xlane.xlu0 %2687
    %2689 = vadd.xlane.f32.xlu0 %v2509
    %v2690 = vpop.xlane.xlu0 %2689
    %2691 = vadd.xlane.f32.xlu0 %v2510
    %v2692 = vpop.xlane.xlu0 %2691
    %2693 = vadd.xlane.f32.xlu0 %v2511
    %v2694 = vpop.xlane.xlu0 %2693
    %2695 = vadd.xlane.f32.xlu0 %v2512
    %v2696 = vpop.xlane.xlu0 %2695
    %2697 = vadd.xlane.f32.xlu0 %v2513
    %v2698 = vpop.xlane.xlu0 %2697
    %2699 = vadd.xlane.f32.xlu0 %v2514
    %v2700 = vpop.xlane.xlu0 %2699
    %2701 = vadd.xlane.f32.xlu0 %v2515
    %v2702 = vpop.xlane.xlu0 %2701
    %2703 = vadd.xlane.f32.xlu0 %v2516
    %v2704 = vpop.xlane.xlu0 %2703
    %2705 = vadd.xlane.f32.xlu0 %v2517
    %v2706 = vpop.xlane.xlu0 %2705
    %2707 = vadd.xlane.f32.xlu0 %v2518
    %v2708 = vpop.xlane.xlu0 %2707
    %2709 = vadd.xlane.f32.xlu0 %v2519
    %v2710 = vpop.xlane.xlu0 %2709
    %2711 = vadd.xlane.f32.xlu0 %v2520
    %v2712 = vpop.xlane.xlu0 %2711
    %2713 = vadd.xlane.f32.xlu0 %v2521
    %v2714 = vpop.xlane.xlu0 %2713
    %2715 = vadd.xlane.f32.xlu0 %v2522
    %v2716 = vpop.xlane.xlu0 %2715
    %2717 = vadd.xlane.f32.xlu0 %v2523
    %v2718 = vpop.xlane.xlu0 %2717
    %2719 = vadd.xlane.f32.xlu0 %v2524
    %v2720 = vpop.xlane.xlu0 %2719
    %2721 = vadd.xlane.f32.xlu0 %v2525
    %v2722 = vpop.xlane.xlu0 %2721
    %2723 = vadd.xlane.f32.xlu0 %v2526
    %v2724 = vpop.xlane.xlu0 %2723
    %2725 = vadd.xlane.f32.xlu0 %v2527
    %v2726 = vpop.xlane.xlu0 %2725
    %2727 = vadd.xlane.f32.xlu0 %v2528
    %v2728 = vpop.xlane.xlu0 %2727
    %2729 = vadd.xlane.f32.xlu0 %v2529
    %v2730 = vpop.xlane.xlu0 %2729
    %2731 = vadd.xlane.f32.xlu0 %v2530
    %v2732 = vpop.xlane.xlu0 %2731
    %2733 = vadd.xlane.f32.xlu0 %v2531
    %v2734 = vpop.xlane.xlu0 %2733
    %2735 = vadd.xlane.f32.xlu0 %v2532
    %v2736 = vpop.xlane.xlu0 %2735
    %2737 = vadd.xlane.f32.xlu0 %v2533
    %v2738 = vpop.xlane.xlu0 %2737
    %2739 = vadd.xlane.f32.xlu0 %v2534
    %v2740 = vpop.xlane.xlu0 %2739
    %2741 = vadd.xlane.f32.xlu0 %v2535
    %v2742 = vpop.xlane.xlu0 %2741
    %2743 = vadd.xlane.f32.xlu0 %v2536
    %v2744 = vpop.xlane.xlu0 %2743
    %2745 = vadd.xlane.f32.xlu0 %v2537
    %v2746 = vpop.xlane.xlu0 %2745
    %2747 = vadd.xlane.f32.xlu0 %v2538
    %v2748 = vpop.xlane.xlu0 %2747
    %2749 = vadd.xlane.f32.xlu0 %v2539
    %v2750 = vpop.xlane.xlu0 %2749
    %2751 = vadd.xlane.f32.xlu0 %v2540
    %v2752 = vpop.xlane.xlu0 %2751
    %2753 = vadd.xlane.f32.xlu0 %v2541
    %v2754 = vpop.xlane.xlu0 %2753
    %2755 = vadd.xlane.f32.xlu0 %v2542
    %v2756 = vpop.xlane.xlu0 %2755
    %2757 = vadd.xlane.f32.xlu0 %v2543
    %v2758 = vpop.xlane.xlu0 %2757
    %2759 = vadd.xlane.f32.xlu0 %v2544
    %v2760 = vpop.xlane.xlu0 %2759
    %2761 = vadd.xlane.f32.xlu0 %v2545
    %v2762 = vpop.xlane.xlu0 %2761
    %2763 = vadd.xlane.f32.xlu0 %v2546
    %v2764 = vpop.xlane.xlu0 %2763
    %2765 = vadd.xlane.f32.xlu0 %v2547
    %v2766 = vpop.xlane.xlu0 %2765
    %2767 = vadd.xlane.f32.xlu0 %v2548
    %v2768 = vpop.xlane.xlu0 %2767
    %2769 = vadd.xlane.f32.xlu0 %v2549
    %v2770 = vpop.xlane.xlu0 %2769
    %2771 = vadd.xlane.f32.xlu0 %v2550
    %v2772 = vpop.xlane.xlu0 %2771
    %2773 = vadd.xlane.f32.xlu0 %v2551
    %v2774 = vpop.xlane.xlu0 %2773
    %2775 = vadd.xlane.f32.xlu0 %v2552
    %v2776 = vpop.xlane.xlu0 %2775
    %2777 = vadd.xlane.f32.xlu0 %v2553
    %v2778 = vpop.xlane.xlu0 %2777
    %2779 = vadd.xlane.f32.xlu0 %v2554
    %v2780 = vpop.xlane.xlu0 %2779
    %2781 = vadd.xlane.f32.xlu0 %v2555
    %v2782 = vpop.xlane.xlu0 %2781
    %2783 = vadd.xlane.f32.xlu0 %v2556
    %v2784 = vpop.xlane.xlu0 %2783
    %2785 = vadd.xlane.f32.xlu0 %v2557
    %v2786 = vpop.xlane.xlu0 %2785
    %2787 = vadd.xlane.f32.xlu0 %v2558
    %v2788 = vpop.xlane.xlu0 %2787
    %2789 = vadd.xlane.f32.xlu0 %v2559
    %v2790 = vpop.xlane.xlu0 %2789
    %2791 = vadd.xlane.f32.xlu0 %v2560
    %v2792 = vpop.xlane.xlu0 %2791
    %2793 = vadd.xlane.f32.xlu0 %v2561
    %v2794 = vpop.xlane.xlu0 %2793
    %2795 = vadd.xlane.f32.xlu0 %v2562
    %v2796 = vpop.xlane.xlu0 %2795
    %2797 = vadd.xlane.f32.xlu0 %v2563
    %v2798 = vpop.xlane.xlu0 %2797
    %2799 = vadd.xlane.f32.xlu0 %v2564
    %v2800 = vpop.xlane.xlu0 %2799
    %2801 = vadd.xlane.f32.xlu0 %v2565
    %v2802 = vpop.xlane.xlu0 %2801
    %2803 = vadd.xlane.f32.xlu0 %v2566
    %v2804 = vpop.xlane.xlu0 %2803
    %2805 = vadd.xlane.f32.xlu0 %v2567
    %v2806 = vpop.xlane.xlu0 %2805
    %2807 = vadd.xlane.f32.xlu0 %v2568
    %v2808 = vpop.xlane.xlu0 %2807
    %2809 = vadd.xlane.f32.xlu0 %v2569
    %v2810 = vpop.xlane.xlu0 %2809
    %2811 = vadd.xlane.f32.xlu0 %v2570
    %v2812 = vpop.xlane.xlu0 %2811
    %2813 = vadd.xlane.f32.xlu0 %v2571
    %v2814 = vpop.xlane.xlu0 %2813
    %2815 = vadd.xlane.f32.xlu0 %v2572
    %v2816 = vpop.xlane.xlu0 %2815
    %2817 = vadd.xlane.f32.xlu0 %v2573
    %v2818 = vpop.xlane.xlu0 %2817
    %2819 = vadd.xlane.f32.xlu0 %v2574
    %v2820 = vpop.xlane.xlu0 %2819
    %2821 = vadd.xlane.f32.xlu0 %v2575
    %v2822 = vpop.xlane.xlu0 %2821
    %2823 = vadd.xlane.f32.xlu0 %v2576
    %v2824 = vpop.xlane.xlu0 %2823
    %2825 = vadd.xlane.f32.xlu0 %v2577
    %v2826 = vpop.xlane.xlu0 %2825
    %2827 = vadd.xlane.f32.xlu0 %v2578
    %v2828 = vpop.xlane.xlu0 %2827
    %2829 = vadd.xlane.f32.xlu0 %v2579
    %v2830 = vpop.xlane.xlu0 %2829
    %2831 = vadd.xlane.f32.xlu0 %v2580
    %v2832 = vpop.xlane.xlu0 %2831
    %2833 = vadd.xlane.f32.xlu0 %v2581
    %v2834 = vpop.xlane.xlu0 %2833
    %2835 = vadd.xlane.f32.xlu0 %v2582
    %v2836 = vpop.xlane.xlu0 %2835
    %2837 = vadd.xlane.f32.xlu0 %v2583
    %v2838 = vpop.xlane.xlu0 %2837
    %2839 = vadd.xlane.f32.xlu0 %v2584
    %v2840 = vpop.xlane.xlu0 %2839
    %v2969 = vlaneseq
    %v2970 = vand.u32 %v2969, 127
    %v2971 = vlaneseq
    %v2972 = vshrl.u32 %v2971, 7
    %v2973 = vsub.s32 %v2970, %v2972
    %v2974 = vrot.slane %v2586, %v2973
    %v2975 = vadd.s32 %v2970, 4294967288
    %v2976 = vlaneseq
    %v2977 = vshrl.u32 %v2976, 7
    %v2978 = vsub.s32 %v2975, %v2977
    %v2979 = vrot.slane %v2588, %v2978
    %vm2980 = vcmask 130112
    %v2981 = vsel %vm2980, %v2979, %v2974
    %v2982 = vadd.s32 %v2970, 4294967280
    %v2983 = vlaneseq
    %v2984 = vshrl.u32 %v2983, 7
    %v2985 = vsub.s32 %v2982, %v2984
    %v2986 = vrot.slane %v2590, %v2985
    %vm2987 = vcmask 195712
    %v2988 = vsel %vm2987, %v2986, %v2981
    %v2989 = vadd.s32 %v2970, 4294967272
    %v2990 = vlaneseq
    %v2991 = vshrl.u32 %v2990, 7
    %v2992 = vsub.s32 %v2989, %v2991
    %v2993 = vrot.slane %v2592, %v2992
    %vm2994 = vcmask 261312
    %v2995 = vsel %vm2994, %v2993, %v2988
    %v2996 = vadd.s32 %v2970, 4294967264
    %v2997 = vlaneseq
    %v2998 = vshrl.u32 %v2997, 7
    %v2999 = vsub.s32 %v2996, %v2998
    %v3000 = vrot.slane %v2594, %v2999
    %vm3001 = vcmask 326912
    %v3002 = vsel %vm3001, %v3000, %v2995
    %v3003 = vadd.s32 %v2970, 4294967256
    %v3004 = vlaneseq
    %v3005 = vshrl.u32 %v3004, 7
    %v3006 = vsub.s32 %v3003, %v3005
    %v3007 = vrot.slane %v2596, %v3006
    %vm3008 = vcmask 392512
    %v3009 = vsel %vm3008, %v3007, %v3002
    %v3010 = vadd.s32 %v2970, 4294967248
    %v3011 = vlaneseq
    %v3012 = vshrl.u32 %v3011, 7
    %v3013 = vsub.s32 %v3010, %v3012
    %v3014 = vrot.slane %v2598, %v3013
    %vm3015 = vcmask 458112
    %v3016 = vsel %vm3015, %v3014, %v3009
    %v3017 = vadd.s32 %v2970, 4294967240
    %v3018 = vlaneseq
    %v3019 = vshrl.u32 %v3018, 7
    %v3020 = vsub.s32 %v3017, %v3019
    %v3021 = vrot.slane %v2600, %v3020
    %vm3022 = vcmask 523712
    %v3023 = vsel %vm3022, %v3021, %v3016
    %v3024 = vadd.s32 %v2970, 4294967232
    %v3025 = vlaneseq
    %v3026 = vshrl.u32 %v3025, 7
    %v3027 = vsub.s32 %v3024, %v3026
    %v3028 = vrot.slane %v2602, %v3027
    %vm3029 = vcmask 589312
    %v3030 = vsel %vm3029, %v3028, %v3023
    %v3031 = vadd.s32 %v2970, 4294967224
    %v3032 = vlaneseq
    %v3033 = vshrl.u32 %v3032, 7
    %v3034 = vsub.s32 %v3031, %v3033
    %v3035 = vrot.slane %v2604, %v3034
    %vm3036 = vcmask 654912
    %v3037 = vsel %vm3036, %v3035, %v3030
    %v3038 = vadd.s32 %v2970, 4294967216
    %v3039 = vlaneseq
    %v3040 = vshrl.u32 %v3039, 7
    %v3041 = vsub.s32 %v3038, %v3040
    %v3042 = vrot.slane %v2606, %v3041
    %vm3043 = vcmask 720512
    %v3044 = vsel %vm3043, %v3042, %v3037
    %v3045 = vadd.s32 %v2970, 4294967208
    %v3046 = vlaneseq
    %v3047 = vshrl.u32 %v3046, 7
    %v3048 = vsub.s32 %v3045, %v3047
    %v3049 = vrot.slane %v2608, %v3048
    %vm3050 = vcmask 786112
    %v3051 = vsel %vm3050, %v3049, %v3044
    %v3052 = vadd.s32 %v2970, 4294967200
    %v3053 = vlaneseq
    %v3054 = vshrl.u32 %v3053, 7
    %v3055 = vsub.s32 %v3052, %v3054
    %v3056 = vrot.slane %v2610, %v3055
    %vm3057 = vcmask 851712
    %v3058 = vsel %vm3057, %v3056, %v3051
    %v3059 = vadd.s32 %v2970, 4294967192
    %v3060 = vlaneseq
    %v3061 = vshrl.u32 %v3060, 7
    %v3062 = vsub.s32 %v3059, %v3061
    %v3063 = vrot.slane %v2612, %v3062
    %vm3064 = vcmask 917312
    %v3065 = vsel %vm3064, %v3063, %v3058
    %v3066 = vadd.s32 %v2970, 4294967184
    %v3067 = vlaneseq
    %v3068 = vshrl.u32 %v3067, 7
    %v3069 = vsub.s32 %v3066, %v3068
    %v3070 = vrot.slane %v2614, %v3069
    %vm3071 = vcmask 982912
    %v3072 = vsel %vm3071, %v3070, %v3065
    %v3073 = vadd.s32 %v2970, 4294967176
    %v3074 = vlaneseq
    %v3075 = vshrl.u32 %v3074, 7
    %v3076 = vsub.s32 %v3073, %v3075
    %v3077 = vrot.slane %v2616, %v3076
    %vm3078 = vcmask 1048512
    %v3079 = vsel %vm3078, %v3077, %v3072
    %v3080 = vlaneseq
    %v3081 = vshrl.u32 %v3080, 7
    %v3082 = vsub.s32 %v2970, %v3081
    %v3083 = vrot.slane %v2618, %v3082
    %v3084 = vlaneseq
    %v3085 = vshrl.u32 %v3084, 7
    %v3086 = vsub.s32 %v2975, %v3085
    %v3087 = vrot.slane %v2620, %v3086
    %v3088 = vsel %vm2980, %v3087, %v3083
    %v3089 = vlaneseq
    %v3090 = vshrl.u32 %v3089, 7
    %v3091 = vsub.s32 %v2982, %v3090
    %v3092 = vrot.slane %v2622, %v3091
    %v3093 = vsel %vm2987, %v3092, %v3088
    %v3094 = vlaneseq
    %v3095 = vshrl.u32 %v3094, 7
    %v3096 = vsub.s32 %v2989, %v3095
    %v3097 = vrot.slane %v2624, %v3096
    %v3098 = vsel %vm2994, %v3097, %v3093
    %v3099 = vlaneseq
    %v3100 = vshrl.u32 %v3099, 7
    %v3101 = vsub.s32 %v2996, %v3100
    %v3102 = vrot.slane %v2626, %v3101
    %v3103 = vsel %vm3001, %v3102, %v3098
    %v3104 = vlaneseq
    %v3105 = vshrl.u32 %v3104, 7
    %v3106 = vsub.s32 %v3003, %v3105
    %v3107 = vrot.slane %v2628, %v3106
    %v3108 = vsel %vm3008, %v3107, %v3103
    %v3109 = vlaneseq
    %v3110 = vshrl.u32 %v3109, 7
    %v3111 = vsub.s32 %v3010, %v3110
    %v3112 = vrot.slane %v2630, %v3111
    %v3113 = vsel %vm3015, %v3112, %v3108
    %v3114 = vlaneseq
    %v3115 = vshrl.u32 %v3114, 7
    %v3116 = vsub.s32 %v3017, %v3115
    %v3117 = vrot.slane %v2632, %v3116
    %v3118 = vsel %vm3022, %v3117, %v3113
    %v3119 = vlaneseq
    %v3120 = vshrl.u32 %v3119, 7
    %v3121 = vsub.s32 %v3024, %v3120
    %v3122 = vrot.slane %v2634, %v3121
    %v3123 = vsel %vm3029, %v3122, %v3118
    %v3124 = vlaneseq
    %v3125 = vshrl.u32 %v3124, 7
    %v3126 = vsub.s32 %v3031, %v3125
    %v3127 = vrot.slane %v2636, %v3126
    %v3128 = vsel %vm3036, %v3127, %v3123
    %v3129 = vlaneseq
    %v3130 = vshrl.u32 %v3129, 7
    %v3131 = vsub.s32 %v3038, %v3130
    %v3132 = vrot.slane %v2638, %v3131
    %v3133 = vsel %vm3043, %v3132, %v3128
    %v3134 = vlaneseq
    %v3135 = vshrl.u32 %v3134, 7
    %v3136 = vsub.s32 %v3045, %v3135
    %v3137 = vrot.slane %v2640, %v3136
    %v3138 = vsel %vm3050, %v3137, %v3133
    %v3139 = vlaneseq
    %v3140 = vshrl.u32 %v3139, 7
    %v3141 = vsub.s32 %v3052, %v3140
    %v3142 = vrot.slane %v2642, %v3141
    %v3143 = vsel %vm3057, %v3142, %v3138
    %v3144 = vlaneseq
    %v3145 = vshrl.u32 %v3144, 7
    %v3146 = vsub.s32 %v3059, %v3145
    %v3147 = vrot.slane %v2644, %v3146
    %v3148 = vsel %vm3064, %v3147, %v3143
    %v3149 = vlaneseq
    %v3150 = vshrl.u32 %v3149, 7
    %v3151 = vsub.s32 %v3066, %v3150
    %v3152 = vrot.slane %v2646, %v3151
    %v3153 = vsel %vm3071, %v3152, %v3148
    %v3154 = vlaneseq
    %v3155 = vshrl.u32 %v3154, 7
    %v3156 = vsub.s32 %v3073, %v3155
    %v3157 = vrot.slane %v2648, %v3156
    %v3158 = vsel %vm3078, %v3157, %v3153
    %v3159 = vlaneseq
    %v3160 = vshrl.u32 %v3159, 7
    %v3161 = vsub.s32 %v2970, %v3160
    %v3162 = vrot.slane %v2650, %v3161
    %v3163 = vlaneseq
    %v3164 = vshrl.u32 %v3163, 7
    %v3165 = vsub.s32 %v2975, %v3164
    %v3166 = vrot.slane %v2652, %v3165
    %v3167 = vsel %vm2980, %v3166, %v3162
    %v3168 = vlaneseq
    %v3169 = vshrl.u32 %v3168, 7
    %v3170 = vsub.s32 %v2982, %v3169
    %v3171 = vrot.slane %v2654, %v3170
    %v3172 = vsel %vm2987, %v3171, %v3167
    %v3173 = vlaneseq
    %v3174 = vshrl.u32 %v3173, 7
    %v3175 = vsub.s32 %v2989, %v3174
    %v3176 = vrot.slane %v2656, %v3175
    %v3177 = vsel %vm2994, %v3176, %v3172
    %v3178 = vlaneseq
    %v3179 = vshrl.u32 %v3178, 7
    %v3180 = vsub.s32 %v2996, %v3179
    %v3181 = vrot.slane %v2658, %v3180
    %v3182 = vsel %vm3001, %v3181, %v3177
    %v3183 = vlaneseq
    %v3184 = vshrl.u32 %v3183, 7
    %v3185 = vsub.s32 %v3003, %v3184
    %v3186 = vrot.slane %v2660, %v3185
    %v3187 = vsel %vm3008, %v3186, %v3182
    %v3188 = vlaneseq
    %v3189 = vshrl.u32 %v3188, 7
    %v3190 = vsub.s32 %v3010, %v3189
    %v3191 = vrot.slane %v2662, %v3190
    %v3192 = vsel %vm3015, %v3191, %v3187
    %v3193 = vlaneseq
    %v3194 = vshrl.u32 %v3193, 7
    %v3195 = vsub.s32 %v3017, %v3194
    %v3196 = vrot.slane %v2664, %v3195
    %v3197 = vsel %vm3022, %v3196, %v3192
    %v3198 = vlaneseq
    %v3199 = vshrl.u32 %v3198, 7
    %v3200 = vsub.s32 %v3024, %v3199
    %v3201 = vrot.slane %v2666, %v3200
    %v3202 = vsel %vm3029, %v3201, %v3197
    %v3203 = vlaneseq
    %v3204 = vshrl.u32 %v3203, 7
    %v3205 = vsub.s32 %v3031, %v3204
    %v3206 = vrot.slane %v2668, %v3205
    %v3207 = vsel %vm3036, %v3206, %v3202
    %v3208 = vlaneseq
    %v3209 = vshrl.u32 %v3208, 7
    %v3210 = vsub.s32 %v3038, %v3209
    %v3211 = vrot.slane %v2670, %v3210
    %v3212 = vsel %vm3043, %v3211, %v3207
    %v3213 = vlaneseq
    %v3214 = vshrl.u32 %v3213, 7
    %v3215 = vsub.s32 %v3045, %v3214
    %v3216 = vrot.slane %v2672, %v3215
    %v3217 = vsel %vm3050, %v3216, %v3212
    %v3218 = vlaneseq
    %v3219 = vshrl.u32 %v3218, 7
    %v3220 = vsub.s32 %v3052, %v3219
    %v3221 = vrot.slane %v2674, %v3220
    %v3222 = vsel %vm3057, %v3221, %v3217
    %v3223 = vlaneseq
    %v3224 = vshrl.u32 %v3223, 7
    %v3225 = vsub.s32 %v3059, %v3224
    %v3226 = vrot.slane %v2676, %v3225
    %v3227 = vsel %vm3064, %v3226, %v3222
    %v3228 = vlaneseq
    %v3229 = vshrl.u32 %v3228, 7
    %v3230 = vsub.s32 %v3066, %v3229
    %v3231 = vrot.slane %v2678, %v3230
    %v3232 = vsel %vm3071, %v3231, %v3227
    %v3233 = vlaneseq
    %v3234 = vshrl.u32 %v3233, 7
    %v3235 = vsub.s32 %v3073, %v3234
    %v3236 = vrot.slane %v2680, %v3235
    %v3237 = vsel %vm3078, %v3236, %v3232
    %v3238 = vlaneseq
    %v3239 = vshrl.u32 %v3238, 7
    %v3240 = vsub.s32 %v2970, %v3239
    %v3241 = vrot.slane %v2682, %v3240
    %v3242 = vlaneseq
    %v3243 = vshrl.u32 %v3242, 7
    %v3244 = vsub.s32 %v2975, %v3243
    %v3245 = vrot.slane %v2684, %v3244
    %v3246 = vsel %vm2980, %v3245, %v3241
    %v3247 = vlaneseq
    %v3248 = vshrl.u32 %v3247, 7
    %v3249 = vsub.s32 %v2982, %v3248
    %v3250 = vrot.slane %v2686, %v3249
    %v3251 = vsel %vm2987, %v3250, %v3246
    %v3252 = vlaneseq
    %v3253 = vshrl.u32 %v3252, 7
    %v3254 = vsub.s32 %v2989, %v3253
    %v3255 = vrot.slane %v2688, %v3254
    %v3256 = vsel %vm2994, %v3255, %v3251
    %v3257 = vlaneseq
    %v3258 = vshrl.u32 %v3257, 7
    %v3259 = vsub.s32 %v2996, %v3258
    %v3260 = vrot.slane %v2690, %v3259
    %v3261 = vsel %vm3001, %v3260, %v3256
    %v3262 = vlaneseq
    %v3263 = vshrl.u32 %v3262, 7
    %v3264 = vsub.s32 %v3003, %v3263
    %v3265 = vrot.slane %v2692, %v3264
    %v3266 = vsel %vm3008, %v3265, %v3261
    %v3267 = vlaneseq
    %v3268 = vshrl.u32 %v3267, 7
    %v3269 = vsub.s32 %v3010, %v3268
    %v3270 = vrot.slane %v2694, %v3269
    %v3271 = vsel %vm3015, %v3270, %v3266
    %v3272 = vlaneseq
    %v3273 = vshrl.u32 %v3272, 7
    %v3274 = vsub.s32 %v3017, %v3273
    %v3275 = vrot.slane %v2696, %v3274
    %v3276 = vsel %vm3022, %v3275, %v3271
    %v3277 = vlaneseq
    %v3278 = vshrl.u32 %v3277, 7
    %v3279 = vsub.s32 %v3024, %v3278
    %v3280 = vrot.slane %v2698, %v3279
    %v3281 = vsel %vm3029, %v3280, %v3276
    %v3282 = vlaneseq
    %v3283 = vshrl.u32 %v3282, 7
    %v3284 = vsub.s32 %v3031, %v3283
    %v3285 = vrot.slane %v2700, %v3284
    %v3286 = vsel %vm3036, %v3285, %v3281
    %v3287 = vlaneseq
    %v3288 = vshrl.u32 %v3287, 7
    %v3289 = vsub.s32 %v3038, %v3288
    %v3290 = vrot.slane %v2702, %v3289
    %v3291 = vsel %vm3043, %v3290, %v3286
    %v3292 = vlaneseq
    %v3293 = vshrl.u32 %v3292, 7
    %v3294 = vsub.s32 %v3045, %v3293
    %v3295 = vrot.slane %v2704, %v3294
    %v3296 = vsel %vm3050, %v3295, %v3291
    %v3297 = vlaneseq
    %v3298 = vshrl.u32 %v3297, 7
    %v3299 = vsub.s32 %v3052, %v3298
    %v3300 = vrot.slane %v2706, %v3299
    %v3301 = vsel %vm3057, %v3300, %v3296
    %v3302 = vlaneseq
    %v3303 = vshrl.u32 %v3302, 7
    %v3304 = vsub.s32 %v3059, %v3303
    %v3305 = vrot.slane %v2708, %v3304
    %v3306 = vsel %vm3064, %v3305, %v3301
    %v3307 = vlaneseq
    %v3308 = vshrl.u32 %v3307, 7
    %v3309 = vsub.s32 %v3066, %v3308
    %v3310 = vrot.slane %v2710, %v3309
    %v3311 = vsel %vm3071, %v3310, %v3306
    %v3312 = vlaneseq
    %v3313 = vshrl.u32 %v3312, 7
    %v3314 = vsub.s32 %v3073, %v3313
    %v3315 = vrot.slane %v2712, %v3314
    %v3316 = vsel %vm3078, %v3315, %v3311
    %v3317 = vlaneseq
    %v3318 = vshrl.u32 %v3317, 7
    %v3319 = vsub.s32 %v2970, %v3318
    %v3320 = vrot.slane %v2714, %v3319
    %v3321 = vlaneseq
    %v3322 = vshrl.u32 %v3321, 7
    %v3323 = vsub.s32 %v2975, %v3322
    %v3324 = vrot.slane %v2716, %v3323
    %v3325 = vsel %vm2980, %v3324, %v3320
    %v3326 = vlaneseq
    %v3327 = vshrl.u32 %v3326, 7
    %v3328 = vsub.s32 %v2982, %v3327
    %v3329 = vrot.slane %v2718, %v3328
    %v3330 = vsel %vm2987, %v3329, %v3325
    %v3331 = vlaneseq
    %v3332 = vshrl.u32 %v3331, 7
    %v3333 = vsub.s32 %v2989, %v3332
    %v3334 = vrot.slane %v2720, %v3333
    %v3335 = vsel %vm2994, %v3334, %v3330
    %v3336 = vlaneseq
    %v3337 = vshrl.u32 %v3336, 7
    %v3338 = vsub.s32 %v2996, %v3337
    %v3339 = vrot.slane %v2722, %v3338
    %v3340 = vsel %vm3001, %v3339, %v3335
    %v3341 = vlaneseq
    %v3342 = vshrl.u32 %v3341, 7
    %v3343 = vsub.s32 %v3003, %v3342
    %v3344 = vrot.slane %v2724, %v3343
    %v3345 = vsel %vm3008, %v3344, %v3340
    %v3346 = vlaneseq
    %v3347 = vshrl.u32 %v3346, 7
    %v3348 = vsub.s32 %v3010, %v3347
    %v3349 = vrot.slane %v2726, %v3348
    %v3350 = vsel %vm3015, %v3349, %v3345
    %v3351 = vlaneseq
    %v3352 = vshrl.u32 %v3351, 7
    %v3353 = vsub.s32 %v3017, %v3352
    %v3354 = vrot.slane %v2728, %v3353
    %v3355 = vsel %vm3022, %v3354, %v3350
    %v3356 = vlaneseq
    %v3357 = vshrl.u32 %v3356, 7
    %v3358 = vsub.s32 %v3024, %v3357
    %v3359 = vrot.slane %v2730, %v3358
    %v3360 = vsel %vm3029, %v3359, %v3355
    %v3361 = vlaneseq
    %v3362 = vshrl.u32 %v3361, 7
    %v3363 = vsub.s32 %v3031, %v3362
    %v3364 = vrot.slane %v2732, %v3363
    %v3365 = vsel %vm3036, %v3364, %v3360
    %v3366 = vlaneseq
    %v3367 = vshrl.u32 %v3366, 7
    %v3368 = vsub.s32 %v3038, %v3367
    %v3369 = vrot.slane %v2734, %v3368
    %v3370 = vsel %vm3043, %v3369, %v3365
    %v3371 = vlaneseq
    %v3372 = vshrl.u32 %v3371, 7
    %v3373 = vsub.s32 %v3045, %v3372
    %v3374 = vrot.slane %v2736, %v3373
    %v3375 = vsel %vm3050, %v3374, %v3370
    %v3376 = vlaneseq
    %v3377 = vshrl.u32 %v3376, 7
    %v3378 = vsub.s32 %v3052, %v3377
    %v3379 = vrot.slane %v2738, %v3378
    %v3380 = vsel %vm3057, %v3379, %v3375
    %v3381 = vlaneseq
    %v3382 = vshrl.u32 %v3381, 7
    %v3383 = vsub.s32 %v3059, %v3382
    %v3384 = vrot.slane %v2740, %v3383
    %v3385 = vsel %vm3064, %v3384, %v3380
    %v3386 = vlaneseq
    %v3387 = vshrl.u32 %v3386, 7
    %v3388 = vsub.s32 %v3066, %v3387
    %v3389 = vrot.slane %v2742, %v3388
    %v3390 = vsel %vm3071, %v3389, %v3385
    %v3391 = vlaneseq
    %v3392 = vshrl.u32 %v3391, 7
    %v3393 = vsub.s32 %v3073, %v3392
    %v3394 = vrot.slane %v2744, %v3393
    %v3395 = vsel %vm3078, %v3394, %v3390
    %v3396 = vlaneseq
    %v3397 = vshrl.u32 %v3396, 7
    %v3398 = vsub.s32 %v2970, %v3397
    %v3399 = vrot.slane %v2746, %v3398
    %v3400 = vlaneseq
    %v3401 = vshrl.u32 %v3400, 7
    %v3402 = vsub.s32 %v2975, %v3401
    %v3403 = vrot.slane %v2748, %v3402
    %v3404 = vsel %vm2980, %v3403, %v3399
    %v3405 = vlaneseq
    %v3406 = vshrl.u32 %v3405, 7
    %v3407 = vsub.s32 %v2982, %v3406
    %v3408 = vrot.slane %v2750, %v3407
    %v3409 = vsel %vm2987, %v3408, %v3404
    %v3410 = vlaneseq
    %v3411 = vshrl.u32 %v3410, 7
    %v3412 = vsub.s32 %v2989, %v3411
    %v3413 = vrot.slane %v2752, %v3412
    %v3414 = vsel %vm2994, %v3413, %v3409
    %v3415 = vlaneseq
    %v3416 = vshrl.u32 %v3415, 7
    %v3417 = vsub.s32 %v2996, %v3416
    %v3418 = vrot.slane %v2754, %v3417
    %v3419 = vsel %vm3001, %v3418, %v3414
    %v3420 = vlaneseq
    %v3421 = vshrl.u32 %v3420, 7
    %v3422 = vsub.s32 %v3003, %v3421
    %v3423 = vrot.slane %v2756, %v3422
    %v3424 = vsel %vm3008, %v3423, %v3419
    %v3425 = vlaneseq
    %v3426 = vshrl.u32 %v3425, 7
    %v3427 = vsub.s32 %v3010, %v3426
    %v3428 = vrot.slane %v2758, %v3427
    %v3429 = vsel %vm3015, %v3428, %v3424
    %v3430 = vlaneseq
    %v3431 = vshrl.u32 %v3430, 7
    %v3432 = vsub.s32 %v3017, %v3431
    %v3433 = vrot.slane %v2760, %v3432
    %v3434 = vsel %vm3022, %v3433, %v3429
    %v3435 = vlaneseq
    %v3436 = vshrl.u32 %v3435, 7
    %v3437 = vsub.s32 %v3024, %v3436
    %v3438 = vrot.slane %v2762, %v3437
    %v3439 = vsel %vm3029, %v3438, %v3434
    %v3440 = vlaneseq
    %v3441 = vshrl.u32 %v3440, 7
    %v3442 = vsub.s32 %v3031, %v3441
    %v3443 = vrot.slane %v2764, %v3442
    %v3444 = vsel %vm3036, %v3443, %v3439
    %v3445 = vlaneseq
    %v3446 = vshrl.u32 %v3445, 7
    %v3447 = vsub.s32 %v3038, %v3446
    %v3448 = vrot.slane %v2766, %v3447
    %v3449 = vsel %vm3043, %v3448, %v3444
    %v3450 = vlaneseq
    %v3451 = vshrl.u32 %v3450, 7
    %v3452 = vsub.s32 %v3045, %v3451
    %v3453 = vrot.slane %v2768, %v3452
    %v3454 = vsel %vm3050, %v3453, %v3449
    %v3455 = vlaneseq
    %v3456 = vshrl.u32 %v3455, 7
    %v3457 = vsub.s32 %v3052, %v3456
    %v3458 = vrot.slane %v2770, %v3457
    %v3459 = vsel %vm3057, %v3458, %v3454
    %v3460 = vlaneseq
    %v3461 = vshrl.u32 %v3460, 7
    %v3462 = vsub.s32 %v3059, %v3461
    %v3463 = vrot.slane %v2772, %v3462
    %v3464 = vsel %vm3064, %v3463, %v3459
    %v3465 = vlaneseq
    %v3466 = vshrl.u32 %v3465, 7
    %v3467 = vsub.s32 %v3066, %v3466
    %v3468 = vrot.slane %v2774, %v3467
    %v3469 = vsel %vm3071, %v3468, %v3464
    %v3470 = vlaneseq
    %v3471 = vshrl.u32 %v3470, 7
    %v3472 = vsub.s32 %v3073, %v3471
    %v3473 = vrot.slane %v2776, %v3472
    %v3474 = vsel %vm3078, %v3473, %v3469
    %v3475 = vlaneseq
    %v3476 = vshrl.u32 %v3475, 7
    %v3477 = vsub.s32 %v2970, %v3476
    %v3478 = vrot.slane %v2778, %v3477
    %v3479 = vlaneseq
    %v3480 = vshrl.u32 %v3479, 7
    %v3481 = vsub.s32 %v2975, %v3480
    %v3482 = vrot.slane %v2780, %v3481
    %v3483 = vsel %vm2980, %v3482, %v3478
    %v3484 = vlaneseq
    %v3485 = vshrl.u32 %v3484, 7
    %v3486 = vsub.s32 %v2982, %v3485
    %v3487 = vrot.slane %v2782, %v3486
    %v3488 = vsel %vm2987, %v3487, %v3483
    %v3489 = vlaneseq
    %v3490 = vshrl.u32 %v3489, 7
    %v3491 = vsub.s32 %v2989, %v3490
    %v3492 = vrot.slane %v2784, %v3491
    %v3493 = vsel %vm2994, %v3492, %v3488
    %v3494 = vlaneseq
    %v3495 = vshrl.u32 %v3494, 7
    %v3496 = vsub.s32 %v2996, %v3495
    %v3497 = vrot.slane %v2786, %v3496
    %v3498 = vsel %vm3001, %v3497, %v3493
    %v3499 = vlaneseq
    %v3500 = vshrl.u32 %v3499, 7
    %v3501 = vsub.s32 %v3003, %v3500
    %v3502 = vrot.slane %v2788, %v3501
    %v3503 = vsel %vm3008, %v3502, %v3498
    %v3504 = vlaneseq
    %v3505 = vshrl.u32 %v3504, 7
    %v3506 = vsub.s32 %v3010, %v3505
    %v3507 = vrot.slane %v2790, %v3506
    %v3508 = vsel %vm3015, %v3507, %v3503
    %v3509 = vlaneseq
    %v3510 = vshrl.u32 %v3509, 7
    %v3511 = vsub.s32 %v3017, %v3510
    %v3512 = vrot.slane %v2792, %v3511
    %v3513 = vsel %vm3022, %v3512, %v3508
    %v3514 = vlaneseq
    %v3515 = vshrl.u32 %v3514, 7
    %v3516 = vsub.s32 %v3024, %v3515
    %v3517 = vrot.slane %v2794, %v3516
    %v3518 = vsel %vm3029, %v3517, %v3513
    %v3519 = vlaneseq
    %v3520 = vshrl.u32 %v3519, 7
    %v3521 = vsub.s32 %v3031, %v3520
    %v3522 = vrot.slane %v2796, %v3521
    %v3523 = vsel %vm3036, %v3522, %v3518
    %v3524 = vlaneseq
    %v3525 = vshrl.u32 %v3524, 7
    %v3526 = vsub.s32 %v3038, %v3525
    %v3527 = vrot.slane %v2798, %v3526
    %v3528 = vsel %vm3043, %v3527, %v3523
    %v3529 = vlaneseq
    %v3530 = vshrl.u32 %v3529, 7
    %v3531 = vsub.s32 %v3045, %v3530
    %v3532 = vrot.slane %v2800, %v3531
    %v3533 = vsel %vm3050, %v3532, %v3528
    %v3534 = vlaneseq
    %v3535 = vshrl.u32 %v3534, 7
    %v3536 = vsub.s32 %v3052, %v3535
    %v3537 = vrot.slane %v2802, %v3536
    %v3538 = vsel %vm3057, %v3537, %v3533
    %v3539 = vlaneseq
    %v3540 = vshrl.u32 %v3539, 7
    %v3541 = vsub.s32 %v3059, %v3540
    %v3542 = vrot.slane %v2804, %v3541
    %v3543 = vsel %vm3064, %v3542, %v3538
    %v3544 = vlaneseq
    %v3545 = vshrl.u32 %v3544, 7
    %v3546 = vsub.s32 %v3066, %v3545
    %v3547 = vrot.slane %v2806, %v3546
    %v3548 = vsel %vm3071, %v3547, %v3543
    %v3549 = vlaneseq
    %v3550 = vshrl.u32 %v3549, 7
    %v3551 = vsub.s32 %v3073, %v3550
    %v3552 = vrot.slane %v2808, %v3551
    %v3553 = vsel %vm3078, %v3552, %v3548
    %v3554 = vlaneseq
    %v3555 = vshrl.u32 %v3554, 7
    %v3556 = vsub.s32 %v2970, %v3555
    %v3557 = vrot.slane %v2810, %v3556
    %v3558 = vlaneseq
    %v3559 = vshrl.u32 %v3558, 7
    %v3560 = vsub.s32 %v2975, %v3559
    %v3561 = vrot.slane %v2812, %v3560
    %v3562 = vsel %vm2980, %v3561, %v3557
    %v3563 = vlaneseq
    %v3564 = vshrl.u32 %v3563, 7
    %v3565 = vsub.s32 %v2982, %v3564
    %v3566 = vrot.slane %v2814, %v3565
    %v3567 = vsel %vm2987, %v3566, %v3562
    %v3568 = vlaneseq
    %v3569 = vshrl.u32 %v3568, 7
    %v3570 = vsub.s32 %v2989, %v3569
    %v3571 = vrot.slane %v2816, %v3570
    %v3572 = vsel %vm2994, %v3571, %v3567
    %v3573 = vlaneseq
    %v3574 = vshrl.u32 %v3573, 7
    %v3575 = vsub.s32 %v2996, %v3574
    %v3576 = vrot.slane %v2818, %v3575
    %v3577 = vsel %vm3001, %v3576, %v3572
    %v3578 = vlaneseq
    %v3579 = vshrl.u32 %v3578, 7
    %v3580 = vsub.s32 %v3003, %v3579
    %v3581 = vrot.slane %v2820, %v3580
    %v3582 = vsel %vm3008, %v3581, %v3577
    %v3583 = vlaneseq
    %v3584 = vshrl.u32 %v3583, 7
    %v3585 = vsub.s32 %v3010, %v3584
    %v3586 = vrot.slane %v2822, %v3585
    %v3587 = vsel %vm3015, %v3586, %v3582
    %v3588 = vlaneseq
    %v3589 = vshrl.u32 %v3588, 7
    %v3590 = vsub.s32 %v3017, %v3589
    %v3591 = vrot.slane %v2824, %v3590
    %v3592 = vsel %vm3022, %v3591, %v3587
    %v3593 = vlaneseq
    %v3594 = vshrl.u32 %v3593, 7
    %v3595 = vsub.s32 %v3024, %v3594
    %v3596 = vrot.slane %v2826, %v3595
    %v3597 = vsel %vm3029, %v3596, %v3592
    %v3598 = vlaneseq
    %v3599 = vshrl.u32 %v3598, 7
    %v3600 = vsub.s32 %v3031, %v3599
    %v3601 = vrot.slane %v2828, %v3600
    %v3602 = vsel %vm3036, %v3601, %v3597
    %v3603 = vlaneseq
    %v3604 = vshrl.u32 %v3603, 7
    %v3605 = vsub.s32 %v3038, %v3604
    %v3606 = vrot.slane %v2830, %v3605
    %v3607 = vsel %vm3043, %v3606, %v3602
    %v3608 = vlaneseq
    %v3609 = vshrl.u32 %v3608, 7
    %v3610 = vsub.s32 %v3045, %v3609
    %v3611 = vrot.slane %v2832, %v3610
    %v3612 = vsel %vm3050, %v3611, %v3607
    %v3613 = vlaneseq
    %v3614 = vshrl.u32 %v3613, 7
    %v3615 = vsub.s32 %v3052, %v3614
    %v3616 = vrot.slane %v2834, %v3615
    %v3617 = vsel %vm3057, %v3616, %v3612
    %v3618 = vlaneseq
    %v3619 = vshrl.u32 %v3618, 7
    %v3620 = vsub.s32 %v3059, %v3619
    %v3621 = vrot.slane %v2836, %v3620
    %v3622 = vsel %vm3064, %v3621, %v3617
    %v3623 = vlaneseq
    %v3624 = vshrl.u32 %v3623, 7
    %v3625 = vsub.s32 %v3066, %v3624
    %v3626 = vrot.slane %v2838, %v3625
    %v3627 = vsel %vm3071, %v3626, %v3622
    %v3628 = vlaneseq
    %v3629 = vshrl.u32 %v3628, 7
    %v3630 = vsub.s32 %v3073, %v3629
    %v3631 = vrot.slane %v2840, %v3630
    %v3632 = vsel %vm3078, %v3631, %v3627
    %vm3633 = vcmask 1041409
    %v3634 = vsel %vm3633, %v3158, %v3079
    %vm3635 = vcmask 1042434
    %v3636 = vsel %vm3635, %v3237, %v3634
    %vm3637 = vcmask 1043459
    %v3638 = vsel %vm3637, %v3316, %v3636
    %vm3639 = vcmask 1044484
    %v3640 = vsel %vm3639, %v3395, %v3638
    %vm3641 = vcmask 1045509
    %v3642 = vsel %vm3641, %v3474, %v3640
    %vm3643 = vcmask 1046534
    %v3644 = vsel %vm3643, %v3553, %v3642
    %vm3645 = vcmask 1047559
    %v3646 = vsel %vm3645, %v3632, %v3644
    %3648 = vmax.xlane.f32.xlu0 %v3646
    %v3649 = vpop.xlane.xlu0 %3648
    %v3651 = vlaneseq
    %v3652 = vshrl.u32 %v3651, 7
    %v3653 = vsub.s32 0, %v3652
    %v3654 = vrot.slane %v3649, %v3653
    %v3655 = vlaneseq
    %v3656 = vshrl.u32 %v3655, 7
    %v3657 = vsub.s32 1, %v3656
    %v3658 = vrot.slane %v3649, %v3657
    %v3659 = vlaneseq
    %v3660 = vshrl.u32 %v3659, 7
    %v3661 = vsub.s32 2, %v3660
    %v3662 = vrot.slane %v3649, %v3661
    %v3663 = vlaneseq
    %v3664 = vshrl.u32 %v3663, 7
    %v3665 = vsub.s32 3, %v3664
    %v3666 = vrot.slane %v3649, %v3665
    %v3667 = vlaneseq
    %v3668 = vshrl.u32 %v3667, 7
    %v3669 = vsub.s32 4, %v3668
    %v3670 = vrot.slane %v3649, %v3669
    %v3671 = vlaneseq
    %v3672 = vshrl.u32 %v3671, 7
    %v3673 = vsub.s32 5, %v3672
    %v3674 = vrot.slane %v3649, %v3673
    %v3675 = vlaneseq
    %v3676 = vshrl.u32 %v3675, 7
    %v3677 = vsub.s32 6, %v3676
    %v3678 = vrot.slane %v3649, %v3677
    %v3679 = vlaneseq
    %v3680 = vshrl.u32 %v3679, 7
    %v3681 = vsub.s32 7, %v3680
    %v3682 = vrot.slane %v3649, %v3681
    %v3691 = vsub.f32 %v2586, %v3654
    %v3692 = vsub.f32 %v2588, %v3654
    %v3693 = vsub.f32 %v2590, %v3654
    %v3694 = vsub.f32 %v2592, %v3654
    %v3695 = vsub.f32 %v2594, %v3654
    %v3696 = vsub.f32 %v2596, %v3654
    %v3697 = vsub.f32 %v2598, %v3654
    %v3698 = vsub.f32 %v2600, %v3654
    %v3699 = vsub.f32 %v2602, %v3654
    %v3700 = vsub.f32 %v2604, %v3654
    %v3701 = vsub.f32 %v2606, %v3654
    %v3702 = vsub.f32 %v2608, %v3654
    %v3703 = vsub.f32 %v2610, %v3654
    %v3704 = vsub.f32 %v2612, %v3654
    %v3705 = vsub.f32 %v2614, %v3654
    %v3706 = vsub.f32 %v2616, %v3654
    %v3707 = vsub.f32 %v2618, %v3658
    %v3708 = vsub.f32 %v2620, %v3658
    %v3709 = vsub.f32 %v2622, %v3658
    %v3710 = vsub.f32 %v2624, %v3658
    %v3711 = vsub.f32 %v2626, %v3658
    %v3712 = vsub.f32 %v2628, %v3658
    %v3713 = vsub.f32 %v2630, %v3658
    %v3714 = vsub.f32 %v2632, %v3658
    %v3715 = vsub.f32 %v2634, %v3658
    %v3716 = vsub.f32 %v2636, %v3658
    %v3717 = vsub.f32 %v2638, %v3658
    %v3718 = vsub.f32 %v2640, %v3658
    %v3719 = vsub.f32 %v2642, %v3658
    %v3720 = vsub.f32 %v2644, %v3658
    %v3721 = vsub.f32 %v2646, %v3658
    %v3722 = vsub.f32 %v2648, %v3658
    %v3723 = vsub.f32 %v2650, %v3662
    %v3724 = vsub.f32 %v2652, %v3662
    %v3725 = vsub.f32 %v2654, %v3662
    %v3726 = vsub.f32 %v2656, %v3662
    %v3727 = vsub.f32 %v2658, %v3662
    %v3728 = vsub.f32 %v2660, %v3662
    %v3729 = vsub.f32 %v2662, %v3662
    %v3730 = vsub.f32 %v2664, %v3662
    %v3731 = vsub.f32 %v2666, %v3662
    %v3732 = vsub.f32 %v2668, %v3662
    %v3733 = vsub.f32 %v2670, %v3662
    %v3734 = vsub.f32 %v2672, %v3662
    %v3735 = vsub.f32 %v2674, %v3662
    %v3736 = vsub.f32 %v2676, %v3662
    %v3737 = vsub.f32 %v2678, %v3662
    %v3738 = vsub.f32 %v2680, %v3662
    %v3739 = vsub.f32 %v2682, %v3666
    %v3740 = vsub.f32 %v2684, %v3666
    %v3741 = vsub.f32 %v2686, %v3666
    %v3742 = vsub.f32 %v2688, %v3666
    %v3743 = vsub.f32 %v2690, %v3666
    %v3744 = vsub.f32 %v2692, %v3666
    %v3745 = vsub.f32 %v2694, %v3666
    %v3746 = vsub.f32 %v2696, %v3666
    %v3747 = vsub.f32 %v2698, %v3666
    %v3748 = vsub.f32 %v2700, %v3666
    %v3749 = vsub.f32 %v2702, %v3666
    %v3750 = vsub.f32 %v2704, %v3666
    %v3751 = vsub.f32 %v2706, %v3666
    %v3752 = vsub.f32 %v2708, %v3666
    %v3753 = vsub.f32 %v2710, %v3666
    %v3754 = vsub.f32 %v2712, %v3666
    %v3755 = vsub.f32 %v2714, %v3670
    %v3756 = vsub.f32 %v2716, %v3670
    %v3757 = vsub.f32 %v2718, %v3670
    %v3758 = vsub.f32 %v2720, %v3670
    %v3759 = vsub.f32 %v2722, %v3670
    %v3760 = vsub.f32 %v2724, %v3670
    %v3761 = vsub.f32 %v2726, %v3670
    %v3762 = vsub.f32 %v2728, %v3670
    %v3763 = vsub.f32 %v2730, %v3670
    %v3764 = vsub.f32 %v2732, %v3670
    %v3765 = vsub.f32 %v2734, %v3670
    %v3766 = vsub.f32 %v2736, %v3670
    %v3767 = vsub.f32 %v2738, %v3670
    %v3768 = vsub.f32 %v2740, %v3670
    %v3769 = vsub.f32 %v2742, %v3670
    %v3770 = vsub.f32 %v2744, %v3670
    %v3771 = vsub.f32 %v2746, %v3674
    %v3772 = vsub.f32 %v2748, %v3674
    %v3773 = vsub.f32 %v2750, %v3674
    %v3774 = vsub.f32 %v2752, %v3674
    %v3775 = vsub.f32 %v2754, %v3674
    %v3776 = vsub.f32 %v2756, %v3674
    %v3777 = vsub.f32 %v2758, %v3674
    %v3778 = vsub.f32 %v2760, %v3674
    %v3779 = vsub.f32 %v2762, %v3674
    %v3780 = vsub.f32 %v2764, %v3674
    %v3781 = vsub.f32 %v2766, %v3674
    %v3782 = vsub.f32 %v2768, %v3674
    %v3783 = vsub.f32 %v2770, %v3674
    %v3784 = vsub.f32 %v2772, %v3674
    %v3785 = vsub.f32 %v2774, %v3674
    %v3786 = vsub.f32 %v2776, %v3674
    %v3787 = vsub.f32 %v2778, %v3678
    %v3788 = vsub.f32 %v2780, %v3678
    %v3789 = vsub.f32 %v2782, %v3678
    %v3790 = vsub.f32 %v2784, %v3678
    %v3791 = vsub.f32 %v2786, %v3678
    %v3792 = vsub.f32 %v2788, %v3678
    %v3793 = vsub.f32 %v2790, %v3678
    %v3794 = vsub.f32 %v2792, %v3678
    %v3795 = vsub.f32 %v2794, %v3678
    %v3796 = vsub.f32 %v2796, %v3678
    %v3797 = vsub.f32 %v2798, %v3678
    %v3798 = vsub.f32 %v2800, %v3678
    %v3799 = vsub.f32 %v2802, %v3678
    %v3800 = vsub.f32 %v2804, %v3678
    %v3801 = vsub.f32 %v2806, %v3678
    %v3802 = vsub.f32 %v2808, %v3678
    %v3803 = vsub.f32 %v2810, %v3682
    %v3804 = vsub.f32 %v2812, %v3682
    %v3805 = vsub.f32 %v2814, %v3682
    %v3806 = vsub.f32 %v2816, %v3682
    %v3807 = vsub.f32 %v2818, %v3682
    %v3808 = vsub.f32 %v2820, %v3682
    %v3809 = vsub.f32 %v2822, %v3682
    %v3810 = vsub.f32 %v2824, %v3682
    %v3811 = vsub.f32 %v2826, %v3682
    %v3812 = vsub.f32 %v2828, %v3682
    %v3813 = vsub.f32 %v2830, %v3682
    %v3814 = vsub.f32 %v2832, %v3682
    %v3815 = vsub.f32 %v2834, %v3682
    %v3816 = vsub.f32 %v2836, %v3682
    %v3817 = vsub.f32 %v2838, %v3682
    %v3818 = vsub.f32 %v2840, %v3682
    %v3819 = vmul.f32 %v3691, 1.442695
    %v3820 = vpow.pop %v3819
    %v3821 = vmul.f32 %v3692, 1.442695
    %v3822 = vpow.pop %v3821
    %v3823 = vmul.f32 %v3693, 1.442695
    %v3824 = vpow.pop %v3823
    %v3825 = vmul.f32 %v3694, 1.442695
    %v3826 = vpow.pop %v3825
    %v3827 = vmul.f32 %v3695, 1.442695
    %v3828 = vpow.pop %v3827
    %v3829 = vmul.f32 %v3696, 1.442695
    %v3830 = vpow.pop %v3829
    %v3831 = vmul.f32 %v3697, 1.442695
    %v3832 = vpow.pop %v3831
    %v3833 = vmul.f32 %v3698, 1.442695
    %v3834 = vpow.pop %v3833
    %v3835 = vmul.f32 %v3699, 1.442695
    %v3836 = vpow.pop %v3835
    %v3837 = vmul.f32 %v3700, 1.442695
    %v3838 = vpow.pop %v3837
    %v3839 = vmul.f32 %v3701, 1.442695
    %v3840 = vpow.pop %v3839
    %v3841 = vmul.f32 %v3702, 1.442695
    %v3842 = vpow.pop %v3841
    %v3843 = vmul.f32 %v3703, 1.442695
    %v3844 = vpow.pop %v3843
    %v3845 = vmul.f32 %v3704, 1.442695
    %v3846 = vpow.pop %v3845
    %v3847 = vmul.f32 %v3705, 1.442695
    %v3848 = vpow.pop %v3847
    %v3849 = vmul.f32 %v3706, 1.442695
    %v3850 = vpow.pop %v3849
    %v3851 = vmul.f32 %v3707, 1.442695
    %v3852 = vpow.pop %v3851
    %v3853 = vmul.f32 %v3708, 1.442695
    %v3854 = vpow.pop %v3853
    %v3855 = vmul.f32 %v3709, 1.442695
    %v3856 = vpow.pop %v3855
    %v3857 = vmul.f32 %v3710, 1.442695
    %v3858 = vpow.pop %v3857
    %v3859 = vmul.f32 %v3711, 1.442695
    %v3860 = vpow.pop %v3859
    %v3861 = vmul.f32 %v3712, 1.442695
    %v3862 = vpow.pop %v3861
    %v3863 = vmul.f32 %v3713, 1.442695
    %v3864 = vpow.pop %v3863
    %v3865 = vmul.f32 %v3714, 1.442695
    %v3866 = vpow.pop %v3865
    %v3867 = vmul.f32 %v3715, 1.442695
    %v3868 = vpow.pop %v3867
    %v3869 = vmul.f32 %v3716, 1.442695
    %v3870 = vpow.pop %v3869
    %v3871 = vmul.f32 %v3717, 1.442695
    %v3872 = vpow.pop %v3871
    %v3873 = vmul.f32 %v3718, 1.442695
    %v3874 = vpow.pop %v3873
    %v3875 = vmul.f32 %v3719, 1.442695
    %v3876 = vpow.pop %v3875
    %v3877 = vmul.f32 %v3720, 1.442695
    %v3878 = vpow.pop %v3877
    %v3879 = vmul.f32 %v3721, 1.442695
    %v3880 = vpow.pop %v3879
    %v3881 = vmul.f32 %v3722, 1.442695
    %v3882 = vpow.pop %v3881
    %v3883 = vmul.f32 %v3723, 1.442695
    %v3884 = vpow.pop %v3883
    %v3885 = vmul.f32 %v3724, 1.442695
    %v3886 = vpow.pop %v3885
    %v3887 = vmul.f32 %v3725, 1.442695
    %v3888 = vpow.pop %v3887
    %v3889 = vmul.f32 %v3726, 1.442695
    %v3890 = vpow.pop %v3889
    %v3891 = vmul.f32 %v3727, 1.442695
    %v3892 = vpow.pop %v3891
    %v3893 = vmul.f32 %v3728, 1.442695
    %v3894 = vpow.pop %v3893
    %v3895 = vmul.f32 %v3729, 1.442695
    %v3896 = vpow.pop %v3895
    %v3897 = vmul.f32 %v3730, 1.442695
    %v3898 = vpow.pop %v3897
    %v3899 = vmul.f32 %v3731, 1.442695
    %v3900 = vpow.pop %v3899
    %v3901 = vmul.f32 %v3732, 1.442695
    %v3902 = vpow.pop %v3901
    %v3903 = vmul.f32 %v3733, 1.442695
    %v3904 = vpow.pop %v3903
    %v3905 = vmul.f32 %v3734, 1.442695
    %v3906 = vpow.pop %v3905
    %v3907 = vmul.f32 %v3735, 1.442695
    %v3908 = vpow.pop %v3907
    %v3909 = vmul.f32 %v3736, 1.442695
    %v3910 = vpow.pop %v3909
    %v3911 = vmul.f32 %v3737, 1.442695
    %v3912 = vpow.pop %v3911
    %v3913 = vmul.f32 %v3738, 1.442695
    %v3914 = vpow.pop %v3913
    %v3915 = vmul.f32 %v3739, 1.442695
    %v3916 = vpow.pop %v3915
    %v3917 = vmul.f32 %v3740, 1.442695
    %v3918 = vpow.pop %v3917
    %v3919 = vmul.f32 %v3741, 1.442695
    %v3920 = vpow.pop %v3919
    %v3921 = vmul.f32 %v3742, 1.442695
    %v3922 = vpow.pop %v3921
    %v3923 = vmul.f32 %v3743, 1.442695
    %v3924 = vpow.pop %v3923
    %v3925 = vmul.f32 %v3744, 1.442695
    %v3926 = vpow.pop %v3925
    %v3927 = vmul.f32 %v3745, 1.442695
    %v3928 = vpow.pop %v3927
    %v3929 = vmul.f32 %v3746, 1.442695
    %v3930 = vpow.pop %v3929
    %v3931 = vmul.f32 %v3747, 1.442695
    %v3932 = vpow.pop %v3931
    %v3933 = vmul.f32 %v3748, 1.442695
    %v3934 = vpow.pop %v3933
    %v3935 = vmul.f32 %v3749, 1.442695
    %v3936 = vpow.pop %v3935
    %v3937 = vmul.f32 %v3750, 1.442695
    %v3938 = vpow.pop %v3937
    %v3939 = vmul.f32 %v3751, 1.442695
    %v3940 = vpow.pop %v3939
    %v3941 = vmul.f32 %v3752, 1.442695
    %v3942 = vpow.pop %v3941
    %v3943 = vmul.f32 %v3753, 1.442695
    %v3944 = vpow.pop %v3943
    %v3945 = vmul.f32 %v3754, 1.442695
    %v3946 = vpow.pop %v3945
    %v3947 = vmul.f32 %v3755, 1.442695
    %v3948 = vpow.pop %v3947
    %v3949 = vmul.f32 %v3756, 1.442695
    %v3950 = vpow.pop %v3949
    %v3951 = vmul.f32 %v3757, 1.442695
    %v3952 = vpow.pop %v3951
    %v3953 = vmul.f32 %v3758, 1.442695
    %v3954 = vpow.pop %v3953
    %v3955 = vmul.f32 %v3759, 1.442695
    %v3956 = vpow.pop %v3955
    %v3957 = vmul.f32 %v3760, 1.442695
    %v3958 = vpow.pop %v3957
    %v3959 = vmul.f32 %v3761, 1.442695
    %v3960 = vpow.pop %v3959
    %v3961 = vmul.f32 %v3762, 1.442695
    %v3962 = vpow.pop %v3961
    %v3963 = vmul.f32 %v3763, 1.442695
    %v3964 = vpow.pop %v3963
    %v3965 = vmul.f32 %v3764, 1.442695
    %v3966 = vpow.pop %v3965
    %v3967 = vmul.f32 %v3765, 1.442695
    %v3968 = vpow.pop %v3967
    %v3969 = vmul.f32 %v3766, 1.442695
    %v3970 = vpow.pop %v3969
    %v3971 = vmul.f32 %v3767, 1.442695
    %v3972 = vpow.pop %v3971
    %v3973 = vmul.f32 %v3768, 1.442695
    %v3974 = vpow.pop %v3973
    %v3975 = vmul.f32 %v3769, 1.442695
    %v3976 = vpow.pop %v3975
    %v3977 = vmul.f32 %v3770, 1.442695
    %v3978 = vpow.pop %v3977
    %v3979 = vmul.f32 %v3771, 1.442695
    %v3980 = vpow.pop %v3979
    %v3981 = vmul.f32 %v3772, 1.442695
    %v3982 = vpow.pop %v3981
    %v3983 = vmul.f32 %v3773, 1.442695
    %v3984 = vpow.pop %v3983
    %v3985 = vmul.f32 %v3774, 1.442695
    %v3986 = vpow.pop %v3985
    %v3987 = vmul.f32 %v3775, 1.442695
    %v3988 = vpow.pop %v3987
    %v3989 = vmul.f32 %v3776, 1.442695
    %v3990 = vpow.pop %v3989
    %v3991 = vmul.f32 %v3777, 1.442695
    %v3992 = vpow.pop %v3991
    %v3993 = vmul.f32 %v3778, 1.442695
    %v3994 = vpow.pop %v3993
    %v3995 = vmul.f32 %v3779, 1.442695
    %v3996 = vpow.pop %v3995
    %v3997 = vmul.f32 %v3780, 1.442695
    %v3998 = vpow.pop %v3997
    %v3999 = vmul.f32 %v3781, 1.442695
    %v4000 = vpow.pop %v3999
    %v4001 = vmul.f32 %v3782, 1.442695
    %v4002 = vpow.pop %v4001
    %v4003 = vmul.f32 %v3783, 1.442695
    %v4004 = vpow.pop %v4003
    %v4005 = vmul.f32 %v3784, 1.442695
    %v4006 = vpow.pop %v4005
    %v4007 = vmul.f32 %v3785, 1.442695
    %v4008 = vpow.pop %v4007
    %v4009 = vmul.f32 %v3786, 1.442695
    %v4010 = vpow.pop %v4009
    %v4011 = vmul.f32 %v3787, 1.442695
    %v4012 = vpow.pop %v4011
    %v4013 = vmul.f32 %v3788, 1.442695
    %v4014 = vpow.pop %v4013
    %v4015 = vmul.f32 %v3789, 1.442695
    %v4016 = vpow.pop %v4015
    %v4017 = vmul.f32 %v3790, 1.442695
    %v4018 = vpow.pop %v4017
    %v4019 = vmul.f32 %v3791, 1.442695
    %v4020 = vpow.pop %v4019
    %v4021 = vmul.f32 %v3792, 1.442695
    %v4022 = vpow.pop %v4021
    %v4023 = vmul.f32 %v3793, 1.442695
    %v4024 = vpow.pop %v4023
    %v4025 = vmul.f32 %v3794, 1.442695
    %v4026 = vpow.pop %v4025
    %v4027 = vmul.f32 %v3795, 1.442695
    %v4028 = vpow.pop %v4027
    %v4029 = vmul.f32 %v3796, 1.442695
    %v4030 = vpow.pop %v4029
    %v4031 = vmul.f32 %v3797, 1.442695
    %v4032 = vpow.pop %v4031
    %v4033 = vmul.f32 %v3798, 1.442695
    %v4034 = vpow.pop %v4033
    %v4035 = vmul.f32 %v3799, 1.442695
    %v4036 = vpow.pop %v4035
    %v4037 = vmul.f32 %v3800, 1.442695
    %v4038 = vpow.pop %v4037
    %v4039 = vmul.f32 %v3801, 1.442695
    %v4040 = vpow.pop %v4039
    %v4041 = vmul.f32 %v3802, 1.442695
    %v4042 = vpow.pop %v4041
    %v4043 = vmul.f32 %v3803, 1.442695
    %v4044 = vpow.pop %v4043
    %v4045 = vmul.f32 %v3804, 1.442695
    %v4046 = vpow.pop %v4045
    %v4047 = vmul.f32 %v3805, 1.442695
    %v4048 = vpow.pop %v4047
    %v4049 = vmul.f32 %v3806, 1.442695
    %v4050 = vpow.pop %v4049
    %v4051 = vmul.f32 %v3807, 1.442695
    %v4052 = vpow.pop %v4051
    %v4053 = vmul.f32 %v3808, 1.442695
    %v4054 = vpow.pop %v4053
    %v4055 = vmul.f32 %v3809, 1.442695
    %v4056 = vpow.pop %v4055
    %v4057 = vmul.f32 %v3810, 1.442695
    %v4058 = vpow.pop %v4057
    %v4059 = vmul.f32 %v3811, 1.442695
    %v4060 = vpow.pop %v4059
    %v4061 = vmul.f32 %v3812, 1.442695
    %v4062 = vpow.pop %v4061
    %v4063 = vmul.f32 %v3813, 1.442695
    %v4064 = vpow.pop %v4063
    %v4065 = vmul.f32 %v3814, 1.442695
    %v4066 = vpow.pop %v4065
    %v4067 = vmul.f32 %v3815, 1.442695
    %v4068 = vpow.pop %v4067
    %v4069 = vmul.f32 %v3816, 1.442695
    %v4070 = vpow.pop %v4069
    %v4071 = vmul.f32 %v3817, 1.442695
    %v4072 = vpow.pop %v4071
    %v4073 = vmul.f32 %v3818, 1.442695
    %v4074 = vpow.pop %v4073
    %v4076 = vlaneseq
    %v4077 = vshrl.u32 %v4076, 7
    %v4078 = vsub.s32 0, %v4077
    %v4079 = vrot.slane %v308, %v4078
    %4081 = vbcast.lane.b32.xlu0 %v4079, 256
    %v4082 = vpop.permute.xlu0 %4081
    %s4084 = sor.u32 256, 8
    %4085 = vbcast.lane.b32.xlu0 %v4079, %s4084
    %v4086 = vpop.permute.xlu0 %4085
    %s4088 = sor.u32 256, 16
    %4089 = vbcast.lane.b32.xlu0 %v4079, %s4088
    %v4090 = vpop.permute.xlu0 %4089
    %s4092 = sor.u32 256, 24
    %4093 = vbcast.lane.b32.xlu0 %v4079, %s4092
    %v4094 = vpop.permute.xlu0 %4093
    %s4096 = sor.u32 256, 32
    %4097 = vbcast.lane.b32.xlu0 %v4079, %s4096
    %v4098 = vpop.permute.xlu0 %4097
    %s4100 = sor.u32 256, 40
    %4101 = vbcast.lane.b32.xlu0 %v4079, %s4100
    %v4102 = vpop.permute.xlu0 %4101
    %s4104 = sor.u32 256, 48
    %4105 = vbcast.lane.b32.xlu0 %v4079, %s4104
    %v4106 = vpop.permute.xlu0 %4105
    %s4108 = sor.u32 256, 56
    %4109 = vbcast.lane.b32.xlu0 %v4079, %s4108
    %v4110 = vpop.permute.xlu0 %4109
    %s4112 = sor.u32 256, 64
    %4113 = vbcast.lane.b32.xlu0 %v4079, %s4112
    %v4114 = vpop.permute.xlu0 %4113
    %s4116 = sor.u32 256, 72
    %4117 = vbcast.lane.b32.xlu0 %v4079, %s4116
    %v4118 = vpop.permute.xlu0 %4117
    %s4120 = sor.u32 256, 80
    %4121 = vbcast.lane.b32.xlu0 %v4079, %s4120
    %v4122 = vpop.permute.xlu0 %4121
    %s4124 = sor.u32 256, 88
    %4125 = vbcast.lane.b32.xlu0 %v4079, %s4124
    %v4126 = vpop.permute.xlu0 %4125
    %s4128 = sor.u32 256, 96
    %4129 = vbcast.lane.b32.xlu0 %v4079, %s4128
    %v4130 = vpop.permute.xlu0 %4129
    %s4132 = sor.u32 256, 104
    %4133 = vbcast.lane.b32.xlu0 %v4079, %s4132
    %v4134 = vpop.permute.xlu0 %4133
    %s4136 = sor.u32 256, 112
    %4137 = vbcast.lane.b32.xlu0 %v4079, %s4136
    %v4138 = vpop.permute.xlu0 %4137
    %s4140 = sor.u32 256, 120
    %4141 = vbcast.lane.b32.xlu0 %v4079, %s4140
    %v4142 = vpop.permute.xlu0 %4141
    %v4143 = vlaneseq
    %v4144 = vshrl.u32 %v4143, 7
    %v4145 = vsub.s32 1, %v4144
    %v4146 = vrot.slane %v308, %v4145
    %4148 = vbcast.lane.b32.xlu0 %v4146, 256
    %v4149 = vpop.permute.xlu0 %4148
    %s4151 = sor.u32 256, 8
    %4152 = vbcast.lane.b32.xlu0 %v4146, %s4151
    %v4153 = vpop.permute.xlu0 %4152
    %s4155 = sor.u32 256, 16
    %4156 = vbcast.lane.b32.xlu0 %v4146, %s4155
    %v4157 = vpop.permute.xlu0 %4156
    %s4159 = sor.u32 256, 24
    %4160 = vbcast.lane.b32.xlu0 %v4146, %s4159
    %v4161 = vpop.permute.xlu0 %4160
    %s4163 = sor.u32 256, 32
    %4164 = vbcast.lane.b32.xlu0 %v4146, %s4163
    %v4165 = vpop.permute.xlu0 %4164
    %s4167 = sor.u32 256, 40
    %4168 = vbcast.lane.b32.xlu0 %v4146, %s4167
    %v4169 = vpop.permute.xlu0 %4168
    %s4171 = sor.u32 256, 48
    %4172 = vbcast.lane.b32.xlu0 %v4146, %s4171
    %v4173 = vpop.permute.xlu0 %4172
    %s4175 = sor.u32 256, 56
    %4176 = vbcast.lane.b32.xlu0 %v4146, %s4175
    %v4177 = vpop.permute.xlu0 %4176
    %s4179 = sor.u32 256, 64
    %4180 = vbcast.lane.b32.xlu0 %v4146, %s4179
    %v4181 = vpop.permute.xlu0 %4180
    %s4183 = sor.u32 256, 72
    %4184 = vbcast.lane.b32.xlu0 %v4146, %s4183
    %v4185 = vpop.permute.xlu0 %4184
    %s4187 = sor.u32 256, 80
    %4188 = vbcast.lane.b32.xlu0 %v4146, %s4187
    %v4189 = vpop.permute.xlu0 %4188
    %s4191 = sor.u32 256, 88
    %4192 = vbcast.lane.b32.xlu0 %v4146, %s4191
    %v4193 = vpop.permute.xlu0 %4192
    %s4195 = sor.u32 256, 96
    %4196 = vbcast.lane.b32.xlu0 %v4146, %s4195
    %v4197 = vpop.permute.xlu0 %4196
    %s4199 = sor.u32 256, 104
    %4200 = vbcast.lane.b32.xlu0 %v4146, %s4199
    %v4201 = vpop.permute.xlu0 %4200
    %s4203 = sor.u32 256, 112
    %4204 = vbcast.lane.b32.xlu0 %v4146, %s4203
    %v4205 = vpop.permute.xlu0 %4204
    %s4207 = sor.u32 256, 120
    %4208 = vbcast.lane.b32.xlu0 %v4146, %s4207
    %v4209 = vpop.permute.xlu0 %4208
    %v4210 = vlaneseq
    %v4211 = vshrl.u32 %v4210, 7
    %v4212 = vsub.s32 2, %v4211
    %v4213 = vrot.slane %v308, %v4212
    %4215 = vbcast.lane.b32.xlu0 %v4213, 256
    %v4216 = vpop.permute.xlu0 %4215
    %s4218 = sor.u32 256, 8
    %4219 = vbcast.lane.b32.xlu0 %v4213, %s4218
    %v4220 = vpop.permute.xlu0 %4219
    %s4222 = sor.u32 256, 16
    %4223 = vbcast.lane.b32.xlu0 %v4213, %s4222
    %v4224 = vpop.permute.xlu0 %4223
    %s4226 = sor.u32 256, 24
    %4227 = vbcast.lane.b32.xlu0 %v4213, %s4226
    %v4228 = vpop.permute.xlu0 %4227
    %s4230 = sor.u32 256, 32
    %4231 = vbcast.lane.b32.xlu0 %v4213, %s4230
    %v4232 = vpop.permute.xlu0 %4231
    %s4234 = sor.u32 256, 40
    %4235 = vbcast.lane.b32.xlu0 %v4213, %s4234
    %v4236 = vpop.permute.xlu0 %4235
    %s4238 = sor.u32 256, 48
    %4239 = vbcast.lane.b32.xlu0 %v4213, %s4238
    %v4240 = vpop.permute.xlu0 %4239
    %s4242 = sor.u32 256, 56
    %4243 = vbcast.lane.b32.xlu0 %v4213, %s4242
    %v4244 = vpop.permute.xlu0 %4243
    %s4246 = sor.u32 256, 64
    %4247 = vbcast.lane.b32.xlu0 %v4213, %s4246
    %v4248 = vpop.permute.xlu0 %4247
    %s4250 = sor.u32 256, 72
    %4251 = vbcast.lane.b32.xlu0 %v4213, %s4250
    %v4252 = vpop.permute.xlu0 %4251
    %s4254 = sor.u32 256, 80
    %4255 = vbcast.lane.b32.xlu0 %v4213, %s4254
    %v4256 = vpop.permute.xlu0 %4255
    %s4258 = sor.u32 256, 88
    %4259 = vbcast.lane.b32.xlu0 %v4213, %s4258
    %v4260 = vpop.permute.xlu0 %4259
    %s4262 = sor.u32 256, 96
    %4263 = vbcast.lane.b32.xlu0 %v4213, %s4262
    %v4264 = vpop.permute.xlu0 %4263
    %s4266 = sor.u32 256, 104
    %4267 = vbcast.lane.b32.xlu0 %v4213, %s4266
    %v4268 = vpop.permute.xlu0 %4267
    %s4270 = sor.u32 256, 112
    %4271 = vbcast.lane.b32.xlu0 %v4213, %s4270
    %v4272 = vpop.permute.xlu0 %4271
    %s4274 = sor.u32 256, 120
    %4275 = vbcast.lane.b32.xlu0 %v4213, %s4274
    %v4276 = vpop.permute.xlu0 %4275
    %v4277 = vlaneseq
    %v4278 = vshrl.u32 %v4277, 7
    %v4279 = vsub.s32 3, %v4278
    %v4280 = vrot.slane %v308, %v4279
    %4282 = vbcast.lane.b32.xlu0 %v4280, 256
    %v4283 = vpop.permute.xlu0 %4282
    %s4285 = sor.u32 256, 8
    %4286 = vbcast.lane.b32.xlu0 %v4280, %s4285
    %v4287 = vpop.permute.xlu0 %4286
    %s4289 = sor.u32 256, 16
    %4290 = vbcast.lane.b32.xlu0 %v4280, %s4289
    %v4291 = vpop.permute.xlu0 %4290
    %s4293 = sor.u32 256, 24
    %4294 = vbcast.lane.b32.xlu0 %v4280, %s4293
    %v4295 = vpop.permute.xlu0 %4294
    %s4297 = sor.u32 256, 32
    %4298 = vbcast.lane.b32.xlu0 %v4280, %s4297
    %v4299 = vpop.permute.xlu0 %4298
    %s4301 = sor.u32 256, 40
    %4302 = vbcast.lane.b32.xlu0 %v4280, %s4301
    %v4303 = vpop.permute.xlu0 %4302
    %s4305 = sor.u32 256, 48
    %4306 = vbcast.lane.b32.xlu0 %v4280, %s4305
    %v4307 = vpop.permute.xlu0 %4306
    %s4309 = sor.u32 256, 56
    %4310 = vbcast.lane.b32.xlu0 %v4280, %s4309
    %v4311 = vpop.permute.xlu0 %4310
    %s4313 = sor.u32 256, 64
    %4314 = vbcast.lane.b32.xlu0 %v4280, %s4313
    %v4315 = vpop.permute.xlu0 %4314
    %s4317 = sor.u32 256, 72
    %4318 = vbcast.lane.b32.xlu0 %v4280, %s4317
    %v4319 = vpop.permute.xlu0 %4318
    %s4321 = sor.u32 256, 80
    %4322 = vbcast.lane.b32.xlu0 %v4280, %s4321
    %v4323 = vpop.permute.xlu0 %4322
    %s4325 = sor.u32 256, 88
    %4326 = vbcast.lane.b32.xlu0 %v4280, %s4325
    %v4327 = vpop.permute.xlu0 %4326
    %s4329 = sor.u32 256, 96
    %4330 = vbcast.lane.b32.xlu0 %v4280, %s4329
    %v4331 = vpop.permute.xlu0 %4330
    %s4333 = sor.u32 256, 104
    %4334 = vbcast.lane.b32.xlu0 %v4280, %s4333
    %v4335 = vpop.permute.xlu0 %4334
    %s4337 = sor.u32 256, 112
    %4338 = vbcast.lane.b32.xlu0 %v4280, %s4337
    %v4339 = vpop.permute.xlu0 %4338
    %s4341 = sor.u32 256, 120
    %4342 = vbcast.lane.b32.xlu0 %v4280, %s4341
    %v4343 = vpop.permute.xlu0 %4342
    %v4344 = vlaneseq
    %v4345 = vshrl.u32 %v4344, 7
    %v4346 = vsub.s32 4, %v4345
    %v4347 = vrot.slane %v308, %v4346
    %4349 = vbcast.lane.b32.xlu0 %v4347, 256
    %v4350 = vpop.permute.xlu0 %4349
    %s4352 = sor.u32 256, 8
    %4353 = vbcast.lane.b32.xlu0 %v4347, %s4352
    %v4354 = vpop.permute.xlu0 %4353
    %s4356 = sor.u32 256, 16
    %4357 = vbcast.lane.b32.xlu0 %v4347, %s4356
    %v4358 = vpop.permute.xlu0 %4357
    %s4360 = sor.u32 256, 24
    %4361 = vbcast.lane.b32.xlu0 %v4347, %s4360
    %v4362 = vpop.permute.xlu0 %4361
    %s4364 = sor.u32 256, 32
    %4365 = vbcast.lane.b32.xlu0 %v4347, %s4364
    %v4366 = vpop.permute.xlu0 %4365
    %s4368 = sor.u32 256, 40
    %4369 = vbcast.lane.b32.xlu0 %v4347, %s4368
    %v4370 = vpop.permute.xlu0 %4369
    %s4372 = sor.u32 256, 48
    %4373 = vbcast.lane.b32.xlu0 %v4347, %s4372
    %v4374 = vpop.permute.xlu0 %4373
    %s4376 = sor.u32 256, 56
    %4377 = vbcast.lane.b32.xlu0 %v4347, %s4376
    %v4378 = vpop.permute.xlu0 %4377
    %s4380 = sor.u32 256, 64
    %4381 = vbcast.lane.b32.xlu0 %v4347, %s4380
    %v4382 = vpop.permute.xlu0 %4381
    %s4384 = sor.u32 256, 72
    %4385 = vbcast.lane.b32.xlu0 %v4347, %s4384
    %v4386 = vpop.permute.xlu0 %4385
    %s4388 = sor.u32 256, 80
    %4389 = vbcast.lane.b32.xlu0 %v4347, %s4388
    %v4390 = vpop.permute.xlu0 %4389
    %s4392 = sor.u32 256, 88
    %4393 = vbcast.lane.b32.xlu0 %v4347, %s4392
    %v4394 = vpop.permute.xlu0 %4393
    %s4396 = sor.u32 256, 96
    %4397 = vbcast.lane.b32.xlu0 %v4347, %s4396
    %v4398 = vpop.permute.xlu0 %4397
    %s4400 = sor.u32 256, 104
    %4401 = vbcast.lane.b32.xlu0 %v4347, %s4400
    %v4402 = vpop.permute.xlu0 %4401
    %s4404 = sor.u32 256, 112
    %4405 = vbcast.lane.b32.xlu0 %v4347, %s4404
    %v4406 = vpop.permute.xlu0 %4405
    %s4408 = sor.u32 256, 120
    %4409 = vbcast.lane.b32.xlu0 %v4347, %s4408
    %v4410 = vpop.permute.xlu0 %4409
    %v4411 = vlaneseq
    %v4412 = vshrl.u32 %v4411, 7
    %v4413 = vsub.s32 5, %v4412
    %v4414 = vrot.slane %v308, %v4413
    %4416 = vbcast.lane.b32.xlu0 %v4414, 256
    %v4417 = vpop.permute.xlu0 %4416
    %s4419 = sor.u32 256, 8
    %4420 = vbcast.lane.b32.xlu0 %v4414, %s4419
    %v4421 = vpop.permute.xlu0 %4420
    %s4423 = sor.u32 256, 16
    %4424 = vbcast.lane.b32.xlu0 %v4414, %s4423
    %v4425 = vpop.permute.xlu0 %4424
    %s4427 = sor.u32 256, 24
    %4428 = vbcast.lane.b32.xlu0 %v4414, %s4427
    %v4429 = vpop.permute.xlu0 %4428
    %s4431 = sor.u32 256, 32
    %4432 = vbcast.lane.b32.xlu0 %v4414, %s4431
    %v4433 = vpop.permute.xlu0 %4432
    %s4435 = sor.u32 256, 40
    %4436 = vbcast.lane.b32.xlu0 %v4414, %s4435
    %v4437 = vpop.permute.xlu0 %4436
    %s4439 = sor.u32 256, 48
    %4440 = vbcast.lane.b32.xlu0 %v4414, %s4439
    %v4441 = vpop.permute.xlu0 %4440
    %s4443 = sor.u32 256, 56
    %4444 = vbcast.lane.b32.xlu0 %v4414, %s4443
    %v4445 = vpop.permute.xlu0 %4444
    %s4447 = sor.u32 256, 64
    %4448 = vbcast.lane.b32.xlu0 %v4414, %s4447
    %v4449 = vpop.permute.xlu0 %4448
    %s4451 = sor.u32 256, 72
    %4452 = vbcast.lane.b32.xlu0 %v4414, %s4451
    %v4453 = vpop.permute.xlu0 %4452
    %s4455 = sor.u32 256, 80
    %4456 = vbcast.lane.b32.xlu0 %v4414, %s4455
    %v4457 = vpop.permute.xlu0 %4456
    %s4459 = sor.u32 256, 88
    %4460 = vbcast.lane.b32.xlu0 %v4414, %s4459
    %v4461 = vpop.permute.xlu0 %4460
    %s4463 = sor.u32 256, 96
    %4464 = vbcast.lane.b32.xlu0 %v4414, %s4463
    %v4465 = vpop.permute.xlu0 %4464
    %s4467 = sor.u32 256, 104
    %4468 = vbcast.lane.b32.xlu0 %v4414, %s4467
    %v4469 = vpop.permute.xlu0 %4468
    %s4471 = sor.u32 256, 112
    %4472 = vbcast.lane.b32.xlu0 %v4414, %s4471
    %v4473 = vpop.permute.xlu0 %4472
    %s4475 = sor.u32 256, 120
    %4476 = vbcast.lane.b32.xlu0 %v4414, %s4475
    %v4477 = vpop.permute.xlu0 %4476
    %v4478 = vlaneseq
    %v4479 = vshrl.u32 %v4478, 7
    %v4480 = vsub.s32 6, %v4479
    %v4481 = vrot.slane %v308, %v4480
    %4483 = vbcast.lane.b32.xlu0 %v4481, 256
    %v4484 = vpop.permute.xlu0 %4483
    %s4486 = sor.u32 256, 8
    %4487 = vbcast.lane.b32.xlu0 %v4481, %s4486
    %v4488 = vpop.permute.xlu0 %4487
    %s4490 = sor.u32 256, 16
    %4491 = vbcast.lane.b32.xlu0 %v4481, %s4490
    %v4492 = vpop.permute.xlu0 %4491
    %s4494 = sor.u32 256, 24
    %4495 = vbcast.lane.b32.xlu0 %v4481, %s4494
    %v4496 = vpop.permute.xlu0 %4495
    %s4498 = sor.u32 256, 32
    %4499 = vbcast.lane.b32.xlu0 %v4481, %s4498
    %v4500 = vpop.permute.xlu0 %4499
    %s4502 = sor.u32 256, 40
    %4503 = vbcast.lane.b32.xlu0 %v4481, %s4502
    %v4504 = vpop.permute.xlu0 %4503
    %s4506 = sor.u32 256, 48
    %4507 = vbcast.lane.b32.xlu0 %v4481, %s4506
    %v4508 = vpop.permute.xlu0 %4507
    %s4510 = sor.u32 256, 56
    %4511 = vbcast.lane.b32.xlu0 %v4481, %s4510
    %v4512 = vpop.permute.xlu0 %4511
    %s4514 = sor.u32 256, 64
    %4515 = vbcast.lane.b32.xlu0 %v4481, %s4514
    %v4516 = vpop.permute.xlu0 %4515
    %s4518 = sor.u32 256, 72
    %4519 = vbcast.lane.b32.xlu0 %v4481, %s4518
    %v4520 = vpop.permute.xlu0 %4519
    %s4522 = sor.u32 256, 80
    %4523 = vbcast.lane.b32.xlu0 %v4481, %s4522
    %v4524 = vpop.permute.xlu0 %4523
    %s4526 = sor.u32 256, 88
    %4527 = vbcast.lane.b32.xlu0 %v4481, %s4526
    %v4528 = vpop.permute.xlu0 %4527
    %s4530 = sor.u32 256, 96
    %4531 = vbcast.lane.b32.xlu0 %v4481, %s4530
    %v4532 = vpop.permute.xlu0 %4531
    %s4534 = sor.u32 256, 104
    %4535 = vbcast.lane.b32.xlu0 %v4481, %s4534
    %v4536 = vpop.permute.xlu0 %4535
    %s4538 = sor.u32 256, 112
    %4539 = vbcast.lane.b32.xlu0 %v4481, %s4538
    %v4540 = vpop.permute.xlu0 %4539
    %s4542 = sor.u32 256, 120
    %4543 = vbcast.lane.b32.xlu0 %v4481, %s4542
    %v4544 = vpop.permute.xlu0 %4543
    %v4545 = vlaneseq
    %v4546 = vshrl.u32 %v4545, 7
    %v4547 = vsub.s32 7, %v4546
    %v4548 = vrot.slane %v308, %v4547
    %4550 = vbcast.lane.b32.xlu0 %v4548, 256
    %v4551 = vpop.permute.xlu0 %4550
    %s4553 = sor.u32 256, 8
    %4554 = vbcast.lane.b32.xlu0 %v4548, %s4553
    %v4555 = vpop.permute.xlu0 %4554
    %s4557 = sor.u32 256, 16
    %4558 = vbcast.lane.b32.xlu0 %v4548, %s4557
    %v4559 = vpop.permute.xlu0 %4558
    %s4561 = sor.u32 256, 24
    %4562 = vbcast.lane.b32.xlu0 %v4548, %s4561
    %v4563 = vpop.permute.xlu0 %4562
    %s4565 = sor.u32 256, 32
    %4566 = vbcast.lane.b32.xlu0 %v4548, %s4565
    %v4567 = vpop.permute.xlu0 %4566
    %s4569 = sor.u32 256, 40
    %4570 = vbcast.lane.b32.xlu0 %v4548, %s4569
    %v4571 = vpop.permute.xlu0 %4570
    %s4573 = sor.u32 256, 48
    %4574 = vbcast.lane.b32.xlu0 %v4548, %s4573
    %v4575 = vpop.permute.xlu0 %4574
    %s4577 = sor.u32 256, 56
    %4578 = vbcast.lane.b32.xlu0 %v4548, %s4577
    %v4579 = vpop.permute.xlu0 %4578
    %s4581 = sor.u32 256, 64
    %4582 = vbcast.lane.b32.xlu0 %v4548, %s4581
    %v4583 = vpop.permute.xlu0 %4582
    %s4585 = sor.u32 256, 72
    %4586 = vbcast.lane.b32.xlu0 %v4548, %s4585
    %v4587 = vpop.permute.xlu0 %4586
    %s4589 = sor.u32 256, 80
    %4590 = vbcast.lane.b32.xlu0 %v4548, %s4589
    %v4591 = vpop.permute.xlu0 %4590
    %s4593 = sor.u32 256, 88
    %4594 = vbcast.lane.b32.xlu0 %v4548, %s4593
    %v4595 = vpop.permute.xlu0 %4594
    %s4597 = sor.u32 256, 96
    %4598 = vbcast.lane.b32.xlu0 %v4548, %s4597
    %v4599 = vpop.permute.xlu0 %4598
    %s4601 = sor.u32 256, 104
    %4602 = vbcast.lane.b32.xlu0 %v4548, %s4601
    %v4603 = vpop.permute.xlu0 %4602
    %s4605 = sor.u32 256, 112
    %4606 = vbcast.lane.b32.xlu0 %v4548, %s4605
    %v4607 = vpop.permute.xlu0 %4606
    %s4609 = sor.u32 256, 120
    %4610 = vbcast.lane.b32.xlu0 %v4548, %s4609
    %v4611 = vpop.permute.xlu0 %4610
    %v4740 = vmul.f32 %v3820, %v4082
    %v4741 = vmul.f32 %v3822, %v4086
    %v4742 = vmul.f32 %v3824, %v4090
    %v4743 = vmul.f32 %v3826, %v4094
    %v4744 = vmul.f32 %v3828, %v4098
    %v4745 = vmul.f32 %v3830, %v4102
    %v4746 = vmul.f32 %v3832, %v4106
    %v4747 = vmul.f32 %v3834, %v4110
    %v4748 = vmul.f32 %v3836, %v4114
    %v4749 = vmul.f32 %v3838, %v4118
    %v4750 = vmul.f32 %v3840, %v4122
    %v4751 = vmul.f32 %v3842, %v4126
    %v4752 = vmul.f32 %v3844, %v4130
    %v4753 = vmul.f32 %v3846, %v4134
    %v4754 = vmul.f32 %v3848, %v4138
    %v4755 = vmul.f32 %v3850, %v4142
    %v4756 = vmul.f32 %v3852, %v4149
    %v4757 = vmul.f32 %v3854, %v4153
    %v4758 = vmul.f32 %v3856, %v4157
    %v4759 = vmul.f32 %v3858, %v4161
    %v4760 = vmul.f32 %v3860, %v4165
    %v4761 = vmul.f32 %v3862, %v4169
    %v4762 = vmul.f32 %v3864, %v4173
    %v4763 = vmul.f32 %v3866, %v4177
    %v4764 = vmul.f32 %v3868, %v4181
    %v4765 = vmul.f32 %v3870, %v4185
    %v4766 = vmul.f32 %v3872, %v4189
    %v4767 = vmul.f32 %v3874, %v4193
    %v4768 = vmul.f32 %v3876, %v4197
    %v4769 = vmul.f32 %v3878, %v4201
    %v4770 = vmul.f32 %v3880, %v4205
    %v4771 = vmul.f32 %v3882, %v4209
    %v4772 = vmul.f32 %v3884, %v4216
    %v4773 = vmul.f32 %v3886, %v4220
    %v4774 = vmul.f32 %v3888, %v4224
    %v4775 = vmul.f32 %v3890, %v4228
    %v4776 = vmul.f32 %v3892, %v4232
    %v4777 = vmul.f32 %v3894, %v4236
    %v4778 = vmul.f32 %v3896, %v4240
    %v4779 = vmul.f32 %v3898, %v4244
    %v4780 = vmul.f32 %v3900, %v4248
    %v4781 = vmul.f32 %v3902, %v4252
    %v4782 = vmul.f32 %v3904, %v4256
    %v4783 = vmul.f32 %v3906, %v4260
    %v4784 = vmul.f32 %v3908, %v4264
    %v4785 = vmul.f32 %v3910, %v4268
    %v4786 = vmul.f32 %v3912, %v4272
    %v4787 = vmul.f32 %v3914, %v4276
    %v4788 = vmul.f32 %v3916, %v4283
    %v4789 = vmul.f32 %v3918, %v4287
    %v4790 = vmul.f32 %v3920, %v4291
    %v4791 = vmul.f32 %v3922, %v4295
    %v4792 = vmul.f32 %v3924, %v4299
    %v4793 = vmul.f32 %v3926, %v4303
    %v4794 = vmul.f32 %v3928, %v4307
    %v4795 = vmul.f32 %v3930, %v4311
    %v4796 = vmul.f32 %v3932, %v4315
    %v4797 = vmul.f32 %v3934, %v4319
    %v4798 = vmul.f32 %v3936, %v4323
    %v4799 = vmul.f32 %v3938, %v4327
    %v4800 = vmul.f32 %v3940, %v4331
    %v4801 = vmul.f32 %v3942, %v4335
    %v4802 = vmul.f32 %v3944, %v4339
    %v4803 = vmul.f32 %v3946, %v4343
    %v4804 = vmul.f32 %v3948, %v4350
    %v4805 = vmul.f32 %v3950, %v4354
    %v4806 = vmul.f32 %v3952, %v4358
    %v4807 = vmul.f32 %v3954, %v4362
    %v4808 = vmul.f32 %v3956, %v4366
    %v4809 = vmul.f32 %v3958, %v4370
    %v4810 = vmul.f32 %v3960, %v4374
    %v4811 = vmul.f32 %v3962, %v4378
    %v4812 = vmul.f32 %v3964, %v4382
    %v4813 = vmul.f32 %v3966, %v4386
    %v4814 = vmul.f32 %v3968, %v4390
    %v4815 = vmul.f32 %v3970, %v4394
    %v4816 = vmul.f32 %v3972, %v4398
    %v4817 = vmul.f32 %v3974, %v4402
    %v4818 = vmul.f32 %v3976, %v4406
    %v4819 = vmul.f32 %v3978, %v4410
    %v4820 = vmul.f32 %v3980, %v4417
    %v4821 = vmul.f32 %v3982, %v4421
    %v4822 = vmul.f32 %v3984, %v4425
    %v4823 = vmul.f32 %v3986, %v4429
    %v4824 = vmul.f32 %v3988, %v4433
    %v4825 = vmul.f32 %v3990, %v4437
    %v4826 = vmul.f32 %v3992, %v4441
    %v4827 = vmul.f32 %v3994, %v4445
    %v4828 = vmul.f32 %v3996, %v4449
    %v4829 = vmul.f32 %v3998, %v4453
    %v4830 = vmul.f32 %v4000, %v4457
    %v4831 = vmul.f32 %v4002, %v4461
    %v4832 = vmul.f32 %v4004, %v4465
    %v4833 = vmul.f32 %v4006, %v4469
    %v4834 = vmul.f32 %v4008, %v4473
    %v4835 = vmul.f32 %v4010, %v4477
    %v4836 = vmul.f32 %v4012, %v4484
    %v4837 = vmul.f32 %v4014, %v4488
    %v4838 = vmul.f32 %v4016, %v4492
    %v4839 = vmul.f32 %v4018, %v4496
    %v4840 = vmul.f32 %v4020, %v4500
    %v4841 = vmul.f32 %v4022, %v4504
    %v4842 = vmul.f32 %v4024, %v4508
    %v4843 = vmul.f32 %v4026, %v4512
    %v4844 = vmul.f32 %v4028, %v4516
    %v4845 = vmul.f32 %v4030, %v4520
    %v4846 = vmul.f32 %v4032, %v4524
    %v4847 = vmul.f32 %v4034, %v4528
    %v4848 = vmul.f32 %v4036, %v4532
    %v4849 = vmul.f32 %v4038, %v4536
    %v4850 = vmul.f32 %v4040, %v4540
    %v4851 = vmul.f32 %v4042, %v4544
    %v4852 = vmul.f32 %v4044, %v4551
    %v4853 = vmul.f32 %v4046, %v4555
    %v4854 = vmul.f32 %v4048, %v4559
    %v4855 = vmul.f32 %v4050, %v4563
    %v4856 = vmul.f32 %v4052, %v4567
    %v4857 = vmul.f32 %v4054, %v4571
    %v4858 = vmul.f32 %v4056, %v4575
    %v4859 = vmul.f32 %v4058, %v4579
    %v4860 = vmul.f32 %v4060, %v4583
    %v4861 = vmul.f32 %v4062, %v4587
    %v4862 = vmul.f32 %v4064, %v4591
    %v4863 = vmul.f32 %v4066, %v4595
    %v4864 = vmul.f32 %v4068, %v4599
    %v4865 = vmul.f32 %v4070, %v4603
    %v4866 = vmul.f32 %v4072, %v4607
    %v4867 = vmul.f32 %v4074, %v4611
    %4996 = vset.pattern.permute.xlu0 0
    %4997 = vperm.xlu0 %4996, %v4740
    %v4998 = vpop.permute.xlu0 %4997
    %4999 = vset.pattern.permute.xlu0 0
    %5000 = vperm.xlu0 %4999, %v4741
    %v5001 = vpop.permute.xlu0 %5000
    %5002 = vset.pattern.permute.xlu0 0
    %5003 = vperm.xlu0 %5002, %v4742
    %v5004 = vpop.permute.xlu0 %5003
    %5005 = vset.pattern.permute.xlu0 0
    %5006 = vperm.xlu0 %5005, %v4743
    %v5007 = vpop.permute.xlu0 %5006
    %5008 = vset.pattern.permute.xlu0 0
    %5009 = vperm.xlu0 %5008, %v4744
    %v5010 = vpop.permute.xlu0 %5009
    %5011 = vset.pattern.permute.xlu0 0
    %5012 = vperm.xlu0 %5011, %v4745
    %v5013 = vpop.permute.xlu0 %5012
    %5014 = vset.pattern.permute.xlu0 0
    %5015 = vperm.xlu0 %5014, %v4746
    %v5016 = vpop.permute.xlu0 %5015
    %5017 = vset.pattern.permute.xlu0 0
    %5018 = vperm.xlu0 %5017, %v4747
    %v5019 = vpop.permute.xlu0 %5018
    %5020 = vset.pattern.permute.xlu0 0
    %5021 = vperm.xlu0 %5020, %v4748
    %v5022 = vpop.permute.xlu0 %5021
    %5023 = vset.pattern.permute.xlu0 0
    %5024 = vperm.xlu0 %5023, %v4749
    %v5025 = vpop.permute.xlu0 %5024
    %5026 = vset.pattern.permute.xlu0 0
    %5027 = vperm.xlu0 %5026, %v4750
    %v5028 = vpop.permute.xlu0 %5027
    %5029 = vset.pattern.permute.xlu0 0
    %5030 = vperm.xlu0 %5029, %v4751
    %v5031 = vpop.permute.xlu0 %5030
    %5032 = vset.pattern.permute.xlu0 0
    %5033 = vperm.xlu0 %5032, %v4752
    %v5034 = vpop.permute.xlu0 %5033
    %5035 = vset.pattern.permute.xlu0 0
    %5036 = vperm.xlu0 %5035, %v4753
    %v5037 = vpop.permute.xlu0 %5036
    %5038 = vset.pattern.permute.xlu0 0
    %5039 = vperm.xlu0 %5038, %v4754
    %v5040 = vpop.permute.xlu0 %5039
    %5041 = vset.pattern.permute.xlu0 0
    %5042 = vperm.xlu0 %5041, %v4755
    %v5043 = vpop.permute.xlu0 %5042
    %5044 = vset.pattern.permute.xlu0 0
    %5045 = vperm.xlu0 %5044, %v4756
    %v5046 = vpop.permute.xlu0 %5045
    %5047 = vset.pattern.permute.xlu0 0
    %5048 = vperm.xlu0 %5047, %v4757
    %v5049 = vpop.permute.xlu0 %5048
    %5050 = vset.pattern.permute.xlu0 0
    %5051 = vperm.xlu0 %5050, %v4758
    %v5052 = vpop.permute.xlu0 %5051
    %5053 = vset.pattern.permute.xlu0 0
    %5054 = vperm.xlu0 %5053, %v4759
    %v5055 = vpop.permute.xlu0 %5054
    %5056 = vset.pattern.permute.xlu0 0
    %5057 = vperm.xlu0 %5056, %v4760
    %v5058 = vpop.permute.xlu0 %5057
    %5059 = vset.pattern.permute.xlu0 0
    %5060 = vperm.xlu0 %5059, %v4761
    %v5061 = vpop.permute.xlu0 %5060
    %5062 = vset.pattern.permute.xlu0 0
    %5063 = vperm.xlu0 %5062, %v4762
    %v5064 = vpop.permute.xlu0 %5063
    %5065 = vset.pattern.permute.xlu0 0
    %5066 = vperm.xlu0 %5065, %v4763
    %v5067 = vpop.permute.xlu0 %5066
    %5068 = vset.pattern.permute.xlu0 0
    %5069 = vperm.xlu0 %5068, %v4764
    %v5070 = vpop.permute.xlu0 %5069
    %5071 = vset.pattern.permute.xlu0 0
    %5072 = vperm.xlu0 %5071, %v4765
    %v5073 = vpop.permute.xlu0 %5072
    %5074 = vset.pattern.permute.xlu0 0
    %5075 = vperm.xlu0 %5074, %v4766
    %v5076 = vpop.permute.xlu0 %5075
    %5077 = vset.pattern.permute.xlu0 0
    %5078 = vperm.xlu0 %5077, %v4767
    %v5079 = vpop.permute.xlu0 %5078
    %5080 = vset.pattern.permute.xlu0 0
    %5081 = vperm.xlu0 %5080, %v4768
    %v5082 = vpop.permute.xlu0 %5081
    %5083 = vset.pattern.permute.xlu0 0
    %5084 = vperm.xlu0 %5083, %v4769
    %v5085 = vpop.permute.xlu0 %5084
    %5086 = vset.pattern.permute.xlu0 0
    %5087 = vperm.xlu0 %5086, %v4770
    %v5088 = vpop.permute.xlu0 %5087
    %5089 = vset.pattern.permute.xlu0 0
    %5090 = vperm.xlu0 %5089, %v4771
    %v5091 = vpop.permute.xlu0 %5090
    %5092 = vset.pattern.permute.xlu0 0
    %5093 = vperm.xlu0 %5092, %v4772
    %v5094 = vpop.permute.xlu0 %5093
    %5095 = vset.pattern.permute.xlu0 0
    %5096 = vperm.xlu0 %5095, %v4773
    %v5097 = vpop.permute.xlu0 %5096
    %5098 = vset.pattern.permute.xlu0 0
    %5099 = vperm.xlu0 %5098, %v4774
    %v5100 = vpop.permute.xlu0 %5099
    %5101 = vset.pattern.permute.xlu0 0
    %5102 = vperm.xlu0 %5101, %v4775
    %v5103 = vpop.permute.xlu0 %5102
    %5104 = vset.pattern.permute.xlu0 0
    %5105 = vperm.xlu0 %5104, %v4776
    %v5106 = vpop.permute.xlu0 %5105
    %5107 = vset.pattern.permute.xlu0 0
    %5108 = vperm.xlu0 %5107, %v4777
    %v5109 = vpop.permute.xlu0 %5108
    %5110 = vset.pattern.permute.xlu0 0
    %5111 = vperm.xlu0 %5110, %v4778
    %v5112 = vpop.permute.xlu0 %5111
    %5113 = vset.pattern.permute.xlu0 0
    %5114 = vperm.xlu0 %5113, %v4779
    %v5115 = vpop.permute.xlu0 %5114
    %5116 = vset.pattern.permute.xlu0 0
    %5117 = vperm.xlu0 %5116, %v4780
    %v5118 = vpop.permute.xlu0 %5117
    %5119 = vset.pattern.permute.xlu0 0
    %5120 = vperm.xlu0 %5119, %v4781
    %v5121 = vpop.permute.xlu0 %5120
    %5122 = vset.pattern.permute.xlu0 0
    %5123 = vperm.xlu0 %5122, %v4782
    %v5124 = vpop.permute.xlu0 %5123
    %5125 = vset.pattern.permute.xlu0 0
    %5126 = vperm.xlu0 %5125, %v4783
    %v5127 = vpop.permute.xlu0 %5126
    %5128 = vset.pattern.permute.xlu0 0
    %5129 = vperm.xlu0 %5128, %v4784
    %v5130 = vpop.permute.xlu0 %5129
    %5131 = vset.pattern.permute.xlu0 0
    %5132 = vperm.xlu0 %5131, %v4785
    %v5133 = vpop.permute.xlu0 %5132
    %5134 = vset.pattern.permute.xlu0 0
    %5135 = vperm.xlu0 %5134, %v4786
    %v5136 = vpop.permute.xlu0 %5135
    %5137 = vset.pattern.permute.xlu0 0
    %5138 = vperm.xlu0 %5137, %v4787
    %v5139 = vpop.permute.xlu0 %5138
    %5140 = vset.pattern.permute.xlu0 0
    %5141 = vperm.xlu0 %5140, %v4788
    %v5142 = vpop.permute.xlu0 %5141
    %5143 = vset.pattern.permute.xlu0 0
    %5144 = vperm.xlu0 %5143, %v4789
    %v5145 = vpop.permute.xlu0 %5144
    %5146 = vset.pattern.permute.xlu0 0
    %5147 = vperm.xlu0 %5146, %v4790
    %v5148 = vpop.permute.xlu0 %5147
    %5149 = vset.pattern.permute.xlu0 0
    %5150 = vperm.xlu0 %5149, %v4791
    %v5151 = vpop.permute.xlu0 %5150
    %5152 = vset.pattern.permute.xlu0 0
    %5153 = vperm.xlu0 %5152, %v4792
    %v5154 = vpop.permute.xlu0 %5153
    %5155 = vset.pattern.permute.xlu0 0
    %5156 = vperm.xlu0 %5155, %v4793
    %v5157 = vpop.permute.xlu0 %5156
    %5158 = vset.pattern.permute.xlu0 0
    %5159 = vperm.xlu0 %5158, %v4794
    %v5160 = vpop.permute.xlu0 %5159
    %5161 = vset.pattern.permute.xlu0 0
    %5162 = vperm.xlu0 %5161, %v4795
    %v5163 = vpop.permute.xlu0 %5162
    %5164 = vset.pattern.permute.xlu0 0
    %5165 = vperm.xlu0 %5164, %v4796
    %v5166 = vpop.permute.xlu0 %5165
    %5167 = vset.pattern.permute.xlu0 0
    %5168 = vperm.xlu0 %5167, %v4797
    %v5169 = vpop.permute.xlu0 %5168
    %5170 = vset.pattern.permute.xlu0 0
    %5171 = vperm.xlu0 %5170, %v4798
    %v5172 = vpop.permute.xlu0 %5171
    %5173 = vset.pattern.permute.xlu0 0
    %5174 = vperm.xlu0 %5173, %v4799
    %v5175 = vpop.permute.xlu0 %5174
    %5176 = vset.pattern.permute.xlu0 0
    %5177 = vperm.xlu0 %5176, %v4800
    %v5178 = vpop.permute.xlu0 %5177
    %5179 = vset.pattern.permute.xlu0 0
    %5180 = vperm.xlu0 %5179, %v4801
    %v5181 = vpop.permute.xlu0 %5180
    %5182 = vset.pattern.permute.xlu0 0
    %5183 = vperm.xlu0 %5182, %v4802
    %v5184 = vpop.permute.xlu0 %5183
    %5185 = vset.pattern.permute.xlu0 0
    %5186 = vperm.xlu0 %5185, %v4803
    %v5187 = vpop.permute.xlu0 %5186
    %5188 = vset.pattern.permute.xlu0 0
    %5189 = vperm.xlu0 %5188, %v4804
    %v5190 = vpop.permute.xlu0 %5189
    %5191 = vset.pattern.permute.xlu0 0
    %5192 = vperm.xlu0 %5191, %v4805
    %v5193 = vpop.permute.xlu0 %5192
    %5194 = vset.pattern.permute.xlu0 0
    %5195 = vperm.xlu0 %5194, %v4806
    %v5196 = vpop.permute.xlu0 %5195
    %5197 = vset.pattern.permute.xlu0 0
    %5198 = vperm.xlu0 %5197, %v4807
    %v5199 = vpop.permute.xlu0 %5198
    %5200 = vset.pattern.permute.xlu0 0
    %5201 = vperm.xlu0 %5200, %v4808
    %v5202 = vpop.permute.xlu0 %5201
    %5203 = vset.pattern.permute.xlu0 0
    %5204 = vperm.xlu0 %5203, %v4809
    %v5205 = vpop.permute.xlu0 %5204
    %5206 = vset.pattern.permute.xlu0 0
    %5207 = vperm.xlu0 %5206, %v4810
    %v5208 = vpop.permute.xlu0 %5207
    %5209 = vset.pattern.permute.xlu0 0
    %5210 = vperm.xlu0 %5209, %v4811
    %v5211 = vpop.permute.xlu0 %5210
    %5212 = vset.pattern.permute.xlu0 0
    %5213 = vperm.xlu0 %5212, %v4812
    %v5214 = vpop.permute.xlu0 %5213
    %5215 = vset.pattern.permute.xlu0 0
    %5216 = vperm.xlu0 %5215, %v4813
    %v5217 = vpop.permute.xlu0 %5216
    %5218 = vset.pattern.permute.xlu0 0
    %5219 = vperm.xlu0 %5218, %v4814
    %v5220 = vpop.permute.xlu0 %5219
    %5221 = vset.pattern.permute.xlu0 0
    %5222 = vperm.xlu0 %5221, %v4815
    %v5223 = vpop.permute.xlu0 %5222
    %5224 = vset.pattern.permute.xlu0 0
    %5225 = vperm.xlu0 %5224, %v4816
    %v5226 = vpop.permute.xlu0 %5225
    %5227 = vset.pattern.permute.xlu0 0
    %5228 = vperm.xlu0 %5227, %v4817
    %v5229 = vpop.permute.xlu0 %5228
    %5230 = vset.pattern.permute.xlu0 0
    %5231 = vperm.xlu0 %5230, %v4818
    %v5232 = vpop.permute.xlu0 %5231
    %5233 = vset.pattern.permute.xlu0 0
    %5234 = vperm.xlu0 %5233, %v4819
    %v5235 = vpop.permute.xlu0 %5234
    %5236 = vset.pattern.permute.xlu0 0
    %5237 = vperm.xlu0 %5236, %v4820
    %v5238 = vpop.permute.xlu0 %5237
    %5239 = vset.pattern.permute.xlu0 0
    %5240 = vperm.xlu0 %5239, %v4821
    %v5241 = vpop.permute.xlu0 %5240
    %5242 = vset.pattern.permute.xlu0 0
    %5243 = vperm.xlu0 %5242, %v4822
    %v5244 = vpop.permute.xlu0 %5243
    %5245 = vset.pattern.permute.xlu0 0
    %5246 = vperm.xlu0 %5245, %v4823
    %v5247 = vpop.permute.xlu0 %5246
    %5248 = vset.pattern.permute.xlu0 0
    %5249 = vperm.xlu0 %5248, %v4824
    %v5250 = vpop.permute.xlu0 %5249
    %5251 = vset.pattern.permute.xlu0 0
    %5252 = vperm.xlu0 %5251, %v4825
    %v5253 = vpop.permute.xlu0 %5252
    %5254 = vset.pattern.permute.xlu0 0
    %5255 = vperm.xlu0 %5254, %v4826
    %v5256 = vpop.permute.xlu0 %5255
    %5257 = vset.pattern.permute.xlu0 0
    %5258 = vperm.xlu0 %5257, %v4827
    %v5259 = vpop.permute.xlu0 %5258
    %5260 = vset.pattern.permute.xlu0 0
    %5261 = vperm.xlu0 %5260, %v4828
    %v5262 = vpop.permute.xlu0 %5261
    %5263 = vset.pattern.permute.xlu0 0
    %5264 = vperm.xlu0 %5263, %v4829
    %v5265 = vpop.permute.xlu0 %5264
    %5266 = vset.pattern.permute.xlu0 0
    %5267 = vperm.xlu0 %5266, %v4830
    %v5268 = vpop.permute.xlu0 %5267
    %5269 = vset.pattern.permute.xlu0 0
    %5270 = vperm.xlu0 %5269, %v4831
    %v5271 = vpop.permute.xlu0 %5270
    %5272 = vset.pattern.permute.xlu0 0
    %5273 = vperm.xlu0 %5272, %v4832
    %v5274 = vpop.permute.xlu0 %5273
    %5275 = vset.pattern.permute.xlu0 0
    %5276 = vperm.xlu0 %5275, %v4833
    %v5277 = vpop.permute.xlu0 %5276
    %5278 = vset.pattern.permute.xlu0 0
    %5279 = vperm.xlu0 %5278, %v4834
    %v5280 = vpop.permute.xlu0 %5279
    %5281 = vset.pattern.permute.xlu0 0
    %5282 = vperm.xlu0 %5281, %v4835
    %v5283 = vpop.permute.xlu0 %5282
    %5284 = vset.pattern.permute.xlu0 0
    %5285 = vperm.xlu0 %5284, %v4836
    %v5286 = vpop.permute.xlu0 %5285
    %5287 = vset.pattern.permute.xlu0 0
    %5288 = vperm.xlu0 %5287, %v4837
    %v5289 = vpop.permute.xlu0 %5288
    %5290 = vset.pattern.permute.xlu0 0
    %5291 = vperm.xlu0 %5290, %v4838
    %v5292 = vpop.permute.xlu0 %5291
    %5293 = vset.pattern.permute.xlu0 0
    %5294 = vperm.xlu0 %5293, %v4839
    %v5295 = vpop.permute.xlu0 %5294
    %5296 = vset.pattern.permute.xlu0 0
    %5297 = vperm.xlu0 %5296, %v4840
    %v5298 = vpop.permute.xlu0 %5297
    %5299 = vset.pattern.permute.xlu0 0
    %5300 = vperm.xlu0 %5299, %v4841
    %v5301 = vpop.permute.xlu0 %5300
    %5302 = vset.pattern.permute.xlu0 0
    %5303 = vperm.xlu0 %5302, %v4842
    %v5304 = vpop.permute.xlu0 %5303
    %5305 = vset.pattern.permute.xlu0 0
    %5306 = vperm.xlu0 %5305, %v4843
    %v5307 = vpop.permute.xlu0 %5306
    %5308 = vset.pattern.permute.xlu0 0
    %5309 = vperm.xlu0 %5308, %v4844
    %v5310 = vpop.permute.xlu0 %5309
    %5311 = vset.pattern.permute.xlu0 0
    %5312 = vperm.xlu0 %5311, %v4845
    %v5313 = vpop.permute.xlu0 %5312
    %5314 = vset.pattern.permute.xlu0 0
    %5315 = vperm.xlu0 %5314, %v4846
    %v5316 = vpop.permute.xlu0 %5315
    %5317 = vset.pattern.permute.xlu0 0
    %5318 = vperm.xlu0 %5317, %v4847
    %v5319 = vpop.permute.xlu0 %5318
    %5320 = vset.pattern.permute.xlu0 0
    %5321 = vperm.xlu0 %5320, %v4848
    %v5322 = vpop.permute.xlu0 %5321
    %5323 = vset.pattern.permute.xlu0 0
    %5324 = vperm.xlu0 %5323, %v4849
    %v5325 = vpop.permute.xlu0 %5324
    %5326 = vset.pattern.permute.xlu0 0
    %5327 = vperm.xlu0 %5326, %v4850
    %v5328 = vpop.permute.xlu0 %5327
    %5329 = vset.pattern.permute.xlu0 0
    %5330 = vperm.xlu0 %5329, %v4851
    %v5331 = vpop.permute.xlu0 %5330
    %5332 = vset.pattern.permute.xlu0 0
    %5333 = vperm.xlu0 %5332, %v4852
    %v5334 = vpop.permute.xlu0 %5333
    %5335 = vset.pattern.permute.xlu0 0
    %5336 = vperm.xlu0 %5335, %v4853
    %v5337 = vpop.permute.xlu0 %5336
    %5338 = vset.pattern.permute.xlu0 0
    %5339 = vperm.xlu0 %5338, %v4854
    %v5340 = vpop.permute.xlu0 %5339
    %5341 = vset.pattern.permute.xlu0 0
    %5342 = vperm.xlu0 %5341, %v4855
    %v5343 = vpop.permute.xlu0 %5342
    %5344 = vset.pattern.permute.xlu0 0
    %5345 = vperm.xlu0 %5344, %v4856
    %v5346 = vpop.permute.xlu0 %5345
    %5347 = vset.pattern.permute.xlu0 0
    %5348 = vperm.xlu0 %5347, %v4857
    %v5349 = vpop.permute.xlu0 %5348
    %5350 = vset.pattern.permute.xlu0 0
    %5351 = vperm.xlu0 %5350, %v4858
    %v5352 = vpop.permute.xlu0 %5351
    %5353 = vset.pattern.permute.xlu0 0
    %5354 = vperm.xlu0 %5353, %v4859
    %v5355 = vpop.permute.xlu0 %5354
    %5356 = vset.pattern.permute.xlu0 0
    %5357 = vperm.xlu0 %5356, %v4860
    %v5358 = vpop.permute.xlu0 %5357
    %5359 = vset.pattern.permute.xlu0 0
    %5360 = vperm.xlu0 %5359, %v4861
    %v5361 = vpop.permute.xlu0 %5360
    %5362 = vset.pattern.permute.xlu0 0
    %5363 = vperm.xlu0 %5362, %v4862
    %v5364 = vpop.permute.xlu0 %5363
    %5365 = vset.pattern.permute.xlu0 0
    %5366 = vperm.xlu0 %5365, %v4863
    %v5367 = vpop.permute.xlu0 %5366
    %5368 = vset.pattern.permute.xlu0 0
    %5369 = vperm.xlu0 %5368, %v4864
    %v5370 = vpop.permute.xlu0 %5369
    %5371 = vset.pattern.permute.xlu0 0
    %5372 = vperm.xlu0 %5371, %v4865
    %v5373 = vpop.permute.xlu0 %5372
    %5374 = vset.pattern.permute.xlu0 0
    %5375 = vperm.xlu0 %5374, %v4866
    %v5376 = vpop.permute.xlu0 %5375
    %5377 = vset.pattern.permute.xlu0 0
    %5378 = vperm.xlu0 %5377, %v4867
    %v5379 = vpop.permute.xlu0 %5378
    %v5380 = vlaneseq
    %v5381 = vshrl.u32 %v5380, 7
    %v5382 = vsub.s32 %v2970, %v5381
    %v5383 = vrot.slane %v4998, %v5382
    %v5384 = vlaneseq
    %v5385 = vshrl.u32 %v5384, 7
    %v5386 = vsub.s32 %v2975, %v5385
    %v5387 = vrot.slane %v5001, %v5386
    %v5388 = vsel %vm2980, %v5387, %v5383
    %v5389 = vlaneseq
    %v5390 = vshrl.u32 %v5389, 7
    %v5391 = vsub.s32 %v2982, %v5390
    %v5392 = vrot.slane %v5004, %v5391
    %v5393 = vsel %vm2987, %v5392, %v5388
    %v5394 = vlaneseq
    %v5395 = vshrl.u32 %v5394, 7
    %v5396 = vsub.s32 %v2989, %v5395
    %v5397 = vrot.slane %v5007, %v5396
    %v5398 = vsel %vm2994, %v5397, %v5393
    %v5399 = vlaneseq
    %v5400 = vshrl.u32 %v5399, 7
    %v5401 = vsub.s32 %v2996, %v5400
    %v5402 = vrot.slane %v5010, %v5401
    %v5403 = vsel %vm3001, %v5402, %v5398
    %v5404 = vlaneseq
    %v5405 = vshrl.u32 %v5404, 7
    %v5406 = vsub.s32 %v3003, %v5405
    %v5407 = vrot.slane %v5013, %v5406
    %v5408 = vsel %vm3008, %v5407, %v5403
    %v5409 = vlaneseq
    %v5410 = vshrl.u32 %v5409, 7
    %v5411 = vsub.s32 %v3010, %v5410
    %v5412 = vrot.slane %v5016, %v5411
    %v5413 = vsel %vm3015, %v5412, %v5408
    %v5414 = vlaneseq
    %v5415 = vshrl.u32 %v5414, 7
    %v5416 = vsub.s32 %v3017, %v5415
    %v5417 = vrot.slane %v5019, %v5416
    %v5418 = vsel %vm3022, %v5417, %v5413
    %v5419 = vlaneseq
    %v5420 = vshrl.u32 %v5419, 7
    %v5421 = vsub.s32 %v3024, %v5420
    %v5422 = vrot.slane %v5022, %v5421
    %v5423 = vsel %vm3029, %v5422, %v5418
    %v5424 = vlaneseq
    %v5425 = vshrl.u32 %v5424, 7
    %v5426 = vsub.s32 %v3031, %v5425
    %v5427 = vrot.slane %v5025, %v5426
    %v5428 = vsel %vm3036, %v5427, %v5423
    %v5429 = vlaneseq
    %v5430 = vshrl.u32 %v5429, 7
    %v5431 = vsub.s32 %v3038, %v5430
    %v5432 = vrot.slane %v5028, %v5431
    %v5433 = vsel %vm3043, %v5432, %v5428
    %v5434 = vlaneseq
    %v5435 = vshrl.u32 %v5434, 7
    %v5436 = vsub.s32 %v3045, %v5435
    %v5437 = vrot.slane %v5031, %v5436
    %v5438 = vsel %vm3050, %v5437, %v5433
    %v5439 = vlaneseq
    %v5440 = vshrl.u32 %v5439, 7
    %v5441 = vsub.s32 %v3052, %v5440
    %v5442 = vrot.slane %v5034, %v5441
    %v5443 = vsel %vm3057, %v5442, %v5438
    %v5444 = vlaneseq
    %v5445 = vshrl.u32 %v5444, 7
    %v5446 = vsub.s32 %v3059, %v5445
    %v5447 = vrot.slane %v5037, %v5446
    %v5448 = vsel %vm3064, %v5447, %v5443
    %v5449 = vlaneseq
    %v5450 = vshrl.u32 %v5449, 7
    %v5451 = vsub.s32 %v3066, %v5450
    %v5452 = vrot.slane %v5040, %v5451
    %v5453 = vsel %vm3071, %v5452, %v5448
    %v5454 = vlaneseq
    %v5455 = vshrl.u32 %v5454, 7
    %v5456 = vsub.s32 %v3073, %v5455
    %v5457 = vrot.slane %v5043, %v5456
    %v5458 = vsel %vm3078, %v5457, %v5453
    %v5459 = vlaneseq
    %v5460 = vshrl.u32 %v5459, 7
    %v5461 = vsub.s32 %v2970, %v5460
    %v5462 = vrot.slane %v5046, %v5461
    %v5463 = vlaneseq
    %v5464 = vshrl.u32 %v5463, 7
    %v5465 = vsub.s32 %v2975, %v5464
    %v5466 = vrot.slane %v5049, %v5465
    %v5467 = vsel %vm2980, %v5466, %v5462
    %v5468 = vlaneseq
    %v5469 = vshrl.u32 %v5468, 7
    %v5470 = vsub.s32 %v2982, %v5469
    %v5471 = vrot.slane %v5052, %v5470
    %v5472 = vsel %vm2987, %v5471, %v5467
    %v5473 = vlaneseq
    %v5474 = vshrl.u32 %v5473, 7
    %v5475 = vsub.s32 %v2989, %v5474
    %v5476 = vrot.slane %v5055, %v5475
    %v5477 = vsel %vm2994, %v5476, %v5472
    %v5478 = vlaneseq
    %v5479 = vshrl.u32 %v5478, 7
    %v5480 = vsub.s32 %v2996, %v5479
    %v5481 = vrot.slane %v5058, %v5480
    %v5482 = vsel %vm3001, %v5481, %v5477
    %v5483 = vlaneseq
    %v5484 = vshrl.u32 %v5483, 7
    %v5485 = vsub.s32 %v3003, %v5484
    %v5486 = vrot.slane %v5061, %v5485
    %v5487 = vsel %vm3008, %v5486, %v5482
    %v5488 = vlaneseq
    %v5489 = vshrl.u32 %v5488, 7
    %v5490 = vsub.s32 %v3010, %v5489
    %v5491 = vrot.slane %v5064, %v5490
    %v5492 = vsel %vm3015, %v5491, %v5487
    %v5493 = vlaneseq
    %v5494 = vshrl.u32 %v5493, 7
    %v5495 = vsub.s32 %v3017, %v5494
    %v5496 = vrot.slane %v5067, %v5495
    %v5497 = vsel %vm3022, %v5496, %v5492
    %v5498 = vlaneseq
    %v5499 = vshrl.u32 %v5498, 7
    %v5500 = vsub.s32 %v3024, %v5499
    %v5501 = vrot.slane %v5070, %v5500
    %v5502 = vsel %vm3029, %v5501, %v5497
    %v5503 = vlaneseq
    %v5504 = vshrl.u32 %v5503, 7
    %v5505 = vsub.s32 %v3031, %v5504
    %v5506 = vrot.slane %v5073, %v5505
    %v5507 = vsel %vm3036, %v5506, %v5502
    %v5508 = vlaneseq
    %v5509 = vshrl.u32 %v5508, 7
    %v5510 = vsub.s32 %v3038, %v5509
    %v5511 = vrot.slane %v5076, %v5510
    %v5512 = vsel %vm3043, %v5511, %v5507
    %v5513 = vlaneseq
    %v5514 = vshrl.u32 %v5513, 7
    %v5515 = vsub.s32 %v3045, %v5514
    %v5516 = vrot.slane %v5079, %v5515
    %v5517 = vsel %vm3050, %v5516, %v5512
    %v5518 = vlaneseq
    %v5519 = vshrl.u32 %v5518, 7
    %v5520 = vsub.s32 %v3052, %v5519
    %v5521 = vrot.slane %v5082, %v5520
    %v5522 = vsel %vm3057, %v5521, %v5517
    %v5523 = vlaneseq
    %v5524 = vshrl.u32 %v5523, 7
    %v5525 = vsub.s32 %v3059, %v5524
    %v5526 = vrot.slane %v5085, %v5525
    %v5527 = vsel %vm3064, %v5526, %v5522
    %v5528 = vlaneseq
    %v5529 = vshrl.u32 %v5528, 7
    %v5530 = vsub.s32 %v3066, %v5529
    %v5531 = vrot.slane %v5088, %v5530
    %v5532 = vsel %vm3071, %v5531, %v5527
    %v5533 = vlaneseq
    %v5534 = vshrl.u32 %v5533, 7
    %v5535 = vsub.s32 %v3073, %v5534
    %v5536 = vrot.slane %v5091, %v5535
    %v5537 = vsel %vm3078, %v5536, %v5532
    %v5538 = vlaneseq
    %v5539 = vshrl.u32 %v5538, 7
    %v5540 = vsub.s32 %v2970, %v5539
    %v5541 = vrot.slane %v5094, %v5540
    %v5542 = vlaneseq
    %v5543 = vshrl.u32 %v5542, 7
    %v5544 = vsub.s32 %v2975, %v5543
    %v5545 = vrot.slane %v5097, %v5544
    %v5546 = vsel %vm2980, %v5545, %v5541
    %v5547 = vlaneseq
    %v5548 = vshrl.u32 %v5547, 7
    %v5549 = vsub.s32 %v2982, %v5548
    %v5550 = vrot.slane %v5100, %v5549
    %v5551 = vsel %vm2987, %v5550, %v5546
    %v5552 = vlaneseq
    %v5553 = vshrl.u32 %v5552, 7
    %v5554 = vsub.s32 %v2989, %v5553
    %v5555 = vrot.slane %v5103, %v5554
    %v5556 = vsel %vm2994, %v5555, %v5551
    %v5557 = vlaneseq
    %v5558 = vshrl.u32 %v5557, 7
    %v5559 = vsub.s32 %v2996, %v5558
    %v5560 = vrot.slane %v5106, %v5559
    %v5561 = vsel %vm3001, %v5560, %v5556
    %v5562 = vlaneseq
    %v5563 = vshrl.u32 %v5562, 7
    %v5564 = vsub.s32 %v3003, %v5563
    %v5565 = vrot.slane %v5109, %v5564
    %v5566 = vsel %vm3008, %v5565, %v5561
    %v5567 = vlaneseq
    %v5568 = vshrl.u32 %v5567, 7
    %v5569 = vsub.s32 %v3010, %v5568
    %v5570 = vrot.slane %v5112, %v5569
    %v5571 = vsel %vm3015, %v5570, %v5566
    %v5572 = vlaneseq
    %v5573 = vshrl.u32 %v5572, 7
    %v5574 = vsub.s32 %v3017, %v5573
    %v5575 = vrot.slane %v5115, %v5574
    %v5576 = vsel %vm3022, %v5575, %v5571
    %v5577 = vlaneseq
    %v5578 = vshrl.u32 %v5577, 7
    %v5579 = vsub.s32 %v3024, %v5578
    %v5580 = vrot.slane %v5118, %v5579
    %v5581 = vsel %vm3029, %v5580, %v5576
    %v5582 = vlaneseq
    %v5583 = vshrl.u32 %v5582, 7
    %v5584 = vsub.s32 %v3031, %v5583
    %v5585 = vrot.slane %v5121, %v5584
    %v5586 = vsel %vm3036, %v5585, %v5581
    %v5587 = vlaneseq
    %v5588 = vshrl.u32 %v5587, 7
    %v5589 = vsub.s32 %v3038, %v5588
    %v5590 = vrot.slane %v5124, %v5589
    %v5591 = vsel %vm3043, %v5590, %v5586
    %v5592 = vlaneseq
    %v5593 = vshrl.u32 %v5592, 7
    %v5594 = vsub.s32 %v3045, %v5593
    %v5595 = vrot.slane %v5127, %v5594
    %v5596 = vsel %vm3050, %v5595, %v5591
    %v5597 = vlaneseq
    %v5598 = vshrl.u32 %v5597, 7
    %v5599 = vsub.s32 %v3052, %v5598
    %v5600 = vrot.slane %v5130, %v5599
    %v5601 = vsel %vm3057, %v5600, %v5596
    %v5602 = vlaneseq
    %v5603 = vshrl.u32 %v5602, 7
    %v5604 = vsub.s32 %v3059, %v5603
    %v5605 = vrot.slane %v5133, %v5604
    %v5606 = vsel %vm3064, %v5605, %v5601
    %v5607 = vlaneseq
    %v5608 = vshrl.u32 %v5607, 7
    %v5609 = vsub.s32 %v3066, %v5608
    %v5610 = vrot.slane %v5136, %v5609
    %v5611 = vsel %vm3071, %v5610, %v5606
    %v5612 = vlaneseq
    %v5613 = vshrl.u32 %v5612, 7
    %v5614 = vsub.s32 %v3073, %v5613
    %v5615 = vrot.slane %v5139, %v5614
    %v5616 = vsel %vm3078, %v5615, %v5611
    %v5617 = vlaneseq
    %v5618 = vshrl.u32 %v5617, 7
    %v5619 = vsub.s32 %v2970, %v5618
    %v5620 = vrot.slane %v5142, %v5619
    %v5621 = vlaneseq
    %v5622 = vshrl.u32 %v5621, 7
    %v5623 = vsub.s32 %v2975, %v5622
    %v5624 = vrot.slane %v5145, %v5623
    %v5625 = vsel %vm2980, %v5624, %v5620
    %v5626 = vlaneseq
    %v5627 = vshrl.u32 %v5626, 7
    %v5628 = vsub.s32 %v2982, %v5627
    %v5629 = vrot.slane %v5148, %v5628
    %v5630 = vsel %vm2987, %v5629, %v5625
    %v5631 = vlaneseq
    %v5632 = vshrl.u32 %v5631, 7
    %v5633 = vsub.s32 %v2989, %v5632
    %v5634 = vrot.slane %v5151, %v5633
    %v5635 = vsel %vm2994, %v5634, %v5630
    %v5636 = vlaneseq
    %v5637 = vshrl.u32 %v5636, 7
    %v5638 = vsub.s32 %v2996, %v5637
    %v5639 = vrot.slane %v5154, %v5638
    %v5640 = vsel %vm3001, %v5639, %v5635
    %v5641 = vlaneseq
    %v5642 = vshrl.u32 %v5641, 7
    %v5643 = vsub.s32 %v3003, %v5642
    %v5644 = vrot.slane %v5157, %v5643
    %v5645 = vsel %vm3008, %v5644, %v5640
    %v5646 = vlaneseq
    %v5647 = vshrl.u32 %v5646, 7
    %v5648 = vsub.s32 %v3010, %v5647
    %v5649 = vrot.slane %v5160, %v5648
    %v5650 = vsel %vm3015, %v5649, %v5645
    %v5651 = vlaneseq
    %v5652 = vshrl.u32 %v5651, 7
    %v5653 = vsub.s32 %v3017, %v5652
    %v5654 = vrot.slane %v5163, %v5653
    %v5655 = vsel %vm3022, %v5654, %v5650
    %v5656 = vlaneseq
    %v5657 = vshrl.u32 %v5656, 7
    %v5658 = vsub.s32 %v3024, %v5657
    %v5659 = vrot.slane %v5166, %v5658
    %v5660 = vsel %vm3029, %v5659, %v5655
    %v5661 = vlaneseq
    %v5662 = vshrl.u32 %v5661, 7
    %v5663 = vsub.s32 %v3031, %v5662
    %v5664 = vrot.slane %v5169, %v5663
    %v5665 = vsel %vm3036, %v5664, %v5660
    %v5666 = vlaneseq
    %v5667 = vshrl.u32 %v5666, 7
    %v5668 = vsub.s32 %v3038, %v5667
    %v5669 = vrot.slane %v5172, %v5668
    %v5670 = vsel %vm3043, %v5669, %v5665
    %v5671 = vlaneseq
    %v5672 = vshrl.u32 %v5671, 7
    %v5673 = vsub.s32 %v3045, %v5672
    %v5674 = vrot.slane %v5175, %v5673
    %v5675 = vsel %vm3050, %v5674, %v5670
    %v5676 = vlaneseq
    %v5677 = vshrl.u32 %v5676, 7
    %v5678 = vsub.s32 %v3052, %v5677
    %v5679 = vrot.slane %v5178, %v5678
    %v5680 = vsel %vm3057, %v5679, %v5675
    %v5681 = vlaneseq
    %v5682 = vshrl.u32 %v5681, 7
    %v5683 = vsub.s32 %v3059, %v5682
    %v5684 = vrot.slane %v5181, %v5683
    %v5685 = vsel %vm3064, %v5684, %v5680
    %v5686 = vlaneseq
    %v5687 = vshrl.u32 %v5686, 7
    %v5688 = vsub.s32 %v3066, %v5687
    %v5689 = vrot.slane %v5184, %v5688
    %v5690 = vsel %vm3071, %v5689, %v5685
    %v5691 = vlaneseq
    %v5692 = vshrl.u32 %v5691, 7
    %v5693 = vsub.s32 %v3073, %v5692
    %v5694 = vrot.slane %v5187, %v5693
    %v5695 = vsel %vm3078, %v5694, %v5690
    %v5696 = vlaneseq
    %v5697 = vshrl.u32 %v5696, 7
    %v5698 = vsub.s32 %v2970, %v5697
    %v5699 = vrot.slane %v5190, %v5698
    %v5700 = vlaneseq
    %v5701 = vshrl.u32 %v5700, 7
    %v5702 = vsub.s32 %v2975, %v5701
    %v5703 = vrot.slane %v5193, %v5702
    %v5704 = vsel %vm2980, %v5703, %v5699
    %v5705 = vlaneseq
    %v5706 = vshrl.u32 %v5705, 7
    %v5707 = vsub.s32 %v2982, %v5706
    %v5708 = vrot.slane %v5196, %v5707
    %v5709 = vsel %vm2987, %v5708, %v5704
    %v5710 = vlaneseq
    %v5711 = vshrl.u32 %v5710, 7
    %v5712 = vsub.s32 %v2989, %v5711
    %v5713 = vrot.slane %v5199, %v5712
    %v5714 = vsel %vm2994, %v5713, %v5709
    %v5715 = vlaneseq
    %v5716 = vshrl.u32 %v5715, 7
    %v5717 = vsub.s32 %v2996, %v5716
    %v5718 = vrot.slane %v5202, %v5717
    %v5719 = vsel %vm3001, %v5718, %v5714
    %v5720 = vlaneseq
    %v5721 = vshrl.u32 %v5720, 7
    %v5722 = vsub.s32 %v3003, %v5721
    %v5723 = vrot.slane %v5205, %v5722
    %v5724 = vsel %vm3008, %v5723, %v5719
    %v5725 = vlaneseq
    %v5726 = vshrl.u32 %v5725, 7
    %v5727 = vsub.s32 %v3010, %v5726
    %v5728 = vrot.slane %v5208, %v5727
    %v5729 = vsel %vm3015, %v5728, %v5724
    %v5730 = vlaneseq
    %v5731 = vshrl.u32 %v5730, 7
    %v5732 = vsub.s32 %v3017, %v5731
    %v5733 = vrot.slane %v5211, %v5732
    %v5734 = vsel %vm3022, %v5733, %v5729
    %v5735 = vlaneseq
    %v5736 = vshrl.u32 %v5735, 7
    %v5737 = vsub.s32 %v3024, %v5736
    %v5738 = vrot.slane %v5214, %v5737
    %v5739 = vsel %vm3029, %v5738, %v5734
    %v5740 = vlaneseq
    %v5741 = vshrl.u32 %v5740, 7
    %v5742 = vsub.s32 %v3031, %v5741
    %v5743 = vrot.slane %v5217, %v5742
    %v5744 = vsel %vm3036, %v5743, %v5739
    %v5745 = vlaneseq
    %v5746 = vshrl.u32 %v5745, 7
    %v5747 = vsub.s32 %v3038, %v5746
    %v5748 = vrot.slane %v5220, %v5747
    %v5749 = vsel %vm3043, %v5748, %v5744
    %v5750 = vlaneseq
    %v5751 = vshrl.u32 %v5750, 7
    %v5752 = vsub.s32 %v3045, %v5751
    %v5753 = vrot.slane %v5223, %v5752
    %v5754 = vsel %vm3050, %v5753, %v5749
    %v5755 = vlaneseq
    %v5756 = vshrl.u32 %v5755, 7
    %v5757 = vsub.s32 %v3052, %v5756
    %v5758 = vrot.slane %v5226, %v5757
    %v5759 = vsel %vm3057, %v5758, %v5754
    %v5760 = vlaneseq
    %v5761 = vshrl.u32 %v5760, 7
    %v5762 = vsub.s32 %v3059, %v5761
    %v5763 = vrot.slane %v5229, %v5762
    %v5764 = vsel %vm3064, %v5763, %v5759
    %v5765 = vlaneseq
    %v5766 = vshrl.u32 %v5765, 7
    %v5767 = vsub.s32 %v3066, %v5766
    %v5768 = vrot.slane %v5232, %v5767
    %v5769 = vsel %vm3071, %v5768, %v5764
    %v5770 = vlaneseq
    %v5771 = vshrl.u32 %v5770, 7
    %v5772 = vsub.s32 %v3073, %v5771
    %v5773 = vrot.slane %v5235, %v5772
    %v5774 = vsel %vm3078, %v5773, %v5769
    %v5775 = vlaneseq
    %v5776 = vshrl.u32 %v5775, 7
    %v5777 = vsub.s32 %v2970, %v5776
    %v5778 = vrot.slane %v5238, %v5777
    %v5779 = vlaneseq
    %v5780 = vshrl.u32 %v5779, 7
    %v5781 = vsub.s32 %v2975, %v5780
    %v5782 = vrot.slane %v5241, %v5781
    %v5783 = vsel %vm2980, %v5782, %v5778
    %v5784 = vlaneseq
    %v5785 = vshrl.u32 %v5784, 7
    %v5786 = vsub.s32 %v2982, %v5785
    %v5787 = vrot.slane %v5244, %v5786
    %v5788 = vsel %vm2987, %v5787, %v5783
    %v5789 = vlaneseq
    %v5790 = vshrl.u32 %v5789, 7
    %v5791 = vsub.s32 %v2989, %v5790
    %v5792 = vrot.slane %v5247, %v5791
    %v5793 = vsel %vm2994, %v5792, %v5788
    %v5794 = vlaneseq
    %v5795 = vshrl.u32 %v5794, 7
    %v5796 = vsub.s32 %v2996, %v5795
    %v5797 = vrot.slane %v5250, %v5796
    %v5798 = vsel %vm3001, %v5797, %v5793
    %v5799 = vlaneseq
    %v5800 = vshrl.u32 %v5799, 7
    %v5801 = vsub.s32 %v3003, %v5800
    %v5802 = vrot.slane %v5253, %v5801
    %v5803 = vsel %vm3008, %v5802, %v5798
    %v5804 = vlaneseq
    %v5805 = vshrl.u32 %v5804, 7
    %v5806 = vsub.s32 %v3010, %v5805
    %v5807 = vrot.slane %v5256, %v5806
    %v5808 = vsel %vm3015, %v5807, %v5803
    %v5809 = vlaneseq
    %v5810 = vshrl.u32 %v5809, 7
    %v5811 = vsub.s32 %v3017, %v5810
    %v5812 = vrot.slane %v5259, %v5811
    %v5813 = vsel %vm3022, %v5812, %v5808
    %v5814 = vlaneseq
    %v5815 = vshrl.u32 %v5814, 7
    %v5816 = vsub.s32 %v3024, %v5815
    %v5817 = vrot.slane %v5262, %v5816
    %v5818 = vsel %vm3029, %v5817, %v5813
    %v5819 = vlaneseq
    %v5820 = vshrl.u32 %v5819, 7
    %v5821 = vsub.s32 %v3031, %v5820
    %v5822 = vrot.slane %v5265, %v5821
    %v5823 = vsel %vm3036, %v5822, %v5818
    %v5824 = vlaneseq
    %v5825 = vshrl.u32 %v5824, 7
    %v5826 = vsub.s32 %v3038, %v5825
    %v5827 = vrot.slane %v5268, %v5826
    %v5828 = vsel %vm3043, %v5827, %v5823
    %v5829 = vlaneseq
    %v5830 = vshrl.u32 %v5829, 7
    %v5831 = vsub.s32 %v3045, %v5830
    %v5832 = vrot.slane %v5271, %v5831
    %v5833 = vsel %vm3050, %v5832, %v5828
    %v5834 = vlaneseq
    %v5835 = vshrl.u32 %v5834, 7
    %v5836 = vsub.s32 %v3052, %v5835
    %v5837 = vrot.slane %v5274, %v5836
    %v5838 = vsel %vm3057, %v5837, %v5833
    %v5839 = vlaneseq
    %v5840 = vshrl.u32 %v5839, 7
    %v5841 = vsub.s32 %v3059, %v5840
    %v5842 = vrot.slane %v5277, %v5841
    %v5843 = vsel %vm3064, %v5842, %v5838
    %v5844 = vlaneseq
    %v5845 = vshrl.u32 %v5844, 7
    %v5846 = vsub.s32 %v3066, %v5845
    %v5847 = vrot.slane %v5280, %v5846
    %v5848 = vsel %vm3071, %v5847, %v5843
    %v5849 = vlaneseq
    %v5850 = vshrl.u32 %v5849, 7
    %v5851 = vsub.s32 %v3073, %v5850
    %v5852 = vrot.slane %v5283, %v5851
    %v5853 = vsel %vm3078, %v5852, %v5848
    %v5854 = vlaneseq
    %v5855 = vshrl.u32 %v5854, 7
    %v5856 = vsub.s32 %v2970, %v5855
    %v5857 = vrot.slane %v5286, %v5856
    %v5858 = vlaneseq
    %v5859 = vshrl.u32 %v5858, 7
    %v5860 = vsub.s32 %v2975, %v5859
    %v5861 = vrot.slane %v5289, %v5860
    %v5862 = vsel %vm2980, %v5861, %v5857
    %v5863 = vlaneseq
    %v5864 = vshrl.u32 %v5863, 7
    %v5865 = vsub.s32 %v2982, %v5864
    %v5866 = vrot.slane %v5292, %v5865
    %v5867 = vsel %vm2987, %v5866, %v5862
    %v5868 = vlaneseq
    %v5869 = vshrl.u32 %v5868, 7
    %v5870 = vsub.s32 %v2989, %v5869
    %v5871 = vrot.slane %v5295, %v5870
    %v5872 = vsel %vm2994, %v5871, %v5867
    %v5873 = vlaneseq
    %v5874 = vshrl.u32 %v5873, 7
    %v5875 = vsub.s32 %v2996, %v5874
    %v5876 = vrot.slane %v5298, %v5875
    %v5877 = vsel %vm3001, %v5876, %v5872
    %v5878 = vlaneseq
    %v5879 = vshrl.u32 %v5878, 7
    %v5880 = vsub.s32 %v3003, %v5879
    %v5881 = vrot.slane %v5301, %v5880
    %v5882 = vsel %vm3008, %v5881, %v5877
    %v5883 = vlaneseq
    %v5884 = vshrl.u32 %v5883, 7
    %v5885 = vsub.s32 %v3010, %v5884
    %v5886 = vrot.slane %v5304, %v5885
    %v5887 = vsel %vm3015, %v5886, %v5882
    %v5888 = vlaneseq
    %v5889 = vshrl.u32 %v5888, 7
    %v5890 = vsub.s32 %v3017, %v5889
    %v5891 = vrot.slane %v5307, %v5890
    %v5892 = vsel %vm3022, %v5891, %v5887
    %v5893 = vlaneseq
    %v5894 = vshrl.u32 %v5893, 7
    %v5895 = vsub.s32 %v3024, %v5894
    %v5896 = vrot.slane %v5310, %v5895
    %v5897 = vsel %vm3029, %v5896, %v5892
    %v5898 = vlaneseq
    %v5899 = vshrl.u32 %v5898, 7
    %v5900 = vsub.s32 %v3031, %v5899
    %v5901 = vrot.slane %v5313, %v5900
    %v5902 = vsel %vm3036, %v5901, %v5897
    %v5903 = vlaneseq
    %v5904 = vshrl.u32 %v5903, 7
    %v5905 = vsub.s32 %v3038, %v5904
    %v5906 = vrot.slane %v5316, %v5905
    %v5907 = vsel %vm3043, %v5906, %v5902
    %v5908 = vlaneseq
    %v5909 = vshrl.u32 %v5908, 7
    %v5910 = vsub.s32 %v3045, %v5909
    %v5911 = vrot.slane %v5319, %v5910
    %v5912 = vsel %vm3050, %v5911, %v5907
    %v5913 = vlaneseq
    %v5914 = vshrl.u32 %v5913, 7
    %v5915 = vsub.s32 %v3052, %v5914
    %v5916 = vrot.slane %v5322, %v5915
    %v5917 = vsel %vm3057, %v5916, %v5912
    %v5918 = vlaneseq
    %v5919 = vshrl.u32 %v5918, 7
    %v5920 = vsub.s32 %v3059, %v5919
    %v5921 = vrot.slane %v5325, %v5920
    %v5922 = vsel %vm3064, %v5921, %v5917
    %v5923 = vlaneseq
    %v5924 = vshrl.u32 %v5923, 7
    %v5925 = vsub.s32 %v3066, %v5924
    %v5926 = vrot.slane %v5328, %v5925
    %v5927 = vsel %vm3071, %v5926, %v5922
    %v5928 = vlaneseq
    %v5929 = vshrl.u32 %v5928, 7
    %v5930 = vsub.s32 %v3073, %v5929
    %v5931 = vrot.slane %v5331, %v5930
    %v5932 = vsel %vm3078, %v5931, %v5927
    %v5933 = vlaneseq
    %v5934 = vshrl.u32 %v5933, 7
    %v5935 = vsub.s32 %v2970, %v5934
    %v5936 = vrot.slane %v5334, %v5935
    %v5937 = vlaneseq
    %v5938 = vshrl.u32 %v5937, 7
    %v5939 = vsub.s32 %v2975, %v5938
    %v5940 = vrot.slane %v5337, %v5939
    %v5941 = vsel %vm2980, %v5940, %v5936
    %v5942 = vlaneseq
    %v5943 = vshrl.u32 %v5942, 7
    %v5944 = vsub.s32 %v2982, %v5943
    %v5945 = vrot.slane %v5340, %v5944
    %v5946 = vsel %vm2987, %v5945, %v5941
    %v5947 = vlaneseq
    %v5948 = vshrl.u32 %v5947, 7
    %v5949 = vsub.s32 %v2989, %v5948
    %v5950 = vrot.slane %v5343, %v5949
    %v5951 = vsel %vm2994, %v5950, %v5946
    %v5952 = vlaneseq
    %v5953 = vshrl.u32 %v5952, 7
    %v5954 = vsub.s32 %v2996, %v5953
    %v5955 = vrot.slane %v5346, %v5954
    %v5956 = vsel %vm3001, %v5955, %v5951
    %v5957 = vlaneseq
    %v5958 = vshrl.u32 %v5957, 7
    %v5959 = vsub.s32 %v3003, %v5958
    %v5960 = vrot.slane %v5349, %v5959
    %v5961 = vsel %vm3008, %v5960, %v5956
    %v5962 = vlaneseq
    %v5963 = vshrl.u32 %v5962, 7
    %v5964 = vsub.s32 %v3010, %v5963
    %v5965 = vrot.slane %v5352, %v5964
    %v5966 = vsel %vm3015, %v5965, %v5961
    %v5967 = vlaneseq
    %v5968 = vshrl.u32 %v5967, 7
    %v5969 = vsub.s32 %v3017, %v5968
    %v5970 = vrot.slane %v5355, %v5969
    %v5971 = vsel %vm3022, %v5970, %v5966
    %v5972 = vlaneseq
    %v5973 = vshrl.u32 %v5972, 7
    %v5974 = vsub.s32 %v3024, %v5973
    %v5975 = vrot.slane %v5358, %v5974
    %v5976 = vsel %vm3029, %v5975, %v5971
    %v5977 = vlaneseq
    %v5978 = vshrl.u32 %v5977, 7
    %v5979 = vsub.s32 %v3031, %v5978
    %v5980 = vrot.slane %v5361, %v5979
    %v5981 = vsel %vm3036, %v5980, %v5976
    %v5982 = vlaneseq
    %v5983 = vshrl.u32 %v5982, 7
    %v5984 = vsub.s32 %v3038, %v5983
    %v5985 = vrot.slane %v5364, %v5984
    %v5986 = vsel %vm3043, %v5985, %v5981
    %v5987 = vlaneseq
    %v5988 = vshrl.u32 %v5987, 7
    %v5989 = vsub.s32 %v3045, %v5988
    %v5990 = vrot.slane %v5367, %v5989
    %v5991 = vsel %vm3050, %v5990, %v5986
    %v5992 = vlaneseq
    %v5993 = vshrl.u32 %v5992, 7
    %v5994 = vsub.s32 %v3052, %v5993
    %v5995 = vrot.slane %v5370, %v5994
    %v5996 = vsel %vm3057, %v5995, %v5991
    %v5997 = vlaneseq
    %v5998 = vshrl.u32 %v5997, 7
    %v5999 = vsub.s32 %v3059, %v5998
    %v6000 = vrot.slane %v5373, %v5999
    %v6001 = vsel %vm3064, %v6000, %v5996
    %v6002 = vlaneseq
    %v6003 = vshrl.u32 %v6002, 7
    %v6004 = vsub.s32 %v3066, %v6003
    %v6005 = vrot.slane %v5376, %v6004
    %v6006 = vsel %vm3071, %v6005, %v6001
    %v6007 = vlaneseq
    %v6008 = vshrl.u32 %v6007, 7
    %v6009 = vsub.s32 %v3073, %v6008
    %v6010 = vrot.slane %v5379, %v6009
    %v6011 = vsel %vm3078, %v6010, %v6006
    %v6012 = vsel %vm3633, %v5537, %v5458
    %v6013 = vsel %vm3635, %v5616, %v6012
    %v6014 = vsel %vm3637, %v5695, %v6013
    %v6015 = vsel %vm3639, %v5774, %v6014
    %v6016 = vsel %vm3641, %v5853, %v6015
    %v6017 = vsel %vm3643, %v5932, %v6016
    %v6018 = vsel %vm3645, %v6011, %v6017
    %6020 = vadd.xlane.f32.xlu0 %v6018
    %v6021 = vpop.xlane.xlu0 %6020
    %v6022 = vadd.f32 %v6021, 1e-12
    %v6023 = vrcp.pop %v6022
    %v6024 = vmul.f32 1.0, %v6023
    %v6026 = vlaneseq
    %v6027 = vshrl.u32 %v6026, 7
    %v6028 = vsub.s32 0, %v6027
    %v6029 = vrot.slane %v6024, %v6028
    %v6030 = vlaneseq
    %v6031 = vshrl.u32 %v6030, 7
    %v6032 = vsub.s32 1, %v6031
    %v6033 = vrot.slane %v6024, %v6032
    %v6034 = vlaneseq
    %v6035 = vshrl.u32 %v6034, 7
    %v6036 = vsub.s32 2, %v6035
    %v6037 = vrot.slane %v6024, %v6036
    %v6038 = vlaneseq
    %v6039 = vshrl.u32 %v6038, 7
    %v6040 = vsub.s32 3, %v6039
    %v6041 = vrot.slane %v6024, %v6040
    %v6042 = vlaneseq
    %v6043 = vshrl.u32 %v6042, 7
    %v6044 = vsub.s32 4, %v6043
    %v6045 = vrot.slane %v6024, %v6044
    %v6046 = vlaneseq
    %v6047 = vshrl.u32 %v6046, 7
    %v6048 = vsub.s32 5, %v6047
    %v6049 = vrot.slane %v6024, %v6048
    %v6050 = vlaneseq
    %v6051 = vshrl.u32 %v6050, 7
    %v6052 = vsub.s32 6, %v6051
    %v6053 = vrot.slane %v6024, %v6052
    %v6054 = vlaneseq
    %v6055 = vshrl.u32 %v6054, 7
    %v6056 = vsub.s32 7, %v6055
    %v6057 = vrot.slane %v6024, %v6056
    %v6066 = vmul.f32 %v4740, %v6029
    %v6067 = vmul.f32 %v4741, %v6029
    %v6068 = vmul.f32 %v4742, %v6029
    %v6069 = vmul.f32 %v4743, %v6029
    %v6070 = vmul.f32 %v4744, %v6029
    %v6071 = vmul.f32 %v4745, %v6029
    %v6072 = vmul.f32 %v4746, %v6029
    %v6073 = vmul.f32 %v4747, %v6029
    %v6074 = vmul.f32 %v4748, %v6029
    %v6075 = vmul.f32 %v4749, %v6029
    %v6076 = vmul.f32 %v4750, %v6029
    %v6077 = vmul.f32 %v4751, %v6029
    %v6078 = vmul.f32 %v4752, %v6029
    %v6079 = vmul.f32 %v4753, %v6029
    %v6080 = vmul.f32 %v4754, %v6029
    %v6081 = vmul.f32 %v4755, %v6029
    %v6082 = vmul.f32 %v4756, %v6033
    %v6083 = vmul.f32 %v4757, %v6033
    %v6084 = vmul.f32 %v4758, %v6033
    %v6085 = vmul.f32 %v4759, %v6033
    %v6086 = vmul.f32 %v4760, %v6033
    %v6087 = vmul.f32 %v4761, %v6033
    %v6088 = vmul.f32 %v4762, %v6033
    %v6089 = vmul.f32 %v4763, %v6033
    %v6090 = vmul.f32 %v4764, %v6033
    %v6091 = vmul.f32 %v4765, %v6033
    %v6092 = vmul.f32 %v4766, %v6033
    %v6093 = vmul.f32 %v4767, %v6033
    %v6094 = vmul.f32 %v4768, %v6033
    %v6095 = vmul.f32 %v4769, %v6033
    %v6096 = vmul.f32 %v4770, %v6033
    %v6097 = vmul.f32 %v4771, %v6033
    %v6098 = vmul.f32 %v4772, %v6037
    %v6099 = vmul.f32 %v4773, %v6037
    %v6100 = vmul.f32 %v4774, %v6037
    %v6101 = vmul.f32 %v4775, %v6037
    %v6102 = vmul.f32 %v4776, %v6037
    %v6103 = vmul.f32 %v4777, %v6037
    %v6104 = vmul.f32 %v4778, %v6037
    %v6105 = vmul.f32 %v4779, %v6037
    %v6106 = vmul.f32 %v4780, %v6037
    %v6107 = vmul.f32 %v4781, %v6037
    %v6108 = vmul.f32 %v4782, %v6037
    %v6109 = vmul.f32 %v4783, %v6037
    %v6110 = vmul.f32 %v4784, %v6037
    %v6111 = vmul.f32 %v4785, %v6037
    %v6112 = vmul.f32 %v4786, %v6037
    %v6113 = vmul.f32 %v4787, %v6037
    %v6114 = vmul.f32 %v4788, %v6041
    %v6115 = vmul.f32 %v4789, %v6041
    %v6116 = vmul.f32 %v4790, %v6041
    %v6117 = vmul.f32 %v4791, %v6041
    %v6118 = vmul.f32 %v4792, %v6041
    %v6119 = vmul.f32 %v4793, %v6041
    %v6120 = vmul.f32 %v4794, %v6041
    %v6121 = vmul.f32 %v4795, %v6041
    %v6122 = vmul.f32 %v4796, %v6041
    %v6123 = vmul.f32 %v4797, %v6041
    %v6124 = vmul.f32 %v4798, %v6041
    %v6125 = vmul.f32 %v4799, %v6041
    %v6126 = vmul.f32 %v4800, %v6041
    %v6127 = vmul.f32 %v4801, %v6041
    %v6128 = vmul.f32 %v4802, %v6041
    %v6129 = vmul.f32 %v4803, %v6041
    %v6130 = vmul.f32 %v4804, %v6045
    %v6131 = vmul.f32 %v4805, %v6045
    %v6132 = vmul.f32 %v4806, %v6045
    %v6133 = vmul.f32 %v4807, %v6045
    %v6134 = vmul.f32 %v4808, %v6045
    %v6135 = vmul.f32 %v4809, %v6045
    %v6136 = vmul.f32 %v4810, %v6045
    %v6137 = vmul.f32 %v4811, %v6045
    %v6138 = vmul.f32 %v4812, %v6045
    %v6139 = vmul.f32 %v4813, %v6045
    %v6140 = vmul.f32 %v4814, %v6045
    %v6141 = vmul.f32 %v4815, %v6045
    %v6142 = vmul.f32 %v4816, %v6045
    %v6143 = vmul.f32 %v4817, %v6045
    %v6144 = vmul.f32 %v4818, %v6045
    %v6145 = vmul.f32 %v4819, %v6045
    %v6146 = vmul.f32 %v4820, %v6049
    %v6147 = vmul.f32 %v4821, %v6049
    %v6148 = vmul.f32 %v4822, %v6049
    %v6149 = vmul.f32 %v4823, %v6049
    %v6150 = vmul.f32 %v4824, %v6049
    %v6151 = vmul.f32 %v4825, %v6049
    %v6152 = vmul.f32 %v4826, %v6049
    %v6153 = vmul.f32 %v4827, %v6049
    %v6154 = vmul.f32 %v4828, %v6049
    %v6155 = vmul.f32 %v4829, %v6049
    %v6156 = vmul.f32 %v4830, %v6049
    %v6157 = vmul.f32 %v4831, %v6049
    %v6158 = vmul.f32 %v4832, %v6049
    %v6159 = vmul.f32 %v4833, %v6049
    %v6160 = vmul.f32 %v4834, %v6049
    %v6161 = vmul.f32 %v4835, %v6049
    %v6162 = vmul.f32 %v4836, %v6053
    %v6163 = vmul.f32 %v4837, %v6053
    %v6164 = vmul.f32 %v4838, %v6053
    %v6165 = vmul.f32 %v4839, %v6053
    %v6166 = vmul.f32 %v4840, %v6053
    %v6167 = vmul.f32 %v4841, %v6053
    %v6168 = vmul.f32 %v4842, %v6053
    %v6169 = vmul.f32 %v4843, %v6053
    %v6170 = vmul.f32 %v4844, %v6053
    %v6171 = vmul.f32 %v4845, %v6053
    %v6172 = vmul.f32 %v4846, %v6053
    %v6173 = vmul.f32 %v4847, %v6053
    %v6174 = vmul.f32 %v4848, %v6053
    %v6175 = vmul.f32 %v4849, %v6053
    %v6176 = vmul.f32 %v4850, %v6053
    %v6177 = vmul.f32 %v4851, %v6053
    %v6178 = vmul.f32 %v4852, %v6057
    %v6179 = vmul.f32 %v4853, %v6057
    %v6180 = vmul.f32 %v4854, %v6057
    %v6181 = vmul.f32 %v4855, %v6057
    %v6182 = vmul.f32 %v4856, %v6057
    %v6183 = vmul.f32 %v4857, %v6057
    %v6184 = vmul.f32 %v4858, %v6057
    %v6185 = vmul.f32 %v4859, %v6057
    %v6186 = vmul.f32 %v4860, %v6057
    %v6187 = vmul.f32 %v4861, %v6057
    %v6188 = vmul.f32 %v4862, %v6057
    %v6189 = vmul.f32 %v4863, %v6057
    %v6190 = vmul.f32 %v4864, %v6057
    %v6191 = vmul.f32 %v4865, %v6057
    %v6192 = vmul.f32 %v4866, %v6057
    %v6193 = vmul.f32 %v4867, %v6057
    %v6194 = vld [vmem:[#allocation9] sm:$0xff]
    %v6195 = vld [vmem:[#allocation9 + $0x8] sm:$0xff]
    %v6196 = vld [vmem:[#allocation9 + $0x10] sm:$0xff]
    %v6197 = vld [vmem:[#allocation9 + $0x18] sm:$0xff]
    %v6198 = vld [vmem:[#allocation9 + $0x20] sm:$0xff]
    %v6199 = vld [vmem:[#allocation9 + $0x28] sm:$0xff]
    %v6200 = vld [vmem:[#allocation9 + $0x30] sm:$0xff]
    %v6201 = vld [vmem:[#allocation9 + $0x38] sm:$0xff]
    %v6202 = vld [vmem:[#allocation9 + $0x40] sm:$0xff]
    %v6203 = vld [vmem:[#allocation9 + $0x48] sm:$0xff]
    %v6204 = vld [vmem:[#allocation9 + $0x50] sm:$0xff]
    %v6205 = vld [vmem:[#allocation9 + $0x58] sm:$0xff]
    %v6206 = vld [vmem:[#allocation9 + $0x60] sm:$0xff]
    %v6207 = vld [vmem:[#allocation9 + $0x68] sm:$0xff]
    %v6208 = vld [vmem:[#allocation9 + $0x70] sm:$0xff]
    %v6209 = vld [vmem:[#allocation9 + $0x78] sm:$0xff]
    %v6210 = vld [vmem:[#allocation9 + $0x80] sm:$0xff]
    %v6211 = vld [vmem:[#allocation9 + $0x88] sm:$0xff]
    %v6212 = vld [vmem:[#allocation9 + $0x90] sm:$0xff]
    %v6213 = vld [vmem:[#allocation9 + $0x98] sm:$0xff]
    %v6214 = vld [vmem:[#allocation9 + $0xa0] sm:$0xff]
    %v6215 = vld [vmem:[#allocation9 + $0xa8] sm:$0xff]
    %v6216 = vld [vmem:[#allocation9 + $0xb0] sm:$0xff]
    %v6217 = vld [vmem:[#allocation9 + $0xb8] sm:$0xff]
    %v6218 = vld [vmem:[#allocation9 + $0xc0] sm:$0xff]
    %v6219 = vld [vmem:[#allocation9 + $0xc8] sm:$0xff]
    %v6220 = vld [vmem:[#allocation9 + $0xd0] sm:$0xff]
    %v6221 = vld [vmem:[#allocation9 + $0xd8] sm:$0xff]
    %v6222 = vld [vmem:[#allocation9 + $0xe0] sm:$0xff]
    %v6223 = vld [vmem:[#allocation9 + $0xe8] sm:$0xff]
    %v6224 = vld [vmem:[#allocation9 + $0xf0] sm:$0xff]
    %v6225 = vld [vmem:[#allocation9 + $0xf8] sm:$0xff]
    %v6226 = vld [vmem:[#allocation9 + $0x100] sm:$0xff]
    %v6227 = vld [vmem:[#allocation9 + $0x108] sm:$0xff]
    %v6228 = vld [vmem:[#allocation9 + $0x110] sm:$0xff]
    %v6229 = vld [vmem:[#allocation9 + $0x118] sm:$0xff]
    %v6230 = vld [vmem:[#allocation9 + $0x120] sm:$0xff]
    %v6231 = vld [vmem:[#allocation9 + $0x128] sm:$0xff]
    %v6232 = vld [vmem:[#allocation9 + $0x130] sm:$0xff]
    %v6233 = vld [vmem:[#allocation9 + $0x138] sm:$0xff]
    %v6234 = vld [vmem:[#allocation9 + $0x140] sm:$0xff]
    %v6235 = vld [vmem:[#allocation9 + $0x148] sm:$0xff]
    %v6236 = vld [vmem:[#allocation9 + $0x150] sm:$0xff]
    %v6237 = vld [vmem:[#allocation9 + $0x158] sm:$0xff]
    %v6238 = vld [vmem:[#allocation9 + $0x160] sm:$0xff]
    %v6239 = vld [vmem:[#allocation9 + $0x168] sm:$0xff]
    %v6240 = vld [vmem:[#allocation9 + $0x170] sm:$0xff]
    %v6241 = vld [vmem:[#allocation9 + $0x178] sm:$0xff]
    %v6242 = vld [vmem:[#allocation9 + $0x180] sm:$0xff]
    %v6243 = vld [vmem:[#allocation9 + $0x188] sm:$0xff]
    %v6244 = vld [vmem:[#allocation9 + $0x190] sm:$0xff]
    %v6245 = vld [vmem:[#allocation9 + $0x198] sm:$0xff]
    %v6246 = vld [vmem:[#allocation9 + $0x1a0] sm:$0xff]
    %v6247 = vld [vmem:[#allocation9 + $0x1a8] sm:$0xff]
    %v6248 = vld [vmem:[#allocation9 + $0x1b0] sm:$0xff]
    %v6249 = vld [vmem:[#allocation9 + $0x1b8] sm:$0xff]
    %v6250 = vld [vmem:[#allocation9 + $0x1c0] sm:$0xff]
    %v6251 = vld [vmem:[#allocation9 + $0x1c8] sm:$0xff]
    %v6252 = vld [vmem:[#allocation9 + $0x1d0] sm:$0xff]
    %v6253 = vld [vmem:[#allocation9 + $0x1d8] sm:$0xff]
    %v6254 = vld [vmem:[#allocation9 + $0x1e0] sm:$0xff]
    %v6255 = vld [vmem:[#allocation9 + $0x1e8] sm:$0xff]
    %v6256 = vld [vmem:[#allocation9 + $0x1f0] sm:$0xff]
    %v6257 = vld [vmem:[#allocation9 + $0x1f8] sm:$0xff]
    %v6258 = vld [vmem:[#allocation9 + $0x200] sm:$0xff]
    %v6259 = vld [vmem:[#allocation9 + $0x208] sm:$0xff]
    %v6260 = vld [vmem:[#allocation9 + $0x210] sm:$0xff]
    %v6261 = vld [vmem:[#allocation9 + $0x218] sm:$0xff]
    %v6262 = vld [vmem:[#allocation9 + $0x220] sm:$0xff]
    %v6263 = vld [vmem:[#allocation9 + $0x228] sm:$0xff]
    %v6264 = vld [vmem:[#allocation9 + $0x230] sm:$0xff]
    %v6265 = vld [vmem:[#allocation9 + $0x238] sm:$0xff]
    %v6266 = vld [vmem:[#allocation9 + $0x240] sm:$0xff]
    %v6267 = vld [vmem:[#allocation9 + $0x248] sm:$0xff]
    %v6268 = vld [vmem:[#allocation9 + $0x250] sm:$0xff]
    %v6269 = vld [vmem:[#allocation9 + $0x258] sm:$0xff]
    %v6270 = vld [vmem:[#allocation9 + $0x260] sm:$0xff]
    %v6271 = vld [vmem:[#allocation9 + $0x268] sm:$0xff]
    %v6272 = vld [vmem:[#allocation9 + $0x270] sm:$0xff]
    %v6273 = vld [vmem:[#allocation9 + $0x278] sm:$0xff]
    %v6274 = vld [vmem:[#allocation9 + $0x280] sm:$0xff]
    %v6275 = vld [vmem:[#allocation9 + $0x288] sm:$0xff]
    %v6276 = vld [vmem:[#allocation9 + $0x290] sm:$0xff]
    %v6277 = vld [vmem:[#allocation9 + $0x298] sm:$0xff]
    %v6278 = vld [vmem:[#allocation9 + $0x2a0] sm:$0xff]
    %v6279 = vld [vmem:[#allocation9 + $0x2a8] sm:$0xff]
    %v6280 = vld [vmem:[#allocation9 + $0x2b0] sm:$0xff]
    %v6281 = vld [vmem:[#allocation9 + $0x2b8] sm:$0xff]
    %v6282 = vld [vmem:[#allocation9 + $0x2c0] sm:$0xff]
    %v6283 = vld [vmem:[#allocation9 + $0x2c8] sm:$0xff]
    %v6284 = vld [vmem:[#allocation9 + $0x2d0] sm:$0xff]
    %v6285 = vld [vmem:[#allocation9 + $0x2d8] sm:$0xff]
    %v6286 = vld [vmem:[#allocation9 + $0x2e0] sm:$0xff]
    %v6287 = vld [vmem:[#allocation9 + $0x2e8] sm:$0xff]
    %v6288 = vld [vmem:[#allocation9 + $0x2f0] sm:$0xff]
    %v6289 = vld [vmem:[#allocation9 + $0x2f8] sm:$0xff]
    %v6290 = vld [vmem:[#allocation9 + $0x300] sm:$0xff]
    %v6291 = vld [vmem:[#allocation9 + $0x308] sm:$0xff]
    %v6292 = vld [vmem:[#allocation9 + $0x310] sm:$0xff]
    %v6293 = vld [vmem:[#allocation9 + $0x318] sm:$0xff]
    %v6294 = vld [vmem:[#allocation9 + $0x320] sm:$0xff]
    %v6295 = vld [vmem:[#allocation9 + $0x328] sm:$0xff]
    %v6296 = vld [vmem:[#allocation9 + $0x330] sm:$0xff]
    %v6297 = vld [vmem:[#allocation9 + $0x338] sm:$0xff]
    %v6298 = vld [vmem:[#allocation9 + $0x340] sm:$0xff]
    %v6299 = vld [vmem:[#allocation9 + $0x348] sm:$0xff]
    %v6300 = vld [vmem:[#allocation9 + $0x350] sm:$0xff]
    %v6301 = vld [vmem:[#allocation9 + $0x358] sm:$0xff]
    %v6302 = vld [vmem:[#allocation9 + $0x360] sm:$0xff]
    %v6303 = vld [vmem:[#allocation9 + $0x368] sm:$0xff]
    %v6304 = vld [vmem:[#allocation9 + $0x370] sm:$0xff]
    %v6305 = vld [vmem:[#allocation9 + $0x378] sm:$0xff]
    %v6306 = vld [vmem:[#allocation9 + $0x380] sm:$0xff]
    %v6307 = vld [vmem:[#allocation9 + $0x388] sm:$0xff]
    %v6308 = vld [vmem:[#allocation9 + $0x390] sm:$0xff]
    %v6309 = vld [vmem:[#allocation9 + $0x398] sm:$0xff]
    %v6310 = vld [vmem:[#allocation9 + $0x3a0] sm:$0xff]
    %v6311 = vld [vmem:[#allocation9 + $0x3a8] sm:$0xff]
    %v6312 = vld [vmem:[#allocation9 + $0x3b0] sm:$0xff]
    %v6313 = vld [vmem:[#allocation9 + $0x3b8] sm:$0xff]
    %v6314 = vld [vmem:[#allocation9 + $0x3c0] sm:$0xff]
    %v6315 = vld [vmem:[#allocation9 + $0x3c8] sm:$0xff]
    %v6316 = vld [vmem:[#allocation9 + $0x3d0] sm:$0xff]
    %v6317 = vld [vmem:[#allocation9 + $0x3d8] sm:$0xff]
    %v6318 = vld [vmem:[#allocation9 + $0x3e0] sm:$0xff]
    %v6319 = vld [vmem:[#allocation9 + $0x3e8] sm:$0xff]
    %v6320 = vld [vmem:[#allocation9 + $0x3f0] sm:$0xff]
    %v6321 = vld [vmem:[#allocation9 + $0x3f8] sm:$0xff]
    %6323 = vset.pattern.permute.xlu0 0
    %6324 = vperm.xlu0 %6323, %v6066
    %v6325 = vpop.permute.xlu0 %6324
    %6328 = vset.pattern.permute.xlu0 0
    %6329 = vperm.xlu0 %6328, %v6067
    %v6330 = vpop.permute.xlu0 %6329
    %6333 = vset.pattern.permute.xlu0 0
    %6334 = vperm.xlu0 %6333, %v6068
    %v6335 = vpop.permute.xlu0 %6334
    %6338 = vset.pattern.permute.xlu0 0
    %6339 = vperm.xlu0 %6338, %v6069
    %v6340 = vpop.permute.xlu0 %6339
    %6343 = vset.pattern.permute.xlu0 0
    %6344 = vperm.xlu0 %6343, %v6070
    %v6345 = vpop.permute.xlu0 %6344
    %6348 = vset.pattern.permute.xlu0 0
    %6349 = vperm.xlu0 %6348, %v6071
    %v6350 = vpop.permute.xlu0 %6349
    %6353 = vset.pattern.permute.xlu0 0
    %6354 = vperm.xlu0 %6353, %v6072
    %v6355 = vpop.permute.xlu0 %6354
    %6358 = vset.pattern.permute.xlu0 0
    %6359 = vperm.xlu0 %6358, %v6073
    %v6360 = vpop.permute.xlu0 %6359
    %6363 = vset.pattern.permute.xlu0 0
    %6364 = vperm.xlu0 %6363, %v6074
    %v6365 = vpop.permute.xlu0 %6364
    %6368 = vset.pattern.permute.xlu0 0
    %6369 = vperm.xlu0 %6368, %v6075
    %v6370 = vpop.permute.xlu0 %6369
    %6373 = vset.pattern.permute.xlu0 0
    %6374 = vperm.xlu0 %6373, %v6076
    %v6375 = vpop.permute.xlu0 %6374
    %6378 = vset.pattern.permute.xlu0 0
    %6379 = vperm.xlu0 %6378, %v6077
    %v6380 = vpop.permute.xlu0 %6379
    %6383 = vset.pattern.permute.xlu0 0
    %6384 = vperm.xlu0 %6383, %v6078
    %v6385 = vpop.permute.xlu0 %6384
    %6388 = vset.pattern.permute.xlu0 0
    %6389 = vperm.xlu0 %6388, %v6079
    %v6390 = vpop.permute.xlu0 %6389
    %6393 = vset.pattern.permute.xlu0 0
    %6394 = vperm.xlu0 %6393, %v6080
    %v6395 = vpop.permute.xlu0 %6394
    %6398 = vset.pattern.permute.xlu0 0
    %6399 = vperm.xlu0 %6398, %v6081
    %v6400 = vpop.permute.xlu0 %6399
    %6403 = vset.pattern.permute.xlu0 0
    %6404 = vperm.xlu0 %6403, %v6082
    %v6405 = vpop.permute.xlu0 %6404
    %6408 = vset.pattern.permute.xlu0 0
    %6409 = vperm.xlu0 %6408, %v6083
    %v6410 = vpop.permute.xlu0 %6409
    %6413 = vset.pattern.permute.xlu0 0
    %6414 = vperm.xlu0 %6413, %v6084
    %v6415 = vpop.permute.xlu0 %6414
    %6418 = vset.pattern.permute.xlu0 0
    %6419 = vperm.xlu0 %6418, %v6085
    %v6420 = vpop.permute.xlu0 %6419
    %6423 = vset.pattern.permute.xlu0 0
    %6424 = vperm.xlu0 %6423, %v6086
    %v6425 = vpop.permute.xlu0 %6424
    %6428 = vset.pattern.permute.xlu0 0
    %6429 = vperm.xlu0 %6428, %v6087
    %v6430 = vpop.permute.xlu0 %6429
    %6433 = vset.pattern.permute.xlu0 0
    %6434 = vperm.xlu0 %6433, %v6088
    %v6435 = vpop.permute.xlu0 %6434
    %6438 = vset.pattern.permute.xlu0 0
    %6439 = vperm.xlu0 %6438, %v6089
    %v6440 = vpop.permute.xlu0 %6439
    %6443 = vset.pattern.permute.xlu0 0
    %6444 = vperm.xlu0 %6443, %v6090
    %v6445 = vpop.permute.xlu0 %6444
    %6448 = vset.pattern.permute.xlu0 0
    %6449 = vperm.xlu0 %6448, %v6091
    %v6450 = vpop.permute.xlu0 %6449
    %6453 = vset.pattern.permute.xlu0 0
    %6454 = vperm.xlu0 %6453, %v6092
    %v6455 = vpop.permute.xlu0 %6454
    %6458 = vset.pattern.permute.xlu0 0
    %6459 = vperm.xlu0 %6458, %v6093
    %v6460 = vpop.permute.xlu0 %6459
    %6463 = vset.pattern.permute.xlu0 0
    %6464 = vperm.xlu0 %6463, %v6094
    %v6465 = vpop.permute.xlu0 %6464
    %6468 = vset.pattern.permute.xlu0 0
    %6469 = vperm.xlu0 %6468, %v6095
    %v6470 = vpop.permute.xlu0 %6469
    %6473 = vset.pattern.permute.xlu0 0
    %6474 = vperm.xlu0 %6473, %v6096
    %v6475 = vpop.permute.xlu0 %6474
    %6478 = vset.pattern.permute.xlu0 0
    %6479 = vperm.xlu0 %6478, %v6097
    %v6480 = vpop.permute.xlu0 %6479
    %6483 = vset.pattern.permute.xlu0 0
    %6484 = vperm.xlu0 %6483, %v6098
    %v6485 = vpop.permute.xlu0 %6484
    %6488 = vset.pattern.permute.xlu0 0
    %6489 = vperm.xlu0 %6488, %v6099
    %v6490 = vpop.permute.xlu0 %6489
    %6493 = vset.pattern.permute.xlu0 0
    %6494 = vperm.xlu0 %6493, %v6100
    %v6495 = vpop.permute.xlu0 %6494
    %6498 = vset.pattern.permute.xlu0 0
    %6499 = vperm.xlu0 %6498, %v6101
    %v6500 = vpop.permute.xlu0 %6499
    %6503 = vset.pattern.permute.xlu0 0
    %6504 = vperm.xlu0 %6503, %v6102
    %v6505 = vpop.permute.xlu0 %6504
    %6508 = vset.pattern.permute.xlu0 0
    %6509 = vperm.xlu0 %6508, %v6103
    %v6510 = vpop.permute.xlu0 %6509
    %6513 = vset.pattern.permute.xlu0 0
    %6514 = vperm.xlu0 %6513, %v6104
    %v6515 = vpop.permute.xlu0 %6514
    %6518 = vset.pattern.permute.xlu0 0
    %6519 = vperm.xlu0 %6518, %v6105
    %v6520 = vpop.permute.xlu0 %6519
    %6523 = vset.pattern.permute.xlu0 0
    %6524 = vperm.xlu0 %6523, %v6106
    %v6525 = vpop.permute.xlu0 %6524
    %6528 = vset.pattern.permute.xlu0 0
    %6529 = vperm.xlu0 %6528, %v6107
    %v6530 = vpop.permute.xlu0 %6529
    %6533 = vset.pattern.permute.xlu0 0
    %6534 = vperm.xlu0 %6533, %v6108
    %v6535 = vpop.permute.xlu0 %6534
    %6538 = vset.pattern.permute.xlu0 0
    %6539 = vperm.xlu0 %6538, %v6109
    %v6540 = vpop.permute.xlu0 %6539
    %6543 = vset.pattern.permute.xlu0 0
    %6544 = vperm.xlu0 %6543, %v6110
    %v6545 = vpop.permute.xlu0 %6544
    %6548 = vset.pattern.permute.xlu0 0
    %6549 = vperm.xlu0 %6548, %v6111
    %v6550 = vpop.permute.xlu0 %6549
    %6553 = vset.pattern.permute.xlu0 0
    %6554 = vperm.xlu0 %6553, %v6112
    %v6555 = vpop.permute.xlu0 %6554
    %6558 = vset.pattern.permute.xlu0 0
    %6559 = vperm.xlu0 %6558, %v6113
    %v6560 = vpop.permute.xlu0 %6559
    %6563 = vset.pattern.permute.xlu0 0
    %6564 = vperm.xlu0 %6563, %v6114
    %v6565 = vpop.permute.xlu0 %6564
    %6568 = vset.pattern.permute.xlu0 0
    %6569 = vperm.xlu0 %6568, %v6115
    %v6570 = vpop.permute.xlu0 %6569
    %6573 = vset.pattern.permute.xlu0 0
    %6574 = vperm.xlu0 %6573, %v6116
    %v6575 = vpop.permute.xlu0 %6574
    %6578 = vset.pattern.permute.xlu0 0
    %6579 = vperm.xlu0 %6578, %v6117
    %v6580 = vpop.permute.xlu0 %6579
    %6583 = vset.pattern.permute.xlu0 0
    %6584 = vperm.xlu0 %6583, %v6118
    %v6585 = vpop.permute.xlu0 %6584
    %6588 = vset.pattern.permute.xlu0 0
    %6589 = vperm.xlu0 %6588, %v6119
    %v6590 = vpop.permute.xlu0 %6589
    %6593 = vset.pattern.permute.xlu0 0
    %6594 = vperm.xlu0 %6593, %v6120
    %v6595 = vpop.permute.xlu0 %6594
    %6598 = vset.pattern.permute.xlu0 0
    %6599 = vperm.xlu0 %6598, %v6121
    %v6600 = vpop.permute.xlu0 %6599
    %6603 = vset.pattern.permute.xlu0 0
    %6604 = vperm.xlu0 %6603, %v6122
    %v6605 = vpop.permute.xlu0 %6604
    %6608 = vset.pattern.permute.xlu0 0
    %6609 = vperm.xlu0 %6608, %v6123
    %v6610 = vpop.permute.xlu0 %6609
    %6613 = vset.pattern.permute.xlu0 0
    %6614 = vperm.xlu0 %6613, %v6124
    %v6615 = vpop.permute.xlu0 %6614
    %6618 = vset.pattern.permute.xlu0 0
    %6619 = vperm.xlu0 %6618, %v6125
    %v6620 = vpop.permute.xlu0 %6619
    %6623 = vset.pattern.permute.xlu0 0
    %6624 = vperm.xlu0 %6623, %v6126
    %v6625 = vpop.permute.xlu0 %6624
    %6628 = vset.pattern.permute.xlu0 0
    %6629 = vperm.xlu0 %6628, %v6127
    %v6630 = vpop.permute.xlu0 %6629
    %6633 = vset.pattern.permute.xlu0 0
    %6634 = vperm.xlu0 %6633, %v6128
    %v6635 = vpop.permute.xlu0 %6634
    %6638 = vset.pattern.permute.xlu0 0
    %6639 = vperm.xlu0 %6638, %v6129
    %v6640 = vpop.permute.xlu0 %6639
    %6643 = vset.pattern.permute.xlu0 0
    %6644 = vperm.xlu0 %6643, %v6130
    %v6645 = vpop.permute.xlu0 %6644
    %6648 = vset.pattern.permute.xlu0 0
    %6649 = vperm.xlu0 %6648, %v6131
    %v6650 = vpop.permute.xlu0 %6649
    %6653 = vset.pattern.permute.xlu0 0
    %6654 = vperm.xlu0 %6653, %v6132
    %v6655 = vpop.permute.xlu0 %6654
    %6658 = vset.pattern.permute.xlu0 0
    %6659 = vperm.xlu0 %6658, %v6133
    %v6660 = vpop.permute.xlu0 %6659
    %6663 = vset.pattern.permute.xlu0 0
    %6664 = vperm.xlu0 %6663, %v6134
    %v6665 = vpop.permute.xlu0 %6664
    %6668 = vset.pattern.permute.xlu0 0
    %6669 = vperm.xlu0 %6668, %v6135
    %v6670 = vpop.permute.xlu0 %6669
    %6673 = vset.pattern.permute.xlu0 0
    %6674 = vperm.xlu0 %6673, %v6136
    %v6675 = vpop.permute.xlu0 %6674
    %6678 = vset.pattern.permute.xlu0 0
    %6679 = vperm.xlu0 %6678, %v6137
    %v6680 = vpop.permute.xlu0 %6679
    %6683 = vset.pattern.permute.xlu0 0
    %6684 = vperm.xlu0 %6683, %v6138
    %v6685 = vpop.permute.xlu0 %6684
    %6688 = vset.pattern.permute.xlu0 0
    %6689 = vperm.xlu0 %6688, %v6139
    %v6690 = vpop.permute.xlu0 %6689
    %6693 = vset.pattern.permute.xlu0 0
    %6694 = vperm.xlu0 %6693, %v6140
    %v6695 = vpop.permute.xlu0 %6694
    %6698 = vset.pattern.permute.xlu0 0
    %6699 = vperm.xlu0 %6698, %v6141
    %v6700 = vpop.permute.xlu0 %6699
    %6703 = vset.pattern.permute.xlu0 0
    %6704 = vperm.xlu0 %6703, %v6142
    %v6705 = vpop.permute.xlu0 %6704
    %6708 = vset.pattern.permute.xlu0 0
    %6709 = vperm.xlu0 %6708, %v6143
    %v6710 = vpop.permute.xlu0 %6709
    %6713 = vset.pattern.permute.xlu0 0
    %6714 = vperm.xlu0 %6713, %v6144
    %v6715 = vpop.permute.xlu0 %6714
    %6718 = vset.pattern.permute.xlu0 0
    %6719 = vperm.xlu0 %6718, %v6145
    %v6720 = vpop.permute.xlu0 %6719
    %6723 = vset.pattern.permute.xlu0 0
    %6724 = vperm.xlu0 %6723, %v6146
    %v6725 = vpop.permute.xlu0 %6724
    %6728 = vset.pattern.permute.xlu0 0
    %6729 = vperm.xlu0 %6728, %v6147
    %v6730 = vpop.permute.xlu0 %6729
    %6733 = vset.pattern.permute.xlu0 0
    %6734 = vperm.xlu0 %6733, %v6148
    %v6735 = vpop.permute.xlu0 %6734
    %6738 = vset.pattern.permute.xlu0 0
    %6739 = vperm.xlu0 %6738, %v6149
    %v6740 = vpop.permute.xlu0 %6739
    %6743 = vset.pattern.permute.xlu0 0
    %6744 = vperm.xlu0 %6743, %v6150
    %v6745 = vpop.permute.xlu0 %6744
    %6748 = vset.pattern.permute.xlu0 0
    %6749 = vperm.xlu0 %6748, %v6151
    %v6750 = vpop.permute.xlu0 %6749
    %6753 = vset.pattern.permute.xlu0 0
    %6754 = vperm.xlu0 %6753, %v6152
    %v6755 = vpop.permute.xlu0 %6754
    %6758 = vset.pattern.permute.xlu0 0
    %6759 = vperm.xlu0 %6758, %v6153
    %v6760 = vpop.permute.xlu0 %6759
    %6763 = vset.pattern.permute.xlu0 0
    %6764 = vperm.xlu0 %6763, %v6154
    %v6765 = vpop.permute.xlu0 %6764
    %6768 = vset.pattern.permute.xlu0 0
    %6769 = vperm.xlu0 %6768, %v6155
    %v6770 = vpop.permute.xlu0 %6769
    %6773 = vset.pattern.permute.xlu0 0
    %6774 = vperm.xlu0 %6773, %v6156
    %v6775 = vpop.permute.xlu0 %6774
    %6778 = vset.pattern.permute.xlu0 0
    %6779 = vperm.xlu0 %6778, %v6157
    %v6780 = vpop.permute.xlu0 %6779
    %6783 = vset.pattern.permute.xlu0 0
    %6784 = vperm.xlu0 %6783, %v6158
    %v6785 = vpop.permute.xlu0 %6784
    %6788 = vset.pattern.permute.xlu0 0
    %6789 = vperm.xlu0 %6788, %v6159
    %v6790 = vpop.permute.xlu0 %6789
    %6793 = vset.pattern.permute.xlu0 0
    %6794 = vperm.xlu0 %6793, %v6160
    %v6795 = vpop.permute.xlu0 %6794
    %6798 = vset.pattern.permute.xlu0 0
    %6799 = vperm.xlu0 %6798, %v6161
    %v6800 = vpop.permute.xlu0 %6799
    %6803 = vset.pattern.permute.xlu0 0
    %6804 = vperm.xlu0 %6803, %v6162
    %v6805 = vpop.permute.xlu0 %6804
    %6808 = vset.pattern.permute.xlu0 0
    %6809 = vperm.xlu0 %6808, %v6163
    %v6810 = vpop.permute.xlu0 %6809
    %6813 = vset.pattern.permute.xlu0 0
    %6814 = vperm.xlu0 %6813, %v6164
    %v6815 = vpop.permute.xlu0 %6814
    %6818 = vset.pattern.permute.xlu0 0
    %6819 = vperm.xlu0 %6818, %v6165
    %v6820 = vpop.permute.xlu0 %6819
    %6823 = vset.pattern.permute.xlu0 0
    %6824 = vperm.xlu0 %6823, %v6166
    %v6825 = vpop.permute.xlu0 %6824
    %6828 = vset.pattern.permute.xlu0 0
    %6829 = vperm.xlu0 %6828, %v6167
    %v6830 = vpop.permute.xlu0 %6829
    %6833 = vset.pattern.permute.xlu0 0
    %6834 = vperm.xlu0 %6833, %v6168
    %v6835 = vpop.permute.xlu0 %6834
    %6838 = vset.pattern.permute.xlu0 0
    %6839 = vperm.xlu0 %6838, %v6169
    %v6840 = vpop.permute.xlu0 %6839
    %6843 = vset.pattern.permute.xlu0 0
    %6844 = vperm.xlu0 %6843, %v6170
    %v6845 = vpop.permute.xlu0 %6844
    %6848 = vset.pattern.permute.xlu0 0
    %6849 = vperm.xlu0 %6848, %v6171
    %v6850 = vpop.permute.xlu0 %6849
    %6853 = vset.pattern.permute.xlu0 0
    %6854 = vperm.xlu0 %6853, %v6172
    %v6855 = vpop.permute.xlu0 %6854
    %6858 = vset.pattern.permute.xlu0 0
    %6859 = vperm.xlu0 %6858, %v6173
    %v6860 = vpop.permute.xlu0 %6859
    %6863 = vset.pattern.permute.xlu0 0
    %6864 = vperm.xlu0 %6863, %v6174
    %v6865 = vpop.permute.xlu0 %6864
    %6868 = vset.pattern.permute.xlu0 0
    %6869 = vperm.xlu0 %6868, %v6175
    %v6870 = vpop.permute.xlu0 %6869
    %6873 = vset.pattern.permute.xlu0 0
    %6874 = vperm.xlu0 %6873, %v6176
    %v6875 = vpop.permute.xlu0 %6874
    %6878 = vset.pattern.permute.xlu0 0
    %6879 = vperm.xlu0 %6878, %v6177
    %v6880 = vpop.permute.xlu0 %6879
    %6883 = vset.pattern.permute.xlu0 0
    %6884 = vperm.xlu0 %6883, %v6178
    %v6885 = vpop.permute.xlu0 %6884
    %6888 = vset.pattern.permute.xlu0 0
    %6889 = vperm.xlu0 %6888, %v6179
    %v6890 = vpop.permute.xlu0 %6889
    %6893 = vset.pattern.permute.xlu0 0
    %6894 = vperm.xlu0 %6893, %v6180
    %v6895 = vpop.permute.xlu0 %6894
    %6898 = vset.pattern.permute.xlu0 0
    %6899 = vperm.xlu0 %6898, %v6181
    %v6900 = vpop.permute.xlu0 %6899
    %6903 = vset.pattern.permute.xlu0 0
    %6904 = vperm.xlu0 %6903, %v6182
    %v6905 = vpop.permute.xlu0 %6904
    %6908 = vset.pattern.permute.xlu0 0
    %6909 = vperm.xlu0 %6908, %v6183
    %v6910 = vpop.permute.xlu0 %6909
    %6913 = vset.pattern.permute.xlu0 0
    %6914 = vperm.xlu0 %6913, %v6184
    %v6915 = vpop.permute.xlu0 %6914
    %6918 = vset.pattern.permute.xlu0 0
    %6919 = vperm.xlu0 %6918, %v6185
    %v6920 = vpop.permute.xlu0 %6919
    %6923 = vset.pattern.permute.xlu0 0
    %6924 = vperm.xlu0 %6923, %v6186
    %v6925 = vpop.permute.xlu0 %6924
    %6928 = vset.pattern.permute.xlu0 0
    %6929 = vperm.xlu0 %6928, %v6187
    %v6930 = vpop.permute.xlu0 %6929
    %6933 = vset.pattern.permute.xlu0 0
    %6934 = vperm.xlu0 %6933, %v6188
    %v6935 = vpop.permute.xlu0 %6934
    %6938 = vset.pattern.permute.xlu0 0
    %6939 = vperm.xlu0 %6938, %v6189
    %v6940 = vpop.permute.xlu0 %6939
    %6943 = vset.pattern.permute.xlu0 0
    %6944 = vperm.xlu0 %6943, %v6190
    %v6945 = vpop.permute.xlu0 %6944
    %6948 = vset.pattern.permute.xlu0 0
    %6949 = vperm.xlu0 %6948, %v6191
    %v6950 = vpop.permute.xlu0 %6949
    %6953 = vset.pattern.permute.xlu0 0
    %6954 = vperm.xlu0 %6953, %v6192
    %v6955 = vpop.permute.xlu0 %6954
    %6958 = vset.pattern.permute.xlu0 0
    %6959 = vperm.xlu0 %6958, %v6193
    %v6960 = vpop.permute.xlu0 %6959
    %v6962 = vmul.f32 %v6325, %v6194
    %v6963 = vmul.f32 %v6330, %v6195
    %v6964 = vmul.f32 %v6335, %v6196
    %v6965 = vmul.f32 %v6340, %v6197
    %v6966 = vmul.f32 %v6345, %v6198
    %v6967 = vmul.f32 %v6350, %v6199
    %v6968 = vmul.f32 %v6355, %v6200
    %v6969 = vmul.f32 %v6360, %v6201
    %v6970 = vmul.f32 %v6365, %v6202
    %v6971 = vmul.f32 %v6370, %v6203
    %v6972 = vmul.f32 %v6375, %v6204
    %v6973 = vmul.f32 %v6380, %v6205
    %v6974 = vmul.f32 %v6385, %v6206
    %v6975 = vmul.f32 %v6390, %v6207
    %v6976 = vmul.f32 %v6395, %v6208
    %v6977 = vmul.f32 %v6400, %v6209
    %v6978 = vmul.f32 %v6405, %v6210
    %v6979 = vmul.f32 %v6410, %v6211
    %v6980 = vmul.f32 %v6415, %v6212
    %v6981 = vmul.f32 %v6420, %v6213
    %v6982 = vmul.f32 %v6425, %v6214
    %v6983 = vmul.f32 %v6430, %v6215
    %v6984 = vmul.f32 %v6435, %v6216
    %v6985 = vmul.f32 %v6440, %v6217
    %v6986 = vmul.f32 %v6445, %v6218
    %v6987 = vmul.f32 %v6450, %v6219
    %v6988 = vmul.f32 %v6455, %v6220
    %v6989 = vmul.f32 %v6460, %v6221
    %v6990 = vmul.f32 %v6465, %v6222
    %v6991 = vmul.f32 %v6470, %v6223
    %v6992 = vmul.f32 %v6475, %v6224
    %v6993 = vmul.f32 %v6480, %v6225
    %v6994 = vmul.f32 %v6485, %v6226
    %v6995 = vmul.f32 %v6490, %v6227
    %v6996 = vmul.f32 %v6495, %v6228
    %v6997 = vmul.f32 %v6500, %v6229
    %v6998 = vmul.f32 %v6505, %v6230
    %v6999 = vmul.f32 %v6510, %v6231
    %v7000 = vmul.f32 %v6515, %v6232
    %v7001 = vmul.f32 %v6520, %v6233
    %v7002 = vmul.f32 %v6525, %v6234
    %v7003 = vmul.f32 %v6530, %v6235
    %v7004 = vmul.f32 %v6535, %v6236
    %v7005 = vmul.f32 %v6540, %v6237
    %v7006 = vmul.f32 %v6545, %v6238
    %v7007 = vmul.f32 %v6550, %v6239
    %v7008 = vmul.f32 %v6555, %v6240
    %v7009 = vmul.f32 %v6560, %v6241
    %v7010 = vmul.f32 %v6565, %v6242
    %v7011 = vmul.f32 %v6570, %v6243
    %v7012 = vmul.f32 %v6575, %v6244
    %v7013 = vmul.f32 %v6580, %v6245
    %v7014 = vmul.f32 %v6585, %v6246
    %v7015 = vmul.f32 %v6590, %v6247
    %v7016 = vmul.f32 %v6595, %v6248
    %v7017 = vmul.f32 %v6600, %v6249
    %v7018 = vmul.f32 %v6605, %v6250
    %v7019 = vmul.f32 %v6610, %v6251
    %v7020 = vmul.f32 %v6615, %v6252
    %v7021 = vmul.f32 %v6620, %v6253
    %v7022 = vmul.f32 %v6625, %v6254
    %v7023 = vmul.f32 %v6630, %v6255
    %v7024 = vmul.f32 %v6635, %v6256
    %v7025 = vmul.f32 %v6640, %v6257
    %v7026 = vmul.f32 %v6645, %v6258
    %v7027 = vmul.f32 %v6650, %v6259
    %v7028 = vmul.f32 %v6655, %v6260
    %v7029 = vmul.f32 %v6660, %v6261
    %v7030 = vmul.f32 %v6665, %v6262
    %v7031 = vmul.f32 %v6670, %v6263
    %v7032 = vmul.f32 %v6675, %v6264
    %v7033 = vmul.f32 %v6680, %v6265
    %v7034 = vmul.f32 %v6685, %v6266
    %v7035 = vmul.f32 %v6690, %v6267
    %v7036 = vmul.f32 %v6695, %v6268
    %v7037 = vmul.f32 %v6700, %v6269
    %v7038 = vmul.f32 %v6705, %v6270
    %v7039 = vmul.f32 %v6710, %v6271
    %v7040 = vmul.f32 %v6715, %v6272
    %v7041 = vmul.f32 %v6720, %v6273
    %v7042 = vmul.f32 %v6725, %v6274
    %v7043 = vmul.f32 %v6730, %v6275
    %v7044 = vmul.f32 %v6735, %v6276
    %v7045 = vmul.f32 %v6740, %v6277
    %v7046 = vmul.f32 %v6745, %v6278
    %v7047 = vmul.f32 %v6750, %v6279
    %v7048 = vmul.f32 %v6755, %v6280
    %v7049 = vmul.f32 %v6760, %v6281
    %v7050 = vmul.f32 %v6765, %v6282
    %v7051 = vmul.f32 %v6770, %v6283
    %v7052 = vmul.f32 %v6775, %v6284
    %v7053 = vmul.f32 %v6780, %v6285
    %v7054 = vmul.f32 %v6785, %v6286
    %v7055 = vmul.f32 %v6790, %v6287
    %v7056 = vmul.f32 %v6795, %v6288
    %v7057 = vmul.f32 %v6800, %v6289
    %v7058 = vmul.f32 %v6805, %v6290
    %v7059 = vmul.f32 %v6810, %v6291
    %v7060 = vmul.f32 %v6815, %v6292
    %v7061 = vmul.f32 %v6820, %v6293
    %v7062 = vmul.f32 %v6825, %v6294
    %v7063 = vmul.f32 %v6830, %v6295
    %v7064 = vmul.f32 %v6835, %v6296
    %v7065 = vmul.f32 %v6840, %v6297
    %v7066 = vmul.f32 %v6845, %v6298
    %v7067 = vmul.f32 %v6850, %v6299
    %v7068 = vmul.f32 %v6855, %v6300
    %v7069 = vmul.f32 %v6860, %v6301
    %v7070 = vmul.f32 %v6865, %v6302
    %v7071 = vmul.f32 %v6870, %v6303
    %v7072 = vmul.f32 %v6875, %v6304
    %v7073 = vmul.f32 %v6880, %v6305
    %v7074 = vmul.f32 %v6885, %v6306
    %v7075 = vmul.f32 %v6890, %v6307
    %v7076 = vmul.f32 %v6895, %v6308
    %v7077 = vmul.f32 %v6900, %v6309
    %v7078 = vmul.f32 %v6905, %v6310
    %v7079 = vmul.f32 %v6910, %v6311
    %v7080 = vmul.f32 %v6915, %v6312
    %v7081 = vmul.f32 %v6920, %v6313
    %v7082 = vmul.f32 %v6925, %v6314
    %v7083 = vmul.f32 %v6930, %v6315
    %v7084 = vmul.f32 %v6935, %v6316
    %v7085 = vmul.f32 %v6940, %v6317
    %v7086 = vmul.f32 %v6945, %v6318
    %v7087 = vmul.f32 %v6950, %v6319
    %v7088 = vmul.f32 %v6955, %v6320
    %v7089 = vmul.f32 %v6960, %v6321
    %v7090 = vadd.f32 %v6962, %v6963
    %v7091 = vadd.f32 %v7090, %v6964
    %v7092 = vadd.f32 %v7091, %v6965
    %v7093 = vadd.f32 %v7092, %v6966
    %v7094 = vadd.f32 %v7093, %v6967
    %v7095 = vadd.f32 %v7094, %v6968
    %v7096 = vadd.f32 %v7095, %v6969
    %v7097 = vadd.f32 %v7096, %v6970
    %v7098 = vadd.f32 %v7097, %v6971
    %v7099 = vadd.f32 %v7098, %v6972
    %v7100 = vadd.f32 %v7099, %v6973
    %v7101 = vadd.f32 %v7100, %v6974
    %v7102 = vadd.f32 %v7101, %v6975
    %v7103 = vadd.f32 %v7102, %v6976
    %v7104 = vadd.f32 %v7103, %v6977
    %v7105 = vrot.slane %v7104, 4
    %v7106 = vadd.f32 %v7104, %v7105
    %v7107 = vrot.slane %v7106, 2
    %v7108 = vadd.f32 %v7106, %v7107
    %v7109 = vrot.slane %v7108, 1
    %v7110 = vadd.f32 %v7108, %v7109
    %v7111 = vadd.f32 %v6978, %v6979
    %v7112 = vadd.f32 %v7111, %v6980
    %v7113 = vadd.f32 %v7112, %v6981
    %v7114 = vadd.f32 %v7113, %v6982
    %v7115 = vadd.f32 %v7114, %v6983
    %v7116 = vadd.f32 %v7115, %v6984
    %v7117 = vadd.f32 %v7116, %v6985
    %v7118 = vadd.f32 %v7117, %v6986
    %v7119 = vadd.f32 %v7118, %v6987
    %v7120 = vadd.f32 %v7119, %v6988
    %v7121 = vadd.f32 %v7120, %v6989
    %v7122 = vadd.f32 %v7121, %v6990
    %v7123 = vadd.f32 %v7122, %v6991
    %v7124 = vadd.f32 %v7123, %v6992
    %v7125 = vadd.f32 %v7124, %v6993
    %v7126 = vrot.slane %v7125, 4
    %v7127 = vadd.f32 %v7125, %v7126
    %v7128 = vrot.slane %v7127, 2
    %v7129 = vadd.f32 %v7127, %v7128
    %v7130 = vrot.slane %v7129, 1
    %v7131 = vadd.f32 %v7129, %v7130
    %v7132 = vadd.f32 %v6994, %v6995
    %v7133 = vadd.f32 %v7132, %v6996
    %v7134 = vadd.f32 %v7133, %v6997
    %v7135 = vadd.f32 %v7134, %v6998
    %v7136 = vadd.f32 %v7135, %v6999
    %v7137 = vadd.f32 %v7136, %v7000
    %v7138 = vadd.f32 %v7137, %v7001
    %v7139 = vadd.f32 %v7138, %v7002
    %v7140 = vadd.f32 %v7139, %v7003
    %v7141 = vadd.f32 %v7140, %v7004
    %v7142 = vadd.f32 %v7141, %v7005
    %v7143 = vadd.f32 %v7142, %v7006
    %v7144 = vadd.f32 %v7143, %v7007
    %v7145 = vadd.f32 %v7144, %v7008
    %v7146 = vadd.f32 %v7145, %v7009
    %v7147 = vrot.slane %v7146, 4
    %v7148 = vadd.f32 %v7146, %v7147
    %v7149 = vrot.slane %v7148, 2
    %v7150 = vadd.f32 %v7148, %v7149
    %v7151 = vrot.slane %v7150, 1
    %v7152 = vadd.f32 %v7150, %v7151
    %v7153 = vadd.f32 %v7010, %v7011
    %v7154 = vadd.f32 %v7153, %v7012
    %v7155 = vadd.f32 %v7154, %v7013
    %v7156 = vadd.f32 %v7155, %v7014
    %v7157 = vadd.f32 %v7156, %v7015
    %v7158 = vadd.f32 %v7157, %v7016
    %v7159 = vadd.f32 %v7158, %v7017
    %v7160 = vadd.f32 %v7159, %v7018
    %v7161 = vadd.f32 %v7160, %v7019
    %v7162 = vadd.f32 %v7161, %v7020
    %v7163 = vadd.f32 %v7162, %v7021
    %v7164 = vadd.f32 %v7163, %v7022
    %v7165 = vadd.f32 %v7164, %v7023
    %v7166 = vadd.f32 %v7165, %v7024
    %v7167 = vadd.f32 %v7166, %v7025
    %v7168 = vrot.slane %v7167, 4
    %v7169 = vadd.f32 %v7167, %v7168
    %v7170 = vrot.slane %v7169, 2
    %v7171 = vadd.f32 %v7169, %v7170
    %v7172 = vrot.slane %v7171, 1
    %v7173 = vadd.f32 %v7171, %v7172
    %v7174 = vadd.f32 %v7026, %v7027
    %v7175 = vadd.f32 %v7174, %v7028
    %v7176 = vadd.f32 %v7175, %v7029
    %v7177 = vadd.f32 %v7176, %v7030
    %v7178 = vadd.f32 %v7177, %v7031
    %v7179 = vadd.f32 %v7178, %v7032
    %v7180 = vadd.f32 %v7179, %v7033
    %v7181 = vadd.f32 %v7180, %v7034
    %v7182 = vadd.f32 %v7181, %v7035
    %v7183 = vadd.f32 %v7182, %v7036
    %v7184 = vadd.f32 %v7183, %v7037
    %v7185 = vadd.f32 %v7184, %v7038
    %v7186 = vadd.f32 %v7185, %v7039
    %v7187 = vadd.f32 %v7186, %v7040
    %v7188 = vadd.f32 %v7187, %v7041
    %v7189 = vrot.slane %v7188, 4
    %v7190 = vadd.f32 %v7188, %v7189
    %v7191 = vrot.slane %v7190, 2
    %v7192 = vadd.f32 %v7190, %v7191
    %v7193 = vrot.slane %v7192, 1
    %v7194 = vadd.f32 %v7192, %v7193
    %v7195 = vadd.f32 %v7042, %v7043
    %v7196 = vadd.f32 %v7195, %v7044
    %v7197 = vadd.f32 %v7196, %v7045
    %v7198 = vadd.f32 %v7197, %v7046
    %v7199 = vadd.f32 %v7198, %v7047
    %v7200 = vadd.f32 %v7199, %v7048
    %v7201 = vadd.f32 %v7200, %v7049
    %v7202 = vadd.f32 %v7201, %v7050
    %v7203 = vadd.f32 %v7202, %v7051
    %v7204 = vadd.f32 %v7203, %v7052
    %v7205 = vadd.f32 %v7204, %v7053
    %v7206 = vadd.f32 %v7205, %v7054
    %v7207 = vadd.f32 %v7206, %v7055
    %v7208 = vadd.f32 %v7207, %v7056
    %v7209 = vadd.f32 %v7208, %v7057
    %v7210 = vrot.slane %v7209, 4
    %v7211 = vadd.f32 %v7209, %v7210
    %v7212 = vrot.slane %v7211, 2
    %v7213 = vadd.f32 %v7211, %v7212
    %v7214 = vrot.slane %v7213, 1
    %v7215 = vadd.f32 %v7213, %v7214
    %v7216 = vadd.f32 %v7058, %v7059
    %v7217 = vadd.f32 %v7216, %v7060
    %v7218 = vadd.f32 %v7217, %v7061
    %v7219 = vadd.f32 %v7218, %v7062
    %v7220 = vadd.f32 %v7219, %v7063
    %v7221 = vadd.f32 %v7220, %v7064
    %v7222 = vadd.f32 %v7221, %v7065
    %v7223 = vadd.f32 %v7222, %v7066
    %v7224 = vadd.f32 %v7223, %v7067
    %v7225 = vadd.f32 %v7224, %v7068
    %v7226 = vadd.f32 %v7225, %v7069
    %v7227 = vadd.f32 %v7226, %v7070
    %v7228 = vadd.f32 %v7227, %v7071
    %v7229 = vadd.f32 %v7228, %v7072
    %v7230 = vadd.f32 %v7229, %v7073
    %v7231 = vrot.slane %v7230, 4
    %v7232 = vadd.f32 %v7230, %v7231
    %v7233 = vrot.slane %v7232, 2
    %v7234 = vadd.f32 %v7232, %v7233
    %v7235 = vrot.slane %v7234, 1
    %v7236 = vadd.f32 %v7234, %v7235
    %v7237 = vadd.f32 %v7074, %v7075
    %v7238 = vadd.f32 %v7237, %v7076
    %v7239 = vadd.f32 %v7238, %v7077
    %v7240 = vadd.f32 %v7239, %v7078
    %v7241 = vadd.f32 %v7240, %v7079
    %v7242 = vadd.f32 %v7241, %v7080
    %v7243 = vadd.f32 %v7242, %v7081
    %v7244 = vadd.f32 %v7243, %v7082
    %v7245 = vadd.f32 %v7244, %v7083
    %v7246 = vadd.f32 %v7245, %v7084
    %v7247 = vadd.f32 %v7246, %v7085
    %v7248 = vadd.f32 %v7247, %v7086
    %v7249 = vadd.f32 %v7248, %v7087
    %v7250 = vadd.f32 %v7249, %v7088
    %v7251 = vadd.f32 %v7250, %v7089
    %v7252 = vrot.slane %v7251, 4
    %v7253 = vadd.f32 %v7251, %v7252
    %v7254 = vrot.slane %v7253, 2
    %v7255 = vadd.f32 %v7253, %v7254
    %v7256 = vrot.slane %v7255, 1
    %v7257 = vadd.f32 %v7255, %v7256
    %v7258 = vlaneseq
    %v7259 = vshrl.u32 %v7258, 7
    %v7260 = vsub.s32 %v2970, %v7259
    %v7261 = vrot.slane %v6325, %v7260
    %v7262 = vlaneseq
    %v7263 = vshrl.u32 %v7262, 7
    %v7264 = vsub.s32 %v2975, %v7263
    %v7265 = vrot.slane %v6330, %v7264
    %v7266 = vsel %vm2980, %v7265, %v7261
    %v7267 = vlaneseq
    %v7268 = vshrl.u32 %v7267, 7
    %v7269 = vsub.s32 %v2982, %v7268
    %v7270 = vrot.slane %v6335, %v7269
    %v7271 = vsel %vm2987, %v7270, %v7266
    %v7272 = vlaneseq
    %v7273 = vshrl.u32 %v7272, 7
    %v7274 = vsub.s32 %v2989, %v7273
    %v7275 = vrot.slane %v6340, %v7274
    %v7276 = vsel %vm2994, %v7275, %v7271
    %v7277 = vlaneseq
    %v7278 = vshrl.u32 %v7277, 7
    %v7279 = vsub.s32 %v2996, %v7278
    %v7280 = vrot.slane %v6345, %v7279
    %v7281 = vsel %vm3001, %v7280, %v7276
    %v7282 = vlaneseq
    %v7283 = vshrl.u32 %v7282, 7
    %v7284 = vsub.s32 %v3003, %v7283
    %v7285 = vrot.slane %v6350, %v7284
    %v7286 = vsel %vm3008, %v7285, %v7281
    %v7287 = vlaneseq
    %v7288 = vshrl.u32 %v7287, 7
    %v7289 = vsub.s32 %v3010, %v7288
    %v7290 = vrot.slane %v6355, %v7289
    %v7291 = vsel %vm3015, %v7290, %v7286
    %v7292 = vlaneseq
    %v7293 = vshrl.u32 %v7292, 7
    %v7294 = vsub.s32 %v3017, %v7293
    %v7295 = vrot.slane %v6360, %v7294
    %v7296 = vsel %vm3022, %v7295, %v7291
    %v7297 = vlaneseq
    %v7298 = vshrl.u32 %v7297, 7
    %v7299 = vsub.s32 %v3024, %v7298
    %v7300 = vrot.slane %v6365, %v7299
    %v7301 = vsel %vm3029, %v7300, %v7296
    %v7302 = vlaneseq
    %v7303 = vshrl.u32 %v7302, 7
    %v7304 = vsub.s32 %v3031, %v7303
    %v7305 = vrot.slane %v6370, %v7304
    %v7306 = vsel %vm3036, %v7305, %v7301
    %v7307 = vlaneseq
    %v7308 = vshrl.u32 %v7307, 7
    %v7309 = vsub.s32 %v3038, %v7308
    %v7310 = vrot.slane %v6375, %v7309
    %v7311 = vsel %vm3043, %v7310, %v7306
    %v7312 = vlaneseq
    %v7313 = vshrl.u32 %v7312, 7
    %v7314 = vsub.s32 %v3045, %v7313
    %v7315 = vrot.slane %v6380, %v7314
    %v7316 = vsel %vm3050, %v7315, %v7311
    %v7317 = vlaneseq
    %v7318 = vshrl.u32 %v7317, 7
    %v7319 = vsub.s32 %v3052, %v7318
    %v7320 = vrot.slane %v6385, %v7319
    %v7321 = vsel %vm3057, %v7320, %v7316
    %v7322 = vlaneseq
    %v7323 = vshrl.u32 %v7322, 7
    %v7324 = vsub.s32 %v3059, %v7323
    %v7325 = vrot.slane %v6390, %v7324
    %v7326 = vsel %vm3064, %v7325, %v7321
    %v7327 = vlaneseq
    %v7328 = vshrl.u32 %v7327, 7
    %v7329 = vsub.s32 %v3066, %v7328
    %v7330 = vrot.slane %v6395, %v7329
    %v7331 = vsel %vm3071, %v7330, %v7326
    %v7332 = vlaneseq
    %v7333 = vshrl.u32 %v7332, 7
    %v7334 = vsub.s32 %v3073, %v7333
    %v7335 = vrot.slane %v6400, %v7334
    %v7336 = vsel %vm3078, %v7335, %v7331
    %v7337 = vlaneseq
    %v7338 = vshrl.u32 %v7337, 7
    %v7339 = vsub.s32 %v2970, %v7338
    %v7340 = vrot.slane %v6405, %v7339
    %v7341 = vlaneseq
    %v7342 = vshrl.u32 %v7341, 7
    %v7343 = vsub.s32 %v2975, %v7342
    %v7344 = vrot.slane %v6410, %v7343
    %v7345 = vsel %vm2980, %v7344, %v7340
    %v7346 = vlaneseq
    %v7347 = vshrl.u32 %v7346, 7
    %v7348 = vsub.s32 %v2982, %v7347
    %v7349 = vrot.slane %v6415, %v7348
    %v7350 = vsel %vm2987, %v7349, %v7345
    %v7351 = vlaneseq
    %v7352 = vshrl.u32 %v7351, 7
    %v7353 = vsub.s32 %v2989, %v7352
    %v7354 = vrot.slane %v6420, %v7353
    %v7355 = vsel %vm2994, %v7354, %v7350
    %v7356 = vlaneseq
    %v7357 = vshrl.u32 %v7356, 7
    %v7358 = vsub.s32 %v2996, %v7357
    %v7359 = vrot.slane %v6425, %v7358
    %v7360 = vsel %vm3001, %v7359, %v7355
    %v7361 = vlaneseq
    %v7362 = vshrl.u32 %v7361, 7
    %v7363 = vsub.s32 %v3003, %v7362
    %v7364 = vrot.slane %v6430, %v7363
    %v7365 = vsel %vm3008, %v7364, %v7360
    %v7366 = vlaneseq
    %v7367 = vshrl.u32 %v7366, 7
    %v7368 = vsub.s32 %v3010, %v7367
    %v7369 = vrot.slane %v6435, %v7368
    %v7370 = vsel %vm3015, %v7369, %v7365
    %v7371 = vlaneseq
    %v7372 = vshrl.u32 %v7371, 7
    %v7373 = vsub.s32 %v3017, %v7372
    %v7374 = vrot.slane %v6440, %v7373
    %v7375 = vsel %vm3022, %v7374, %v7370
    %v7376 = vlaneseq
    %v7377 = vshrl.u32 %v7376, 7
    %v7378 = vsub.s32 %v3024, %v7377
    %v7379 = vrot.slane %v6445, %v7378
    %v7380 = vsel %vm3029, %v7379, %v7375
    %v7381 = vlaneseq
    %v7382 = vshrl.u32 %v7381, 7
    %v7383 = vsub.s32 %v3031, %v7382
    %v7384 = vrot.slane %v6450, %v7383
    %v7385 = vsel %vm3036, %v7384, %v7380
    %v7386 = vlaneseq
    %v7387 = vshrl.u32 %v7386, 7
    %v7388 = vsub.s32 %v3038, %v7387
    %v7389 = vrot.slane %v6455, %v7388
    %v7390 = vsel %vm3043, %v7389, %v7385
    %v7391 = vlaneseq
    %v7392 = vshrl.u32 %v7391, 7
    %v7393 = vsub.s32 %v3045, %v7392
    %v7394 = vrot.slane %v6460, %v7393
    %v7395 = vsel %vm3050, %v7394, %v7390
    %v7396 = vlaneseq
    %v7397 = vshrl.u32 %v7396, 7
    %v7398 = vsub.s32 %v3052, %v7397
    %v7399 = vrot.slane %v6465, %v7398
    %v7400 = vsel %vm3057, %v7399, %v7395
    %v7401 = vlaneseq
    %v7402 = vshrl.u32 %v7401, 7
    %v7403 = vsub.s32 %v3059, %v7402
    %v7404 = vrot.slane %v6470, %v7403
    %v7405 = vsel %vm3064, %v7404, %v7400
    %v7406 = vlaneseq
    %v7407 = vshrl.u32 %v7406, 7
    %v7408 = vsub.s32 %v3066, %v7407
    %v7409 = vrot.slane %v6475, %v7408
    %v7410 = vsel %vm3071, %v7409, %v7405
    %v7411 = vlaneseq
    %v7412 = vshrl.u32 %v7411, 7
    %v7413 = vsub.s32 %v3073, %v7412
    %v7414 = vrot.slane %v6480, %v7413
    %v7415 = vsel %vm3078, %v7414, %v7410
    %v7416 = vlaneseq
    %v7417 = vshrl.u32 %v7416, 7
    %v7418 = vsub.s32 %v2970, %v7417
    %v7419 = vrot.slane %v6485, %v7418
    %v7420 = vlaneseq
    %v7421 = vshrl.u32 %v7420, 7
    %v7422 = vsub.s32 %v2975, %v7421
    %v7423 = vrot.slane %v6490, %v7422
    %v7424 = vsel %vm2980, %v7423, %v7419
    %v7425 = vlaneseq
    %v7426 = vshrl.u32 %v7425, 7
    %v7427 = vsub.s32 %v2982, %v7426
    %v7428 = vrot.slane %v6495, %v7427
    %v7429 = vsel %vm2987, %v7428, %v7424
    %v7430 = vlaneseq
    %v7431 = vshrl.u32 %v7430, 7
    %v7432 = vsub.s32 %v2989, %v7431
    %v7433 = vrot.slane %v6500, %v7432
    %v7434 = vsel %vm2994, %v7433, %v7429
    %v7435 = vlaneseq
    %v7436 = vshrl.u32 %v7435, 7
    %v7437 = vsub.s32 %v2996, %v7436
    %v7438 = vrot.slane %v6505, %v7437
    %v7439 = vsel %vm3001, %v7438, %v7434
    %v7440 = vlaneseq
    %v7441 = vshrl.u32 %v7440, 7
    %v7442 = vsub.s32 %v3003, %v7441
    %v7443 = vrot.slane %v6510, %v7442
    %v7444 = vsel %vm3008, %v7443, %v7439
    %v7445 = vlaneseq
    %v7446 = vshrl.u32 %v7445, 7
    %v7447 = vsub.s32 %v3010, %v7446
    %v7448 = vrot.slane %v6515, %v7447
    %v7449 = vsel %vm3015, %v7448, %v7444
    %v7450 = vlaneseq
    %v7451 = vshrl.u32 %v7450, 7
    %v7452 = vsub.s32 %v3017, %v7451
    %v7453 = vrot.slane %v6520, %v7452
    %v7454 = vsel %vm3022, %v7453, %v7449
    %v7455 = vlaneseq
    %v7456 = vshrl.u32 %v7455, 7
    %v7457 = vsub.s32 %v3024, %v7456
    %v7458 = vrot.slane %v6525, %v7457
    %v7459 = vsel %vm3029, %v7458, %v7454
    %v7460 = vlaneseq
    %v7461 = vshrl.u32 %v7460, 7
    %v7462 = vsub.s32 %v3031, %v7461
    %v7463 = vrot.slane %v6530, %v7462
    %v7464 = vsel %vm3036, %v7463, %v7459
    %v7465 = vlaneseq
    %v7466 = vshrl.u32 %v7465, 7
    %v7467 = vsub.s32 %v3038, %v7466
    %v7468 = vrot.slane %v6535, %v7467
    %v7469 = vsel %vm3043, %v7468, %v7464
    %v7470 = vlaneseq
    %v7471 = vshrl.u32 %v7470, 7
    %v7472 = vsub.s32 %v3045, %v7471
    %v7473 = vrot.slane %v6540, %v7472
    %v7474 = vsel %vm3050, %v7473, %v7469
    %v7475 = vlaneseq
    %v7476 = vshrl.u32 %v7475, 7
    %v7477 = vsub.s32 %v3052, %v7476
    %v7478 = vrot.slane %v6545, %v7477
    %v7479 = vsel %vm3057, %v7478, %v7474
    %v7480 = vlaneseq
    %v7481 = vshrl.u32 %v7480, 7
    %v7482 = vsub.s32 %v3059, %v7481
    %v7483 = vrot.slane %v6550, %v7482
    %v7484 = vsel %vm3064, %v7483, %v7479
    %v7485 = vlaneseq
    %v7486 = vshrl.u32 %v7485, 7
    %v7487 = vsub.s32 %v3066, %v7486
    %v7488 = vrot.slane %v6555, %v7487
    %v7489 = vsel %vm3071, %v7488, %v7484
    %v7490 = vlaneseq
    %v7491 = vshrl.u32 %v7490, 7
    %v7492 = vsub.s32 %v3073, %v7491
    %v7493 = vrot.slane %v6560, %v7492
    %v7494 = vsel %vm3078, %v7493, %v7489
    %v7495 = vlaneseq
    %v7496 = vshrl.u32 %v7495, 7
    %v7497 = vsub.s32 %v2970, %v7496
    %v7498 = vrot.slane %v6565, %v7497
    %v7499 = vlaneseq
    %v7500 = vshrl.u32 %v7499, 7
    %v7501 = vsub.s32 %v2975, %v7500
    %v7502 = vrot.slane %v6570, %v7501
    %v7503 = vsel %vm2980, %v7502, %v7498
    %v7504 = vlaneseq
    %v7505 = vshrl.u32 %v7504, 7
    %v7506 = vsub.s32 %v2982, %v7505
    %v7507 = vrot.slane %v6575, %v7506
    %v7508 = vsel %vm2987, %v7507, %v7503
    %v7509 = vlaneseq
    %v7510 = vshrl.u32 %v7509, 7
    %v7511 = vsub.s32 %v2989, %v7510
    %v7512 = vrot.slane %v6580, %v7511
    %v7513 = vsel %vm2994, %v7512, %v7508
    %v7514 = vlaneseq
    %v7515 = vshrl.u32 %v7514, 7
    %v7516 = vsub.s32 %v2996, %v7515
    %v7517 = vrot.slane %v6585, %v7516
    %v7518 = vsel %vm3001, %v7517, %v7513
    %v7519 = vlaneseq
    %v7520 = vshrl.u32 %v7519, 7
    %v7521 = vsub.s32 %v3003, %v7520
    %v7522 = vrot.slane %v6590, %v7521
    %v7523 = vsel %vm3008, %v7522, %v7518
    %v7524 = vlaneseq
    %v7525 = vshrl.u32 %v7524, 7
    %v7526 = vsub.s32 %v3010, %v7525
    %v7527 = vrot.slane %v6595, %v7526
    %v7528 = vsel %vm3015, %v7527, %v7523
    %v7529 = vlaneseq
    %v7530 = vshrl.u32 %v7529, 7
    %v7531 = vsub.s32 %v3017, %v7530
    %v7532 = vrot.slane %v6600, %v7531
    %v7533 = vsel %vm3022, %v7532, %v7528
    %v7534 = vlaneseq
    %v7535 = vshrl.u32 %v7534, 7
    %v7536 = vsub.s32 %v3024, %v7535
    %v7537 = vrot.slane %v6605, %v7536
    %v7538 = vsel %vm3029, %v7537, %v7533
    %v7539 = vlaneseq
    %v7540 = vshrl.u32 %v7539, 7
    %v7541 = vsub.s32 %v3031, %v7540
    %v7542 = vrot.slane %v6610, %v7541
    %v7543 = vsel %vm3036, %v7542, %v7538
    %v7544 = vlaneseq
    %v7545 = vshrl.u32 %v7544, 7
    %v7546 = vsub.s32 %v3038, %v7545
    %v7547 = vrot.slane %v6615, %v7546
    %v7548 = vsel %vm3043, %v7547, %v7543
    %v7549 = vlaneseq
    %v7550 = vshrl.u32 %v7549, 7
    %v7551 = vsub.s32 %v3045, %v7550
    %v7552 = vrot.slane %v6620, %v7551
    %v7553 = vsel %vm3050, %v7552, %v7548
    %v7554 = vlaneseq
    %v7555 = vshrl.u32 %v7554, 7
    %v7556 = vsub.s32 %v3052, %v7555
    %v7557 = vrot.slane %v6625, %v7556
    %v7558 = vsel %vm3057, %v7557, %v7553
    %v7559 = vlaneseq
    %v7560 = vshrl.u32 %v7559, 7
    %v7561 = vsub.s32 %v3059, %v7560
    %v7562 = vrot.slane %v6630, %v7561
    %v7563 = vsel %vm3064, %v7562, %v7558
    %v7564 = vlaneseq
    %v7565 = vshrl.u32 %v7564, 7
    %v7566 = vsub.s32 %v3066, %v7565
    %v7567 = vrot.slane %v6635, %v7566
    %v7568 = vsel %vm3071, %v7567, %v7563
    %v7569 = vlaneseq
    %v7570 = vshrl.u32 %v7569, 7
    %v7571 = vsub.s32 %v3073, %v7570
    %v7572 = vrot.slane %v6640, %v7571
    %v7573 = vsel %vm3078, %v7572, %v7568
    %v7574 = vlaneseq
    %v7575 = vshrl.u32 %v7574, 7
    %v7576 = vsub.s32 %v2970, %v7575
    %v7577 = vrot.slane %v6645, %v7576
    %v7578 = vlaneseq
    %v7579 = vshrl.u32 %v7578, 7
    %v7580 = vsub.s32 %v2975, %v7579
    %v7581 = vrot.slane %v6650, %v7580
    %v7582 = vsel %vm2980, %v7581, %v7577
    %v7583 = vlaneseq
    %v7584 = vshrl.u32 %v7583, 7
    %v7585 = vsub.s32 %v2982, %v7584
    %v7586 = vrot.slane %v6655, %v7585
    %v7587 = vsel %vm2987, %v7586, %v7582
    %v7588 = vlaneseq
    %v7589 = vshrl.u32 %v7588, 7
    %v7590 = vsub.s32 %v2989, %v7589
    %v7591 = vrot.slane %v6660, %v7590
    %v7592 = vsel %vm2994, %v7591, %v7587
    %v7593 = vlaneseq
    %v7594 = vshrl.u32 %v7593, 7
    %v7595 = vsub.s32 %v2996, %v7594
    %v7596 = vrot.slane %v6665, %v7595
    %v7597 = vsel %vm3001, %v7596, %v7592
    %v7598 = vlaneseq
    %v7599 = vshrl.u32 %v7598, 7
    %v7600 = vsub.s32 %v3003, %v7599
    %v7601 = vrot.slane %v6670, %v7600
    %v7602 = vsel %vm3008, %v7601, %v7597
    %v7603 = vlaneseq
    %v7604 = vshrl.u32 %v7603, 7
    %v7605 = vsub.s32 %v3010, %v7604
    %v7606 = vrot.slane %v6675, %v7605
    %v7607 = vsel %vm3015, %v7606, %v7602
    %v7608 = vlaneseq
    %v7609 = vshrl.u32 %v7608, 7
    %v7610 = vsub.s32 %v3017, %v7609
    %v7611 = vrot.slane %v6680, %v7610
    %v7612 = vsel %vm3022, %v7611, %v7607
    %v7613 = vlaneseq
    %v7614 = vshrl.u32 %v7613, 7
    %v7615 = vsub.s32 %v3024, %v7614
    %v7616 = vrot.slane %v6685, %v7615
    %v7617 = vsel %vm3029, %v7616, %v7612
    %v7618 = vlaneseq
    %v7619 = vshrl.u32 %v7618, 7
    %v7620 = vsub.s32 %v3031, %v7619
    %v7621 = vrot.slane %v6690, %v7620
    %v7622 = vsel %vm3036, %v7621, %v7617
    %v7623 = vlaneseq
    %v7624 = vshrl.u32 %v7623, 7
    %v7625 = vsub.s32 %v3038, %v7624
    %v7626 = vrot.slane %v6695, %v7625
    %v7627 = vsel %vm3043, %v7626, %v7622
    %v7628 = vlaneseq
    %v7629 = vshrl.u32 %v7628, 7
    %v7630 = vsub.s32 %v3045, %v7629
    %v7631 = vrot.slane %v6700, %v7630
    %v7632 = vsel %vm3050, %v7631, %v7627
    %v7633 = vlaneseq
    %v7634 = vshrl.u32 %v7633, 7
    %v7635 = vsub.s32 %v3052, %v7634
    %v7636 = vrot.slane %v6705, %v7635
    %v7637 = vsel %vm3057, %v7636, %v7632
    %v7638 = vlaneseq
    %v7639 = vshrl.u32 %v7638, 7
    %v7640 = vsub.s32 %v3059, %v7639
    %v7641 = vrot.slane %v6710, %v7640
    %v7642 = vsel %vm3064, %v7641, %v7637
    %v7643 = vlaneseq
    %v7644 = vshrl.u32 %v7643, 7
    %v7645 = vsub.s32 %v3066, %v7644
    %v7646 = vrot.slane %v6715, %v7645
    %v7647 = vsel %vm3071, %v7646, %v7642
    %v7648 = vlaneseq
    %v7649 = vshrl.u32 %v7648, 7
    %v7650 = vsub.s32 %v3073, %v7649
    %v7651 = vrot.slane %v6720, %v7650
    %v7652 = vsel %vm3078, %v7651, %v7647
    %v7653 = vlaneseq
    %v7654 = vshrl.u32 %v7653, 7
    %v7655 = vsub.s32 %v2970, %v7654
    %v7656 = vrot.slane %v6725, %v7655
    %v7657 = vlaneseq
    %v7658 = vshrl.u32 %v7657, 7
    %v7659 = vsub.s32 %v2975, %v7658
    %v7660 = vrot.slane %v6730, %v7659
    %v7661 = vsel %vm2980, %v7660, %v7656
    %v7662 = vlaneseq
    %v7663 = vshrl.u32 %v7662, 7
    %v7664 = vsub.s32 %v2982, %v7663
    %v7665 = vrot.slane %v6735, %v7664
    %v7666 = vsel %vm2987, %v7665, %v7661
    %v7667 = vlaneseq
    %v7668 = vshrl.u32 %v7667, 7
    %v7669 = vsub.s32 %v2989, %v7668
    %v7670 = vrot.slane %v6740, %v7669
    %v7671 = vsel %vm2994, %v7670, %v7666
    %v7672 = vlaneseq
    %v7673 = vshrl.u32 %v7672, 7
    %v7674 = vsub.s32 %v2996, %v7673
    %v7675 = vrot.slane %v6745, %v7674
    %v7676 = vsel %vm3001, %v7675, %v7671
    %v7677 = vlaneseq
    %v7678 = vshrl.u32 %v7677, 7
    %v7679 = vsub.s32 %v3003, %v7678
    %v7680 = vrot.slane %v6750, %v7679
    %v7681 = vsel %vm3008, %v7680, %v7676
    %v7682 = vlaneseq
    %v7683 = vshrl.u32 %v7682, 7
    %v7684 = vsub.s32 %v3010, %v7683
    %v7685 = vrot.slane %v6755, %v7684
    %v7686 = vsel %vm3015, %v7685, %v7681
    %v7687 = vlaneseq
    %v7688 = vshrl.u32 %v7687, 7
    %v7689 = vsub.s32 %v3017, %v7688
    %v7690 = vrot.slane %v6760, %v7689
    %v7691 = vsel %vm3022, %v7690, %v7686
    %v7692 = vlaneseq
    %v7693 = vshrl.u32 %v7692, 7
    %v7694 = vsub.s32 %v3024, %v7693
    %v7695 = vrot.slane %v6765, %v7694
    %v7696 = vsel %vm3029, %v7695, %v7691
    %v7697 = vlaneseq
    %v7698 = vshrl.u32 %v7697, 7
    %v7699 = vsub.s32 %v3031, %v7698
    %v7700 = vrot.slane %v6770, %v7699
    %v7701 = vsel %vm3036, %v7700, %v7696
    %v7702 = vlaneseq
    %v7703 = vshrl.u32 %v7702, 7
    %v7704 = vsub.s32 %v3038, %v7703
    %v7705 = vrot.slane %v6775, %v7704
    %v7706 = vsel %vm3043, %v7705, %v7701
    %v7707 = vlaneseq
    %v7708 = vshrl.u32 %v7707, 7
    %v7709 = vsub.s32 %v3045, %v7708
    %v7710 = vrot.slane %v6780, %v7709
    %v7711 = vsel %vm3050, %v7710, %v7706
    %v7712 = vlaneseq
    %v7713 = vshrl.u32 %v7712, 7
    %v7714 = vsub.s32 %v3052, %v7713
    %v7715 = vrot.slane %v6785, %v7714
    %v7716 = vsel %vm3057, %v7715, %v7711
    %v7717 = vlaneseq
    %v7718 = vshrl.u32 %v7717, 7
    %v7719 = vsub.s32 %v3059, %v7718
    %v7720 = vrot.slane %v6790, %v7719
    %v7721 = vsel %vm3064, %v7720, %v7716
    %v7722 = vlaneseq
    %v7723 = vshrl.u32 %v7722, 7
    %v7724 = vsub.s32 %v3066, %v7723
    %v7725 = vrot.slane %v6795, %v7724
    %v7726 = vsel %vm3071, %v7725, %v7721
    %v7727 = vlaneseq
    %v7728 = vshrl.u32 %v7727, 7
    %v7729 = vsub.s32 %v3073, %v7728
    %v7730 = vrot.slane %v6800, %v7729
    %v7731 = vsel %vm3078, %v7730, %v7726
    %v7732 = vlaneseq
    %v7733 = vshrl.u32 %v7732, 7
    %v7734 = vsub.s32 %v2970, %v7733
    %v7735 = vrot.slane %v6805, %v7734
    %v7736 = vlaneseq
    %v7737 = vshrl.u32 %v7736, 7
    %v7738 = vsub.s32 %v2975, %v7737
    %v7739 = vrot.slane %v6810, %v7738
    %v7740 = vsel %vm2980, %v7739, %v7735
    %v7741 = vlaneseq
    %v7742 = vshrl.u32 %v7741, 7
    %v7743 = vsub.s32 %v2982, %v7742
    %v7744 = vrot.slane %v6815, %v7743
    %v7745 = vsel %vm2987, %v7744, %v7740
    %v7746 = vlaneseq
    %v7747 = vshrl.u32 %v7746, 7
    %v7748 = vsub.s32 %v2989, %v7747
    %v7749 = vrot.slane %v6820, %v7748
    %v7750 = vsel %vm2994, %v7749, %v7745
    %v7751 = vlaneseq
    %v7752 = vshrl.u32 %v7751, 7
    %v7753 = vsub.s32 %v2996, %v7752
    %v7754 = vrot.slane %v6825, %v7753
    %v7755 = vsel %vm3001, %v7754, %v7750
    %v7756 = vlaneseq
    %v7757 = vshrl.u32 %v7756, 7
    %v7758 = vsub.s32 %v3003, %v7757
    %v7759 = vrot.slane %v6830, %v7758
    %v7760 = vsel %vm3008, %v7759, %v7755
    %v7761 = vlaneseq
    %v7762 = vshrl.u32 %v7761, 7
    %v7763 = vsub.s32 %v3010, %v7762
    %v7764 = vrot.slane %v6835, %v7763
    %v7765 = vsel %vm3015, %v7764, %v7760
    %v7766 = vlaneseq
    %v7767 = vshrl.u32 %v7766, 7
    %v7768 = vsub.s32 %v3017, %v7767
    %v7769 = vrot.slane %v6840, %v7768
    %v7770 = vsel %vm3022, %v7769, %v7765
    %v7771 = vlaneseq
    %v7772 = vshrl.u32 %v7771, 7
    %v7773 = vsub.s32 %v3024, %v7772
    %v7774 = vrot.slane %v6845, %v7773
    %v7775 = vsel %vm3029, %v7774, %v7770
    %v7776 = vlaneseq
    %v7777 = vshrl.u32 %v7776, 7
    %v7778 = vsub.s32 %v3031, %v7777
    %v7779 = vrot.slane %v6850, %v7778
    %v7780 = vsel %vm3036, %v7779, %v7775
    %v7781 = vlaneseq
    %v7782 = vshrl.u32 %v7781, 7
    %v7783 = vsub.s32 %v3038, %v7782
    %v7784 = vrot.slane %v6855, %v7783
    %v7785 = vsel %vm3043, %v7784, %v7780
    %v7786 = vlaneseq
    %v7787 = vshrl.u32 %v7786, 7
    %v7788 = vsub.s32 %v3045, %v7787
    %v7789 = vrot.slane %v6860, %v7788
    %v7790 = vsel %vm3050, %v7789, %v7785
    %v7791 = vlaneseq
    %v7792 = vshrl.u32 %v7791, 7
    %v7793 = vsub.s32 %v3052, %v7792
    %v7794 = vrot.slane %v6865, %v7793
    %v7795 = vsel %vm3057, %v7794, %v7790
    %v7796 = vlaneseq
    %v7797 = vshrl.u32 %v7796, 7
    %v7798 = vsub.s32 %v3059, %v7797
    %v7799 = vrot.slane %v6870, %v7798
    %v7800 = vsel %vm3064, %v7799, %v7795
    %v7801 = vlaneseq
    %v7802 = vshrl.u32 %v7801, 7
    %v7803 = vsub.s32 %v3066, %v7802
    %v7804 = vrot.slane %v6875, %v7803
    %v7805 = vsel %vm3071, %v7804, %v7800
    %v7806 = vlaneseq
    %v7807 = vshrl.u32 %v7806, 7
    %v7808 = vsub.s32 %v3073, %v7807
    %v7809 = vrot.slane %v6880, %v7808
    %v7810 = vsel %vm3078, %v7809, %v7805
    %v7811 = vlaneseq
    %v7812 = vshrl.u32 %v7811, 7
    %v7813 = vsub.s32 %v2970, %v7812
    %v7814 = vrot.slane %v6885, %v7813
    %v7815 = vlaneseq
    %v7816 = vshrl.u32 %v7815, 7
    %v7817 = vsub.s32 %v2975, %v7816
    %v7818 = vrot.slane %v6890, %v7817
    %v7819 = vsel %vm2980, %v7818, %v7814
    %v7820 = vlaneseq
    %v7821 = vshrl.u32 %v7820, 7
    %v7822 = vsub.s32 %v2982, %v7821
    %v7823 = vrot.slane %v6895, %v7822
    %v7824 = vsel %vm2987, %v7823, %v7819
    %v7825 = vlaneseq
    %v7826 = vshrl.u32 %v7825, 7
    %v7827 = vsub.s32 %v2989, %v7826
    %v7828 = vrot.slane %v6900, %v7827
    %v7829 = vsel %vm2994, %v7828, %v7824
    %v7830 = vlaneseq
    %v7831 = vshrl.u32 %v7830, 7
    %v7832 = vsub.s32 %v2996, %v7831
    %v7833 = vrot.slane %v6905, %v7832
    %v7834 = vsel %vm3001, %v7833, %v7829
    %v7835 = vlaneseq
    %v7836 = vshrl.u32 %v7835, 7
    %v7837 = vsub.s32 %v3003, %v7836
    %v7838 = vrot.slane %v6910, %v7837
    %v7839 = vsel %vm3008, %v7838, %v7834
    %v7840 = vlaneseq
    %v7841 = vshrl.u32 %v7840, 7
    %v7842 = vsub.s32 %v3010, %v7841
    %v7843 = vrot.slane %v6915, %v7842
    %v7844 = vsel %vm3015, %v7843, %v7839
    %v7845 = vlaneseq
    %v7846 = vshrl.u32 %v7845, 7
    %v7847 = vsub.s32 %v3017, %v7846
    %v7848 = vrot.slane %v6920, %v7847
    %v7849 = vsel %vm3022, %v7848, %v7844
    %v7850 = vlaneseq
    %v7851 = vshrl.u32 %v7850, 7
    %v7852 = vsub.s32 %v3024, %v7851
    %v7853 = vrot.slane %v6925, %v7852
    %v7854 = vsel %vm3029, %v7853, %v7849
    %v7855 = vlaneseq
    %v7856 = vshrl.u32 %v7855, 7
    %v7857 = vsub.s32 %v3031, %v7856
    %v7858 = vrot.slane %v6930, %v7857
    %v7859 = vsel %vm3036, %v7858, %v7854
    %v7860 = vlaneseq
    %v7861 = vshrl.u32 %v7860, 7
    %v7862 = vsub.s32 %v3038, %v7861
    %v7863 = vrot.slane %v6935, %v7862
    %v7864 = vsel %vm3043, %v7863, %v7859
    %v7865 = vlaneseq
    %v7866 = vshrl.u32 %v7865, 7
    %v7867 = vsub.s32 %v3045, %v7866
    %v7868 = vrot.slane %v6940, %v7867
    %v7869 = vsel %vm3050, %v7868, %v7864
    %v7870 = vlaneseq
    %v7871 = vshrl.u32 %v7870, 7
    %v7872 = vsub.s32 %v3052, %v7871
    %v7873 = vrot.slane %v6945, %v7872
    %v7874 = vsel %vm3057, %v7873, %v7869
    %v7875 = vlaneseq
    %v7876 = vshrl.u32 %v7875, 7
    %v7877 = vsub.s32 %v3059, %v7876
    %v7878 = vrot.slane %v6950, %v7877
    %v7879 = vsel %vm3064, %v7878, %v7874
    %v7880 = vlaneseq
    %v7881 = vshrl.u32 %v7880, 7
    %v7882 = vsub.s32 %v3066, %v7881
    %v7883 = vrot.slane %v6955, %v7882
    %v7884 = vsel %vm3071, %v7883, %v7879
    %v7885 = vlaneseq
    %v7886 = vshrl.u32 %v7885, 7
    %v7887 = vsub.s32 %v3073, %v7886
    %v7888 = vrot.slane %v6960, %v7887
    %v7889 = vsel %vm3078, %v7888, %v7884
    %v7890 = vsel %vm3633, %v7415, %v7336
    %v7891 = vsel %vm3635, %v7494, %v7890
    %v7892 = vsel %vm3637, %v7573, %v7891
    %v7893 = vsel %vm3639, %v7652, %v7892
    %v7894 = vsel %vm3641, %v7731, %v7893
    %v7895 = vsel %vm3643, %v7810, %v7894
    %v7896 = vsel %vm3645, %v7889, %v7895
    %v7898 = vadd.f32 %v307, %v7896
    %v7899 = vld [vmem:[#allocation23] sm:$0xf]
    %v7900 = vlaneseq
    %v7901 = vshrl.u32 %v7900, 7
    %v7902 = vsub.s32 0, %v7901
    %v7903 = vrot.slane %v7899, %v7902
    %v7904 = vmul.f32 %v7110, %v7903
    %v7905 = vmul.f32 %v7131, %v7903
    %v7906 = vmul.f32 %v7152, %v7903
    %v7907 = vmul.f32 %v7173, %v7903
    %v7908 = vmul.f32 %v7194, %v7903
    %v7909 = vmul.f32 %v7215, %v7903
    %v7910 = vmul.f32 %v7236, %v7903
    %v7911 = vmul.f32 %v7257, %v7903
    %v7912 = vlaneseq
    %v7913 = vshrl.u32 %v7912, 7
    %v7914 = vsub.s32 1, %v7913
    %v7915 = vrot.slane %v7899, %v7914
    %v7916 = vmul.f32 %v999, %v7915
    %v7918 = vrot.slane %v7916, 1
    %v7919 = vrot.slane %v7916, 2
    %v7920 = vrot.slane %v7916, 3
    %v7921 = vrot.slane %v7916, 4
    %v7922 = vrot.slane %v7916, 5
    %v7923 = vrot.slane %v7916, 6
    %v7924 = vrot.slane %v7916, 7
    %v7933 = vadd.f32 %v7904, %v7916
    %v7934 = vadd.f32 %v7905, %v7918
    %v7935 = vadd.f32 %v7906, %v7919
    %v7936 = vadd.f32 %v7907, %v7920
    %v7937 = vadd.f32 %v7908, %v7921
    %v7938 = vadd.f32 %v7909, %v7922
    %v7939 = vadd.f32 %v7910, %v7923
    %v7940 = vadd.f32 %v7911, %v7924
    %v7941 = vlaneseq
    %v7942 = vshrl.u32 %v7941, 7
    %v7943 = vsub.s32 2, %v7942
    %v7944 = vrot.slane %v7899, %v7943
    %v7945 = vmul.f32 %v997, %v7944
    %v7947 = vrot.slane %v7945, 1
    %v7948 = vrot.slane %v7945, 2
    %v7949 = vrot.slane %v7945, 3
    %v7950 = vrot.slane %v7945, 4
    %v7951 = vrot.slane %v7945, 5
    %v7952 = vrot.slane %v7945, 6
    %v7953 = vrot.slane %v7945, 7
    %v7962 = vadd.f32 %v7933, %v7945
    %v7963 = vadd.f32 %v7934, %v7947
    %v7964 = vadd.f32 %v7935, %v7948
    %v7965 = vadd.f32 %v7936, %v7949
    %v7966 = vadd.f32 %v7937, %v7950
    %v7967 = vadd.f32 %v7938, %v7951
    %v7968 = vadd.f32 %v7939, %v7952
    %v7969 = vadd.f32 %v7940, %v7953
    %v7970 = vlaneseq
    %v7971 = vshrl.u32 %v7970, 7
    %v7972 = vsub.s32 3, %v7971
    %v7973 = vrot.slane %v7899, %v7972
    %v7974 = vmul.f32 %v481, %v7973
    %v7976 = vrot.slane %v7974, 1
    %v7977 = vrot.slane %v7974, 2
    %v7978 = vrot.slane %v7974, 3
    %v7979 = vrot.slane %v7974, 4
    %v7980 = vrot.slane %v7974, 5
    %v7981 = vrot.slane %v7974, 6
    %v7982 = vrot.slane %v7974, 7
    %v7991 = vadd.f32 %v7962, %v7974
    %v7992 = vadd.f32 %v7963, %v7976
    %v7993 = vadd.f32 %v7964, %v7977
    %v7994 = vadd.f32 %v7965, %v7978
    %v7995 = vadd.f32 %v7966, %v7979
    %v7996 = vadd.f32 %v7967, %v7980
    %v7997 = vadd.f32 %v7968, %v7981
    %v7998 = vadd.f32 %v7969, %v7982
    %v8007 = vrot.slane %v7992, 7
    %v8008 = vsel %vm3633, %v8007, %v7991
    %v8009 = vrot.slane %v7993, 6
    %v8010 = vsel %vm3635, %v8009, %v8008
    %v8011 = vrot.slane %v7994, 5
    %v8012 = vsel %vm3637, %v8011, %v8010
    %v8013 = vrot.slane %v7995, 4
    %v8014 = vsel %vm3639, %v8013, %v8012
    %v8015 = vrot.slane %v7996, 3
    %v8016 = vsel %vm3641, %v8015, %v8014
    %v8017 = vrot.slane %v7997, 2
    %v8018 = vsel %vm3643, %v8017, %v8016
    %v8019 = vrot.slane %v7998, 1
    %v8020 = vsel %vm3645, %v8019, %v8018
    %8022 = vadd.xlane.f32.xlu0 %v8020
    %v8023 = vpop.xlane.xlu0 %8022
    %v8024 = vld [vmem:[#allocation2] sm:$0x1]
    %v8026 = vlaneseq
    %v8027 = vshrl.u32 %v8026, 7
    %v8028 = vsub.s32 0, %v8027
    %v8029 = vrot.slane %v8024, %v8028
    %v8031 = vadd.f32 %v8023, %v8029
    %v8032 = vxor.u32 %v8031, 2147483648
    %v8033 = vmul.f32 %v8032, 1.442695
    %v8034 = vpow.pop %v8033
    %v8035 = vadd.f32 %v8034, 1.0
    %v8036 = vrcp.pop %v8035
    %v8037 = vmul.f32 1.0, %v8036
    %v8046 = vsel %vm3633, %v7131, %v7110
    %v8047 = vsel %vm3635, %v7152, %v8046
    %v8048 = vsel %vm3637, %v7173, %v8047
    %v8049 = vsel %vm3639, %v7194, %v8048
    %v8050 = vsel %vm3641, %v7215, %v8049
    %v8051 = vsel %vm3643, %v7236, %v8050
    %v8052 = vsel %vm3645, %v7257, %v8051
    %v8054 = vpack.c.bf16 %v8052, %v8052
    %v8055 = vld [vmem:[#allocation24] sm:$0xf]
    %v8056 = vld [vmem:[#allocation24 + $0x4] sm:$0xf]
    %v8057 = vld [vmem:[#allocation24 + $0x8] sm:$0xf]
    %v8058 = vld [vmem:[#allocation24 + $0xc] sm:$0xf]
    %v8059 = vld [vmem:[#allocation24 + $0x10] sm:$0xf]
    %v8060 = vld [vmem:[#allocation24 + $0x14] sm:$0xf]
    %v8061 = vld [vmem:[#allocation24 + $0x18] sm:$0xf]
    %v8062 = vld [vmem:[#allocation24 + $0x1c] sm:$0xf]
    %v8063 = vld [vmem:[#allocation24 + $0x20] sm:$0xf]
    %v8064 = vld [vmem:[#allocation24 + $0x24] sm:$0xf]
    %v8065 = vld [vmem:[#allocation24 + $0x28] sm:$0xf]
    %v8066 = vld [vmem:[#allocation24 + $0x2c] sm:$0xf]
    %v8067 = vld [vmem:[#allocation24 + $0x30] sm:$0xf]
    %v8068 = vld [vmem:[#allocation24 + $0x34] sm:$0xf]
    %v8069 = vld [vmem:[#allocation24 + $0x38] sm:$0xf]
    %v8070 = vld [vmem:[#allocation24 + $0x3c] sm:$0xf]
    %v8071 = vld [vmem:[#allocation24 + $0x40] sm:$0xf]
    %v8072 = vld [vmem:[#allocation24 + $0x44] sm:$0xf]
    %v8073 = vld [vmem:[#allocation24 + $0x48] sm:$0xf]
    %v8074 = vld [vmem:[#allocation24 + $0x4c] sm:$0xf]
    %v8075 = vld [vmem:[#allocation24 + $0x50] sm:$0xf]
    %v8076 = vld [vmem:[#allocation24 + $0x54] sm:$0xf]
    %v8077 = vld [vmem:[#allocation24 + $0x58] sm:$0xf]
    %v8078 = vld [vmem:[#allocation24 + $0x5c] sm:$0xf]
    %v8079 = vld [vmem:[#allocation24 + $0x60] sm:$0xf]
    %v8080 = vld [vmem:[#allocation24 + $0x64] sm:$0xf]
    %v8081 = vld [vmem:[#allocation24 + $0x68] sm:$0xf]
    %v8082 = vld [vmem:[#allocation24 + $0x6c] sm:$0xf]
    %v8083 = vld [vmem:[#allocation24 + $0x70] sm:$0xf]
    %v8084 = vld [vmem:[#allocation24 + $0x74] sm:$0xf]
    %v8085 = vld [vmem:[#allocation24 + $0x78] sm:$0xf]
    %v8086 = vld [vmem:[#allocation24 + $0x7c] sm:$0xf]
    %v8087 = vld [vmem:[#allocation26] sm:$0x1]
    %v8089 = vlaneseq
    %v8090 = vshrl.u32 %v8089, 7
    %v8091 = vsub.s32 0, %v8090
    %v8092 = vrot.slane %v8087, %v8091
    %v8126 = vunpack.c.l.b16 %v8055
    %v8127 = vunpack.c.l.b16 %v8056
    %v8128 = vunpack.c.l.b16 %v8057
    %v8129 = vunpack.c.l.b16 %v8058
    %v8130 = vunpack.c.l.b16 %v8059
    %v8131 = vunpack.c.l.b16 %v8060
    %v8132 = vunpack.c.l.b16 %v8061
    %v8133 = vunpack.c.l.b16 %v8062
    %v8134 = vunpack.c.l.b16 %v8063
    %v8135 = vunpack.c.l.b16 %v8064
    %v8136 = vunpack.c.l.b16 %v8065
    %v8137 = vunpack.c.l.b16 %v8066
    %v8138 = vunpack.c.l.b16 %v8067
    %v8139 = vunpack.c.l.b16 %v8068
    %v8140 = vunpack.c.l.b16 %v8069
    %v8141 = vunpack.c.l.b16 %v8070
    %v8142 = vunpack.c.l.b16 %v8071
    %v8143 = vunpack.c.l.b16 %v8072
    %v8144 = vunpack.c.l.b16 %v8073
    %v8145 = vunpack.c.l.b16 %v8074
    %v8146 = vunpack.c.l.b16 %v8075
    %v8147 = vunpack.c.l.b16 %v8076
    %v8148 = vunpack.c.l.b16 %v8077
    %v8149 = vunpack.c.l.b16 %v8078
    %v8150 = vunpack.c.l.b16 %v8079
    %v8151 = vunpack.c.l.b16 %v8080
    %v8152 = vunpack.c.l.b16 %v8081
    %v8153 = vunpack.c.l.b16 %v8082
    %v8154 = vunpack.c.l.b16 %v8083
    %v8155 = vunpack.c.l.b16 %v8084
    %v8156 = vunpack.c.l.b16 %v8085
    %v8157 = vunpack.c.l.b16 %v8086
    %v8158 = vpack.c.b16 %v8127, %v8126
    %v8159 = vpack.c.b16 %v8129, %v8128
    %v8160 = vpack.c.b16 %v8131, %v8130
    %v8161 = vpack.c.b16 %v8133, %v8132
    %v8162 = vpack.c.b16 %v8135, %v8134
    %v8163 = vpack.c.b16 %v8137, %v8136
    %v8164 = vpack.c.b16 %v8139, %v8138
    %v8165 = vpack.c.b16 %v8141, %v8140
    %v8166 = vpack.c.b16 %v8143, %v8142
    %v8167 = vpack.c.b16 %v8145, %v8144
    %v8168 = vpack.c.b16 %v8147, %v8146
    %v8169 = vpack.c.b16 %v8149, %v8148
    %v8170 = vpack.c.b16 %v8151, %v8150
    %v8171 = vpack.c.b16 %v8153, %v8152
    %v8172 = vpack.c.b16 %v8155, %v8154
    %v8173 = vpack.c.b16 %v8157, %v8156
    %8190 = vmatprep.subr.bf16.mxu0 0
    %8191 = vmatpush1.bf16.msra.mxu0 %v8158
    %8192 = vmatprep.subr.bf16.mxu0 0
    %8193 = vmatpush1.bf16.msra.mxu0 %v8159
    %8194 = vmatprep.subr.bf16.mxu0 0
    %8195 = vmatpush1.bf16.msra.mxu0 %v8160
    %8196 = vmatprep.subr.bf16.mxu0 0
    %8197 = vmatpush1.bf16.msra.mxu0 %v8161
    %8198 = vmatprep.subr.bf16.mxu0 0
    %8199 = vmatpush1.bf16.msra.mxu0 %v8162
    %8200 = vmatprep.subr.bf16.mxu0 0
    %8201 = vmatpush1.bf16.msra.mxu0 %v8163
    %8202 = vmatprep.subr.bf16.mxu0 0
    %8203 = vmatpush1.bf16.msra.mxu0 %v8164
    %8204 = vmatprep.subr.bf16.mxu0 0
    %8205 = vmatpush1.bf16.msra.mxu0 %v8165
    %8206 = vmatprep.subr.bf16.mxu0 0
    %8207 = vmatpush1.bf16.msra.mxu0 %v8166
    %8208 = vmatprep.subr.bf16.mxu0 0
    %8209 = vmatpush1.bf16.msra.mxu0 %v8167
    %8210 = vmatprep.subr.bf16.mxu0 0
    %8211 = vmatpush1.bf16.msra.mxu0 %v8168
    %8212 = vmatprep.subr.bf16.mxu0 0
    %8213 = vmatpush1.bf16.msra.mxu0 %v8169
    %8214 = vmatprep.subr.bf16.mxu0 0
    %8215 = vmatpush1.bf16.msra.mxu0 %v8170
    %8216 = vmatprep.subr.bf16.mxu0 0
    %8217 = vmatpush1.bf16.msra.mxu0 %v8171
    %8218 = vmatprep.subr.bf16.mxu0 0
    %8219 = vmatpush1.bf16.msra.mxu0 %v8172
    %8220 = vmatprep.subr.bf16.mxu0 0
    %8221 = vmatpush1.bf16.msra.mxu0 %v8173
    %8222 = vmatprep.mubr.bf16.mxu0 %v8054
    %8223 = vmatmul.mubr.bf16.gmra.mrb[0].mxu0 %v1000
    %v8224 = vpop.f32.mrb[0].mxu0
    %v8225 = vadd.f32 %v8092, %v8224
    %v8226 = vpop.f32.mrb[0].mxu0
    %v8227 = vpop.f32.mrb[0].mxu0
    %v8228 = vpop.f32.mrb[0].mxu0
    %8229 = vdwg.mxu0
    %v8230 = vpack.c.bf16 %v8225, %v8225
    %v8231 = vld [vmem:[%s43] sm:$0xf]
    %v8232 = vld [vmem:[%s43 + $0x4] sm:$0xf]
    %v8233 = vld [vmem:[%s43 + $0x8] sm:$0xf]
    %v8234 = vld [vmem:[%s43 + $0xc] sm:$0xf]
    %v8235 = vld [vmem:[%s43 + $0x10] sm:$0xf]
    %v8236 = vld [vmem:[%s43 + $0x14] sm:$0xf]
    %v8237 = vld [vmem:[%s43 + $0x18] sm:$0xf]
    %v8238 = vld [vmem:[%s43 + $0x1c] sm:$0xf]
    %v8239 = vld [vmem:[%s43 + $0x20] sm:$0xf]
    %v8240 = vld [vmem:[%s43 + $0x24] sm:$0xf]
    %v8241 = vld [vmem:[%s43 + $0x28] sm:$0xf]
    %v8242 = vld [vmem:[%s43 + $0x2c] sm:$0xf]
    %v8243 = vld [vmem:[%s43 + $0x30] sm:$0xf]
    %v8244 = vld [vmem:[%s43 + $0x34] sm:$0xf]
    %v8245 = vld [vmem:[%s43 + $0x38] sm:$0xf]
    %v8246 = vld [vmem:[%s43 + $0x3c] sm:$0xf]
    %v8247 = vld [vmem:[%s45] sm:$0x1]
    %v8249 = vlaneseq
    %v8250 = vshrl.u32 %v8249, 7
    %v8251 = vsub.s32 0, %v8250
    %v8252 = vrot.slane %v8247, %v8251
    %v8270 = vunpack.c.l.b16 %v8231
    %v8271 = vunpack.c.l.b16 %v8232
    %v8272 = vunpack.c.l.b16 %v8233
    %v8273 = vunpack.c.l.b16 %v8234
    %v8274 = vunpack.c.l.b16 %v8235
    %v8275 = vunpack.c.l.b16 %v8236
    %v8276 = vunpack.c.l.b16 %v8237
    %v8277 = vunpack.c.l.b16 %v8238
    %v8278 = vunpack.c.l.b16 %v8239
    %v8279 = vunpack.c.l.b16 %v8240
    %v8280 = vunpack.c.l.b16 %v8241
    %v8281 = vunpack.c.l.b16 %v8242
    %v8282 = vunpack.c.l.b16 %v8243
    %v8283 = vunpack.c.l.b16 %v8244
    %v8284 = vunpack.c.l.b16 %v8245
    %v8285 = vunpack.c.l.b16 %v8246
    %v8286 = vpack.c.b16 %v8271, %v8270
    %v8287 = vpack.c.b16 %v8273, %v8272
    %v8288 = vpack.c.b16 %v8275, %v8274
    %v8289 = vpack.c.b16 %v8277, %v8276
    %v8290 = vpack.c.b16 %v8279, %v8278
    %v8291 = vpack.c.b16 %v8281, %v8280
    %v8292 = vpack.c.b16 %v8283, %v8282
    %v8293 = vpack.c.b16 %v8285, %v8284
    %8302 = vmatprep.subr.bf16.mxu0 0
    %8303 = vmatpush1.bf16.msra.mxu0 %v8286
    %8304 = vmatprep.subr.bf16.mxu0 0
    %8305 = vmatpush1.bf16.msra.mxu0 %v8287
    %8306 = vmatprep.subr.bf16.mxu0 0
    %8307 = vmatpush1.bf16.msra.mxu0 %v8288
    %8308 = vmatprep.subr.bf16.mxu0 0
    %8309 = vmatpush1.bf16.msra.mxu0 %v8289
    %8310 = vmatprep.subr.bf16.mxu0 0
    %8311 = vmatpush1.bf16.msra.mxu0 %v8290
    %8312 = vmatprep.subr.bf16.mxu0 0
    %8313 = vmatpush1.bf16.msra.mxu0 %v8291
    %8314 = vmatprep.subr.bf16.mxu0 0
    %8315 = vmatpush1.bf16.msra.mxu0 %v8292
    %8316 = vmatprep.subr.bf16.mxu0 0
    %8317 = vmatpush1.bf16.msra.mxu0 %v8293
    %8318 = vmatprep.subr.bf16.mxu0 0
    %8319 = vmatpush1.bf16.msra.mxu0 0
    %8320 = vmatprep.subr.bf16.mxu0 0
    %8321 = vmatpush1.bf16.msra.mxu0 0
    %8322 = vmatprep.subr.bf16.mxu0 0
    %8323 = vmatpush1.bf16.msra.mxu0 0
    %8324 = vmatprep.subr.bf16.mxu0 0
    %8325 = vmatpush1.bf16.msra.mxu0 0
    %8326 = vmatprep.subr.bf16.mxu0 0
    %8327 = vmatpush1.bf16.msra.mxu0 0
    %8328 = vmatprep.subr.bf16.mxu0 0
    %8329 = vmatpush1.bf16.msra.mxu0 0
    %8330 = vmatprep.subr.bf16.mxu0 0
    %8331 = vmatpush1.bf16.msra.mxu0 0
    %8332 = vmatprep.subr.bf16.mxu0 0
    %8333 = vmatpush1.bf16.msra.mxu0 0
    %8334 = vmatprep.mubr.bf16.mxu0 0
    %8335 = vmatmul.mubr.bf16.gmra.mrb[0].mxu0 %v8230
    %v8336 = vpop.f32.mrb[0].mxu0
    %v8337 = vadd.f32 %v8252, %v8336
    %v8338 = vpop.f32.mrb[0].mxu0
    %v8339 = vpop.f32.mrb[0].mxu0
    %v8340 = vpop.f32.mrb[0].mxu0
    %8341 = vdwg.mxu0
    %8342 = vmax.xlane.f32.xlu0 %v8337
    %v8343 = vpop.xlane.xlu0 %8342
    %v8344 = vsub.f32 %v8337, %v8343
    %v8345 = vmul.f32 %v8344, 1.442695
    %v8346 = vpow.pop %v8345
    %8347 = vadd.xlane.f32.xlu0 %v8346
    %v8348 = vpop.xlane.xlu0 %8347
    %v8349 = vrcp.pop %v8348
    %v8350 = vmul.f32 1.0, %v8349
    %v8351 = vmul.f32 %v8346, %v8350
    %v8352 = vld [vmem:[#allocation15] sm:$0xff]
    %v8353 = vlaneseq
    %v8354 = vshrl.u32 %v8353, 7
    %v8355 = vsub.s32 0, %v8354
    %v8356 = vrot.slane %v8352, %v8355
    %8358 = vbcast.lane.b32.xlu0 %v8356, 256
    %v8359 = vpop.permute.xlu0 %8358
    %s8361 = sor.u32 256, 8
    %8362 = vbcast.lane.b32.xlu0 %v8356, %s8361
    %v8363 = vpop.permute.xlu0 %8362
    %s8365 = sor.u32 256, 16
    %8366 = vbcast.lane.b32.xlu0 %v8356, %s8365
    %v8367 = vpop.permute.xlu0 %8366
    %s8369 = sor.u32 256, 24
    %8370 = vbcast.lane.b32.xlu0 %v8356, %s8369
    %v8371 = vpop.permute.xlu0 %8370
    %s8373 = sor.u32 256, 32
    %8374 = vbcast.lane.b32.xlu0 %v8356, %s8373
    %v8375 = vpop.permute.xlu0 %8374
    %s8377 = sor.u32 256, 40
    %8378 = vbcast.lane.b32.xlu0 %v8356, %s8377
    %v8379 = vpop.permute.xlu0 %8378
    %s8381 = sor.u32 256, 48
    %8382 = vbcast.lane.b32.xlu0 %v8356, %s8381
    %v8383 = vpop.permute.xlu0 %8382
    %s8385 = sor.u32 256, 56
    %8386 = vbcast.lane.b32.xlu0 %v8356, %s8385
    %v8387 = vpop.permute.xlu0 %8386
    %s8389 = sor.u32 256, 64
    %8390 = vbcast.lane.b32.xlu0 %v8356, %s8389
    %v8391 = vpop.permute.xlu0 %8390
    %s8393 = sor.u32 256, 72
    %8394 = vbcast.lane.b32.xlu0 %v8356, %s8393
    %v8395 = vpop.permute.xlu0 %8394
    %s8397 = sor.u32 256, 80
    %8398 = vbcast.lane.b32.xlu0 %v8356, %s8397
    %v8399 = vpop.permute.xlu0 %8398
    %s8401 = sor.u32 256, 88
    %8402 = vbcast.lane.b32.xlu0 %v8356, %s8401
    %v8403 = vpop.permute.xlu0 %8402
    %s8405 = sor.u32 256, 96
    %8406 = vbcast.lane.b32.xlu0 %v8356, %s8405
    %v8407 = vpop.permute.xlu0 %8406
    %s8409 = sor.u32 256, 104
    %8410 = vbcast.lane.b32.xlu0 %v8356, %s8409
    %v8411 = vpop.permute.xlu0 %8410
    %s8413 = sor.u32 256, 112
    %8414 = vbcast.lane.b32.xlu0 %v8356, %s8413
    %v8415 = vpop.permute.xlu0 %8414
    %s8417 = sor.u32 256, 120
    %8418 = vbcast.lane.b32.xlu0 %v8356, %s8417
    %v8419 = vpop.permute.xlu0 %8418
    %v8420 = vlaneseq
    %v8421 = vshrl.u32 %v8420, 7
    %v8422 = vsub.s32 1, %v8421
    %v8423 = vrot.slane %v8352, %v8422
    %8425 = vbcast.lane.b32.xlu0 %v8423, 256
    %v8426 = vpop.permute.xlu0 %8425
    %s8428 = sor.u32 256, 8
    %8429 = vbcast.lane.b32.xlu0 %v8423, %s8428
    %v8430 = vpop.permute.xlu0 %8429
    %s8432 = sor.u32 256, 16
    %8433 = vbcast.lane.b32.xlu0 %v8423, %s8432
    %v8434 = vpop.permute.xlu0 %8433
    %s8436 = sor.u32 256, 24
    %8437 = vbcast.lane.b32.xlu0 %v8423, %s8436
    %v8438 = vpop.permute.xlu0 %8437
    %s8440 = sor.u32 256, 32
    %8441 = vbcast.lane.b32.xlu0 %v8423, %s8440
    %v8442 = vpop.permute.xlu0 %8441
    %s8444 = sor.u32 256, 40
    %8445 = vbcast.lane.b32.xlu0 %v8423, %s8444
    %v8446 = vpop.permute.xlu0 %8445
    %s8448 = sor.u32 256, 48
    %8449 = vbcast.lane.b32.xlu0 %v8423, %s8448
    %v8450 = vpop.permute.xlu0 %8449
    %s8452 = sor.u32 256, 56
    %8453 = vbcast.lane.b32.xlu0 %v8423, %s8452
    %v8454 = vpop.permute.xlu0 %8453
    %s8456 = sor.u32 256, 64
    %8457 = vbcast.lane.b32.xlu0 %v8423, %s8456
    %v8458 = vpop.permute.xlu0 %8457
    %s8460 = sor.u32 256, 72
    %8461 = vbcast.lane.b32.xlu0 %v8423, %s8460
    %v8462 = vpop.permute.xlu0 %8461
    %s8464 = sor.u32 256, 80
    %8465 = vbcast.lane.b32.xlu0 %v8423, %s8464
    %v8466 = vpop.permute.xlu0 %8465
    %s8468 = sor.u32 256, 88
    %8469 = vbcast.lane.b32.xlu0 %v8423, %s8468
    %v8470 = vpop.permute.xlu0 %8469
    %s8472 = sor.u32 256, 96
    %8473 = vbcast.lane.b32.xlu0 %v8423, %s8472
    %v8474 = vpop.permute.xlu0 %8473
    %s8476 = sor.u32 256, 104
    %8477 = vbcast.lane.b32.xlu0 %v8423, %s8476
    %v8478 = vpop.permute.xlu0 %8477
    %s8480 = sor.u32 256, 112
    %8481 = vbcast.lane.b32.xlu0 %v8423, %s8480
    %v8482 = vpop.permute.xlu0 %8481
    %s8484 = sor.u32 256, 120
    %8485 = vbcast.lane.b32.xlu0 %v8423, %s8484
    %v8486 = vpop.permute.xlu0 %8485
    %v8487 = vlaneseq
    %v8488 = vshrl.u32 %v8487, 7
    %v8489 = vsub.s32 2, %v8488
    %v8490 = vrot.slane %v8352, %v8489
    %8492 = vbcast.lane.b32.xlu0 %v8490, 256
    %v8493 = vpop.permute.xlu0 %8492
    %s8495 = sor.u32 256, 8
    %8496 = vbcast.lane.b32.xlu0 %v8490, %s8495
    %v8497 = vpop.permute.xlu0 %8496
    %s8499 = sor.u32 256, 16
    %8500 = vbcast.lane.b32.xlu0 %v8490, %s8499
    %v8501 = vpop.permute.xlu0 %8500
    %s8503 = sor.u32 256, 24
    %8504 = vbcast.lane.b32.xlu0 %v8490, %s8503
    %v8505 = vpop.permute.xlu0 %8504
    %s8507 = sor.u32 256, 32
    %8508 = vbcast.lane.b32.xlu0 %v8490, %s8507
    %v8509 = vpop.permute.xlu0 %8508
    %s8511 = sor.u32 256, 40
    %8512 = vbcast.lane.b32.xlu0 %v8490, %s8511
    %v8513 = vpop.permute.xlu0 %8512
    %s8515 = sor.u32 256, 48
    %8516 = vbcast.lane.b32.xlu0 %v8490, %s8515
    %v8517 = vpop.permute.xlu0 %8516
    %s8519 = sor.u32 256, 56
    %8520 = vbcast.lane.b32.xlu0 %v8490, %s8519
    %v8521 = vpop.permute.xlu0 %8520
    %s8523 = sor.u32 256, 64
    %8524 = vbcast.lane.b32.xlu0 %v8490, %s8523
    %v8525 = vpop.permute.xlu0 %8524
    %s8527 = sor.u32 256, 72
    %8528 = vbcast.lane.b32.xlu0 %v8490, %s8527
    %v8529 = vpop.permute.xlu0 %8528
    %s8531 = sor.u32 256, 80
    %8532 = vbcast.lane.b32.xlu0 %v8490, %s8531
    %v8533 = vpop.permute.xlu0 %8532
    %s8535 = sor.u32 256, 88
    %8536 = vbcast.lane.b32.xlu0 %v8490, %s8535
    %v8537 = vpop.permute.xlu0 %8536
    %s8539 = sor.u32 256, 96
    %8540 = vbcast.lane.b32.xlu0 %v8490, %s8539
    %v8541 = vpop.permute.xlu0 %8540
    %s8543 = sor.u32 256, 104
    %8544 = vbcast.lane.b32.xlu0 %v8490, %s8543
    %v8545 = vpop.permute.xlu0 %8544
    %s8547 = sor.u32 256, 112
    %8548 = vbcast.lane.b32.xlu0 %v8490, %s8547
    %v8549 = vpop.permute.xlu0 %8548
    %s8551 = sor.u32 256, 120
    %8552 = vbcast.lane.b32.xlu0 %v8490, %s8551
    %v8553 = vpop.permute.xlu0 %8552
    %v8554 = vlaneseq
    %v8555 = vshrl.u32 %v8554, 7
    %v8556 = vsub.s32 3, %v8555
    %v8557 = vrot.slane %v8352, %v8556
    %8559 = vbcast.lane.b32.xlu0 %v8557, 256
    %v8560 = vpop.permute.xlu0 %8559
    %s8562 = sor.u32 256, 8
    %8563 = vbcast.lane.b32.xlu0 %v8557, %s8562
    %v8564 = vpop.permute.xlu0 %8563
    %s8566 = sor.u32 256, 16
    %8567 = vbcast.lane.b32.xlu0 %v8557, %s8566
    %v8568 = vpop.permute.xlu0 %8567
    %s8570 = sor.u32 256, 24
    %8571 = vbcast.lane.b32.xlu0 %v8557, %s8570
    %v8572 = vpop.permute.xlu0 %8571
    %s8574 = sor.u32 256, 32
    %8575 = vbcast.lane.b32.xlu0 %v8557, %s8574
    %v8576 = vpop.permute.xlu0 %8575
    %s8578 = sor.u32 256, 40
    %8579 = vbcast.lane.b32.xlu0 %v8557, %s8578
    %v8580 = vpop.permute.xlu0 %8579
    %s8582 = sor.u32 256, 48
    %8583 = vbcast.lane.b32.xlu0 %v8557, %s8582
    %v8584 = vpop.permute.xlu0 %8583
    %s8586 = sor.u32 256, 56
    %8587 = vbcast.lane.b32.xlu0 %v8557, %s8586
    %v8588 = vpop.permute.xlu0 %8587
    %s8590 = sor.u32 256, 64
    %8591 = vbcast.lane.b32.xlu0 %v8557, %s8590
    %v8592 = vpop.permute.xlu0 %8591
    %s8594 = sor.u32 256, 72
    %8595 = vbcast.lane.b32.xlu0 %v8557, %s8594
    %v8596 = vpop.permute.xlu0 %8595
    %s8598 = sor.u32 256, 80
    %8599 = vbcast.lane.b32.xlu0 %v8557, %s8598
    %v8600 = vpop.permute.xlu0 %8599
    %s8602 = sor.u32 256, 88
    %8603 = vbcast.lane.b32.xlu0 %v8557, %s8602
    %v8604 = vpop.permute.xlu0 %8603
    %s8606 = sor.u32 256, 96
    %8607 = vbcast.lane.b32.xlu0 %v8557, %s8606
    %v8608 = vpop.permute.xlu0 %8607
    %s8610 = sor.u32 256, 104
    %8611 = vbcast.lane.b32.xlu0 %v8557, %s8610
    %v8612 = vpop.permute.xlu0 %8611
    %s8614 = sor.u32 256, 112
    %8615 = vbcast.lane.b32.xlu0 %v8557, %s8614
    %v8616 = vpop.permute.xlu0 %8615
    %s8618 = sor.u32 256, 120
    %8619 = vbcast.lane.b32.xlu0 %v8557, %s8618
    %v8620 = vpop.permute.xlu0 %8619
    %v8621 = vlaneseq
    %v8622 = vshrl.u32 %v8621, 7
    %v8623 = vsub.s32 4, %v8622
    %v8624 = vrot.slane %v8352, %v8623
    %8626 = vbcast.lane.b32.xlu0 %v8624, 256
    %v8627 = vpop.permute.xlu0 %8626
    %s8629 = sor.u32 256, 8
    %8630 = vbcast.lane.b32.xlu0 %v8624, %s8629
    %v8631 = vpop.permute.xlu0 %8630
    %s8633 = sor.u32 256, 16
    %8634 = vbcast.lane.b32.xlu0 %v8624, %s8633
    %v8635 = vpop.permute.xlu0 %8634
    %s8637 = sor.u32 256, 24
    %8638 = vbcast.lane.b32.xlu0 %v8624, %s8637
    %v8639 = vpop.permute.xlu0 %8638
    %s8641 = sor.u32 256, 32
    %8642 = vbcast.lane.b32.xlu0 %v8624, %s8641
    %v8643 = vpop.permute.xlu0 %8642
    %s8645 = sor.u32 256, 40
    %8646 = vbcast.lane.b32.xlu0 %v8624, %s8645
    %v8647 = vpop.permute.xlu0 %8646
    %s8649 = sor.u32 256, 48
    %8650 = vbcast.lane.b32.xlu0 %v8624, %s8649
    %v8651 = vpop.permute.xlu0 %8650
    %s8653 = sor.u32 256, 56
    %8654 = vbcast.lane.b32.xlu0 %v8624, %s8653
    %v8655 = vpop.permute.xlu0 %8654
    %s8657 = sor.u32 256, 64
    %8658 = vbcast.lane.b32.xlu0 %v8624, %s8657
    %v8659 = vpop.permute.xlu0 %8658
    %s8661 = sor.u32 256, 72
    %8662 = vbcast.lane.b32.xlu0 %v8624, %s8661
    %v8663 = vpop.permute.xlu0 %8662
    %s8665 = sor.u32 256, 80
    %8666 = vbcast.lane.b32.xlu0 %v8624, %s8665
    %v8667 = vpop.permute.xlu0 %8666
    %s8669 = sor.u32 256, 88
    %8670 = vbcast.lane.b32.xlu0 %v8624, %s8669
    %v8671 = vpop.permute.xlu0 %8670
    %s8673 = sor.u32 256, 96
    %8674 = vbcast.lane.b32.xlu0 %v8624, %s8673
    %v8675 = vpop.permute.xlu0 %8674
    %s8677 = sor.u32 256, 104
    %8678 = vbcast.lane.b32.xlu0 %v8624, %s8677
    %v8679 = vpop.permute.xlu0 %8678
    %s8681 = sor.u32 256, 112
    %8682 = vbcast.lane.b32.xlu0 %v8624, %s8681
    %v8683 = vpop.permute.xlu0 %8682
    %s8685 = sor.u32 256, 120
    %8686 = vbcast.lane.b32.xlu0 %v8624, %s8685
    %v8687 = vpop.permute.xlu0 %8686
    %v8688 = vlaneseq
    %v8689 = vshrl.u32 %v8688, 7
    %v8690 = vsub.s32 5, %v8689
    %v8691 = vrot.slane %v8352, %v8690
    %8693 = vbcast.lane.b32.xlu0 %v8691, 256
    %v8694 = vpop.permute.xlu0 %8693
    %s8696 = sor.u32 256, 8
    %8697 = vbcast.lane.b32.xlu0 %v8691, %s8696
    %v8698 = vpop.permute.xlu0 %8697
    %s8700 = sor.u32 256, 16
    %8701 = vbcast.lane.b32.xlu0 %v8691, %s8700
    %v8702 = vpop.permute.xlu0 %8701
    %s8704 = sor.u32 256, 24
    %8705 = vbcast.lane.b32.xlu0 %v8691, %s8704
    %v8706 = vpop.permute.xlu0 %8705
    %s8708 = sor.u32 256, 32
    %8709 = vbcast.lane.b32.xlu0 %v8691, %s8708
    %v8710 = vpop.permute.xlu0 %8709
    %s8712 = sor.u32 256, 40
    %8713 = vbcast.lane.b32.xlu0 %v8691, %s8712
    %v8714 = vpop.permute.xlu0 %8713
    %s8716 = sor.u32 256, 48
    %8717 = vbcast.lane.b32.xlu0 %v8691, %s8716
    %v8718 = vpop.permute.xlu0 %8717
    %s8720 = sor.u32 256, 56
    %8721 = vbcast.lane.b32.xlu0 %v8691, %s8720
    %v8722 = vpop.permute.xlu0 %8721
    %s8724 = sor.u32 256, 64
    %8725 = vbcast.lane.b32.xlu0 %v8691, %s8724
    %v8726 = vpop.permute.xlu0 %8725
    %s8728 = sor.u32 256, 72
    %8729 = vbcast.lane.b32.xlu0 %v8691, %s8728
    %v8730 = vpop.permute.xlu0 %8729
    %s8732 = sor.u32 256, 80
    %8733 = vbcast.lane.b32.xlu0 %v8691, %s8732
    %v8734 = vpop.permute.xlu0 %8733
    %s8736 = sor.u32 256, 88
    %8737 = vbcast.lane.b32.xlu0 %v8691, %s8736
    %v8738 = vpop.permute.xlu0 %8737
    %s8740 = sor.u32 256, 96
    %8741 = vbcast.lane.b32.xlu0 %v8691, %s8740
    %v8742 = vpop.permute.xlu0 %8741
    %s8744 = sor.u32 256, 104
    %8745 = vbcast.lane.b32.xlu0 %v8691, %s8744
    %v8746 = vpop.permute.xlu0 %8745
    %s8748 = sor.u32 256, 112
    %8749 = vbcast.lane.b32.xlu0 %v8691, %s8748
    %v8750 = vpop.permute.xlu0 %8749
    %s8752 = sor.u32 256, 120
    %8753 = vbcast.lane.b32.xlu0 %v8691, %s8752
    %v8754 = vpop.permute.xlu0 %8753
    %v8755 = vlaneseq
    %v8756 = vshrl.u32 %v8755, 7
    %v8757 = vsub.s32 6, %v8756
    %v8758 = vrot.slane %v8352, %v8757
    %8760 = vbcast.lane.b32.xlu0 %v8758, 256
    %v8761 = vpop.permute.xlu0 %8760
    %s8763 = sor.u32 256, 8
    %8764 = vbcast.lane.b32.xlu0 %v8758, %s8763
    %v8765 = vpop.permute.xlu0 %8764
    %s8767 = sor.u32 256, 16
    %8768 = vbcast.lane.b32.xlu0 %v8758, %s8767
    %v8769 = vpop.permute.xlu0 %8768
    %s8771 = sor.u32 256, 24
    %8772 = vbcast.lane.b32.xlu0 %v8758, %s8771
    %v8773 = vpop.permute.xlu0 %8772
    %s8775 = sor.u32 256, 32
    %8776 = vbcast.lane.b32.xlu0 %v8758, %s8775
    %v8777 = vpop.permute.xlu0 %8776
    %s8779 = sor.u32 256, 40
    %8780 = vbcast.lane.b32.xlu0 %v8758, %s8779
    %v8781 = vpop.permute.xlu0 %8780
    %s8783 = sor.u32 256, 48
    %8784 = vbcast.lane.b32.xlu0 %v8758, %s8783
    %v8785 = vpop.permute.xlu0 %8784
    %s8787 = sor.u32 256, 56
    %8788 = vbcast.lane.b32.xlu0 %v8758, %s8787
    %v8789 = vpop.permute.xlu0 %8788
    %s8791 = sor.u32 256, 64
    %8792 = vbcast.lane.b32.xlu0 %v8758, %s8791
    %v8793 = vpop.permute.xlu0 %8792
    %s8795 = sor.u32 256, 72
    %8796 = vbcast.lane.b32.xlu0 %v8758, %s8795
    %v8797 = vpop.permute.xlu0 %8796
    %s8799 = sor.u32 256, 80
    %8800 = vbcast.lane.b32.xlu0 %v8758, %s8799
    %v8801 = vpop.permute.xlu0 %8800
    %s8803 = sor.u32 256, 88
    %8804 = vbcast.lane.b32.xlu0 %v8758, %s8803
    %v8805 = vpop.permute.xlu0 %8804
    %s8807 = sor.u32 256, 96
    %8808 = vbcast.lane.b32.xlu0 %v8758, %s8807
    %v8809 = vpop.permute.xlu0 %8808
    %s8811 = sor.u32 256, 104
    %8812 = vbcast.lane.b32.xlu0 %v8758, %s8811
    %v8813 = vpop.permute.xlu0 %8812
    %s8815 = sor.u32 256, 112
    %8816 = vbcast.lane.b32.xlu0 %v8758, %s8815
    %v8817 = vpop.permute.xlu0 %8816
    %s8819 = sor.u32 256, 120
    %8820 = vbcast.lane.b32.xlu0 %v8758, %s8819
    %v8821 = vpop.permute.xlu0 %8820
    %v8822 = vlaneseq
    %v8823 = vshrl.u32 %v8822, 7
    %v8824 = vsub.s32 7, %v8823
    %v8825 = vrot.slane %v8352, %v8824
    %8827 = vbcast.lane.b32.xlu0 %v8825, 256
    %v8828 = vpop.permute.xlu0 %8827
    %s8830 = sor.u32 256, 8
    %8831 = vbcast.lane.b32.xlu0 %v8825, %s8830
    %v8832 = vpop.permute.xlu0 %8831
    %s8834 = sor.u32 256, 16
    %8835 = vbcast.lane.b32.xlu0 %v8825, %s8834
    %v8836 = vpop.permute.xlu0 %8835
    %s8838 = sor.u32 256, 24
    %8839 = vbcast.lane.b32.xlu0 %v8825, %s8838
    %v8840 = vpop.permute.xlu0 %8839
    %s8842 = sor.u32 256, 32
    %8843 = vbcast.lane.b32.xlu0 %v8825, %s8842
    %v8844 = vpop.permute.xlu0 %8843
    %s8846 = sor.u32 256, 40
    %8847 = vbcast.lane.b32.xlu0 %v8825, %s8846
    %v8848 = vpop.permute.xlu0 %8847
    %s8850 = sor.u32 256, 48
    %8851 = vbcast.lane.b32.xlu0 %v8825, %s8850
    %v8852 = vpop.permute.xlu0 %8851
    %s8854 = sor.u32 256, 56
    %8855 = vbcast.lane.b32.xlu0 %v8825, %s8854
    %v8856 = vpop.permute.xlu0 %8855
    %s8858 = sor.u32 256, 64
    %8859 = vbcast.lane.b32.xlu0 %v8825, %s8858
    %v8860 = vpop.permute.xlu0 %8859
    %s8862 = sor.u32 256, 72
    %8863 = vbcast.lane.b32.xlu0 %v8825, %s8862
    %v8864 = vpop.permute.xlu0 %8863
    %s8866 = sor.u32 256, 80
    %8867 = vbcast.lane.b32.xlu0 %v8825, %s8866
    %v8868 = vpop.permute.xlu0 %8867
    %s8870 = sor.u32 256, 88
    %8871 = vbcast.lane.b32.xlu0 %v8825, %s8870
    %v8872 = vpop.permute.xlu0 %8871
    %s8874 = sor.u32 256, 96
    %8875 = vbcast.lane.b32.xlu0 %v8825, %s8874
    %v8876 = vpop.permute.xlu0 %8875
    %s8878 = sor.u32 256, 104
    %8879 = vbcast.lane.b32.xlu0 %v8825, %s8878
    %v8880 = vpop.permute.xlu0 %8879
    %s8882 = sor.u32 256, 112
    %8883 = vbcast.lane.b32.xlu0 %v8825, %s8882
    %v8884 = vpop.permute.xlu0 %8883
    %s8886 = sor.u32 256, 120
    %8887 = vbcast.lane.b32.xlu0 %v8825, %s8886
    %v8888 = vpop.permute.xlu0 %8887
    %vm8889 = vcmp.eq.s32.totalorder %v8359, %v2970
    %vm8890 = vcmp.eq.s32.totalorder %v8363, %v2970
    %vm8891 = vcmp.eq.s32.totalorder %v8367, %v2970
    %vm8892 = vcmp.eq.s32.totalorder %v8371, %v2970
    %vm8893 = vcmp.eq.s32.totalorder %v8375, %v2970
    %vm8894 = vcmp.eq.s32.totalorder %v8379, %v2970
    %vm8895 = vcmp.eq.s32.totalorder %v8383, %v2970
    %vm8896 = vcmp.eq.s32.totalorder %v8387, %v2970
    %vm8897 = vcmp.eq.s32.totalorder %v8391, %v2970
    %vm8898 = vcmp.eq.s32.totalorder %v8395, %v2970
    %vm8899 = vcmp.eq.s32.totalorder %v8399, %v2970
    %vm8900 = vcmp.eq.s32.totalorder %v8403, %v2970
    %vm8901 = vcmp.eq.s32.totalorder %v8407, %v2970
    %vm8902 = vcmp.eq.s32.totalorder %v8411, %v2970
    %vm8903 = vcmp.eq.s32.totalorder %v8415, %v2970
    %vm8904 = vcmp.eq.s32.totalorder %v8419, %v2970
    %vm8905 = vcmp.eq.s32.totalorder %v8426, %v2970
    %vm8906 = vcmp.eq.s32.totalorder %v8430, %v2970
    %vm8907 = vcmp.eq.s32.totalorder %v8434, %v2970
    %vm8908 = vcmp.eq.s32.totalorder %v8438, %v2970
    %vm8909 = vcmp.eq.s32.totalorder %v8442, %v2970
    %vm8910 = vcmp.eq.s32.totalorder %v8446, %v2970
    %vm8911 = vcmp.eq.s32.totalorder %v8450, %v2970
    %vm8912 = vcmp.eq.s32.totalorder %v8454, %v2970
    %vm8913 = vcmp.eq.s32.totalorder %v8458, %v2970
    %vm8914 = vcmp.eq.s32.totalorder %v8462, %v2970
    %vm8915 = vcmp.eq.s32.totalorder %v8466, %v2970
    %vm8916 = vcmp.eq.s32.totalorder %v8470, %v2970
    %vm8917 = vcmp.eq.s32.totalorder %v8474, %v2970
    %vm8918 = vcmp.eq.s32.totalorder %v8478, %v2970
    %vm8919 = vcmp.eq.s32.totalorder %v8482, %v2970
    %vm8920 = vcmp.eq.s32.totalorder %v8486, %v2970
    %vm8921 = vcmp.eq.s32.totalorder %v8493, %v2970
    %vm8922 = vcmp.eq.s32.totalorder %v8497, %v2970
    %vm8923 = vcmp.eq.s32.totalorder %v8501, %v2970
    %vm8924 = vcmp.eq.s32.totalorder %v8505, %v2970
    %vm8925 = vcmp.eq.s32.totalorder %v8509, %v2970
    %vm8926 = vcmp.eq.s32.totalorder %v8513, %v2970
    %vm8927 = vcmp.eq.s32.totalorder %v8517, %v2970
    %vm8928 = vcmp.eq.s32.totalorder %v8521, %v2970
    %vm8929 = vcmp.eq.s32.totalorder %v8525, %v2970
    %vm8930 = vcmp.eq.s32.totalorder %v8529, %v2970
    %vm8931 = vcmp.eq.s32.totalorder %v8533, %v2970
    %vm8932 = vcmp.eq.s32.totalorder %v8537, %v2970
    %vm8933 = vcmp.eq.s32.totalorder %v8541, %v2970
    %vm8934 = vcmp.eq.s32.totalorder %v8545, %v2970
    %vm8935 = vcmp.eq.s32.totalorder %v8549, %v2970
    %vm8936 = vcmp.eq.s32.totalorder %v8553, %v2970
    %vm8937 = vcmp.eq.s32.totalorder %v8560, %v2970
    %vm8938 = vcmp.eq.s32.totalorder %v8564, %v2970
    %vm8939 = vcmp.eq.s32.totalorder %v8568, %v2970
    %vm8940 = vcmp.eq.s32.totalorder %v8572, %v2970
    %vm8941 = vcmp.eq.s32.totalorder %v8576, %v2970
    %vm8942 = vcmp.eq.s32.totalorder %v8580, %v2970
    %vm8943 = vcmp.eq.s32.totalorder %v8584, %v2970
    %vm8944 = vcmp.eq.s32.totalorder %v8588, %v2970
    %vm8945 = vcmp.eq.s32.totalorder %v8592, %v2970
    %vm8946 = vcmp.eq.s32.totalorder %v8596, %v2970
    %vm8947 = vcmp.eq.s32.totalorder %v8600, %v2970
    %vm8948 = vcmp.eq.s32.totalorder %v8604, %v2970
    %vm8949 = vcmp.eq.s32.totalorder %v8608, %v2970
    %vm8950 = vcmp.eq.s32.totalorder %v8612, %v2970
    %vm8951 = vcmp.eq.s32.totalorder %v8616, %v2970
    %vm8952 = vcmp.eq.s32.totalorder %v8620, %v2970
    %vm8953 = vcmp.eq.s32.totalorder %v8627, %v2970
    %vm8954 = vcmp.eq.s32.totalorder %v8631, %v2970
    %vm8955 = vcmp.eq.s32.totalorder %v8635, %v2970
    %vm8956 = vcmp.eq.s32.totalorder %v8639, %v2970
    %vm8957 = vcmp.eq.s32.totalorder %v8643, %v2970
    %vm8958 = vcmp.eq.s32.totalorder %v8647, %v2970
    %vm8959 = vcmp.eq.s32.totalorder %v8651, %v2970
    %vm8960 = vcmp.eq.s32.totalorder %v8655, %v2970
    %vm8961 = vcmp.eq.s32.totalorder %v8659, %v2970
    %vm8962 = vcmp.eq.s32.totalorder %v8663, %v2970
    %vm8963 = vcmp.eq.s32.totalorder %v8667, %v2970
    %vm8964 = vcmp.eq.s32.totalorder %v8671, %v2970
    %vm8965 = vcmp.eq.s32.totalorder %v8675, %v2970
    %vm8966 = vcmp.eq.s32.totalorder %v8679, %v2970
    %vm8967 = vcmp.eq.s32.totalorder %v8683, %v2970
    %vm8968 = vcmp.eq.s32.totalorder %v8687, %v2970
    %vm8969 = vcmp.eq.s32.totalorder %v8694, %v2970
    %vm8970 = vcmp.eq.s32.totalorder %v8698, %v2970
    %vm8971 = vcmp.eq.s32.totalorder %v8702, %v2970
    %vm8972 = vcmp.eq.s32.totalorder %v8706, %v2970
    %vm8973 = vcmp.eq.s32.totalorder %v8710, %v2970
    %vm8974 = vcmp.eq.s32.totalorder %v8714, %v2970
    %vm8975 = vcmp.eq.s32.totalorder %v8718, %v2970
    %vm8976 = vcmp.eq.s32.totalorder %v8722, %v2970
    %vm8977 = vcmp.eq.s32.totalorder %v8726, %v2970
    %vm8978 = vcmp.eq.s32.totalorder %v8730, %v2970
    %vm8979 = vcmp.eq.s32.totalorder %v8734, %v2970
    %vm8980 = vcmp.eq.s32.totalorder %v8738, %v2970
    %vm8981 = vcmp.eq.s32.totalorder %v8742, %v2970
    %vm8982 = vcmp.eq.s32.totalorder %v8746, %v2970
    %vm8983 = vcmp.eq.s32.totalorder %v8750, %v2970
    %vm8984 = vcmp.eq.s32.totalorder %v8754, %v2970
    %vm8985 = vcmp.eq.s32.totalorder %v8761, %v2970
    %vm8986 = vcmp.eq.s32.totalorder %v8765, %v2970
    %vm8987 = vcmp.eq.s32.totalorder %v8769, %v2970
    %vm8988 = vcmp.eq.s32.totalorder %v8773, %v2970
    %vm8989 = vcmp.eq.s32.totalorder %v8777, %v2970
    %vm8990 = vcmp.eq.s32.totalorder %v8781, %v2970
    %vm8991 = vcmp.eq.s32.totalorder %v8785, %v2970
    %vm8992 = vcmp.eq.s32.totalorder %v8789, %v2970
    %vm8993 = vcmp.eq.s32.totalorder %v8793, %v2970
    %vm8994 = vcmp.eq.s32.totalorder %v8797, %v2970
    %vm8995 = vcmp.eq.s32.totalorder %v8801, %v2970
    %vm8996 = vcmp.eq.s32.totalorder %v8805, %v2970
    %vm8997 = vcmp.eq.s32.totalorder %v8809, %v2970
    %vm8998 = vcmp.eq.s32.totalorder %v8813, %v2970
    %vm8999 = vcmp.eq.s32.totalorder %v8817, %v2970
    %vm9000 = vcmp.eq.s32.totalorder %v8821, %v2970
    %vm9001 = vcmp.eq.s32.totalorder %v8828, %v2970
    %vm9002 = vcmp.eq.s32.totalorder %v8832, %v2970
    %vm9003 = vcmp.eq.s32.totalorder %v8836, %v2970
    %vm9004 = vcmp.eq.s32.totalorder %v8840, %v2970
    %vm9005 = vcmp.eq.s32.totalorder %v8844, %v2970
    %vm9006 = vcmp.eq.s32.totalorder %v8848, %v2970
    %vm9007 = vcmp.eq.s32.totalorder %v8852, %v2970
    %vm9008 = vcmp.eq.s32.totalorder %v8856, %v2970
    %vm9009 = vcmp.eq.s32.totalorder %v8860, %v2970
    %vm9010 = vcmp.eq.s32.totalorder %v8864, %v2970
    %vm9011 = vcmp.eq.s32.totalorder %v8868, %v2970
    %vm9012 = vcmp.eq.s32.totalorder %v8872, %v2970
    %vm9013 = vcmp.eq.s32.totalorder %v8876, %v2970
    %vm9014 = vcmp.eq.s32.totalorder %v8880, %v2970
    %vm9015 = vcmp.eq.s32.totalorder %v8884, %v2970
    %vm9016 = vcmp.eq.s32.totalorder %v8888, %v2970
    %v9017 = vsel %vm8889, 1, 0
    %v9018 = vsel %vm8890, 1, 0
    %v9019 = vsel %vm8891, 1, 0
    %v9020 = vsel %vm8892, 1, 0
    %v9021 = vsel %vm8893, 1, 0
    %v9022 = vsel %vm8894, 1, 0
    %v9023 = vsel %vm8895, 1, 0
    %v9024 = vsel %vm8896, 1, 0
    %v9025 = vsel %vm8897, 1, 0
    %v9026 = vsel %vm8898, 1, 0
    %v9027 = vsel %vm8899, 1, 0
    %v9028 = vsel %vm8900, 1, 0
    %v9029 = vsel %vm8901, 1, 0
    %v9030 = vsel %vm8902, 1, 0
    %v9031 = vsel %vm8903, 1, 0
    %v9032 = vsel %vm8904, 1, 0
    %v9033 = vsel %vm8905, 1, 0
    %v9034 = vsel %vm8906, 1, 0
    %v9035 = vsel %vm8907, 1, 0
    %v9036 = vsel %vm8908, 1, 0
    %v9037 = vsel %vm8909, 1, 0
    %v9038 = vsel %vm8910, 1, 0
    %v9039 = vsel %vm8911, 1, 0
    %v9040 = vsel %vm8912, 1, 0
    %v9041 = vsel %vm8913, 1, 0
    %v9042 = vsel %vm8914, 1, 0
    %v9043 = vsel %vm8915, 1, 0
    %v9044 = vsel %vm8916, 1, 0
    %v9045 = vsel %vm8917, 1, 0
    %v9046 = vsel %vm8918, 1, 0
    %v9047 = vsel %vm8919, 1, 0
    %v9048 = vsel %vm8920, 1, 0
    %v9049 = vsel %vm8921, 1, 0
    %v9050 = vsel %vm8922, 1, 0
    %v9051 = vsel %vm8923, 1, 0
    %v9052 = vsel %vm8924, 1, 0
    %v9053 = vsel %vm8925, 1, 0
    %v9054 = vsel %vm8926, 1, 0
    %v9055 = vsel %vm8927, 1, 0
    %v9056 = vsel %vm8928, 1, 0
    %v9057 = vsel %vm8929, 1, 0
    %v9058 = vsel %vm8930, 1, 0
    %v9059 = vsel %vm8931, 1, 0
    %v9060 = vsel %vm8932, 1, 0
    %v9061 = vsel %vm8933, 1, 0
    %v9062 = vsel %vm8934, 1, 0
    %v9063 = vsel %vm8935, 1, 0
    %v9064 = vsel %vm8936, 1, 0
    %v9065 = vsel %vm8937, 1, 0
    %v9066 = vsel %vm8938, 1, 0
    %v9067 = vsel %vm8939, 1, 0
    %v9068 = vsel %vm8940, 1, 0
    %v9069 = vsel %vm8941, 1, 0
    %v9070 = vsel %vm8942, 1, 0
    %v9071 = vsel %vm8943, 1, 0
    %v9072 = vsel %vm8944, 1, 0
    %v9073 = vsel %vm8945, 1, 0
    %v9074 = vsel %vm8946, 1, 0
    %v9075 = vsel %vm8947, 1, 0
    %v9076 = vsel %vm8948, 1, 0
    %v9077 = vsel %vm8949, 1, 0
    %v9078 = vsel %vm8950, 1, 0
    %v9079 = vsel %vm8951, 1, 0
    %v9080 = vsel %vm8952, 1, 0
    %v9081 = vsel %vm8953, 1, 0
    %v9082 = vsel %vm8954, 1, 0
    %v9083 = vsel %vm8955, 1, 0
    %v9084 = vsel %vm8956, 1, 0
    %v9085 = vsel %vm8957, 1, 0
    %v9086 = vsel %vm8958, 1, 0
    %v9087 = vsel %vm8959, 1, 0
    %v9088 = vsel %vm8960, 1, 0
    %v9089 = vsel %vm8961, 1, 0
    %v9090 = vsel %vm8962, 1, 0
    %v9091 = vsel %vm8963, 1, 0
    %v9092 = vsel %vm8964, 1, 0
    %v9093 = vsel %vm8965, 1, 0
    %v9094 = vsel %vm8966, 1, 0
    %v9095 = vsel %vm8967, 1, 0
    %v9096 = vsel %vm8968, 1, 0
    %v9097 = vsel %vm8969, 1, 0
    %v9098 = vsel %vm8970, 1, 0
    %v9099 = vsel %vm8971, 1, 0
    %v9100 = vsel %vm8972, 1, 0
    %v9101 = vsel %vm8973, 1, 0
    %v9102 = vsel %vm8974, 1, 0
    %v9103 = vsel %vm8975, 1, 0
    %v9104 = vsel %vm8976, 1, 0
    %v9105 = vsel %vm8977, 1, 0
    %v9106 = vsel %vm8978, 1, 0
    %v9107 = vsel %vm8979, 1, 0
    %v9108 = vsel %vm8980, 1, 0
    %v9109 = vsel %vm8981, 1, 0
    %v9110 = vsel %vm8982, 1, 0
    %v9111 = vsel %vm8983, 1, 0
    %v9112 = vsel %vm8984, 1, 0
    %v9113 = vsel %vm8985, 1, 0
    %v9114 = vsel %vm8986, 1, 0
    %v9115 = vsel %vm8987, 1, 0
    %v9116 = vsel %vm8988, 1, 0
    %v9117 = vsel %vm8989, 1, 0
    %v9118 = vsel %vm8990, 1, 0
    %v9119 = vsel %vm8991, 1, 0
    %v9120 = vsel %vm8992, 1, 0
    %v9121 = vsel %vm8993, 1, 0
    %v9122 = vsel %vm8994, 1, 0
    %v9123 = vsel %vm8995, 1, 0
    %v9124 = vsel %vm8996, 1, 0
    %v9125 = vsel %vm8997, 1, 0
    %v9126 = vsel %vm8998, 1, 0
    %v9127 = vsel %vm8999, 1, 0
    %v9128 = vsel %vm9000, 1, 0
    %v9129 = vsel %vm9001, 1, 0
    %v9130 = vsel %vm9002, 1, 0
    %v9131 = vsel %vm9003, 1, 0
    %v9132 = vsel %vm9004, 1, 0
    %v9133 = vsel %vm9005, 1, 0
    %v9134 = vsel %vm9006, 1, 0
    %v9135 = vsel %vm9007, 1, 0
    %v9136 = vsel %vm9008, 1, 0
    %v9137 = vsel %vm9009, 1, 0
    %v9138 = vsel %vm9010, 1, 0
    %v9139 = vsel %vm9011, 1, 0
    %v9140 = vsel %vm9012, 1, 0
    %v9141 = vsel %vm9013, 1, 0
    %v9142 = vsel %vm9014, 1, 0
    %v9143 = vsel %vm9015, 1, 0
    %v9144 = vsel %vm9016, 1, 0
    %v9145 = vcvt.s32.f32 %v9017
    %v9146 = vcvt.s32.f32 %v9018
    %v9147 = vcvt.s32.f32 %v9019
    %v9148 = vcvt.s32.f32 %v9020
    %v9149 = vcvt.s32.f32 %v9021
    %v9150 = vcvt.s32.f32 %v9022
    %v9151 = vcvt.s32.f32 %v9023
    %v9152 = vcvt.s32.f32 %v9024
    %v9153 = vcvt.s32.f32 %v9025
    %v9154 = vcvt.s32.f32 %v9026
    %v9155 = vcvt.s32.f32 %v9027
    %v9156 = vcvt.s32.f32 %v9028
    %v9157 = vcvt.s32.f32 %v9029
    %v9158 = vcvt.s32.f32 %v9030
    %v9159 = vcvt.s32.f32 %v9031
    %v9160 = vcvt.s32.f32 %v9032
    %v9161 = vcvt.s32.f32 %v9033
    %v9162 = vcvt.s32.f32 %v9034
    %v9163 = vcvt.s32.f32 %v9035
    %v9164 = vcvt.s32.f32 %v9036
    %v9165 = vcvt.s32.f32 %v9037
    %v9166 = vcvt.s32.f32 %v9038
    %v9167 = vcvt.s32.f32 %v9039
    %v9168 = vcvt.s32.f32 %v9040
    %v9169 = vcvt.s32.f32 %v9041
    %v9170 = vcvt.s32.f32 %v9042
    %v9171 = vcvt.s32.f32 %v9043
    %v9172 = vcvt.s32.f32 %v9044
    %v9173 = vcvt.s32.f32 %v9045
    %v9174 = vcvt.s32.f32 %v9046
    %v9175 = vcvt.s32.f32 %v9047
    %v9176 = vcvt.s32.f32 %v9048
    %v9177 = vcvt.s32.f32 %v9049
    %v9178 = vcvt.s32.f32 %v9050
    %v9179 = vcvt.s32.f32 %v9051
    %v9180 = vcvt.s32.f32 %v9052
    %v9181 = vcvt.s32.f32 %v9053
    %v9182 = vcvt.s32.f32 %v9054
    %v9183 = vcvt.s32.f32 %v9055
    %v9184 = vcvt.s32.f32 %v9056
    %v9185 = vcvt.s32.f32 %v9057
    %v9186 = vcvt.s32.f32 %v9058
    %v9187 = vcvt.s32.f32 %v9059
    %v9188 = vcvt.s32.f32 %v9060
    %v9189 = vcvt.s32.f32 %v9061
    %v9190 = vcvt.s32.f32 %v9062
    %v9191 = vcvt.s32.f32 %v9063
    %v9192 = vcvt.s32.f32 %v9064
    %v9193 = vcvt.s32.f32 %v9065
    %v9194 = vcvt.s32.f32 %v9066
    %v9195 = vcvt.s32.f32 %v9067
    %v9196 = vcvt.s32.f32 %v9068
    %v9197 = vcvt.s32.f32 %v9069
    %v9198 = vcvt.s32.f32 %v9070
    %v9199 = vcvt.s32.f32 %v9071
    %v9200 = vcvt.s32.f32 %v9072
    %v9201 = vcvt.s32.f32 %v9073
    %v9202 = vcvt.s32.f32 %v9074
    %v9203 = vcvt.s32.f32 %v9075
    %v9204 = vcvt.s32.f32 %v9076
    %v9205 = vcvt.s32.f32 %v9077
    %v9206 = vcvt.s32.f32 %v9078
    %v9207 = vcvt.s32.f32 %v9079
    %v9208 = vcvt.s32.f32 %v9080
    %v9209 = vcvt.s32.f32 %v9081
    %v9210 = vcvt.s32.f32 %v9082
    %v9211 = vcvt.s32.f32 %v9083
    %v9212 = vcvt.s32.f32 %v9084
    %v9213 = vcvt.s32.f32 %v9085
    %v9214 = vcvt.s32.f32 %v9086
    %v9215 = vcvt.s32.f32 %v9087
    %v9216 = vcvt.s32.f32 %v9088
    %v9217 = vcvt.s32.f32 %v9089
    %v9218 = vcvt.s32.f32 %v9090
    %v9219 = vcvt.s32.f32 %v9091
    %v9220 = vcvt.s32.f32 %v9092
    %v9221 = vcvt.s32.f32 %v9093
    %v9222 = vcvt.s32.f32 %v9094
    %v9223 = vcvt.s32.f32 %v9095
    %v9224 = vcvt.s32.f32 %v9096
    %v9225 = vcvt.s32.f32 %v9097
    %v9226 = vcvt.s32.f32 %v9098
    %v9227 = vcvt.s32.f32 %v9099
    %v9228 = vcvt.s32.f32 %v9100
    %v9229 = vcvt.s32.f32 %v9101
    %v9230 = vcvt.s32.f32 %v9102
    %v9231 = vcvt.s32.f32 %v9103
    %v9232 = vcvt.s32.f32 %v9104
    %v9233 = vcvt.s32.f32 %v9105
    %v9234 = vcvt.s32.f32 %v9106
    %v9235 = vcvt.s32.f32 %v9107
    %v9236 = vcvt.s32.f32 %v9108
    %v9237 = vcvt.s32.f32 %v9109
    %v9238 = vcvt.s32.f32 %v9110
    %v9239 = vcvt.s32.f32 %v9111
    %v9240 = vcvt.s32.f32 %v9112
    %v9241 = vcvt.s32.f32 %v9113
    %v9242 = vcvt.s32.f32 %v9114
    %v9243 = vcvt.s32.f32 %v9115
    %v9244 = vcvt.s32.f32 %v9116
    %v9245 = vcvt.s32.f32 %v9117
    %v9246 = vcvt.s32.f32 %v9118
    %v9247 = vcvt.s32.f32 %v9119
    %v9248 = vcvt.s32.f32 %v9120
    %v9249 = vcvt.s32.f32 %v9121
    %v9250 = vcvt.s32.f32 %v9122
    %v9251 = vcvt.s32.f32 %v9123
    %v9252 = vcvt.s32.f32 %v9124
    %v9253 = vcvt.s32.f32 %v9125
    %v9254 = vcvt.s32.f32 %v9126
    %v9255 = vcvt.s32.f32 %v9127
    %v9256 = vcvt.s32.f32 %v9128
    %v9257 = vcvt.s32.f32 %v9129
    %v9258 = vcvt.s32.f32 %v9130
    %v9259 = vcvt.s32.f32 %v9131
    %v9260 = vcvt.s32.f32 %v9132
    %v9261 = vcvt.s32.f32 %v9133
    %v9262 = vcvt.s32.f32 %v9134
    %v9263 = vcvt.s32.f32 %v9135
    %v9264 = vcvt.s32.f32 %v9136
    %v9265 = vcvt.s32.f32 %v9137
    %v9266 = vcvt.s32.f32 %v9138
    %v9267 = vcvt.s32.f32 %v9139
    %v9268 = vcvt.s32.f32 %v9140
    %v9269 = vcvt.s32.f32 %v9141
    %v9270 = vcvt.s32.f32 %v9142
    %v9271 = vcvt.s32.f32 %v9143
    %v9272 = vcvt.s32.f32 %v9144
    %v9273 = vsub.f32 1.0, %v8037
    %9275 = vset.pattern.permute.xlu0 0
    %9276 = vperm.xlu0 %9275, %v9273
    %v9277 = vpop.permute.xlu0 %9276
    %v9279 = vmul.f32 %v9277, %v7896
    %v9280 = vlaneseq
    %v9281 = vshrl.u32 %v9280, 7
    %v9282 = vsub.s32 0, %v9281
    %v9283 = vrot.slane %v9279, %v9282
    %9285 = vbcast.lane.b32.xlu0 %v9283, 256
    %v9286 = vpop.permute.xlu0 %9285
    %s9288 = sor.u32 256, 8
    %9289 = vbcast.lane.b32.xlu0 %v9283, %s9288
    %v9290 = vpop.permute.xlu0 %9289
    %s9292 = sor.u32 256, 16
    %9293 = vbcast.lane.b32.xlu0 %v9283, %s9292
    %v9294 = vpop.permute.xlu0 %9293
    %s9296 = sor.u32 256, 24
    %9297 = vbcast.lane.b32.xlu0 %v9283, %s9296
    %v9298 = vpop.permute.xlu0 %9297
    %s9300 = sor.u32 256, 32
    %9301 = vbcast.lane.b32.xlu0 %v9283, %s9300
    %v9302 = vpop.permute.xlu0 %9301
    %s9304 = sor.u32 256, 40
    %9305 = vbcast.lane.b32.xlu0 %v9283, %s9304
    %v9306 = vpop.permute.xlu0 %9305
    %s9308 = sor.u32 256, 48
    %9309 = vbcast.lane.b32.xlu0 %v9283, %s9308
    %v9310 = vpop.permute.xlu0 %9309
    %s9312 = sor.u32 256, 56
    %9313 = vbcast.lane.b32.xlu0 %v9283, %s9312
    %v9314 = vpop.permute.xlu0 %9313
    %s9316 = sor.u32 256, 64
    %9317 = vbcast.lane.b32.xlu0 %v9283, %s9316
    %v9318 = vpop.permute.xlu0 %9317
    %s9320 = sor.u32 256, 72
    %9321 = vbcast.lane.b32.xlu0 %v9283, %s9320
    %v9322 = vpop.permute.xlu0 %9321
    %s9324 = sor.u32 256, 80
    %9325 = vbcast.lane.b32.xlu0 %v9283, %s9324
    %v9326 = vpop.permute.xlu0 %9325
    %s9328 = sor.u32 256, 88
    %9329 = vbcast.lane.b32.xlu0 %v9283, %s9328
    %v9330 = vpop.permute.xlu0 %9329
    %s9332 = sor.u32 256, 96
    %9333 = vbcast.lane.b32.xlu0 %v9283, %s9332
    %v9334 = vpop.permute.xlu0 %9333
    %s9336 = sor.u32 256, 104
    %9337 = vbcast.lane.b32.xlu0 %v9283, %s9336
    %v9338 = vpop.permute.xlu0 %9337
    %s9340 = sor.u32 256, 112
    %9341 = vbcast.lane.b32.xlu0 %v9283, %s9340
    %v9342 = vpop.permute.xlu0 %9341
    %s9344 = sor.u32 256, 120
    %9345 = vbcast.lane.b32.xlu0 %v9283, %s9344
    %v9346 = vpop.permute.xlu0 %9345
    %v9347 = vlaneseq
    %v9348 = vshrl.u32 %v9347, 7
    %v9349 = vsub.s32 1, %v9348
    %v9350 = vrot.slane %v9279, %v9349
    %9352 = vbcast.lane.b32.xlu0 %v9350, 256
    %v9353 = vpop.permute.xlu0 %9352
    %s9355 = sor.u32 256, 8
    %9356 = vbcast.lane.b32.xlu0 %v9350, %s9355
    %v9357 = vpop.permute.xlu0 %9356
    %s9359 = sor.u32 256, 16
    %9360 = vbcast.lane.b32.xlu0 %v9350, %s9359
    %v9361 = vpop.permute.xlu0 %9360
    %s9363 = sor.u32 256, 24
    %9364 = vbcast.lane.b32.xlu0 %v9350, %s9363
    %v9365 = vpop.permute.xlu0 %9364
    %s9367 = sor.u32 256, 32
    %9368 = vbcast.lane.b32.xlu0 %v9350, %s9367
    %v9369 = vpop.permute.xlu0 %9368
    %s9371 = sor.u32 256, 40
    %9372 = vbcast.lane.b32.xlu0 %v9350, %s9371
    %v9373 = vpop.permute.xlu0 %9372
    %s9375 = sor.u32 256, 48
    %9376 = vbcast.lane.b32.xlu0 %v9350, %s9375
    %v9377 = vpop.permute.xlu0 %9376
    %s9379 = sor.u32 256, 56
    %9380 = vbcast.lane.b32.xlu0 %v9350, %s9379
    %v9381 = vpop.permute.xlu0 %9380
    %s9383 = sor.u32 256, 64
    %9384 = vbcast.lane.b32.xlu0 %v9350, %s9383
    %v9385 = vpop.permute.xlu0 %9384
    %s9387 = sor.u32 256, 72
    %9388 = vbcast.lane.b32.xlu0 %v9350, %s9387
    %v9389 = vpop.permute.xlu0 %9388
    %s9391 = sor.u32 256, 80
    %9392 = vbcast.lane.b32.xlu0 %v9350, %s9391
    %v9393 = vpop.permute.xlu0 %9392
    %s9395 = sor.u32 256, 88
    %9396 = vbcast.lane.b32.xlu0 %v9350, %s9395
    %v9397 = vpop.permute.xlu0 %9396
    %s9399 = sor.u32 256, 96
    %9400 = vbcast.lane.b32.xlu0 %v9350, %s9399
    %v9401 = vpop.permute.xlu0 %9400
    %s9403 = sor.u32 256, 104
    %9404 = vbcast.lane.b32.xlu0 %v9350, %s9403
    %v9405 = vpop.permute.xlu0 %9404
    %s9407 = sor.u32 256, 112
    %9408 = vbcast.lane.b32.xlu0 %v9350, %s9407
    %v9409 = vpop.permute.xlu0 %9408
    %s9411 = sor.u32 256, 120
    %9412 = vbcast.lane.b32.xlu0 %v9350, %s9411
    %v9413 = vpop.permute.xlu0 %9412
    %v9414 = vlaneseq
    %v9415 = vshrl.u32 %v9414, 7
    %v9416 = vsub.s32 2, %v9415
    %v9417 = vrot.slane %v9279, %v9416
    %9419 = vbcast.lane.b32.xlu0 %v9417, 256
    %v9420 = vpop.permute.xlu0 %9419
    %s9422 = sor.u32 256, 8
    %9423 = vbcast.lane.b32.xlu0 %v9417, %s9422
    %v9424 = vpop.permute.xlu0 %9423
    %s9426 = sor.u32 256, 16
    %9427 = vbcast.lane.b32.xlu0 %v9417, %s9426
    %v9428 = vpop.permute.xlu0 %9427
    %s9430 = sor.u32 256, 24
    %9431 = vbcast.lane.b32.xlu0 %v9417, %s9430
    %v9432 = vpop.permute.xlu0 %9431
    %s9434 = sor.u32 256, 32
    %9435 = vbcast.lane.b32.xlu0 %v9417, %s9434
    %v9436 = vpop.permute.xlu0 %9435
    %s9438 = sor.u32 256, 40
    %9439 = vbcast.lane.b32.xlu0 %v9417, %s9438
    %v9440 = vpop.permute.xlu0 %9439
    %s9442 = sor.u32 256, 48
    %9443 = vbcast.lane.b32.xlu0 %v9417, %s9442
    %v9444 = vpop.permute.xlu0 %9443
    %s9446 = sor.u32 256, 56
    %9447 = vbcast.lane.b32.xlu0 %v9417, %s9446
    %v9448 = vpop.permute.xlu0 %9447
    %s9450 = sor.u32 256, 64
    %9451 = vbcast.lane.b32.xlu0 %v9417, %s9450
    %v9452 = vpop.permute.xlu0 %9451
    %s9454 = sor.u32 256, 72
    %9455 = vbcast.lane.b32.xlu0 %v9417, %s9454
    %v9456 = vpop.permute.xlu0 %9455
    %s9458 = sor.u32 256, 80
    %9459 = vbcast.lane.b32.xlu0 %v9417, %s9458
    %v9460 = vpop.permute.xlu0 %9459
    %s9462 = sor.u32 256, 88
    %9463 = vbcast.lane.b32.xlu0 %v9417, %s9462
    %v9464 = vpop.permute.xlu0 %9463
    %s9466 = sor.u32 256, 96
    %9467 = vbcast.lane.b32.xlu0 %v9417, %s9466
    %v9468 = vpop.permute.xlu0 %9467
    %s9470 = sor.u32 256, 104
    %9471 = vbcast.lane.b32.xlu0 %v9417, %s9470
    %v9472 = vpop.permute.xlu0 %9471
    %s9474 = sor.u32 256, 112
    %9475 = vbcast.lane.b32.xlu0 %v9417, %s9474
    %v9476 = vpop.permute.xlu0 %9475
    %s9478 = sor.u32 256, 120
    %9479 = vbcast.lane.b32.xlu0 %v9417, %s9478
    %v9480 = vpop.permute.xlu0 %9479
    %v9481 = vlaneseq
    %v9482 = vshrl.u32 %v9481, 7
    %v9483 = vsub.s32 3, %v9482
    %v9484 = vrot.slane %v9279, %v9483
    %9486 = vbcast.lane.b32.xlu0 %v9484, 256
    %v9487 = vpop.permute.xlu0 %9486
    %s9489 = sor.u32 256, 8
    %9490 = vbcast.lane.b32.xlu0 %v9484, %s9489
    %v9491 = vpop.permute.xlu0 %9490
    %s9493 = sor.u32 256, 16
    %9494 = vbcast.lane.b32.xlu0 %v9484, %s9493
    %v9495 = vpop.permute.xlu0 %9494
    %s9497 = sor.u32 256, 24
    %9498 = vbcast.lane.b32.xlu0 %v9484, %s9497
    %v9499 = vpop.permute.xlu0 %9498
    %s9501 = sor.u32 256, 32
    %9502 = vbcast.lane.b32.xlu0 %v9484, %s9501
    %v9503 = vpop.permute.xlu0 %9502
    %s9505 = sor.u32 256, 40
    %9506 = vbcast.lane.b32.xlu0 %v9484, %s9505
    %v9507 = vpop.permute.xlu0 %9506
    %s9509 = sor.u32 256, 48
    %9510 = vbcast.lane.b32.xlu0 %v9484, %s9509
    %v9511 = vpop.permute.xlu0 %9510
    %s9513 = sor.u32 256, 56
    %9514 = vbcast.lane.b32.xlu0 %v9484, %s9513
    %v9515 = vpop.permute.xlu0 %9514
    %s9517 = sor.u32 256, 64
    %9518 = vbcast.lane.b32.xlu0 %v9484, %s9517
    %v9519 = vpop.permute.xlu0 %9518
    %s9521 = sor.u32 256, 72
    %9522 = vbcast.lane.b32.xlu0 %v9484, %s9521
    %v9523 = vpop.permute.xlu0 %9522
    %s9525 = sor.u32 256, 80
    %9526 = vbcast.lane.b32.xlu0 %v9484, %s9525
    %v9527 = vpop.permute.xlu0 %9526
    %s9529 = sor.u32 256, 88
    %9530 = vbcast.lane.b32.xlu0 %v9484, %s9529
    %v9531 = vpop.permute.xlu0 %9530
    %s9533 = sor.u32 256, 96
    %9534 = vbcast.lane.b32.xlu0 %v9484, %s9533
    %v9535 = vpop.permute.xlu0 %9534
    %s9537 = sor.u32 256, 104
    %9538 = vbcast.lane.b32.xlu0 %v9484, %s9537
    %v9539 = vpop.permute.xlu0 %9538
    %s9541 = sor.u32 256, 112
    %9542 = vbcast.lane.b32.xlu0 %v9484, %s9541
    %v9543 = vpop.permute.xlu0 %9542
    %s9545 = sor.u32 256, 120
    %9546 = vbcast.lane.b32.xlu0 %v9484, %s9545
    %v9547 = vpop.permute.xlu0 %9546
    %v9548 = vlaneseq
    %v9549 = vshrl.u32 %v9548, 7
    %v9550 = vsub.s32 4, %v9549
    %v9551 = vrot.slane %v9279, %v9550
    %9553 = vbcast.lane.b32.xlu0 %v9551, 256
    %v9554 = vpop.permute.xlu0 %9553
    %s9556 = sor.u32 256, 8
    %9557 = vbcast.lane.b32.xlu0 %v9551, %s9556
    %v9558 = vpop.permute.xlu0 %9557
    %s9560 = sor.u32 256, 16
    %9561 = vbcast.lane.b32.xlu0 %v9551, %s9560
    %v9562 = vpop.permute.xlu0 %9561
    %s9564 = sor.u32 256, 24
    %9565 = vbcast.lane.b32.xlu0 %v9551, %s9564
    %v9566 = vpop.permute.xlu0 %9565
    %s9568 = sor.u32 256, 32
    %9569 = vbcast.lane.b32.xlu0 %v9551, %s9568
    %v9570 = vpop.permute.xlu0 %9569
    %s9572 = sor.u32 256, 40
    %9573 = vbcast.lane.b32.xlu0 %v9551, %s9572
    %v9574 = vpop.permute.xlu0 %9573
    %s9576 = sor.u32 256, 48
    %9577 = vbcast.lane.b32.xlu0 %v9551, %s9576
    %v9578 = vpop.permute.xlu0 %9577
    %s9580 = sor.u32 256, 56
    %9581 = vbcast.lane.b32.xlu0 %v9551, %s9580
    %v9582 = vpop.permute.xlu0 %9581
    %s9584 = sor.u32 256, 64
    %9585 = vbcast.lane.b32.xlu0 %v9551, %s9584
    %v9586 = vpop.permute.xlu0 %9585
    %s9588 = sor.u32 256, 72
    %9589 = vbcast.lane.b32.xlu0 %v9551, %s9588
    %v9590 = vpop.permute.xlu0 %9589
    %s9592 = sor.u32 256, 80
    %9593 = vbcast.lane.b32.xlu0 %v9551, %s9592
    %v9594 = vpop.permute.xlu0 %9593
    %s9596 = sor.u32 256, 88
    %9597 = vbcast.lane.b32.xlu0 %v9551, %s9596
    %v9598 = vpop.permute.xlu0 %9597
    %s9600 = sor.u32 256, 96
    %9601 = vbcast.lane.b32.xlu0 %v9551, %s9600
    %v9602 = vpop.permute.xlu0 %9601
    %s9604 = sor.u32 256, 104
    %9605 = vbcast.lane.b32.xlu0 %v9551, %s9604
    %v9606 = vpop.permute.xlu0 %9605
    %s9608 = sor.u32 256, 112
    %9609 = vbcast.lane.b32.xlu0 %v9551, %s9608
    %v9610 = vpop.permute.xlu0 %9609
    %s9612 = sor.u32 256, 120
    %9613 = vbcast.lane.b32.xlu0 %v9551, %s9612
    %v9614 = vpop.permute.xlu0 %9613
    %v9615 = vlaneseq
    %v9616 = vshrl.u32 %v9615, 7
    %v9617 = vsub.s32 5, %v9616
    %v9618 = vrot.slane %v9279, %v9617
    %9620 = vbcast.lane.b32.xlu0 %v9618, 256
    %v9621 = vpop.permute.xlu0 %9620
    %s9623 = sor.u32 256, 8
    %9624 = vbcast.lane.b32.xlu0 %v9618, %s9623
    %v9625 = vpop.permute.xlu0 %9624
    %s9627 = sor.u32 256, 16
    %9628 = vbcast.lane.b32.xlu0 %v9618, %s9627
    %v9629 = vpop.permute.xlu0 %9628
    %s9631 = sor.u32 256, 24
    %9632 = vbcast.lane.b32.xlu0 %v9618, %s9631
    %v9633 = vpop.permute.xlu0 %9632
    %s9635 = sor.u32 256, 32
    %9636 = vbcast.lane.b32.xlu0 %v9618, %s9635
    %v9637 = vpop.permute.xlu0 %9636
    %s9639 = sor.u32 256, 40
    %9640 = vbcast.lane.b32.xlu0 %v9618, %s9639
    %v9641 = vpop.permute.xlu0 %9640
    %s9643 = sor.u32 256, 48
    %9644 = vbcast.lane.b32.xlu0 %v9618, %s9643
    %v9645 = vpop.permute.xlu0 %9644
    %s9647 = sor.u32 256, 56
    %9648 = vbcast.lane.b32.xlu0 %v9618, %s9647
    %v9649 = vpop.permute.xlu0 %9648
    %s9651 = sor.u32 256, 64
    %9652 = vbcast.lane.b32.xlu0 %v9618, %s9651
    %v9653 = vpop.permute.xlu0 %9652
    %s9655 = sor.u32 256, 72
    %9656 = vbcast.lane.b32.xlu0 %v9618, %s9655
    %v9657 = vpop.permute.xlu0 %9656
    %s9659 = sor.u32 256, 80
    %9660 = vbcast.lane.b32.xlu0 %v9618, %s9659
    %v9661 = vpop.permute.xlu0 %9660
    %s9663 = sor.u32 256, 88
    %9664 = vbcast.lane.b32.xlu0 %v9618, %s9663
    %v9665 = vpop.permute.xlu0 %9664
    %s9667 = sor.u32 256, 96
    %9668 = vbcast.lane.b32.xlu0 %v9618, %s9667
    %v9669 = vpop.permute.xlu0 %9668
    %s9671 = sor.u32 256, 104
    %9672 = vbcast.lane.b32.xlu0 %v9618, %s9671
    %v9673 = vpop.permute.xlu0 %9672
    %s9675 = sor.u32 256, 112
    %9676 = vbcast.lane.b32.xlu0 %v9618, %s9675
    %v9677 = vpop.permute.xlu0 %9676
    %s9679 = sor.u32 256, 120
    %9680 = vbcast.lane.b32.xlu0 %v9618, %s9679
    %v9681 = vpop.permute.xlu0 %9680
    %v9682 = vlaneseq
    %v9683 = vshrl.u32 %v9682, 7
    %v9684 = vsub.s32 6, %v9683
    %v9685 = vrot.slane %v9279, %v9684
    %9687 = vbcast.lane.b32.xlu0 %v9685, 256
    %v9688 = vpop.permute.xlu0 %9687
    %s9690 = sor.u32 256, 8
    %9691 = vbcast.lane.b32.xlu0 %v9685, %s9690
    %v9692 = vpop.permute.xlu0 %9691
    %s9694 = sor.u32 256, 16
    %9695 = vbcast.lane.b32.xlu0 %v9685, %s9694
    %v9696 = vpop.permute.xlu0 %9695
    %s9698 = sor.u32 256, 24
    %9699 = vbcast.lane.b32.xlu0 %v9685, %s9698
    %v9700 = vpop.permute.xlu0 %9699
    %s9702 = sor.u32 256, 32
    %9703 = vbcast.lane.b32.xlu0 %v9685, %s9702
    %v9704 = vpop.permute.xlu0 %9703
    %s9706 = sor.u32 256, 40
    %9707 = vbcast.lane.b32.xlu0 %v9685, %s9706
    %v9708 = vpop.permute.xlu0 %9707
    %s9710 = sor.u32 256, 48
    %9711 = vbcast.lane.b32.xlu0 %v9685, %s9710
    %v9712 = vpop.permute.xlu0 %9711
    %s9714 = sor.u32 256, 56
    %9715 = vbcast.lane.b32.xlu0 %v9685, %s9714
    %v9716 = vpop.permute.xlu0 %9715
    %s9718 = sor.u32 256, 64
    %9719 = vbcast.lane.b32.xlu0 %v9685, %s9718
    %v9720 = vpop.permute.xlu0 %9719
    %s9722 = sor.u32 256, 72
    %9723 = vbcast.lane.b32.xlu0 %v9685, %s9722
    %v9724 = vpop.permute.xlu0 %9723
    %s9726 = sor.u32 256, 80
    %9727 = vbcast.lane.b32.xlu0 %v9685, %s9726
    %v9728 = vpop.permute.xlu0 %9727
    %s9730 = sor.u32 256, 88
    %9731 = vbcast.lane.b32.xlu0 %v9685, %s9730
    %v9732 = vpop.permute.xlu0 %9731
    %s9734 = sor.u32 256, 96
    %9735 = vbcast.lane.b32.xlu0 %v9685, %s9734
    %v9736 = vpop.permute.xlu0 %9735
    %s9738 = sor.u32 256, 104
    %9739 = vbcast.lane.b32.xlu0 %v9685, %s9738
    %v9740 = vpop.permute.xlu0 %9739
    %s9742 = sor.u32 256, 112
    %9743 = vbcast.lane.b32.xlu0 %v9685, %s9742
    %v9744 = vpop.permute.xlu0 %9743
    %s9746 = sor.u32 256, 120
    %9747 = vbcast.lane.b32.xlu0 %v9685, %s9746
    %v9748 = vpop.permute.xlu0 %9747
    %v9749 = vlaneseq
    %v9750 = vshrl.u32 %v9749, 7
    %v9751 = vsub.s32 7, %v9750
    %v9752 = vrot.slane %v9279, %v9751
    %9754 = vbcast.lane.b32.xlu0 %v9752, 256
    %v9755 = vpop.permute.xlu0 %9754
    %s9757 = sor.u32 256, 8
    %9758 = vbcast.lane.b32.xlu0 %v9752, %s9757
    %v9759 = vpop.permute.xlu0 %9758
    %s9761 = sor.u32 256, 16
    %9762 = vbcast.lane.b32.xlu0 %v9752, %s9761
    %v9763 = vpop.permute.xlu0 %9762
    %s9765 = sor.u32 256, 24
    %9766 = vbcast.lane.b32.xlu0 %v9752, %s9765
    %v9767 = vpop.permute.xlu0 %9766
    %s9769 = sor.u32 256, 32
    %9770 = vbcast.lane.b32.xlu0 %v9752, %s9769
    %v9771 = vpop.permute.xlu0 %9770
    %s9773 = sor.u32 256, 40
    %9774 = vbcast.lane.b32.xlu0 %v9752, %s9773
    %v9775 = vpop.permute.xlu0 %9774
    %s9777 = sor.u32 256, 48
    %9778 = vbcast.lane.b32.xlu0 %v9752, %s9777
    %v9779 = vpop.permute.xlu0 %9778
    %s9781 = sor.u32 256, 56
    %9782 = vbcast.lane.b32.xlu0 %v9752, %s9781
    %v9783 = vpop.permute.xlu0 %9782
    %s9785 = sor.u32 256, 64
    %9786 = vbcast.lane.b32.xlu0 %v9752, %s9785
    %v9787 = vpop.permute.xlu0 %9786
    %s9789 = sor.u32 256, 72
    %9790 = vbcast.lane.b32.xlu0 %v9752, %s9789
    %v9791 = vpop.permute.xlu0 %9790
    %s9793 = sor.u32 256, 80
    %9794 = vbcast.lane.b32.xlu0 %v9752, %s9793
    %v9795 = vpop.permute.xlu0 %9794
    %s9797 = sor.u32 256, 88
    %9798 = vbcast.lane.b32.xlu0 %v9752, %s9797
    %v9799 = vpop.permute.xlu0 %9798
    %s9801 = sor.u32 256, 96
    %9802 = vbcast.lane.b32.xlu0 %v9752, %s9801
    %v9803 = vpop.permute.xlu0 %9802
    %s9805 = sor.u32 256, 104
    %9806 = vbcast.lane.b32.xlu0 %v9752, %s9805
    %v9807 = vpop.permute.xlu0 %9806
    %s9809 = sor.u32 256, 112
    %9810 = vbcast.lane.b32.xlu0 %v9752, %s9809
    %v9811 = vpop.permute.xlu0 %9810
    %s9813 = sor.u32 256, 120
    %9814 = vbcast.lane.b32.xlu0 %v9752, %s9813
    %v9815 = vpop.permute.xlu0 %9814
    %v9816 = vmul.f32 %v9145, %v9286
    %v9817 = vmul.f32 %v9146, %v9290
    %v9818 = vmul.f32 %v9147, %v9294
    %v9819 = vmul.f32 %v9148, %v9298
    %v9820 = vmul.f32 %v9149, %v9302
    %v9821 = vmul.f32 %v9150, %v9306
    %v9822 = vmul.f32 %v9151, %v9310
    %v9823 = vmul.f32 %v9152, %v9314
    %v9824 = vmul.f32 %v9153, %v9318
    %v9825 = vmul.f32 %v9154, %v9322
    %v9826 = vmul.f32 %v9155, %v9326
    %v9827 = vmul.f32 %v9156, %v9330
    %v9828 = vmul.f32 %v9157, %v9334
    %v9829 = vmul.f32 %v9158, %v9338
    %v9830 = vmul.f32 %v9159, %v9342
    %v9831 = vmul.f32 %v9160, %v9346
    %v9832 = vmul.f32 %v9161, %v9353
    %v9833 = vmul.f32 %v9162, %v9357
    %v9834 = vmul.f32 %v9163, %v9361
    %v9835 = vmul.f32 %v9164, %v9365
    %v9836 = vmul.f32 %v9165, %v9369
    %v9837 = vmul.f32 %v9166, %v9373
    %v9838 = vmul.f32 %v9167, %v9377
    %v9839 = vmul.f32 %v9168, %v9381
    %v9840 = vmul.f32 %v9169, %v9385
    %v9841 = vmul.f32 %v9170, %v9389
    %v9842 = vmul.f32 %v9171, %v9393
    %v9843 = vmul.f32 %v9172, %v9397
    %v9844 = vmul.f32 %v9173, %v9401
    %v9845 = vmul.f32 %v9174, %v9405
    %v9846 = vmul.f32 %v9175, %v9409
    %v9847 = vmul.f32 %v9176, %v9413
    %v9848 = vmul.f32 %v9177, %v9420
    %v9849 = vmul.f32 %v9178, %v9424
    %v9850 = vmul.f32 %v9179, %v9428
    %v9851 = vmul.f32 %v9180, %v9432
    %v9852 = vmul.f32 %v9181, %v9436
    %v9853 = vmul.f32 %v9182, %v9440
    %v9854 = vmul.f32 %v9183, %v9444
    %v9855 = vmul.f32 %v9184, %v9448
    %v9856 = vmul.f32 %v9185, %v9452
    %v9857 = vmul.f32 %v9186, %v9456
    %v9858 = vmul.f32 %v9187, %v9460
    %v9859 = vmul.f32 %v9188, %v9464
    %v9860 = vmul.f32 %v9189, %v9468
    %v9861 = vmul.f32 %v9190, %v9472
    %v9862 = vmul.f32 %v9191, %v9476
    %v9863 = vmul.f32 %v9192, %v9480
    %v9864 = vmul.f32 %v9193, %v9487
    %v9865 = vmul.f32 %v9194, %v9491
    %v9866 = vmul.f32 %v9195, %v9495
    %v9867 = vmul.f32 %v9196, %v9499
    %v9868 = vmul.f32 %v9197, %v9503
    %v9869 = vmul.f32 %v9198, %v9507
    %v9870 = vmul.f32 %v9199, %v9511
    %v9871 = vmul.f32 %v9200, %v9515
    %v9872 = vmul.f32 %v9201, %v9519
    %v9873 = vmul.f32 %v9202, %v9523
    %v9874 = vmul.f32 %v9203, %v9527
    %v9875 = vmul.f32 %v9204, %v9531
    %v9876 = vmul.f32 %v9205, %v9535
    %v9877 = vmul.f32 %v9206, %v9539
    %v9878 = vmul.f32 %v9207, %v9543
    %v9879 = vmul.f32 %v9208, %v9547
    %v9880 = vmul.f32 %v9209, %v9554
    %v9881 = vmul.f32 %v9210, %v9558
    %v9882 = vmul.f32 %v9211, %v9562
    %v9883 = vmul.f32 %v9212, %v9566
    %v9884 = vmul.f32 %v9213, %v9570
    %v9885 = vmul.f32 %v9214, %v9574
    %v9886 = vmul.f32 %v9215, %v9578
    %v9887 = vmul.f32 %v9216, %v9582
    %v9888 = vmul.f32 %v9217, %v9586
    %v9889 = vmul.f32 %v9218, %v9590
    %v9890 = vmul.f32 %v9219, %v9594
    %v9891 = vmul.f32 %v9220, %v9598
    %v9892 = vmul.f32 %v9221, %v9602
    %v9893 = vmul.f32 %v9222, %v9606
    %v9894 = vmul.f32 %v9223, %v9610
    %v9895 = vmul.f32 %v9224, %v9614
    %v9896 = vmul.f32 %v9225, %v9621
    %v9897 = vmul.f32 %v9226, %v9625
    %v9898 = vmul.f32 %v9227, %v9629
    %v9899 = vmul.f32 %v9228, %v9633
    %v9900 = vmul.f32 %v9229, %v9637
    %v9901 = vmul.f32 %v9230, %v9641
    %v9902 = vmul.f32 %v9231, %v9645
    %v9903 = vmul.f32 %v9232, %v9649
    %v9904 = vmul.f32 %v9233, %v9653
    %v9905 = vmul.f32 %v9234, %v9657
    %v9906 = vmul.f32 %v9235, %v9661
    %v9907 = vmul.f32 %v9236, %v9665
    %v9908 = vmul.f32 %v9237, %v9669
    %v9909 = vmul.f32 %v9238, %v9673
    %v9910 = vmul.f32 %v9239, %v9677
    %v9911 = vmul.f32 %v9240, %v9681
    %v9912 = vmul.f32 %v9241, %v9688
    %v9913 = vmul.f32 %v9242, %v9692
    %v9914 = vmul.f32 %v9243, %v9696
    %v9915 = vmul.f32 %v9244, %v9700
    %v9916 = vmul.f32 %v9245, %v9704
    %v9917 = vmul.f32 %v9246, %v9708
    %v9918 = vmul.f32 %v9247, %v9712
    %v9919 = vmul.f32 %v9248, %v9716
    %v9920 = vmul.f32 %v9249, %v9720
    %v9921 = vmul.f32 %v9250, %v9724
    %v9922 = vmul.f32 %v9251, %v9728
    %v9923 = vmul.f32 %v9252, %v9732
    %v9924 = vmul.f32 %v9253, %v9736
    %v9925 = vmul.f32 %v9254, %v9740
    %v9926 = vmul.f32 %v9255, %v9744
    %v9927 = vmul.f32 %v9256, %v9748
    %v9928 = vmul.f32 %v9257, %v9755
    %v9929 = vmul.f32 %v9258, %v9759
    %v9930 = vmul.f32 %v9259, %v9763
    %v9931 = vmul.f32 %v9260, %v9767
    %v9932 = vmul.f32 %v9261, %v9771
    %v9933 = vmul.f32 %v9262, %v9775
    %v9934 = vmul.f32 %v9263, %v9779
    %v9935 = vmul.f32 %v9264, %v9783
    %v9936 = vmul.f32 %v9265, %v9787
    %v9937 = vmul.f32 %v9266, %v9791
    %v9938 = vmul.f32 %v9267, %v9795
    %v9939 = vmul.f32 %v9268, %v9799
    %v9940 = vmul.f32 %v9269, %v9803
    %v9941 = vmul.f32 %v9270, %v9807
    %v9942 = vmul.f32 %v9271, %v9811
    %v9943 = vmul.f32 %v9272, %v9815
    %v9944 = vadd.f32 %v9816, %v9817
    %v9945 = vadd.f32 %v9944, %v9818
    %v9946 = vadd.f32 %v9945, %v9819
    %v9947 = vadd.f32 %v9946, %v9820
    %v9948 = vadd.f32 %v9947, %v9821
    %v9949 = vadd.f32 %v9948, %v9822
    %v9950 = vadd.f32 %v9949, %v9823
    %v9951 = vadd.f32 %v9950, %v9824
    %v9952 = vadd.f32 %v9951, %v9825
    %v9953 = vadd.f32 %v9952, %v9826
    %v9954 = vadd.f32 %v9953, %v9827
    %v9955 = vadd.f32 %v9954, %v9828
    %v9956 = vadd.f32 %v9955, %v9829
    %v9957 = vadd.f32 %v9956, %v9830
    %v9958 = vadd.f32 %v9957, %v9831
    %v9959 = vrot.slane %v9958, 4
    %v9960 = vadd.f32 %v9958, %v9959
    %v9961 = vrot.slane %v9960, 2
    %v9962 = vadd.f32 %v9960, %v9961
    %v9963 = vrot.slane %v9962, 1
    %v9964 = vadd.f32 %v9962, %v9963
    %v9965 = vadd.f32 %v9832, %v9833
    %v9966 = vadd.f32 %v9965, %v9834
    %v9967 = vadd.f32 %v9966, %v9835
    %v9968 = vadd.f32 %v9967, %v9836
    %v9969 = vadd.f32 %v9968, %v9837
    %v9970 = vadd.f32 %v9969, %v9838
    %v9971 = vadd.f32 %v9970, %v9839
    %v9972 = vadd.f32 %v9971, %v9840
    %v9973 = vadd.f32 %v9972, %v9841
    %v9974 = vadd.f32 %v9973, %v9842
    %v9975 = vadd.f32 %v9974, %v9843
    %v9976 = vadd.f32 %v9975, %v9844
    %v9977 = vadd.f32 %v9976, %v9845
    %v9978 = vadd.f32 %v9977, %v9846
    %v9979 = vadd.f32 %v9978, %v9847
    %v9980 = vrot.slane %v9979, 4
    %v9981 = vadd.f32 %v9979, %v9980
    %v9982 = vrot.slane %v9981, 2
    %v9983 = vadd.f32 %v9981, %v9982
    %v9984 = vrot.slane %v9983, 1
    %v9985 = vadd.f32 %v9983, %v9984
    %v9986 = vadd.f32 %v9848, %v9849
    %v9987 = vadd.f32 %v9986, %v9850
    %v9988 = vadd.f32 %v9987, %v9851
    %v9989 = vadd.f32 %v9988, %v9852
    %v9990 = vadd.f32 %v9989, %v9853
    %v9991 = vadd.f32 %v9990, %v9854
    %v9992 = vadd.f32 %v9991, %v9855
    %v9993 = vadd.f32 %v9992, %v9856
    %v9994 = vadd.f32 %v9993, %v9857
    %v9995 = vadd.f32 %v9994, %v9858
    %v9996 = vadd.f32 %v9995, %v9859
    %v9997 = vadd.f32 %v9996, %v9860
    %v9998 = vadd.f32 %v9997, %v9861
    %v9999 = vadd.f32 %v9998, %v9862
    %v10000 = vadd.f32 %v9999, %v9863
    %v10001 = vrot.slane %v10000, 4
    %v10002 = vadd.f32 %v10000, %v10001
    %v10003 = vrot.slane %v10002, 2
    %v10004 = vadd.f32 %v10002, %v10003
    %v10005 = vrot.slane %v10004, 1
    %v10006 = vadd.f32 %v10004, %v10005
    %v10007 = vadd.f32 %v9864, %v9865
    %v10008 = vadd.f32 %v10007, %v9866
    %v10009 = vadd.f32 %v10008, %v9867
    %v10010 = vadd.f32 %v10009, %v9868
    %v10011 = vadd.f32 %v10010, %v9869
    %v10012 = vadd.f32 %v10011, %v9870
    %v10013 = vadd.f32 %v10012, %v9871
    %v10014 = vadd.f32 %v10013, %v9872
    %v10015 = vadd.f32 %v10014, %v9873
    %v10016 = vadd.f32 %v10015, %v9874
    %v10017 = vadd.f32 %v10016, %v9875
    %v10018 = vadd.f32 %v10017, %v9876
    %v10019 = vadd.f32 %v10018, %v9877
    %v10020 = vadd.f32 %v10019, %v9878
    %v10021 = vadd.f32 %v10020, %v9879
    %v10022 = vrot.slane %v10021, 4
    %v10023 = vadd.f32 %v10021, %v10022
    %v10024 = vrot.slane %v10023, 2
    %v10025 = vadd.f32 %v10023, %v10024
    %v10026 = vrot.slane %v10025, 1
    %v10027 = vadd.f32 %v10025, %v10026
    %v10028 = vadd.f32 %v9880, %v9881
    %v10029 = vadd.f32 %v10028, %v9882
    %v10030 = vadd.f32 %v10029, %v9883
    %v10031 = vadd.f32 %v10030, %v9884
    %v10032 = vadd.f32 %v10031, %v9885
    %v10033 = vadd.f32 %v10032, %v9886
    %v10034 = vadd.f32 %v10033, %v9887
    %v10035 = vadd.f32 %v10034, %v9888
    %v10036 = vadd.f32 %v10035, %v9889
    %v10037 = vadd.f32 %v10036, %v9890
    %v10038 = vadd.f32 %v10037, %v9891
    %v10039 = vadd.f32 %v10038, %v9892
    %v10040 = vadd.f32 %v10039, %v9893
    %v10041 = vadd.f32 %v10040, %v9894
    %v10042 = vadd.f32 %v10041, %v9895
    %v10043 = vrot.slane %v10042, 4
    %v10044 = vadd.f32 %v10042, %v10043
    %v10045 = vrot.slane %v10044, 2
    %v10046 = vadd.f32 %v10044, %v10045
    %v10047 = vrot.slane %v10046, 1
    %v10048 = vadd.f32 %v10046, %v10047
    %v10049 = vadd.f32 %v9896, %v9897
    %v10050 = vadd.f32 %v10049, %v9898
    %v10051 = vadd.f32 %v10050, %v9899
    %v10052 = vadd.f32 %v10051, %v9900
    %v10053 = vadd.f32 %v10052, %v9901
    %v10054 = vadd.f32 %v10053, %v9902
    %v10055 = vadd.f32 %v10054, %v9903
    %v10056 = vadd.f32 %v10055, %v9904
    %v10057 = vadd.f32 %v10056, %v9905
    %v10058 = vadd.f32 %v10057, %v9906
    %v10059 = vadd.f32 %v10058, %v9907
    %v10060 = vadd.f32 %v10059, %v9908
    %v10061 = vadd.f32 %v10060, %v9909
    %v10062 = vadd.f32 %v10061, %v9910
    %v10063 = vadd.f32 %v10062, %v9911
    %v10064 = vrot.slane %v10063, 4
    %v10065 = vadd.f32 %v10063, %v10064
    %v10066 = vrot.slane %v10065, 2
    %v10067 = vadd.f32 %v10065, %v10066
    %v10068 = vrot.slane %v10067, 1
    %v10069 = vadd.f32 %v10067, %v10068
    %v10070 = vadd.f32 %v9912, %v9913
    %v10071 = vadd.f32 %v10070, %v9914
    %v10072 = vadd.f32 %v10071, %v9915
    %v10073 = vadd.f32 %v10072, %v9916
    %v10074 = vadd.f32 %v10073, %v9917
    %v10075 = vadd.f32 %v10074, %v9918
    %v10076 = vadd.f32 %v10075, %v9919
    %v10077 = vadd.f32 %v10076, %v9920
    %v10078 = vadd.f32 %v10077, %v9921
    %v10079 = vadd.f32 %v10078, %v9922
    %v10080 = vadd.f32 %v10079, %v9923
    %v10081 = vadd.f32 %v10080, %v9924
    %v10082 = vadd.f32 %v10081, %v9925
    %v10083 = vadd.f32 %v10082, %v9926
    %v10084 = vadd.f32 %v10083, %v9927
    %v10085 = vrot.slane %v10084, 4
    %v10086 = vadd.f32 %v10084, %v10085
    %v10087 = vrot.slane %v10086, 2
    %v10088 = vadd.f32 %v10086, %v10087
    %v10089 = vrot.slane %v10088, 1
    %v10090 = vadd.f32 %v10088, %v10089
    %v10091 = vadd.f32 %v9928, %v9929
    %v10092 = vadd.f32 %v10091, %v9930
    %v10093 = vadd.f32 %v10092, %v9931
    %v10094 = vadd.f32 %v10093, %v9932
    %v10095 = vadd.f32 %v10094, %v9933
    %v10096 = vadd.f32 %v10095, %v9934
    %v10097 = vadd.f32 %v10096, %v9935
    %v10098 = vadd.f32 %v10097, %v9936
    %v10099 = vadd.f32 %v10098, %v9937
    %v10100 = vadd.f32 %v10099, %v9938
    %v10101 = vadd.f32 %v10100, %v9939
    %v10102 = vadd.f32 %v10101, %v9940
    %v10103 = vadd.f32 %v10102, %v9941
    %v10104 = vadd.f32 %v10103, %v9942
    %v10105 = vadd.f32 %v10104, %v9943
    %v10106 = vrot.slane %v10105, 4
    %v10107 = vadd.f32 %v10105, %v10106
    %v10108 = vrot.slane %v10107, 2
    %v10109 = vadd.f32 %v10107, %v10108
    %v10110 = vrot.slane %v10109, 1
    %v10111 = vadd.f32 %v10109, %v10110
    %10113 = vset.pattern.permute.xlu0 0
    %10114 = vperm.xlu0 %10113, %v8037
    %v10115 = vpop.permute.xlu0 %10114
    %v10117 = vmul.f32 %v10115, %v8351
    %v10126 = vsel %vm3633, %v9985, %v9964
    %v10127 = vsel %vm3635, %v10006, %v10126
    %v10128 = vsel %vm3637, %v10027, %v10127
    %v10129 = vsel %vm3639, %v10048, %v10128
    %v10130 = vsel %vm3641, %v10069, %v10129
    %v10131 = vsel %vm3643, %v10090, %v10130
    %v10132 = vsel %vm3645, %v10111, %v10131
    %v10134 = vadd.f32 %v10117, %v10132
    %10135 = vst [vmem:[#allocation27] sm:$0xff] %v10134
    %10136 = vst [vmem:[#allocation28] sm:$0xff] %v999
    %10137 = vst [vmem:[#allocation30] sm:$0xff] %v997
    %10138 = vst [vmem:[#allocation31] sm:$0xff] %v8052
    %10139 = vst [vmem:[#allocation33] sm:$0xff] %v7896
    %vm10140 = vcmask 7168
    %10141 = vst.msk [vmem:[%s57] sm:$0xff] %vm10140, %v8037
    %10142 = vst [vmem:[#allocation34] sm:$0xff] %v7898
    // Predicated region
    $region154: #{tpu_custom_call.1} parent=1 // pred_check
      _
    $region155: #{tpu_custom_call.1} parent=1 // pred_check_branch
      %10144 = sbr.rel (0) target = $region157
    $region156: #{tpu_custom_call.1} parent=1 // pred_region
      %s10146 = ssub.s32 128, 128
      %10147 = vsyncadd [#allocation5], %s10146
      %s10149 = sshll.u32 [#allocation27], 4
      %s10150 = int_to_ptr.vmem [resolvable:$true] %s10149
      %10152 = dma.vmem_to_hbm [thread:$0]  %s10150, 128, %s47, [#allocation5]
    $region157: #{tpu_custom_call.1} parent=1 // pred_fallthru
      _
    // Predicated region
    $region158: #{tpu_custom_call.1} parent=1 // pred_check
      _
    $region159: #{tpu_custom_call.1} parent=1 // pred_check_branch
      %10154 = sbr.rel (0) target = $region161
    $region160: #{tpu_custom_call.1} parent=1 // pred_region
      %s10156 = ssub.s32 128, 128
      %10157 = vsyncadd [#allocation29], %s10156
      %s10159 = sshll.u32 [#allocation28], 4
      %s10160 = int_to_ptr.vmem [resolvable:$true] %s10159
      %10162 = dma.vmem_to_hbm [thread:$0]  %s10160, 128, %s49, [#allocation29]
    $region161: #{tpu_custom_call.1} parent=1 // pred_fallthru
      _
    // Predicated region
    $region162: #{tpu_custom_call.1} parent=1 // pred_check
      _
    $region163: #{tpu_custom_call.1} parent=1 // pred_check_branch
      %10164 = sbr.rel (0) target = $region165
    $region164: #{tpu_custom_call.1} parent=1 // pred_region
      %s10166 = ssub.s32 128, 128
      %10167 = vsyncadd [#allocation29], %s10166
      %s10169 = sshll.u32 [#allocation30], 4
      %s10170 = int_to_ptr.vmem [resolvable:$true] %s10169
      %10172 = dma.vmem_to_hbm [thread:$0]  %s10170, 128, %s51, [#allocation29]
    $region165: #{tpu_custom_call.1} parent=1 // pred_fallthru
      _
    // Predicated region
    $region166: #{tpu_custom_call.1} parent=1 // pred_check
      _
    $region167: #{tpu_custom_call.1} parent=1 // pred_check_branch
      %10174 = sbr.rel (0) target = $region169
    $region168: #{tpu_custom_call.1} parent=1 // pred_region
      %s10176 = ssub.s32 128, 128
      %10177 = vsyncadd [#allocation32], %s10176
      %s10179 = sshll.u32 [#allocation31], 4
      %s10180 = int_to_ptr.vmem [resolvable:$true] %s10179
      %10182 = dma.vmem_to_hbm [thread:$0]  %s10180, 128, %s53, [#allocation32]
    $region169: #{tpu_custom_call.1} parent=1 // pred_fallthru
      _
    // Predicated region
    $region170: #{tpu_custom_call.1} parent=1 // pred_check
      _
    $region171: #{tpu_custom_call.1} parent=1 // pred_check_branch
      %10184 = sbr.rel (0) target = $region173
    $region172: #{tpu_custom_call.1} parent=1 // pred_region
      %s10186 = ssub.s32 128, 128
      %10187 = vsyncadd [#allocation32], %s10186
      %s10189 = sshll.u32 [#allocation33], 4
      %s10190 = int_to_ptr.vmem [resolvable:$true] %s10189
      %10192 = dma.vmem_to_hbm [thread:$0]  %s10190, 128, %s55, [#allocation32]
    $region173: #{tpu_custom_call.1} parent=1 // pred_fallthru
      _
    // Predicated region
    $region174: #{tpu_custom_call.1} parent=1 // pred_check
      _
    $region175: #{tpu_custom_call.1} parent=1 // pred_check_branch
      %10194 = sbr.rel (0) target = $region177
    $region176: #{tpu_custom_call.1} parent=1 // pred_region
      _
    $region177: #{tpu_custom_call.1} parent=1 // pred_fallthru
      _
    // Predicated region
    $region178: #{tpu_custom_call.1} parent=1 // pred_check
      _
    $region179: #{tpu_custom_call.1} parent=1 // pred_check_branch
      %10196 = sbr.rel (0) target = $region181
    $region180: #{tpu_custom_call.1} parent=1 // pred_region
      %s10198 = ssub.s32 128, 128
      %10199 = vsyncadd [#allocation35], %s10198
      %s10201 = sshll.u32 [#allocation34], 4
      %s10202 = int_to_ptr.vmem [resolvable:$true] %s10201
      %10204 = dma.vmem_to_hbm [thread:$0]  %s10202, 128, %s59, [#allocation35]
    $region181: #{tpu_custom_call.1} parent=1 // pred_fallthru
      _
    // Predicated region
    $region182: #{tpu_custom_call.1} parent=1 // pred_check
      _
    $region183: #{tpu_custom_call.1} parent=1 // pred_check_branch
      %10206 = sbr.rel (0) target = $region185
    $region184: #{tpu_custom_call.1} parent=1 // pred_region
      %10207 = dma.done [#allocation5], 128
    $region185: #{tpu_custom_call.1} parent=1 // pred_fallthru
      _
    // Predicated region
    $region186: #{tpu_custom_call.1} parent=1 // pred_check
      _
    $region187: #{tpu_custom_call.1} parent=1 // pred_check_branch
      %10209 = sbr.rel (0) target = $region189
    $region188: #{tpu_custom_call.1} parent=1 // pred_region
      %10210 = dma.done [#allocation29], 128
    $region189: #{tpu_custom_call.1} parent=1 // pred_fallthru
      _
    // Predicated region
    $region190: #{tpu_custom_call.1} parent=1 // pred_check
      _
    $region191: #{tpu_custom_call.1} parent=1 // pred_check_branch
      %10212 = sbr.rel (0) target = $region193
    $region192: #{tpu_custom_call.1} parent=1 // pred_region
      %10213 = dma.done [#allocation29], 128
    $region193: #{tpu_custom_call.1} parent=1 // pred_fallthru
      _
    // Predicated region
    $region194: #{tpu_custom_call.1} parent=1 // pred_check
      _
    $region195: #{tpu_custom_call.1} parent=1 // pred_check_branch
      %10215 = sbr.rel (0) target = $region197
    $region196: #{tpu_custom_call.1} parent=1 // pred_region
      %10216 = dma.done [#allocation32], 128
    $region197: #{tpu_custom_call.1} parent=1 // pred_fallthru
      _
    // Predicated region
    $region198: #{tpu_custom_call.1} parent=1 // pred_check
      _
    $region199: #{tpu_custom_call.1} parent=1 // pred_check_branch
      %10218 = sbr.rel (0) target = $region201
    $region200: #{tpu_custom_call.1} parent=1 // pred_region
      %10219 = dma.done [#allocation32], 128
    $region201: #{tpu_custom_call.1} parent=1 // pred_fallthru
      _
    // Predicated region
    $region202: #{tpu_custom_call.1} parent=1 // pred_check
      _
    $region203: #{tpu_custom_call.1} parent=1 // pred_check_branch
      %10221 = sbr.rel (0) target = $region205
    $region204: #{tpu_custom_call.1} parent=1 // pred_region
      _
    $region205: #{tpu_custom_call.1} parent=1 // pred_fallthru
      _
    // Predicated region
    $region206: #{tpu_custom_call.1} parent=1 // pred_check
      _
    $region207: #{tpu_custom_call.1} parent=1 // pred_check_branch
      %10223 = sbr.rel (0) target = $region209
    $region208: #{tpu_custom_call.1} parent=1 // pred_region
      %10224 = dma.done [#allocation35], 128
    $region209: #{tpu_custom_call.1} parent=1 // pred_fallthru
      _
    %10225 = vsyncpa [#allocation4], 1
    %10226 = vsyncpa [#allocation7], 1
    %10227 = vsyncpa [#allocation10], 1
    %10228 = vsyncpa [#allocation13], 1
    %10229 = vsyncpa [#allocation16], 1
    %10230 = vsyncpa [#allocation19], 1
    %10231 = vsyncpa [#allocation22], 1
    %10232 = vsyncpa [#allocation25], 1
    %10233 = vsyncpa [#allocation5], 1
    %10234 = vsyncpa [#allocation29], 1
    %10235 = vsyncpa [#allocation32], 1
    %10236 = vsyncpa [#allocation35], 1

</llo_original>
